<compile_context>
chip_gen: v5e
topology: v5e:2x2
jax: 0.10.0
libtpu: 0.0.40
codegen_flags: <defaults>
</compile_context>

<pallas_src>
import functools

import jax
import jax.numpy as jnp
from jax import lax
from jax.experimental import pallas as pl
from jax.experimental.pallas import tpu as pltpu


# ------------------------------ fused kernel ------------------------------- #

def _net_kernel(cols1_ref, w1_ref, b1_ref, w2t_ref, b2_ref,
                fw1b_ref, fb1_ref, fw2t_ref, fb2_ref, out_ref, *, n):
    """conv1+relu+pool1+conv2+relu+pool2+flatten+fc1+relu+fc2, all in VMEM."""
    f32 = jnp.float32

    # ---- conv1: single im2col GEMM on the MXU, bias + ReLU fused ----
    y1 = jnp.dot(cols1_ref[...], w1_ref[...], preferred_element_type=f32)
    y1 = jnp.maximum(y1 + b1_ref[...], 0.0)            # (n*576, 10), rows=(n,h,w)

    # ---- pool1 (2x2 / stride 2), fused in-register ----
    y1 = y1.reshape(n, 24, 24, 10)                     # [n, h, w, c]
    y1 = y1.reshape(n, 12, 2, 24, 10)                  # h -> (h2, dh)
    hmax = jnp.maximum(y1[:, :, 0], y1[:, :, 1])       # [n, h2, w, c]
    cols = []
    for w2 in range(12):                               # pair adjacent w columns
        m = jnp.maximum(hmax[:, :, 2 * w2, :], hmax[:, :, 2 * w2 + 1, :])
        cols.append(m[:, None])                        # [n, 1, h2, c]
    p1t = jnp.concatenate(cols, axis=1)                # [n, w2, h2, c] (spatially transposed)

    # ---- conv2: 25 shift-and-accumulate tap GEMMs (in-kernel im2col) ----
    y2 = jnp.zeros((n * 64, 20), f32)
    for ki in range(5):
        for kj in range(5):
            s = p1t[:, kj:kj + 8, ki:ki + 8, :].reshape(n * 64, 10)
            y2 = y2 + jnp.dot(s, w2t_ref[ki * 5 + kj], preferred_element_type=f32)
    y2 = jnp.maximum(y2 + b2_ref[...], 0.0)            # rows = (n, w, h)

    # ---- pool2 + torch-order flatten + fc1 (fc1 accumulated per position) ----
    y2 = y2.reshape(n, 8, 8, 20)                       # [n, w, h, c]
    y2 = y2.reshape(n, 4, 2, 8, 20)                    # w -> (w2, dw)
    wmax = jnp.maximum(y2[:, :, 0], y2[:, :, 1])       # [n, w2, h, c]
    h1 = jnp.zeros((n, 50), f32)
    for h2 in range(4):
        p = jnp.maximum(wmax[:, :, 2 * h2, :], wmax[:, :, 2 * h2 + 1, :])  # [n, w2, c]
        for w2 in range(4):
            h1 = h1 + jnp.dot(p[:, w2, :], fw1b_ref[w2 * 4 + h2],
                              preferred_element_type=f32)
    h1 = jnp.maximum(h1 + fb1_ref[...], 0.0)           # (n, 50)

    # ---- fc2 ----
    out = jnp.dot(h1, fw2t_ref[...], preferred_element_type=f32) + fb2_ref[...]
    out_ref[...] = out.astype(out_ref.dtype)


# --------------------------- wrapper / param prep -------------------------- #

def prepare_params(params):
    """One-time re-layout of the PyTorch-style parameters for the fused kernel."""
    w1, b1, w2, b2, fw1, fb1, fw2, fb2 = params
    # conv1 weight as an im2col matrix: w1m[ki*5+kj, co] = w1[co, 0, ki, kj]
    w1m = jnp.transpose(w1[:, 0], (1, 2, 0)).reshape(25, 10)
    # conv2 taps: w2t[ki*5+kj, ci, co] = w2[co, ci, ki, kj]
    w2t = jnp.transpose(w2, (2, 3, 1, 0)).reshape(25, 10, 20)
    # fc1 weight regrouped per pooled spatial position, matching
    # torch.flatten of the NCHW pool2 output: fw1b[w*4+h, c, k] = fw1[k, c*16+h*4+w]
    fw1b = jnp.transpose(fw1.reshape(50, 20, 4, 4), (3, 2, 1, 0)).reshape(16, 20, 50)
    return (w1m, b1.reshape(1, 10), w2t, b2.reshape(1, 20),
            fw1b, fb1.reshape(1, 50), fw2.T, fb2.reshape(1, 10))


def _im2col_conv1(x_nchw):
    # Layout plumbing on the raw 6 KB network input only; every intermediate
    # after this lives inside the fused kernel.  rows=(n,h,w), cols=(ki,kj).
    x = x_nchw[:, 0]                                        # (N, 28, 28)
    cols = jnp.stack([x[:, ki:ki + 24, kj:kj + 24]
                      for ki in range(5) for kj in range(5)], axis=-1)
    return cols.reshape(-1, 25).astype(jnp.float32)         # (N*576, 25)


@jax.jit
def net_forward(x_nchw, prepped):
    w1m, b1, w2t, b2, fw1b, fb1, fw2t, fb2 = prepped
    n = x_nchw.shape[0]
    cols1 = _im2col_conv1(x_nchw)
    return pl.pallas_call(
        functools.partial(_net_kernel, n=n),
        out_shape=jax.ShapeDtypeStruct((n, 10), jnp.float32),
        in_specs=[pl.BlockSpec(memory_space=pltpu.MemorySpace.VMEM)
                  for _ in range(9)],
        out_specs=pl.BlockSpec(memory_space=pltpu.MemorySpace.VMEM),
    )(cols1, w1m, b1, w2t, b2, fw1b, fb1, fw2t, fb2)


# --------------------------- pure-JAX reference ---------------------------- #

def ref_forward(x_nchw, params):
    w1, b1, w2, b2, fw1, fb1, fw2, fb2 = params
    dn = ("NCHW", "OIHW", "NCHW")
    y = lax.conv_general_dilated(x_nchw, w1, (1, 1), "VALID",
                                 dimension_numbers=dn)
    y = jnp.maximum(y + b1[None, :, None, None], 0.0)
    y = lax.reduce_window(y, -jnp.inf, lax.max, (1, 1, 2, 2), (1, 1, 2, 2),
                          "VALID")
    y = lax.conv_general_dilated(y, w2, (1, 1), "VALID",
                                 dimension_numbers=dn)
    y = jnp.maximum(y + b2[None, :, None, None], 0.0)
    y = lax.reduce_window(y, -jnp.inf, lax.max, (1, 1, 2, 2), (1, 1, 2, 2),
                          "VALID")
    y = y.reshape(y.shape[0], -1)
    y = jnp.maximum(y @ fw1.T + fb1, 0.0)
    return y @ fw2.T + fb2


# ------------------------------- parameters -------------------------------- #

def init_params(key):
    ks = jax.random.split(key, 8)

    def u(k, shape, fan_in):
        bound = 1.0 / (fan_in ** 0.5)
        return jax.random.uniform(k, shape, jnp.float32, -bound, bound)

    w1 = u(ks[0], (10, 1, 5, 5), 1 * 5 * 5)
    b1 = u(ks[1], (10,), 1 * 5 * 5)
    w2 = u(ks[2], (20, 10, 5, 5), 10 * 5 * 5)
    b2 = u(ks[3], (20,), 10 * 5 * 5)
    fw1 = u(ks[4], (50, 320), 320)
    fb1 = u(ks[5], (50,), 320)
    fw2 = u(ks[6], (10, 50), 50)
    fb2 = u(ks[7], (10,), 50)
    return (w1, b1, w2, b2, fw1, fb1, fw2, fb2)


# ---------------------------------- main ------------------------------------ #

if __name__ == "__main__":
    key = jax.random.PRNGKey(0)
    kx, kp = jax.random.split(key)
    # MNIST-style input: batch=2, 1 channel, 28x28 (required so fc1 sees 20*4*4)
    x = jax.random.normal(kx, (2, 1, 28, 28), dtype=jnp.float32)
    params = init_params(kp)
    prepped = prepare_params(params)          # one-time weight re-layout

    out = jax.block_until_ready(net_forward(x, prepped))
    ref = jax.block_until_ready(ref_forward(x, params))

    assert out.shape == (2, 10)
    max_err = float(jnp.max(jnp.abs(out - ref)))
    assert max_err < 1e-3, f"mismatch vs reference: {max_err}"

    print("KERNEL_OK")
</pallas_src>

<mosaic_0001>
module attributes {stable_mosaic.version = 11 : i64} {
  func.func @_net_kernel(%arg0: memref<1152x25xf32, #tpu.memory_space<vmem>>, %arg1: memref<25x10xf32, #tpu.memory_space<vmem>>, %arg2: memref<1x10xf32, #tpu.memory_space<vmem>>, %arg3: memref<25x10x20xf32, #tpu.memory_space<vmem>>, %arg4: memref<1x20xf32, #tpu.memory_space<vmem>>, %arg5: memref<16x20x50xf32, #tpu.memory_space<vmem>>, %arg6: memref<1x50xf32, #tpu.memory_space<vmem>>, %arg7: memref<50x10xf32, #tpu.memory_space<vmem>>, %arg8: memref<1x10xf32, #tpu.memory_space<vmem>>, %arg9: memref<2x10xf32, #tpu.memory_space<vmem>>) attributes {dimension_semantics = [], scalar_prefetch = 0 : i64, scratch_operands = 0 : i64, tpu.core_type = #tpu.core_type<tc>} {
    %c0 = arith.constant 0 : index
    %c0_0 = arith.constant 0 : index
    %0 = vector.load %arg0[%c0, %c0_0] : memref<1152x25xf32, #tpu.memory_space<vmem>>, vector<1152x25xf32>
    %c0_1 = arith.constant 0 : index
    %c0_2 = arith.constant 0 : index
    %1 = vector.load %arg1[%c0_1, %c0_2] : memref<25x10xf32, #tpu.memory_space<vmem>>, vector<25x10xf32>
    %cst = arith.constant dense<0.000000e+00> : vector<1152x10xf32>
    %2 = tpu.matmul %0, %1, %cst {dimension_numbers = #tpu.dot_dimension_numbers<[1], [0], [0], [1], [0, 0, 1, 1], [], []>} : vector<1152x25xf32>, vector<25x10xf32>, vector<1152x10xf32> -> vector<1152x10xf32>
    %c0_3 = arith.constant 0 : index
    %c0_4 = arith.constant 0 : index
    %3 = vector.load %arg2[%c0_3, %c0_4] : memref<1x10xf32, #tpu.memory_space<vmem>>, vector<1x10xf32>
    %4 = vector.broadcast %3 : vector<1x10xf32> to vector<1152x10xf32>
    %5 = arith.addf %2, %4 : vector<1152x10xf32>
    %cst_5 = arith.constant 0.000000e+00 : f32
    %6 = vector.broadcast %cst_5 : f32 to vector<1152x10xf32>
    %7 = arith.maximumf %5, %6 : vector<1152x10xf32>
    %8 = vector.shape_cast %7 : vector<1152x10xf32> to vector<2x24x24x10xf32>
    %9 = vector.shape_cast %8 : vector<2x24x24x10xf32> to vector<2x12x2x24x10xf32>
    %10 = vector.extract_strided_slice %9 {offsets = [0, 0, 0, 0, 0], sizes = [2, 12, 1, 24, 10], strides = [1, 1, 1, 1, 1]} : vector<2x12x2x24x10xf32> to vector<2x12x1x24x10xf32>
    %11 = vector.shape_cast %10 : vector<2x12x1x24x10xf32> to vector<2x12x24x10xf32>
    %12 = vector.extract_strided_slice %9 {offsets = [0, 0, 1, 0, 0], sizes = [2, 12, 1, 24, 10], strides = [1, 1, 1, 1, 1]} : vector<2x12x2x24x10xf32> to vector<2x12x1x24x10xf32>
    %13 = vector.shape_cast %12 : vector<2x12x1x24x10xf32> to vector<2x12x24x10xf32>
    %14 = arith.maximumf %11, %13 : vector<2x12x24x10xf32>
    %15 = vector.extract_strided_slice %14 {offsets = [0, 0, 0, 0], sizes = [2, 12, 1, 10], strides = [1, 1, 1, 1]} : vector<2x12x24x10xf32> to vector<2x12x1x10xf32>
    %16 = vector.shape_cast %15 : vector<2x12x1x10xf32> to vector<2x12x10xf32>
    %17 = vector.extract_strided_slice %14 {offsets = [0, 0, 1, 0], sizes = [2, 12, 1, 10], strides = [1, 1, 1, 1]} : vector<2x12x24x10xf32> to vector<2x12x1x10xf32>
    %18 = vector.shape_cast %17 : vector<2x12x1x10xf32> to vector<2x12x10xf32>
    %19 = arith.maximumf %16, %18 : vector<2x12x10xf32>
    %20 = vector.shape_cast %19 : vector<2x12x10xf32> to vector<2x1x12x10xf32>
    %21 = vector.extract_strided_slice %14 {offsets = [0, 0, 2, 0], sizes = [2, 12, 1, 10], strides = [1, 1, 1, 1]} : vector<2x12x24x10xf32> to vector<2x12x1x10xf32>
    %22 = vector.shape_cast %21 : vector<2x12x1x10xf32> to vector<2x12x10xf32>
    %23 = vector.extract_strided_slice %14 {offsets = [0, 0, 3, 0], sizes = [2, 12, 1, 10], strides = [1, 1, 1, 1]} : vector<2x12x24x10xf32> to vector<2x12x1x10xf32>
    %24 = vector.shape_cast %23 : vector<2x12x1x10xf32> to vector<2x12x10xf32>
    %25 = arith.maximumf %22, %24 : vector<2x12x10xf32>
    %26 = vector.shape_cast %25 : vector<2x12x10xf32> to vector<2x1x12x10xf32>
    %27 = vector.extract_strided_slice %14 {offsets = [0, 0, 4, 0], sizes = [2, 12, 1, 10], strides = [1, 1, 1, 1]} : vector<2x12x24x10xf32> to vector<2x12x1x10xf32>
    %28 = vector.shape_cast %27 : vector<2x12x1x10xf32> to vector<2x12x10xf32>
    %29 = vector.extract_strided_slice %14 {offsets = [0, 0, 5, 0], sizes = [2, 12, 1, 10], strides = [1, 1, 1, 1]} : vector<2x12x24x10xf32> to vector<2x12x1x10xf32>
    %30 = vector.shape_cast %29 : vector<2x12x1x10xf32> to vector<2x12x10xf32>
    %31 = arith.maximumf %28, %30 : vector<2x12x10xf32>
    %32 = vector.shape_cast %31 : vector<2x12x10xf32> to vector<2x1x12x10xf32>
    %33 = vector.extract_strided_slice %14 {offsets = [0, 0, 6, 0], sizes = [2, 12, 1, 10], strides = [1, 1, 1, 1]} : vector<2x12x24x10xf32> to vector<2x12x1x10xf32>
    %34 = vector.shape_cast %33 : vector<2x12x1x10xf32> to vector<2x12x10xf32>
    %35 = vector.extract_strided_slice %14 {offsets = [0, 0, 7, 0], sizes = [2, 12, 1, 10], strides = [1, 1, 1, 1]} : vector<2x12x24x10xf32> to vector<2x12x1x10xf32>
    %36 = vector.shape_cast %35 : vector<2x12x1x10xf32> to vector<2x12x10xf32>
    %37 = arith.maximumf %34, %36 : vector<2x12x10xf32>
    %38 = vector.shape_cast %37 : vector<2x12x10xf32> to vector<2x1x12x10xf32>
    %39 = vector.extract_strided_slice %14 {offsets = [0, 0, 8, 0], sizes = [2, 12, 1, 10], strides = [1, 1, 1, 1]} : vector<2x12x24x10xf32> to vector<2x12x1x10xf32>
    %40 = vector.shape_cast %39 : vector<2x12x1x10xf32> to vector<2x12x10xf32>
    %41 = vector.extract_strided_slice %14 {offsets = [0, 0, 9, 0], sizes = [2, 12, 1, 10], strides = [1, 1, 1, 1]} : vector<2x12x24x10xf32> to vector<2x12x1x10xf32>
    %42 = vector.shape_cast %41 : vector<2x12x1x10xf32> to vector<2x12x10xf32>
    %43 = arith.maximumf %40, %42 : vector<2x12x10xf32>
    %44 = vector.shape_cast %43 : vector<2x12x10xf32> to vector<2x1x12x10xf32>
    %45 = vector.extract_strided_slice %14 {offsets = [0, 0, 10, 0], sizes = [2, 12, 1, 10], strides = [1, 1, 1, 1]} : vector<2x12x24x10xf32> to vector<2x12x1x10xf32>
    %46 = vector.shape_cast %45 : vector<2x12x1x10xf32> to vector<2x12x10xf32>
    %47 = vector.extract_strided_slice %14 {offsets = [0, 0, 11, 0], sizes = [2, 12, 1, 10], strides = [1, 1, 1, 1]} : vector<2x12x24x10xf32> to vector<2x12x1x10xf32>
    %48 = vector.shape_cast %47 : vector<2x12x1x10xf32> to vector<2x12x10xf32>
    %49 = arith.maximumf %46, %48 : vector<2x12x10xf32>
    %50 = vector.shape_cast %49 : vector<2x12x10xf32> to vector<2x1x12x10xf32>
    %51 = vector.extract_strided_slice %14 {offsets = [0, 0, 12, 0], sizes = [2, 12, 1, 10], strides = [1, 1, 1, 1]} : vector<2x12x24x10xf32> to vector<2x12x1x10xf32>
    %52 = vector.shape_cast %51 : vector<2x12x1x10xf32> to vector<2x12x10xf32>
    %53 = vector.extract_strided_slice %14 {offsets = [0, 0, 13, 0], sizes = [2, 12, 1, 10], strides = [1, 1, 1, 1]} : vector<2x12x24x10xf32> to vector<2x12x1x10xf32>
    %54 = vector.shape_cast %53 : vector<2x12x1x10xf32> to vector<2x12x10xf32>
    %55 = arith.maximumf %52, %54 : vector<2x12x10xf32>
    %56 = vector.shape_cast %55 : vector<2x12x10xf32> to vector<2x1x12x10xf32>
    %57 = vector.extract_strided_slice %14 {offsets = [0, 0, 14, 0], sizes = [2, 12, 1, 10], strides = [1, 1, 1, 1]} : vector<2x12x24x10xf32> to vector<2x12x1x10xf32>
    %58 = vector.shape_cast %57 : vector<2x12x1x10xf32> to vector<2x12x10xf32>
    %59 = vector.extract_strided_slice %14 {offsets = [0, 0, 15, 0], sizes = [2, 12, 1, 10], strides = [1, 1, 1, 1]} : vector<2x12x24x10xf32> to vector<2x12x1x10xf32>
    %60 = vector.shape_cast %59 : vector<2x12x1x10xf32> to vector<2x12x10xf32>
    %61 = arith.maximumf %58, %60 : vector<2x12x10xf32>
    %62 = vector.shape_cast %61 : vector<2x12x10xf32> to vector<2x1x12x10xf32>
    %63 = vector.extract_strided_slice %14 {offsets = [0, 0, 16, 0], sizes = [2, 12, 1, 10], strides = [1, 1, 1, 1]} : vector<2x12x24x10xf32> to vector<2x12x1x10xf32>
    %64 = vector.shape_cast %63 : vector<2x12x1x10xf32> to vector<2x12x10xf32>
    %65 = vector.extract_strided_slice %14 {offsets = [0, 0, 17, 0], sizes = [2, 12, 1, 10], strides = [1, 1, 1, 1]} : vector<2x12x24x10xf32> to vector<2x12x1x10xf32>
    %66 = vector.shape_cast %65 : vector<2x12x1x10xf32> to vector<2x12x10xf32>
    %67 = arith.maximumf %64, %66 : vector<2x12x10xf32>
    %68 = vector.shape_cast %67 : vector<2x12x10xf32> to vector<2x1x12x10xf32>
    %69 = vector.extract_strided_slice %14 {offsets = [0, 0, 18, 0], sizes = [2, 12, 1, 10], strides = [1, 1, 1, 1]} : vector<2x12x24x10xf32> to vector<2x12x1x10xf32>
    %70 = vector.shape_cast %69 : vector<2x12x1x10xf32> to vector<2x12x10xf32>
    %71 = vector.extract_strided_slice %14 {offsets = [0, 0, 19, 0], sizes = [2, 12, 1, 10], strides = [1, 1, 1, 1]} : vector<2x12x24x10xf32> to vector<2x12x1x10xf32>
    %72 = vector.shape_cast %71 : vector<2x12x1x10xf32> to vector<2x12x10xf32>
    %73 = arith.maximumf %70, %72 : vector<2x12x10xf32>
    %74 = vector.shape_cast %73 : vector<2x12x10xf32> to vector<2x1x12x10xf32>
    %75 = vector.extract_strided_slice %14 {offsets = [0, 0, 20, 0], sizes = [2, 12, 1, 10], strides = [1, 1, 1, 1]} : vector<2x12x24x10xf32> to vector<2x12x1x10xf32>
    %76 = vector.shape_cast %75 : vector<2x12x1x10xf32> to vector<2x12x10xf32>
    %77 = vector.extract_strided_slice %14 {offsets = [0, 0, 21, 0], sizes = [2, 12, 1, 10], strides = [1, 1, 1, 1]} : vector<2x12x24x10xf32> to vector<2x12x1x10xf32>
    %78 = vector.shape_cast %77 : vector<2x12x1x10xf32> to vector<2x12x10xf32>
    %79 = arith.maximumf %76, %78 : vector<2x12x10xf32>
    %80 = vector.shape_cast %79 : vector<2x12x10xf32> to vector<2x1x12x10xf32>
    %81 = vector.extract_strided_slice %14 {offsets = [0, 0, 22, 0], sizes = [2, 12, 1, 10], strides = [1, 1, 1, 1]} : vector<2x12x24x10xf32> to vector<2x12x1x10xf32>
    %82 = vector.shape_cast %81 : vector<2x12x1x10xf32> to vector<2x12x10xf32>
    %83 = vector.extract_strided_slice %14 {offsets = [0, 0, 23, 0], sizes = [2, 12, 1, 10], strides = [1, 1, 1, 1]} : vector<2x12x24x10xf32> to vector<2x12x1x10xf32>
    %84 = vector.shape_cast %83 : vector<2x12x1x10xf32> to vector<2x12x10xf32>
    %85 = arith.maximumf %82, %84 : vector<2x12x10xf32>
    %86 = vector.shape_cast %85 : vector<2x12x10xf32> to vector<2x1x12x10xf32>
    %87 = tpu.concatenate %20, %26, %32, %38, %44, %50, %56, %62, %68, %74, %80, %86 in 1 : vector<2x1x12x10xf32>, vector<2x1x12x10xf32>, vector<2x1x12x10xf32>, vector<2x1x12x10xf32>, vector<2x1x12x10xf32>, vector<2x1x12x10xf32>, vector<2x1x12x10xf32>, vector<2x1x12x10xf32>, vector<2x1x12x10xf32>, vector<2x1x12x10xf32>, vector<2x1x12x10xf32>, vector<2x1x12x10xf32> -> vector<2x12x12x10xf32>
    %cst_6 = arith.constant 0.000000e+00 : f32
    %88 = vector.broadcast %cst_6 : f32 to vector<128x20xf32>
    %89 = vector.extract_strided_slice %87 {offsets = [0, 0, 0, 0], sizes = [2, 8, 8, 10], strides = [1, 1, 1, 1]} : vector<2x12x12x10xf32> to vector<2x8x8x10xf32>
    %90 = vector.shape_cast %89 : vector<2x8x8x10xf32> to vector<128x10xf32>
    %c0_7 = arith.constant 0 : index
    %c0_8 = arith.constant 0 : index
    %c0_9 = arith.constant 0 : index
    %91 = vector.load %arg3[%c0_7, %c0_8, %c0_9] : memref<25x10x20xf32, #tpu.memory_space<vmem>>, vector<1x10x20xf32>
    %92 = vector.shape_cast %91 : vector<1x10x20xf32> to vector<10x20xf32>
    %cst_10 = arith.constant dense<0.000000e+00> : vector<128x20xf32>
    %93 = tpu.matmul %90, %92, %cst_10 {dimension_numbers = #tpu.dot_dimension_numbers<[1], [0], [0], [1], [0, 0, 1, 1], [], []>} : vector<128x10xf32>, vector<10x20xf32>, vector<128x20xf32> -> vector<128x20xf32>
    %94 = arith.addf %88, %93 : vector<128x20xf32>
    %95 = vector.extract_strided_slice %87 {offsets = [0, 1, 0, 0], sizes = [2, 8, 8, 10], strides = [1, 1, 1, 1]} : vector<2x12x12x10xf32> to vector<2x8x8x10xf32>
    %96 = vector.shape_cast %95 : vector<2x8x8x10xf32> to vector<128x10xf32>
    %c1 = arith.constant 1 : index
    %c0_11 = arith.constant 0 : index
    %c0_12 = arith.constant 0 : index
    %97 = vector.load %arg3[%c1, %c0_11, %c0_12] : memref<25x10x20xf32, #tpu.memory_space<vmem>>, vector<1x10x20xf32>
    %98 = vector.shape_cast %97 : vector<1x10x20xf32> to vector<10x20xf32>
    %cst_13 = arith.constant dense<0.000000e+00> : vector<128x20xf32>
    %99 = tpu.matmul %96, %98, %cst_13 {dimension_numbers = #tpu.dot_dimension_numbers<[1], [0], [0], [1], [0, 0, 1, 1], [], []>} : vector<128x10xf32>, vector<10x20xf32>, vector<128x20xf32> -> vector<128x20xf32>
    %100 = arith.addf %94, %99 : vector<128x20xf32>
    %101 = vector.extract_strided_slice %87 {offsets = [0, 2, 0, 0], sizes = [2, 8, 8, 10], strides = [1, 1, 1, 1]} : vector<2x12x12x10xf32> to vector<2x8x8x10xf32>
    %102 = vector.shape_cast %101 : vector<2x8x8x10xf32> to vector<128x10xf32>
    %c2 = arith.constant 2 : index
    %c0_14 = arith.constant 0 : index
    %c0_15 = arith.constant 0 : index
    %103 = vector.load %arg3[%c2, %c0_14, %c0_15] : memref<25x10x20xf32, #tpu.memory_space<vmem>>, vector<1x10x20xf32>
    %104 = vector.shape_cast %103 : vector<1x10x20xf32> to vector<10x20xf32>
    %cst_16 = arith.constant dense<0.000000e+00> : vector<128x20xf32>
    %105 = tpu.matmul %102, %104, %cst_16 {dimension_numbers = #tpu.dot_dimension_numbers<[1], [0], [0], [1], [0, 0, 1, 1], [], []>} : vector<128x10xf32>, vector<10x20xf32>, vector<128x20xf32> -> vector<128x20xf32>
    %106 = arith.addf %100, %105 : vector<128x20xf32>
    %107 = vector.extract_strided_slice %87 {offsets = [0, 3, 0, 0], sizes = [2, 8, 8, 10], strides = [1, 1, 1, 1]} : vector<2x12x12x10xf32> to vector<2x8x8x10xf32>
    %108 = vector.shape_cast %107 : vector<2x8x8x10xf32> to vector<128x10xf32>
    %c3 = arith.constant 3 : index
    %c0_17 = arith.constant 0 : index
    %c0_18 = arith.constant 0 : index
    %109 = vector.load %arg3[%c3, %c0_17, %c0_18] : memref<25x10x20xf32, #tpu.memory_space<vmem>>, vector<1x10x20xf32>
    %110 = vector.shape_cast %109 : vector<1x10x20xf32> to vector<10x20xf32>
    %cst_19 = arith.constant dense<0.000000e+00> : vector<128x20xf32>
    %111 = tpu.matmul %108, %110, %cst_19 {dimension_numbers = #tpu.dot_dimension_numbers<[1], [0], [0], [1], [0, 0, 1, 1], [], []>} : vector<128x10xf32>, vector<10x20xf32>, vector<128x20xf32> -> vector<128x20xf32>
    %112 = arith.addf %106, %111 : vector<128x20xf32>
    %113 = vector.extract_strided_slice %87 {offsets = [0, 4, 0, 0], sizes = [2, 8, 8, 10], strides = [1, 1, 1, 1]} : vector<2x12x12x10xf32> to vector<2x8x8x10xf32>
    %114 = vector.shape_cast %113 : vector<2x8x8x10xf32> to vector<128x10xf32>
    %c4 = arith.constant 4 : index
    %c0_20 = arith.constant 0 : index
    %c0_21 = arith.constant 0 : index
    %115 = vector.load %arg3[%c4, %c0_20, %c0_21] : memref<25x10x20xf32, #tpu.memory_space<vmem>>, vector<1x10x20xf32>
    %116 = vector.shape_cast %115 : vector<1x10x20xf32> to vector<10x20xf32>
    %cst_22 = arith.constant dense<0.000000e+00> : vector<128x20xf32>
    %117 = tpu.matmul %114, %116, %cst_22 {dimension_numbers = #tpu.dot_dimension_numbers<[1], [0], [0], [1], [0, 0, 1, 1], [], []>} : vector<128x10xf32>, vector<10x20xf32>, vector<128x20xf32> -> vector<128x20xf32>
    %118 = arith.addf %112, %117 : vector<128x20xf32>
    %119 = vector.extract_strided_slice %87 {offsets = [0, 0, 1, 0], sizes = [2, 8, 8, 10], strides = [1, 1, 1, 1]} : vector<2x12x12x10xf32> to vector<2x8x8x10xf32>
    %120 = vector.shape_cast %119 : vector<2x8x8x10xf32> to vector<128x10xf32>
    %c5 = arith.constant 5 : index
    %c0_23 = arith.constant 0 : index
    %c0_24 = arith.constant 0 : index
    %121 = vector.load %arg3[%c5, %c0_23, %c0_24] : memref<25x10x20xf32, #tpu.memory_space<vmem>>, vector<1x10x20xf32>
    %122 = vector.shape_cast %121 : vector<1x10x20xf32> to vector<10x20xf32>
    %cst_25 = arith.constant dense<0.000000e+00> : vector<128x20xf32>
    %123 = tpu.matmul %120, %122, %cst_25 {dimension_numbers = #tpu.dot_dimension_numbers<[1], [0], [0], [1], [0, 0, 1, 1], [], []>} : vector<128x10xf32>, vector<10x20xf32>, vector<128x20xf32> -> vector<128x20xf32>
    %124 = arith.addf %118, %123 : vector<128x20xf32>
    %125 = vector.extract_strided_slice %87 {offsets = [0, 1, 1, 0], sizes = [2, 8, 8, 10], strides = [1, 1, 1, 1]} : vector<2x12x12x10xf32> to vector<2x8x8x10xf32>
    %126 = vector.shape_cast %125 : vector<2x8x8x10xf32> to vector<128x10xf32>
    %c6 = arith.constant 6 : index
    %c0_26 = arith.constant 0 : index
    %c0_27 = arith.constant 0 : index
    %127 = vector.load %arg3[%c6, %c0_26, %c0_27] : memref<25x10x20xf32, #tpu.memory_space<vmem>>, vector<1x10x20xf32>
    %128 = vector.shape_cast %127 : vector<1x10x20xf32> to vector<10x20xf32>
    %cst_28 = arith.constant dense<0.000000e+00> : vector<128x20xf32>
    %129 = tpu.matmul %126, %128, %cst_28 {dimension_numbers = #tpu.dot_dimension_numbers<[1], [0], [0], [1], [0, 0, 1, 1], [], []>} : vector<128x10xf32>, vector<10x20xf32>, vector<128x20xf32> -> vector<128x20xf32>
    %130 = arith.addf %124, %129 : vector<128x20xf32>
    %131 = vector.extract_strided_slice %87 {offsets = [0, 2, 1, 0], sizes = [2, 8, 8, 10], strides = [1, 1, 1, 1]} : vector<2x12x12x10xf32> to vector<2x8x8x10xf32>
    %132 = vector.shape_cast %131 : vector<2x8x8x10xf32> to vector<128x10xf32>
    %c7 = arith.constant 7 : index
    %c0_29 = arith.constant 0 : index
    %c0_30 = arith.constant 0 : index
    %133 = vector.load %arg3[%c7, %c0_29, %c0_30] : memref<25x10x20xf32, #tpu.memory_space<vmem>>, vector<1x10x20xf32>
    %134 = vector.shape_cast %133 : vector<1x10x20xf32> to vector<10x20xf32>
    %cst_31 = arith.constant dense<0.000000e+00> : vector<128x20xf32>
    %135 = tpu.matmul %132, %134, %cst_31 {dimension_numbers = #tpu.dot_dimension_numbers<[1], [0], [0], [1], [0, 0, 1, 1], [], []>} : vector<128x10xf32>, vector<10x20xf32>, vector<128x20xf32> -> vector<128x20xf32>
    %136 = arith.addf %130, %135 : vector<128x20xf32>
    %137 = vector.extract_strided_slice %87 {offsets = [0, 3, 1, 0], sizes = [2, 8, 8, 10], strides = [1, 1, 1, 1]} : vector<2x12x12x10xf32> to vector<2x8x8x10xf32>
    %138 = vector.shape_cast %137 : vector<2x8x8x10xf32> to vector<128x10xf32>
    %c8 = arith.constant 8 : index
    %c0_32 = arith.constant 0 : index
    %c0_33 = arith.constant 0 : index
    %139 = vector.load %arg3[%c8, %c0_32, %c0_33] : memref<25x10x20xf32, #tpu.memory_space<vmem>>, vector<1x10x20xf32>
    %140 = vector.shape_cast %139 : vector<1x10x20xf32> to vector<10x20xf32>
    %cst_34 = arith.constant dense<0.000000e+00> : vector<128x20xf32>
    %141 = tpu.matmul %138, %140, %cst_34 {dimension_numbers = #tpu.dot_dimension_numbers<[1], [0], [0], [1], [0, 0, 1, 1], [], []>} : vector<128x10xf32>, vector<10x20xf32>, vector<128x20xf32> -> vector<128x20xf32>
    %142 = arith.addf %136, %141 : vector<128x20xf32>
    %143 = vector.extract_strided_slice %87 {offsets = [0, 4, 1, 0], sizes = [2, 8, 8, 10], strides = [1, 1, 1, 1]} : vector<2x12x12x10xf32> to vector<2x8x8x10xf32>
    %144 = vector.shape_cast %143 : vector<2x8x8x10xf32> to vector<128x10xf32>
    %c9 = arith.constant 9 : index
    %c0_35 = arith.constant 0 : index
    %c0_36 = arith.constant 0 : index
    %145 = vector.load %arg3[%c9, %c0_35, %c0_36] : memref<25x10x20xf32, #tpu.memory_space<vmem>>, vector<1x10x20xf32>
    %146 = vector.shape_cast %145 : vector<1x10x20xf32> to vector<10x20xf32>
    %cst_37 = arith.constant dense<0.000000e+00> : vector<128x20xf32>
    %147 = tpu.matmul %144, %146, %cst_37 {dimension_numbers = #tpu.dot_dimension_numbers<[1], [0], [0], [1], [0, 0, 1, 1], [], []>} : vector<128x10xf32>, vector<10x20xf32>, vector<128x20xf32> -> vector<128x20xf32>
    %148 = arith.addf %142, %147 : vector<128x20xf32>
    %149 = vector.extract_strided_slice %87 {offsets = [0, 0, 2, 0], sizes = [2, 8, 8, 10], strides = [1, 1, 1, 1]} : vector<2x12x12x10xf32> to vector<2x8x8x10xf32>
    %150 = vector.shape_cast %149 : vector<2x8x8x10xf32> to vector<128x10xf32>
    %c10 = arith.constant 10 : index
    %c0_38 = arith.constant 0 : index
    %c0_39 = arith.constant 0 : index
    %151 = vector.load %arg3[%c10, %c0_38, %c0_39] : memref<25x10x20xf32, #tpu.memory_space<vmem>>, vector<1x10x20xf32>
    %152 = vector.shape_cast %151 : vector<1x10x20xf32> to vector<10x20xf32>
    %cst_40 = arith.constant dense<0.000000e+00> : vector<128x20xf32>
    %153 = tpu.matmul %150, %152, %cst_40 {dimension_numbers = #tpu.dot_dimension_numbers<[1], [0], [0], [1], [0, 0, 1, 1], [], []>} : vector<128x10xf32>, vector<10x20xf32>, vector<128x20xf32> -> vector<128x20xf32>
    %154 = arith.addf %148, %153 : vector<128x20xf32>
    %155 = vector.extract_strided_slice %87 {offsets = [0, 1, 2, 0], sizes = [2, 8, 8, 10], strides = [1, 1, 1, 1]} : vector<2x12x12x10xf32> to vector<2x8x8x10xf32>
    %156 = vector.shape_cast %155 : vector<2x8x8x10xf32> to vector<128x10xf32>
    %c11 = arith.constant 11 : index
    %c0_41 = arith.constant 0 : index
    %c0_42 = arith.constant 0 : index
    %157 = vector.load %arg3[%c11, %c0_41, %c0_42] : memref<25x10x20xf32, #tpu.memory_space<vmem>>, vector<1x10x20xf32>
    %158 = vector.shape_cast %157 : vector<1x10x20xf32> to vector<10x20xf32>
    %cst_43 = arith.constant dense<0.000000e+00> : vector<128x20xf32>
    %159 = tpu.matmul %156, %158, %cst_43 {dimension_numbers = #tpu.dot_dimension_numbers<[1], [0], [0], [1], [0, 0, 1, 1], [], []>} : vector<128x10xf32>, vector<10x20xf32>, vector<128x20xf32> -> vector<128x20xf32>
    %160 = arith.addf %154, %159 : vector<128x20xf32>
    %161 = vector.extract_strided_slice %87 {offsets = [0, 2, 2, 0], sizes = [2, 8, 8, 10], strides = [1, 1, 1, 1]} : vector<2x12x12x10xf32> to vector<2x8x8x10xf32>
    %162 = vector.shape_cast %161 : vector<2x8x8x10xf32> to vector<128x10xf32>
    %c12 = arith.constant 12 : index
    %c0_44 = arith.constant 0 : index
    %c0_45 = arith.constant 0 : index
    %163 = vector.load %arg3[%c12, %c0_44, %c0_45] : memref<25x10x20xf32, #tpu.memory_space<vmem>>, vector<1x10x20xf32>
    %164 = vector.shape_cast %163 : vector<1x10x20xf32> to vector<10x20xf32>
    %cst_46 = arith.constant dense<0.000000e+00> : vector<128x20xf32>
    %165 = tpu.matmul %162, %164, %cst_46 {dimension_numbers = #tpu.dot_dimension_numbers<[1], [0], [0], [1], [0, 0, 1, 1], [], []>} : vector<128x10xf32>, vector<10x20xf32>, vector<128x20xf32> -> vector<128x20xf32>
    %166 = arith.addf %160, %165 : vector<128x20xf32>
    %167 = vector.extract_strided_slice %87 {offsets = [0, 3, 2, 0], sizes = [2, 8, 8, 10], strides = [1, 1, 1, 1]} : vector<2x12x12x10xf32> to vector<2x8x8x10xf32>
    %168 = vector.shape_cast %167 : vector<2x8x8x10xf32> to vector<128x10xf32>
    %c13 = arith.constant 13 : index
    %c0_47 = arith.constant 0 : index
    %c0_48 = arith.constant 0 : index
    %169 = vector.load %arg3[%c13, %c0_47, %c0_48] : memref<25x10x20xf32, #tpu.memory_space<vmem>>, vector<1x10x20xf32>
    %170 = vector.shape_cast %169 : vector<1x10x20xf32> to vector<10x20xf32>
    %cst_49 = arith.constant dense<0.000000e+00> : vector<128x20xf32>
    %171 = tpu.matmul %168, %170, %cst_49 {dimension_numbers = #tpu.dot_dimension_numbers<[1], [0], [0], [1], [0, 0, 1, 1], [], []>} : vector<128x10xf32>, vector<10x20xf32>, vector<128x20xf32> -> vector<128x20xf32>
    %172 = arith.addf %166, %171 : vector<128x20xf32>
    %173 = vector.extract_strided_slice %87 {offsets = [0, 4, 2, 0], sizes = [2, 8, 8, 10], strides = [1, 1, 1, 1]} : vector<2x12x12x10xf32> to vector<2x8x8x10xf32>
    %174 = vector.shape_cast %173 : vector<2x8x8x10xf32> to vector<128x10xf32>
    %c14 = arith.constant 14 : index
    %c0_50 = arith.constant 0 : index
    %c0_51 = arith.constant 0 : index
    %175 = vector.load %arg3[%c14, %c0_50, %c0_51] : memref<25x10x20xf32, #tpu.memory_space<vmem>>, vector<1x10x20xf32>
    %176 = vector.shape_cast %175 : vector<1x10x20xf32> to vector<10x20xf32>
    %cst_52 = arith.constant dense<0.000000e+00> : vector<128x20xf32>
    %177 = tpu.matmul %174, %176, %cst_52 {dimension_numbers = #tpu.dot_dimension_numbers<[1], [0], [0], [1], [0, 0, 1, 1], [], []>} : vector<128x10xf32>, vector<10x20xf32>, vector<128x20xf32> -> vector<128x20xf32>
    %178 = arith.addf %172, %177 : vector<128x20xf32>
    %179 = vector.extract_strided_slice %87 {offsets = [0, 0, 3, 0], sizes = [2, 8, 8, 10], strides = [1, 1, 1, 1]} : vector<2x12x12x10xf32> to vector<2x8x8x10xf32>
    %180 = vector.shape_cast %179 : vector<2x8x8x10xf32> to vector<128x10xf32>
    %c15 = arith.constant 15 : index
    %c0_53 = arith.constant 0 : index
    %c0_54 = arith.constant 0 : index
    %181 = vector.load %arg3[%c15, %c0_53, %c0_54] : memref<25x10x20xf32, #tpu.memory_space<vmem>>, vector<1x10x20xf32>
    %182 = vector.shape_cast %181 : vector<1x10x20xf32> to vector<10x20xf32>
    %cst_55 = arith.constant dense<0.000000e+00> : vector<128x20xf32>
    %183 = tpu.matmul %180, %182, %cst_55 {dimension_numbers = #tpu.dot_dimension_numbers<[1], [0], [0], [1], [0, 0, 1, 1], [], []>} : vector<128x10xf32>, vector<10x20xf32>, vector<128x20xf32> -> vector<128x20xf32>
    %184 = arith.addf %178, %183 : vector<128x20xf32>
    %185 = vector.extract_strided_slice %87 {offsets = [0, 1, 3, 0], sizes = [2, 8, 8, 10], strides = [1, 1, 1, 1]} : vector<2x12x12x10xf32> to vector<2x8x8x10xf32>
    %186 = vector.shape_cast %185 : vector<2x8x8x10xf32> to vector<128x10xf32>
    %c16 = arith.constant 16 : index
    %c0_56 = arith.constant 0 : index
    %c0_57 = arith.constant 0 : index
    %187 = vector.load %arg3[%c16, %c0_56, %c0_57] : memref<25x10x20xf32, #tpu.memory_space<vmem>>, vector<1x10x20xf32>
    %188 = vector.shape_cast %187 : vector<1x10x20xf32> to vector<10x20xf32>
    %cst_58 = arith.constant dense<0.000000e+00> : vector<128x20xf32>
    %189 = tpu.matmul %186, %188, %cst_58 {dimension_numbers = #tpu.dot_dimension_numbers<[1], [0], [0], [1], [0, 0, 1, 1], [], []>} : vector<128x10xf32>, vector<10x20xf32>, vector<128x20xf32> -> vector<128x20xf32>
    %190 = arith.addf %184, %189 : vector<128x20xf32>
    %191 = vector.extract_strided_slice %87 {offsets = [0, 2, 3, 0], sizes = [2, 8, 8, 10], strides = [1, 1, 1, 1]} : vector<2x12x12x10xf32> to vector<2x8x8x10xf32>
    %192 = vector.shape_cast %191 : vector<2x8x8x10xf32> to vector<128x10xf32>
    %c17 = arith.constant 17 : index
    %c0_59 = arith.constant 0 : index
    %c0_60 = arith.constant 0 : index
    %193 = vector.load %arg3[%c17, %c0_59, %c0_60] : memref<25x10x20xf32, #tpu.memory_space<vmem>>, vector<1x10x20xf32>
    %194 = vector.shape_cast %193 : vector<1x10x20xf32> to vector<10x20xf32>
    %cst_61 = arith.constant dense<0.000000e+00> : vector<128x20xf32>
    %195 = tpu.matmul %192, %194, %cst_61 {dimension_numbers = #tpu.dot_dimension_numbers<[1], [0], [0], [1], [0, 0, 1, 1], [], []>} : vector<128x10xf32>, vector<10x20xf32>, vector<128x20xf32> -> vector<128x20xf32>
    %196 = arith.addf %190, %195 : vector<128x20xf32>
    %197 = vector.extract_strided_slice %87 {offsets = [0, 3, 3, 0], sizes = [2, 8, 8, 10], strides = [1, 1, 1, 1]} : vector<2x12x12x10xf32> to vector<2x8x8x10xf32>
    %198 = vector.shape_cast %197 : vector<2x8x8x10xf32> to vector<128x10xf32>
    %c18 = arith.constant 18 : index
    %c0_62 = arith.constant 0 : index
    %c0_63 = arith.constant 0 : index
    %199 = vector.load %arg3[%c18, %c0_62, %c0_63] : memref<25x10x20xf32, #tpu.memory_space<vmem>>, vector<1x10x20xf32>
    %200 = vector.shape_cast %199 : vector<1x10x20xf32> to vector<10x20xf32>
    %cst_64 = arith.constant dense<0.000000e+00> : vector<128x20xf32>
    %201 = tpu.matmul %198, %200, %cst_64 {dimension_numbers = #tpu.dot_dimension_numbers<[1], [0], [0], [1], [0, 0, 1, 1], [], []>} : vector<128x10xf32>, vector<10x20xf32>, vector<128x20xf32> -> vector<128x20xf32>
    %202 = arith.addf %196, %201 : vector<128x20xf32>
    %203 = vector.extract_strided_slice %87 {offsets = [0, 4, 3, 0], sizes = [2, 8, 8, 10], strides = [1, 1, 1, 1]} : vector<2x12x12x10xf32> to vector<2x8x8x10xf32>
    %204 = vector.shape_cast %203 : vector<2x8x8x10xf32> to vector<128x10xf32>
    %c19 = arith.constant 19 : index
    %c0_65 = arith.constant 0 : index
    %c0_66 = arith.constant 0 : index
    %205 = vector.load %arg3[%c19, %c0_65, %c0_66] : memref<25x10x20xf32, #tpu.memory_space<vmem>>, vector<1x10x20xf32>
    %206 = vector.shape_cast %205 : vector<1x10x20xf32> to vector<10x20xf32>
    %cst_67 = arith.constant dense<0.000000e+00> : vector<128x20xf32>
    %207 = tpu.matmul %204, %206, %cst_67 {dimension_numbers = #tpu.dot_dimension_numbers<[1], [0], [0], [1], [0, 0, 1, 1], [], []>} : vector<128x10xf32>, vector<10x20xf32>, vector<128x20xf32> -> vector<128x20xf32>
    %208 = arith.addf %202, %207 : vector<128x20xf32>
    %209 = vector.extract_strided_slice %87 {offsets = [0, 0, 4, 0], sizes = [2, 8, 8, 10], strides = [1, 1, 1, 1]} : vector<2x12x12x10xf32> to vector<2x8x8x10xf32>
    %210 = vector.shape_cast %209 : vector<2x8x8x10xf32> to vector<128x10xf32>
    %c20 = arith.constant 20 : index
    %c0_68 = arith.constant 0 : index
    %c0_69 = arith.constant 0 : index
    %211 = vector.load %arg3[%c20, %c0_68, %c0_69] : memref<25x10x20xf32, #tpu.memory_space<vmem>>, vector<1x10x20xf32>
    %212 = vector.shape_cast %211 : vector<1x10x20xf32> to vector<10x20xf32>
    %cst_70 = arith.constant dense<0.000000e+00> : vector<128x20xf32>
    %213 = tpu.matmul %210, %212, %cst_70 {dimension_numbers = #tpu.dot_dimension_numbers<[1], [0], [0], [1], [0, 0, 1, 1], [], []>} : vector<128x10xf32>, vector<10x20xf32>, vector<128x20xf32> -> vector<128x20xf32>
    %214 = arith.addf %208, %213 : vector<128x20xf32>
    %215 = vector.extract_strided_slice %87 {offsets = [0, 1, 4, 0], sizes = [2, 8, 8, 10], strides = [1, 1, 1, 1]} : vector<2x12x12x10xf32> to vector<2x8x8x10xf32>
    %216 = vector.shape_cast %215 : vector<2x8x8x10xf32> to vector<128x10xf32>
    %c21 = arith.constant 21 : index
    %c0_71 = arith.constant 0 : index
    %c0_72 = arith.constant 0 : index
    %217 = vector.load %arg3[%c21, %c0_71, %c0_72] : memref<25x10x20xf32, #tpu.memory_space<vmem>>, vector<1x10x20xf32>
    %218 = vector.shape_cast %217 : vector<1x10x20xf32> to vector<10x20xf32>
    %cst_73 = arith.constant dense<0.000000e+00> : vector<128x20xf32>
    %219 = tpu.matmul %216, %218, %cst_73 {dimension_numbers = #tpu.dot_dimension_numbers<[1], [0], [0], [1], [0, 0, 1, 1], [], []>} : vector<128x10xf32>, vector<10x20xf32>, vector<128x20xf32> -> vector<128x20xf32>
    %220 = arith.addf %214, %219 : vector<128x20xf32>
    %221 = vector.extract_strided_slice %87 {offsets = [0, 2, 4, 0], sizes = [2, 8, 8, 10], strides = [1, 1, 1, 1]} : vector<2x12x12x10xf32> to vector<2x8x8x10xf32>
    %222 = vector.shape_cast %221 : vector<2x8x8x10xf32> to vector<128x10xf32>
    %c22 = arith.constant 22 : index
    %c0_74 = arith.constant 0 : index
    %c0_75 = arith.constant 0 : index
    %223 = vector.load %arg3[%c22, %c0_74, %c0_75] : memref<25x10x20xf32, #tpu.memory_space<vmem>>, vector<1x10x20xf32>
    %224 = vector.shape_cast %223 : vector<1x10x20xf32> to vector<10x20xf32>
    %cst_76 = arith.constant dense<0.000000e+00> : vector<128x20xf32>
    %225 = tpu.matmul %222, %224, %cst_76 {dimension_numbers = #tpu.dot_dimension_numbers<[1], [0], [0], [1], [0, 0, 1, 1], [], []>} : vector<128x10xf32>, vector<10x20xf32>, vector<128x20xf32> -> vector<128x20xf32>
    %226 = arith.addf %220, %225 : vector<128x20xf32>
    %227 = vector.extract_strided_slice %87 {offsets = [0, 3, 4, 0], sizes = [2, 8, 8, 10], strides = [1, 1, 1, 1]} : vector<2x12x12x10xf32> to vector<2x8x8x10xf32>
    %228 = vector.shape_cast %227 : vector<2x8x8x10xf32> to vector<128x10xf32>
    %c23 = arith.constant 23 : index
    %c0_77 = arith.constant 0 : index
    %c0_78 = arith.constant 0 : index
    %229 = vector.load %arg3[%c23, %c0_77, %c0_78] : memref<25x10x20xf32, #tpu.memory_space<vmem>>, vector<1x10x20xf32>
    %230 = vector.shape_cast %229 : vector<1x10x20xf32> to vector<10x20xf32>
    %cst_79 = arith.constant dense<0.000000e+00> : vector<128x20xf32>
    %231 = tpu.matmul %228, %230, %cst_79 {dimension_numbers = #tpu.dot_dimension_numbers<[1], [0], [0], [1], [0, 0, 1, 1], [], []>} : vector<128x10xf32>, vector<10x20xf32>, vector<128x20xf32> -> vector<128x20xf32>
    %232 = arith.addf %226, %231 : vector<128x20xf32>
    %233 = vector.extract_strided_slice %87 {offsets = [0, 4, 4, 0], sizes = [2, 8, 8, 10], strides = [1, 1, 1, 1]} : vector<2x12x12x10xf32> to vector<2x8x8x10xf32>
    %234 = vector.shape_cast %233 : vector<2x8x8x10xf32> to vector<128x10xf32>
    %c24 = arith.constant 24 : index
    %c0_80 = arith.constant 0 : index
    %c0_81 = arith.constant 0 : index
    %235 = vector.load %arg3[%c24, %c0_80, %c0_81] : memref<25x10x20xf32, #tpu.memory_space<vmem>>, vector<1x10x20xf32>
    %236 = vector.shape_cast %235 : vector<1x10x20xf32> to vector<10x20xf32>
    %cst_82 = arith.constant dense<0.000000e+00> : vector<128x20xf32>
    %237 = tpu.matmul %234, %236, %cst_82 {dimension_numbers = #tpu.dot_dimension_numbers<[1], [0], [0], [1], [0, 0, 1, 1], [], []>} : vector<128x10xf32>, vector<10x20xf32>, vector<128x20xf32> -> vector<128x20xf32>
    %238 = arith.addf %232, %237 : vector<128x20xf32>
    %c0_83 = arith.constant 0 : index
    %c0_84 = arith.constant 0 : index
    %239 = vector.load %arg4[%c0_83, %c0_84] : memref<1x20xf32, #tpu.memory_space<vmem>>, vector<1x20xf32>
    %240 = vector.broadcast %239 : vector<1x20xf32> to vector<128x20xf32>
    %241 = arith.addf %238, %240 : vector<128x20xf32>
    %cst_85 = arith.constant 0.000000e+00 : f32
    %242 = vector.broadcast %cst_85 : f32 to vector<128x20xf32>
    %243 = arith.maximumf %241, %242 : vector<128x20xf32>
    %244 = vector.shape_cast %243 : vector<128x20xf32> to vector<2x8x8x20xf32>
    %245 = vector.shape_cast %244 : vector<2x8x8x20xf32> to vector<2x4x2x8x20xf32>
    %246 = vector.extract_strided_slice %245 {offsets = [0, 0, 0, 0, 0], sizes = [2, 4, 1, 8, 20], strides = [1, 1, 1, 1, 1]} : vector<2x4x2x8x20xf32> to vector<2x4x1x8x20xf32>
    %247 = vector.shape_cast %246 : vector<2x4x1x8x20xf32> to vector<2x4x8x20xf32>
    %248 = vector.extract_strided_slice %245 {offsets = [0, 0, 1, 0, 0], sizes = [2, 4, 1, 8, 20], strides = [1, 1, 1, 1, 1]} : vector<2x4x2x8x20xf32> to vector<2x4x1x8x20xf32>
    %249 = vector.shape_cast %248 : vector<2x4x1x8x20xf32> to vector<2x4x8x20xf32>
    %250 = arith.maximumf %247, %249 : vector<2x4x8x20xf32>
    %cst_86 = arith.constant 0.000000e+00 : f32
    %251 = vector.broadcast %cst_86 : f32 to vector<2x50xf32>
    %252 = vector.extract_strided_slice %250 {offsets = [0, 0, 0, 0], sizes = [2, 4, 1, 20], strides = [1, 1, 1, 1]} : vector<2x4x8x20xf32> to vector<2x4x1x20xf32>
    %253 = vector.shape_cast %252 : vector<2x4x1x20xf32> to vector<2x4x20xf32>
    %254 = vector.extract_strided_slice %250 {offsets = [0, 0, 1, 0], sizes = [2, 4, 1, 20], strides = [1, 1, 1, 1]} : vector<2x4x8x20xf32> to vector<2x4x1x20xf32>
    %255 = vector.shape_cast %254 : vector<2x4x1x20xf32> to vector<2x4x20xf32>
    %256 = arith.maximumf %253, %255 : vector<2x4x20xf32>
    %257 = vector.extract_strided_slice %256 {offsets = [0, 0, 0], sizes = [2, 1, 20], strides = [1, 1, 1]} : vector<2x4x20xf32> to vector<2x1x20xf32>
    %258 = vector.shape_cast %257 : vector<2x1x20xf32> to vector<2x20xf32>
    %c0_87 = arith.constant 0 : index
    %c0_88 = arith.constant 0 : index
    %c0_89 = arith.constant 0 : index
    %259 = vector.load %arg5[%c0_87, %c0_88, %c0_89] : memref<16x20x50xf32, #tpu.memory_space<vmem>>, vector<1x20x50xf32>
    %260 = vector.shape_cast %259 : vector<1x20x50xf32> to vector<20x50xf32>
    %cst_90 = arith.constant dense<0.000000e+00> : vector<2x50xf32>
    %261 = tpu.matmul %258, %260, %cst_90 {dimension_numbers = #tpu.dot_dimension_numbers<[1], [0], [0], [1], [0, 0, 1, 1], [], []>} : vector<2x20xf32>, vector<20x50xf32>, vector<2x50xf32> -> vector<2x50xf32>
    %262 = arith.addf %251, %261 : vector<2x50xf32>
    %263 = vector.extract_strided_slice %256 {offsets = [0, 1, 0], sizes = [2, 1, 20], strides = [1, 1, 1]} : vector<2x4x20xf32> to vector<2x1x20xf32>
    %264 = vector.shape_cast %263 : vector<2x1x20xf32> to vector<2x20xf32>
    %c4_91 = arith.constant 4 : index
    %c0_92 = arith.constant 0 : index
    %c0_93 = arith.constant 0 : index
    %265 = vector.load %arg5[%c4_91, %c0_92, %c0_93] : memref<16x20x50xf32, #tpu.memory_space<vmem>>, vector<1x20x50xf32>
    %266 = vector.shape_cast %265 : vector<1x20x50xf32> to vector<20x50xf32>
    %cst_94 = arith.constant dense<0.000000e+00> : vector<2x50xf32>
    %267 = tpu.matmul %264, %266, %cst_94 {dimension_numbers = #tpu.dot_dimension_numbers<[1], [0], [0], [1], [0, 0, 1, 1], [], []>} : vector<2x20xf32>, vector<20x50xf32>, vector<2x50xf32> -> vector<2x50xf32>
    %268 = arith.addf %262, %267 : vector<2x50xf32>
    %269 = vector.extract_strided_slice %256 {offsets = [0, 2, 0], sizes = [2, 1, 20], strides = [1, 1, 1]} : vector<2x4x20xf32> to vector<2x1x20xf32>
    %270 = vector.shape_cast %269 : vector<2x1x20xf32> to vector<2x20xf32>
    %c8_95 = arith.constant 8 : index
    %c0_96 = arith.constant 0 : index
    %c0_97 = arith.constant 0 : index
    %271 = vector.load %arg5[%c8_95, %c0_96, %c0_97] : memref<16x20x50xf32, #tpu.memory_space<vmem>>, vector<1x20x50xf32>
    %272 = vector.shape_cast %271 : vector<1x20x50xf32> to vector<20x50xf32>
    %cst_98 = arith.constant dense<0.000000e+00> : vector<2x50xf32>
    %273 = tpu.matmul %270, %272, %cst_98 {dimension_numbers = #tpu.dot_dimension_numbers<[1], [0], [0], [1], [0, 0, 1, 1], [], []>} : vector<2x20xf32>, vector<20x50xf32>, vector<2x50xf32> -> vector<2x50xf32>
    %274 = arith.addf %268, %273 : vector<2x50xf32>
    %275 = vector.extract_strided_slice %256 {offsets = [0, 3, 0], sizes = [2, 1, 20], strides = [1, 1, 1]} : vector<2x4x20xf32> to vector<2x1x20xf32>
    %276 = vector.shape_cast %275 : vector<2x1x20xf32> to vector<2x20xf32>
    %c12_99 = arith.constant 12 : index
    %c0_100 = arith.constant 0 : index
    %c0_101 = arith.constant 0 : index
    %277 = vector.load %arg5[%c12_99, %c0_100, %c0_101] : memref<16x20x50xf32, #tpu.memory_space<vmem>>, vector<1x20x50xf32>
    %278 = vector.shape_cast %277 : vector<1x20x50xf32> to vector<20x50xf32>
    %cst_102 = arith.constant dense<0.000000e+00> : vector<2x50xf32>
    %279 = tpu.matmul %276, %278, %cst_102 {dimension_numbers = #tpu.dot_dimension_numbers<[1], [0], [0], [1], [0, 0, 1, 1], [], []>} : vector<2x20xf32>, vector<20x50xf32>, vector<2x50xf32> -> vector<2x50xf32>
    %280 = arith.addf %274, %279 : vector<2x50xf32>
    %281 = vector.extract_strided_slice %250 {offsets = [0, 0, 2, 0], sizes = [2, 4, 1, 20], strides = [1, 1, 1, 1]} : vector<2x4x8x20xf32> to vector<2x4x1x20xf32>
    %282 = vector.shape_cast %281 : vector<2x4x1x20xf32> to vector<2x4x20xf32>
    %283 = vector.extract_strided_slice %250 {offsets = [0, 0, 3, 0], sizes = [2, 4, 1, 20], strides = [1, 1, 1, 1]} : vector<2x4x8x20xf32> to vector<2x4x1x20xf32>
    %284 = vector.shape_cast %283 : vector<2x4x1x20xf32> to vector<2x4x20xf32>
    %285 = arith.maximumf %282, %284 : vector<2x4x20xf32>
    %286 = vector.extract_strided_slice %285 {offsets = [0, 0, 0], sizes = [2, 1, 20], strides = [1, 1, 1]} : vector<2x4x20xf32> to vector<2x1x20xf32>
    %287 = vector.shape_cast %286 : vector<2x1x20xf32> to vector<2x20xf32>
    %c1_103 = arith.constant 1 : index
    %c0_104 = arith.constant 0 : index
    %c0_105 = arith.constant 0 : index
    %288 = vector.load %arg5[%c1_103, %c0_104, %c0_105] : memref<16x20x50xf32, #tpu.memory_space<vmem>>, vector<1x20x50xf32>
    %289 = vector.shape_cast %288 : vector<1x20x50xf32> to vector<20x50xf32>
    %cst_106 = arith.constant dense<0.000000e+00> : vector<2x50xf32>
    %290 = tpu.matmul %287, %289, %cst_106 {dimension_numbers = #tpu.dot_dimension_numbers<[1], [0], [0], [1], [0, 0, 1, 1], [], []>} : vector<2x20xf32>, vector<20x50xf32>, vector<2x50xf32> -> vector<2x50xf32>
    %291 = arith.addf %280, %290 : vector<2x50xf32>
    %292 = vector.extract_strided_slice %285 {offsets = [0, 1, 0], sizes = [2, 1, 20], strides = [1, 1, 1]} : vector<2x4x20xf32> to vector<2x1x20xf32>
    %293 = vector.shape_cast %292 : vector<2x1x20xf32> to vector<2x20xf32>
    %c5_107 = arith.constant 5 : index
    %c0_108 = arith.constant 0 : index
    %c0_109 = arith.constant 0 : index
    %294 = vector.load %arg5[%c5_107, %c0_108, %c0_109] : memref<16x20x50xf32, #tpu.memory_space<vmem>>, vector<1x20x50xf32>
    %295 = vector.shape_cast %294 : vector<1x20x50xf32> to vector<20x50xf32>
    %cst_110 = arith.constant dense<0.000000e+00> : vector<2x50xf32>
    %296 = tpu.matmul %293, %295, %cst_110 {dimension_numbers = #tpu.dot_dimension_numbers<[1], [0], [0], [1], [0, 0, 1, 1], [], []>} : vector<2x20xf32>, vector<20x50xf32>, vector<2x50xf32> -> vector<2x50xf32>
    %297 = arith.addf %291, %296 : vector<2x50xf32>
    %298 = vector.extract_strided_slice %285 {offsets = [0, 2, 0], sizes = [2, 1, 20], strides = [1, 1, 1]} : vector<2x4x20xf32> to vector<2x1x20xf32>
    %299 = vector.shape_cast %298 : vector<2x1x20xf32> to vector<2x20xf32>
    %c9_111 = arith.constant 9 : index
    %c0_112 = arith.constant 0 : index
    %c0_113 = arith.constant 0 : index
    %300 = vector.load %arg5[%c9_111, %c0_112, %c0_113] : memref<16x20x50xf32, #tpu.memory_space<vmem>>, vector<1x20x50xf32>
    %301 = vector.shape_cast %300 : vector<1x20x50xf32> to vector<20x50xf32>
    %cst_114 = arith.constant dense<0.000000e+00> : vector<2x50xf32>
    %302 = tpu.matmul %299, %301, %cst_114 {dimension_numbers = #tpu.dot_dimension_numbers<[1], [0], [0], [1], [0, 0, 1, 1], [], []>} : vector<2x20xf32>, vector<20x50xf32>, vector<2x50xf32> -> vector<2x50xf32>
    %303 = arith.addf %297, %302 : vector<2x50xf32>
    %304 = vector.extract_strided_slice %285 {offsets = [0, 3, 0], sizes = [2, 1, 20], strides = [1, 1, 1]} : vector<2x4x20xf32> to vector<2x1x20xf32>
    %305 = vector.shape_cast %304 : vector<2x1x20xf32> to vector<2x20xf32>
    %c13_115 = arith.constant 13 : index
    %c0_116 = arith.constant 0 : index
    %c0_117 = arith.constant 0 : index
    %306 = vector.load %arg5[%c13_115, %c0_116, %c0_117] : memref<16x20x50xf32, #tpu.memory_space<vmem>>, vector<1x20x50xf32>
    %307 = vector.shape_cast %306 : vector<1x20x50xf32> to vector<20x50xf32>
    %cst_118 = arith.constant dense<0.000000e+00> : vector<2x50xf32>
    %308 = tpu.matmul %305, %307, %cst_118 {dimension_numbers = #tpu.dot_dimension_numbers<[1], [0], [0], [1], [0, 0, 1, 1], [], []>} : vector<2x20xf32>, vector<20x50xf32>, vector<2x50xf32> -> vector<2x50xf32>
    %309 = arith.addf %303, %308 : vector<2x50xf32>
    %310 = vector.extract_strided_slice %250 {offsets = [0, 0, 4, 0], sizes = [2, 4, 1, 20], strides = [1, 1, 1, 1]} : vector<2x4x8x20xf32> to vector<2x4x1x20xf32>
    %311 = vector.shape_cast %310 : vector<2x4x1x20xf32> to vector<2x4x20xf32>
    %312 = vector.extract_strided_slice %250 {offsets = [0, 0, 5, 0], sizes = [2, 4, 1, 20], strides = [1, 1, 1, 1]} : vector<2x4x8x20xf32> to vector<2x4x1x20xf32>
    %313 = vector.shape_cast %312 : vector<2x4x1x20xf32> to vector<2x4x20xf32>
    %314 = arith.maximumf %311, %313 : vector<2x4x20xf32>
    %315 = vector.extract_strided_slice %314 {offsets = [0, 0, 0], sizes = [2, 1, 20], strides = [1, 1, 1]} : vector<2x4x20xf32> to vector<2x1x20xf32>
    %316 = vector.shape_cast %315 : vector<2x1x20xf32> to vector<2x20xf32>
    %c2_119 = arith.constant 2 : index
    %c0_120 = arith.constant 0 : index
    %c0_121 = arith.constant 0 : index
    %317 = vector.load %arg5[%c2_119, %c0_120, %c0_121] : memref<16x20x50xf32, #tpu.memory_space<vmem>>, vector<1x20x50xf32>
    %318 = vector.shape_cast %317 : vector<1x20x50xf32> to vector<20x50xf32>
    %cst_122 = arith.constant dense<0.000000e+00> : vector<2x50xf32>
    %319 = tpu.matmul %316, %318, %cst_122 {dimension_numbers = #tpu.dot_dimension_numbers<[1], [0], [0], [1], [0, 0, 1, 1], [], []>} : vector<2x20xf32>, vector<20x50xf32>, vector<2x50xf32> -> vector<2x50xf32>
    %320 = arith.addf %309, %319 : vector<2x50xf32>
    %321 = vector.extract_strided_slice %314 {offsets = [0, 1, 0], sizes = [2, 1, 20], strides = [1, 1, 1]} : vector<2x4x20xf32> to vector<2x1x20xf32>
    %322 = vector.shape_cast %321 : vector<2x1x20xf32> to vector<2x20xf32>
    %c6_123 = arith.constant 6 : index
    %c0_124 = arith.constant 0 : index
    %c0_125 = arith.constant 0 : index
    %323 = vector.load %arg5[%c6_123, %c0_124, %c0_125] : memref<16x20x50xf32, #tpu.memory_space<vmem>>, vector<1x20x50xf32>
    %324 = vector.shape_cast %323 : vector<1x20x50xf32> to vector<20x50xf32>
    %cst_126 = arith.constant dense<0.000000e+00> : vector<2x50xf32>
    %325 = tpu.matmul %322, %324, %cst_126 {dimension_numbers = #tpu.dot_dimension_numbers<[1], [0], [0], [1], [0, 0, 1, 1], [], []>} : vector<2x20xf32>, vector<20x50xf32>, vector<2x50xf32> -> vector<2x50xf32>
    %326 = arith.addf %320, %325 : vector<2x50xf32>
    %327 = vector.extract_strided_slice %314 {offsets = [0, 2, 0], sizes = [2, 1, 20], strides = [1, 1, 1]} : vector<2x4x20xf32> to vector<2x1x20xf32>
    %328 = vector.shape_cast %327 : vector<2x1x20xf32> to vector<2x20xf32>
    %c10_127 = arith.constant 10 : index
    %c0_128 = arith.constant 0 : index
    %c0_129 = arith.constant 0 : index
    %329 = vector.load %arg5[%c10_127, %c0_128, %c0_129] : memref<16x20x50xf32, #tpu.memory_space<vmem>>, vector<1x20x50xf32>
    %330 = vector.shape_cast %329 : vector<1x20x50xf32> to vector<20x50xf32>
    %cst_130 = arith.constant dense<0.000000e+00> : vector<2x50xf32>
    %331 = tpu.matmul %328, %330, %cst_130 {dimension_numbers = #tpu.dot_dimension_numbers<[1], [0], [0], [1], [0, 0, 1, 1], [], []>} : vector<2x20xf32>, vector<20x50xf32>, vector<2x50xf32> -> vector<2x50xf32>
    %332 = arith.addf %326, %331 : vector<2x50xf32>
    %333 = vector.extract_strided_slice %314 {offsets = [0, 3, 0], sizes = [2, 1, 20], strides = [1, 1, 1]} : vector<2x4x20xf32> to vector<2x1x20xf32>
    %334 = vector.shape_cast %333 : vector<2x1x20xf32> to vector<2x20xf32>
    %c14_131 = arith.constant 14 : index
    %c0_132 = arith.constant 0 : index
    %c0_133 = arith.constant 0 : index
    %335 = vector.load %arg5[%c14_131, %c0_132, %c0_133] : memref<16x20x50xf32, #tpu.memory_space<vmem>>, vector<1x20x50xf32>
    %336 = vector.shape_cast %335 : vector<1x20x50xf32> to vector<20x50xf32>
    %cst_134 = arith.constant dense<0.000000e+00> : vector<2x50xf32>
    %337 = tpu.matmul %334, %336, %cst_134 {dimension_numbers = #tpu.dot_dimension_numbers<[1], [0], [0], [1], [0, 0, 1, 1], [], []>} : vector<2x20xf32>, vector<20x50xf32>, vector<2x50xf32> -> vector<2x50xf32>
    %338 = arith.addf %332, %337 : vector<2x50xf32>
    %339 = vector.extract_strided_slice %250 {offsets = [0, 0, 6, 0], sizes = [2, 4, 1, 20], strides = [1, 1, 1, 1]} : vector<2x4x8x20xf32> to vector<2x4x1x20xf32>
    %340 = vector.shape_cast %339 : vector<2x4x1x20xf32> to vector<2x4x20xf32>
    %341 = vector.extract_strided_slice %250 {offsets = [0, 0, 7, 0], sizes = [2, 4, 1, 20], strides = [1, 1, 1, 1]} : vector<2x4x8x20xf32> to vector<2x4x1x20xf32>
    %342 = vector.shape_cast %341 : vector<2x4x1x20xf32> to vector<2x4x20xf32>
    %343 = arith.maximumf %340, %342 : vector<2x4x20xf32>
    %344 = vector.extract_strided_slice %343 {offsets = [0, 0, 0], sizes = [2, 1, 20], strides = [1, 1, 1]} : vector<2x4x20xf32> to vector<2x1x20xf32>
    %345 = vector.shape_cast %344 : vector<2x1x20xf32> to vector<2x20xf32>
    %c3_135 = arith.constant 3 : index
    %c0_136 = arith.constant 0 : index
    %c0_137 = arith.constant 0 : index
    %346 = vector.load %arg5[%c3_135, %c0_136, %c0_137] : memref<16x20x50xf32, #tpu.memory_space<vmem>>, vector<1x20x50xf32>
    %347 = vector.shape_cast %346 : vector<1x20x50xf32> to vector<20x50xf32>
    %cst_138 = arith.constant dense<0.000000e+00> : vector<2x50xf32>
    %348 = tpu.matmul %345, %347, %cst_138 {dimension_numbers = #tpu.dot_dimension_numbers<[1], [0], [0], [1], [0, 0, 1, 1], [], []>} : vector<2x20xf32>, vector<20x50xf32>, vector<2x50xf32> -> vector<2x50xf32>
    %349 = arith.addf %338, %348 : vector<2x50xf32>
    %350 = vector.extract_strided_slice %343 {offsets = [0, 1, 0], sizes = [2, 1, 20], strides = [1, 1, 1]} : vector<2x4x20xf32> to vector<2x1x20xf32>
    %351 = vector.shape_cast %350 : vector<2x1x20xf32> to vector<2x20xf32>
    %c7_139 = arith.constant 7 : index
    %c0_140 = arith.constant 0 : index
    %c0_141 = arith.constant 0 : index
    %352 = vector.load %arg5[%c7_139, %c0_140, %c0_141] : memref<16x20x50xf32, #tpu.memory_space<vmem>>, vector<1x20x50xf32>
    %353 = vector.shape_cast %352 : vector<1x20x50xf32> to vector<20x50xf32>
    %cst_142 = arith.constant dense<0.000000e+00> : vector<2x50xf32>
    %354 = tpu.matmul %351, %353, %cst_142 {dimension_numbers = #tpu.dot_dimension_numbers<[1], [0], [0], [1], [0, 0, 1, 1], [], []>} : vector<2x20xf32>, vector<20x50xf32>, vector<2x50xf32> -> vector<2x50xf32>
    %355 = arith.addf %349, %354 : vector<2x50xf32>
    %356 = vector.extract_strided_slice %343 {offsets = [0, 2, 0], sizes = [2, 1, 20], strides = [1, 1, 1]} : vector<2x4x20xf32> to vector<2x1x20xf32>
    %357 = vector.shape_cast %356 : vector<2x1x20xf32> to vector<2x20xf32>
    %c11_143 = arith.constant 11 : index
    %c0_144 = arith.constant 0 : index
    %c0_145 = arith.constant 0 : index
    %358 = vector.load %arg5[%c11_143, %c0_144, %c0_145] : memref<16x20x50xf32, #tpu.memory_space<vmem>>, vector<1x20x50xf32>
    %359 = vector.shape_cast %358 : vector<1x20x50xf32> to vector<20x50xf32>
    %cst_146 = arith.constant dense<0.000000e+00> : vector<2x50xf32>
    %360 = tpu.matmul %357, %359, %cst_146 {dimension_numbers = #tpu.dot_dimension_numbers<[1], [0], [0], [1], [0, 0, 1, 1], [], []>} : vector<2x20xf32>, vector<20x50xf32>, vector<2x50xf32> -> vector<2x50xf32>
    %361 = arith.addf %355, %360 : vector<2x50xf32>
    %362 = vector.extract_strided_slice %343 {offsets = [0, 3, 0], sizes = [2, 1, 20], strides = [1, 1, 1]} : vector<2x4x20xf32> to vector<2x1x20xf32>
    %363 = vector.shape_cast %362 : vector<2x1x20xf32> to vector<2x20xf32>
    %c15_147 = arith.constant 15 : index
    %c0_148 = arith.constant 0 : index
    %c0_149 = arith.constant 0 : index
    %364 = vector.load %arg5[%c15_147, %c0_148, %c0_149] : memref<16x20x50xf32, #tpu.memory_space<vmem>>, vector<1x20x50xf32>
    %365 = vector.shape_cast %364 : vector<1x20x50xf32> to vector<20x50xf32>
    %cst_150 = arith.constant dense<0.000000e+00> : vector<2x50xf32>
    %366 = tpu.matmul %363, %365, %cst_150 {dimension_numbers = #tpu.dot_dimension_numbers<[1], [0], [0], [1], [0, 0, 1, 1], [], []>} : vector<2x20xf32>, vector<20x50xf32>, vector<2x50xf32> -> vector<2x50xf32>
    %367 = arith.addf %361, %366 : vector<2x50xf32>
    %c0_151 = arith.constant 0 : index
    %c0_152 = arith.constant 0 : index
    %368 = vector.load %arg6[%c0_151, %c0_152] : memref<1x50xf32, #tpu.memory_space<vmem>>, vector<1x50xf32>
    %369 = vector.broadcast %368 : vector<1x50xf32> to vector<2x50xf32>
    %370 = arith.addf %367, %369 : vector<2x50xf32>
    %cst_153 = arith.constant 0.000000e+00 : f32
    %371 = vector.broadcast %cst_153 : f32 to vector<2x50xf32>
    %372 = arith.maximumf %370, %371 : vector<2x50xf32>
    %c0_154 = arith.constant 0 : index
    %c0_155 = arith.constant 0 : index
    %373 = vector.load %arg7[%c0_154, %c0_155] : memref<50x10xf32, #tpu.memory_space<vmem>>, vector<50x10xf32>
    %cst_156 = arith.constant dense<0.000000e+00> : vector<2x10xf32>
    %374 = tpu.matmul %372, %373, %cst_156 {dimension_numbers = #tpu.dot_dimension_numbers<[1], [0], [0], [1], [0, 0, 1, 1], [], []>} : vector<2x50xf32>, vector<50x10xf32>, vector<2x10xf32> -> vector<2x10xf32>
    %c0_157 = arith.constant 0 : index
    %c0_158 = arith.constant 0 : index
    %375 = vector.load %arg8[%c0_157, %c0_158] : memref<1x10xf32, #tpu.memory_space<vmem>>, vector<1x10xf32>
    %376 = vector.broadcast %375 : vector<1x10xf32> to vector<2x10xf32>
    %377 = arith.addf %374, %376 : vector<2x10xf32>
    %c0_159 = arith.constant 0 : index
    %c0_160 = arith.constant 0 : index
    %378 = vector.load %arg9[%c0_159, %c0_160] : memref<2x10xf32, #tpu.memory_space<vmem>>, vector<2x10xf32>
    tpu.vector_store %arg9[%c0_159, %c0_160], %377 {strides = array<i32>} : memref<2x10xf32, #tpu.memory_space<vmem>>, vector<2x10xf32>,
    return
  }
}

</mosaic_0001>

<llo_original>
// kernel: net_forward.1
$region0: #{net_forward.1}
  #allocation0 [shape = 'u32[]', space=smem, size = 0x4, offset = 0x4, fixed_abs, tag = 'smem constant byte address 0x4 - core index']
  #allocation1 [shape = 'u32[72,128]{1,0:T(1,128)}', space=vmem, size = 0x9000, scoped, tag = 'internal scratch']
  %s0 = inlined_call_operand.vmem [shape: f32[1152,25], index: 0, kind: input, shape index: {}]
  %s1 = inlined_call_operand.vmem [shape: f32[25,10], index: 1, kind: input, shape index: {}]
  %s2 = inlined_call_operand.vmem [shape: f32[1,10], index: 2, kind: input, shape index: {}]
  %s3 = inlined_call_operand.vmem [shape: f32[25,10,20], index: 3, kind: input, shape index: {}]
  %s4 = inlined_call_operand.vmem [shape: f32[1,20], index: 4, kind: input, shape index: {}]
  %s5 = inlined_call_operand.vmem [shape: f32[16,20,50], index: 5, kind: input, shape index: {}]
  %s6 = inlined_call_operand.vmem [shape: f32[1,50], index: 6, kind: input, shape index: {}]
  %s7 = inlined_call_operand.vmem [shape: f32[50,10], index: 7, kind: input, shape index: {}]
  %s8 = inlined_call_operand.vmem [shape: f32[1,10], index: 8, kind: input, shape index: {}]
  %s9 = inlined_call_operand.hbm [shape: f32[2,10], index: 9, kind: output, shape index: {}]
  %s10 = sld [smem:[#allocation0]]
  $region46: #{net_forward.1} parent=0
    _
  %s12 = ssub.s32 1, %s10
  %s13 = scalar_select 0, %s12, %s10
  $region1: #{net_forward.1} parent=0
    #allocation2 [shape = 'u8[1024]{0}', space=vmem, size = 0x400, scoped, tag = 'output window, operand 0, single buffered']
    #allocation3 [shape = 's32[1]{0}', space=sflag, size = 0x4, scoped, tag = 'scoped memory for net_forward.1']
    %14 = vsyncpa [#allocation3], 0
    // Predicated region
    $region2: #{net_forward.1} parent=1 // pred_check
      _
    $region3: #{net_forward.1} parent=1 // pred_check_branch
      %16 = sbr.rel (0) target = $region5
    $region4: #{net_forward.1} parent=1 // pred_region
      _
    $region5: #{net_forward.1} parent=1 // pred_fallthru
      _
    // Predicated region
    $region6: #{net_forward.1} parent=1 // pred_check
      _
    $region7: #{net_forward.1} parent=1 // pred_check_branch
      %18 = sbr.rel (0) target = $region9
    $region8: #{net_forward.1} parent=1 // pred_region
      _
    $region9: #{net_forward.1} parent=1 // pred_fallthru
      _
    // Predicated region
    $region10: #{net_forward.1} parent=1 // pred_check
      _
    $region11: #{net_forward.1} parent=1 // pred_check_branch
      %20 = sbr.rel (0) target = $region13
    $region12: #{net_forward.1} parent=1 // pred_region
      _
    $region13: #{net_forward.1} parent=1 // pred_fallthru
      _
    // Predicated region
    $region14: #{net_forward.1} parent=1 // pred_check
      _
    $region15: #{net_forward.1} parent=1 // pred_check_branch
      %22 = sbr.rel (0) target = $region17
    $region16: #{net_forward.1} parent=1 // pred_region
      _
    $region17: #{net_forward.1} parent=1 // pred_fallthru
      _
    // Predicated region
    $region18: #{net_forward.1} parent=1 // pred_check
      _
    $region19: #{net_forward.1} parent=1 // pred_check_branch
      %24 = sbr.rel (0) target = $region21
    $region20: #{net_forward.1} parent=1 // pred_region
      _
    $region21: #{net_forward.1} parent=1 // pred_fallthru
      _
    // Predicated region
    $region22: #{net_forward.1} parent=1 // pred_check
      _
    $region23: #{net_forward.1} parent=1 // pred_check_branch
      %26 = sbr.rel (0) target = $region25
    $region24: #{net_forward.1} parent=1 // pred_region
      _
    $region25: #{net_forward.1} parent=1 // pred_fallthru
      _
    // Predicated region
    $region26: #{net_forward.1} parent=1 // pred_check
      _
    $region27: #{net_forward.1} parent=1 // pred_check_branch
      %28 = sbr.rel (0) target = $region29
    $region28: #{net_forward.1} parent=1 // pred_region
      _
    $region29: #{net_forward.1} parent=1 // pred_fallthru
      _
    // Predicated region
    $region30: #{net_forward.1} parent=1 // pred_check
      _
    $region31: #{net_forward.1} parent=1 // pred_check_branch
      %30 = sbr.rel (0) target = $region33
    $region32: #{net_forward.1} parent=1 // pred_region
      _
    $region33: #{net_forward.1} parent=1 // pred_fallthru
      _
    // Predicated region
    $region34: #{net_forward.1} parent=1 // pred_check
      _
    $region35: #{net_forward.1} parent=1 // pred_check_branch
      %32 = sbr.rel (0) target = $region37
    $region36: #{net_forward.1} parent=1 // pred_region
      _
    $region37: #{net_forward.1} parent=1 // pred_fallthru
      _
    %v33 = vld [vmem:[%s0] sm:$0xff]
    %v34 = vld [vmem:[%s0 + $0x8] sm:$0xff]
    %v35 = vld [vmem:[%s0 + $0x10] sm:$0xff]
    %v36 = vld [vmem:[%s0 + $0x18] sm:$0xff]
    %v37 = vld [vmem:[%s0 + $0x20] sm:$0xff]
    %v38 = vld [vmem:[%s0 + $0x28] sm:$0xff]
    %v39 = vld [vmem:[%s0 + $0x30] sm:$0xff]
    %v40 = vld [vmem:[%s0 + $0x38] sm:$0xff]
    %v41 = vld [vmem:[%s0 + $0x40] sm:$0xff]
    %v42 = vld [vmem:[%s0 + $0x48] sm:$0xff]
    %v43 = vld [vmem:[%s0 + $0x50] sm:$0xff]
    %v44 = vld [vmem:[%s0 + $0x58] sm:$0xff]
    %v45 = vld [vmem:[%s0 + $0x60] sm:$0xff]
    %v46 = vld [vmem:[%s0 + $0x68] sm:$0xff]
    %v47 = vld [vmem:[%s0 + $0x70] sm:$0xff]
    %v48 = vld [vmem:[%s0 + $0x78] sm:$0xff]
    %v49 = vld [vmem:[%s0 + $0x80] sm:$0xff]
    %v50 = vld [vmem:[%s0 + $0x88] sm:$0xff]
    %v51 = vld [vmem:[%s0 + $0x90] sm:$0xff]
    %v52 = vld [vmem:[%s0 + $0x98] sm:$0xff]
    %v53 = vld [vmem:[%s0 + $0xa0] sm:$0xff]
    %v54 = vld [vmem:[%s0 + $0xa8] sm:$0xff]
    %v55 = vld [vmem:[%s0 + $0xb0] sm:$0xff]
    %v56 = vld [vmem:[%s0 + $0xb8] sm:$0xff]
    %v57 = vld [vmem:[%s0 + $0xc0] sm:$0xff]
    %v58 = vld [vmem:[%s0 + $0xc8] sm:$0xff]
    %v59 = vld [vmem:[%s0 + $0xd0] sm:$0xff]
    %v60 = vld [vmem:[%s0 + $0xd8] sm:$0xff]
    %v61 = vld [vmem:[%s0 + $0xe0] sm:$0xff]
    %v62 = vld [vmem:[%s0 + $0xe8] sm:$0xff]
    %v63 = vld [vmem:[%s0 + $0xf0] sm:$0xff]
    %v64 = vld [vmem:[%s0 + $0xf8] sm:$0xff]
    %v65 = vld [vmem:[%s0 + $0x100] sm:$0xff]
    %v66 = vld [vmem:[%s0 + $0x108] sm:$0xff]
    %v67 = vld [vmem:[%s0 + $0x110] sm:$0xff]
    %v68 = vld [vmem:[%s0 + $0x118] sm:$0xff]
    %v69 = vld [vmem:[%s0 + $0x120] sm:$0xff]
    %v70 = vld [vmem:[%s0 + $0x128] sm:$0xff]
    %v71 = vld [vmem:[%s0 + $0x130] sm:$0xff]
    %v72 = vld [vmem:[%s0 + $0x138] sm:$0xff]
    %v73 = vld [vmem:[%s0 + $0x140] sm:$0xff]
    %v74 = vld [vmem:[%s0 + $0x148] sm:$0xff]
    %v75 = vld [vmem:[%s0 + $0x150] sm:$0xff]
    %v76 = vld [vmem:[%s0 + $0x158] sm:$0xff]
    %v77 = vld [vmem:[%s0 + $0x160] sm:$0xff]
    %v78 = vld [vmem:[%s0 + $0x168] sm:$0xff]
    %v79 = vld [vmem:[%s0 + $0x170] sm:$0xff]
    %v80 = vld [vmem:[%s0 + $0x178] sm:$0xff]
    %v81 = vld [vmem:[%s0 + $0x180] sm:$0xff]
    %v82 = vld [vmem:[%s0 + $0x188] sm:$0xff]
    %v83 = vld [vmem:[%s0 + $0x190] sm:$0xff]
    %v84 = vld [vmem:[%s0 + $0x198] sm:$0xff]
    %v85 = vld [vmem:[%s0 + $0x1a0] sm:$0xff]
    %v86 = vld [vmem:[%s0 + $0x1a8] sm:$0xff]
    %v87 = vld [vmem:[%s0 + $0x1b0] sm:$0xff]
    %v88 = vld [vmem:[%s0 + $0x1b8] sm:$0xff]
    %v89 = vld [vmem:[%s0 + $0x1c0] sm:$0xff]
    %v90 = vld [vmem:[%s0 + $0x1c8] sm:$0xff]
    %v91 = vld [vmem:[%s0 + $0x1d0] sm:$0xff]
    %v92 = vld [vmem:[%s0 + $0x1d8] sm:$0xff]
    %v93 = vld [vmem:[%s0 + $0x1e0] sm:$0xff]
    %v94 = vld [vmem:[%s0 + $0x1e8] sm:$0xff]
    %v95 = vld [vmem:[%s0 + $0x1f0] sm:$0xff]
    %v96 = vld [vmem:[%s0 + $0x1f8] sm:$0xff]
    %v97 = vld [vmem:[%s0 + $0x200] sm:$0xff]
    %v98 = vld [vmem:[%s0 + $0x208] sm:$0xff]
    %v99 = vld [vmem:[%s0 + $0x210] sm:$0xff]
    %v100 = vld [vmem:[%s0 + $0x218] sm:$0xff]
    %v101 = vld [vmem:[%s0 + $0x220] sm:$0xff]
    %v102 = vld [vmem:[%s0 + $0x228] sm:$0xff]
    %v103 = vld [vmem:[%s0 + $0x230] sm:$0xff]
    %v104 = vld [vmem:[%s0 + $0x238] sm:$0xff]
    %v105 = vld [vmem:[%s0 + $0x240] sm:$0xff]
    %v106 = vld [vmem:[%s0 + $0x248] sm:$0xff]
    %v107 = vld [vmem:[%s0 + $0x250] sm:$0xff]
    %v108 = vld [vmem:[%s0 + $0x258] sm:$0xff]
    %v109 = vld [vmem:[%s0 + $0x260] sm:$0xff]
    %v110 = vld [vmem:[%s0 + $0x268] sm:$0xff]
    %v111 = vld [vmem:[%s0 + $0x270] sm:$0xff]
    %v112 = vld [vmem:[%s0 + $0x278] sm:$0xff]
    %v113 = vld [vmem:[%s0 + $0x280] sm:$0xff]
    %v114 = vld [vmem:[%s0 + $0x288] sm:$0xff]
    %v115 = vld [vmem:[%s0 + $0x290] sm:$0xff]
    %v116 = vld [vmem:[%s0 + $0x298] sm:$0xff]
    %v117 = vld [vmem:[%s0 + $0x2a0] sm:$0xff]
    %v118 = vld [vmem:[%s0 + $0x2a8] sm:$0xff]
    %v119 = vld [vmem:[%s0 + $0x2b0] sm:$0xff]
    %v120 = vld [vmem:[%s0 + $0x2b8] sm:$0xff]
    %v121 = vld [vmem:[%s0 + $0x2c0] sm:$0xff]
    %v122 = vld [vmem:[%s0 + $0x2c8] sm:$0xff]
    %v123 = vld [vmem:[%s0 + $0x2d0] sm:$0xff]
    %v124 = vld [vmem:[%s0 + $0x2d8] sm:$0xff]
    %v125 = vld [vmem:[%s0 + $0x2e0] sm:$0xff]
    %v126 = vld [vmem:[%s0 + $0x2e8] sm:$0xff]
    %v127 = vld [vmem:[%s0 + $0x2f0] sm:$0xff]
    %v128 = vld [vmem:[%s0 + $0x2f8] sm:$0xff]
    %v129 = vld [vmem:[%s0 + $0x300] sm:$0xff]
    %v130 = vld [vmem:[%s0 + $0x308] sm:$0xff]
    %v131 = vld [vmem:[%s0 + $0x310] sm:$0xff]
    %v132 = vld [vmem:[%s0 + $0x318] sm:$0xff]
    %v133 = vld [vmem:[%s0 + $0x320] sm:$0xff]
    %v134 = vld [vmem:[%s0 + $0x328] sm:$0xff]
    %v135 = vld [vmem:[%s0 + $0x330] sm:$0xff]
    %v136 = vld [vmem:[%s0 + $0x338] sm:$0xff]
    %v137 = vld [vmem:[%s0 + $0x340] sm:$0xff]
    %v138 = vld [vmem:[%s0 + $0x348] sm:$0xff]
    %v139 = vld [vmem:[%s0 + $0x350] sm:$0xff]
    %v140 = vld [vmem:[%s0 + $0x358] sm:$0xff]
    %v141 = vld [vmem:[%s0 + $0x360] sm:$0xff]
    %v142 = vld [vmem:[%s0 + $0x368] sm:$0xff]
    %v143 = vld [vmem:[%s0 + $0x370] sm:$0xff]
    %v144 = vld [vmem:[%s0 + $0x378] sm:$0xff]
    %v145 = vld [vmem:[%s0 + $0x380] sm:$0xff]
    %v146 = vld [vmem:[%s0 + $0x388] sm:$0xff]
    %v147 = vld [vmem:[%s0 + $0x390] sm:$0xff]
    %v148 = vld [vmem:[%s0 + $0x398] sm:$0xff]
    %v149 = vld [vmem:[%s0 + $0x3a0] sm:$0xff]
    %v150 = vld [vmem:[%s0 + $0x3a8] sm:$0xff]
    %v151 = vld [vmem:[%s0 + $0x3b0] sm:$0xff]
    %v152 = vld [vmem:[%s0 + $0x3b8] sm:$0xff]
    %v153 = vld [vmem:[%s0 + $0x3c0] sm:$0xff]
    %v154 = vld [vmem:[%s0 + $0x3c8] sm:$0xff]
    %v155 = vld [vmem:[%s0 + $0x3d0] sm:$0xff]
    %v156 = vld [vmem:[%s0 + $0x3d8] sm:$0xff]
    %v157 = vld [vmem:[%s0 + $0x3e0] sm:$0xff]
    %v158 = vld [vmem:[%s0 + $0x3e8] sm:$0xff]
    %v159 = vld [vmem:[%s0 + $0x3f0] sm:$0xff]
    %v160 = vld [vmem:[%s0 + $0x3f8] sm:$0xff]
    %v161 = vld [vmem:[%s0 + $0x400] sm:$0xff]
    %v162 = vld [vmem:[%s0 + $0x408] sm:$0xff]
    %v163 = vld [vmem:[%s0 + $0x410] sm:$0xff]
    %v164 = vld [vmem:[%s0 + $0x418] sm:$0xff]
    %v165 = vld [vmem:[%s0 + $0x420] sm:$0xff]
    %v166 = vld [vmem:[%s0 + $0x428] sm:$0xff]
    %v167 = vld [vmem:[%s0 + $0x430] sm:$0xff]
    %v168 = vld [vmem:[%s0 + $0x438] sm:$0xff]
    %v169 = vld [vmem:[%s0 + $0x440] sm:$0xff]
    %v170 = vld [vmem:[%s0 + $0x448] sm:$0xff]
    %v171 = vld [vmem:[%s0 + $0x450] sm:$0xff]
    %v172 = vld [vmem:[%s0 + $0x458] sm:$0xff]
    %v173 = vld [vmem:[%s0 + $0x460] sm:$0xff]
    %v174 = vld [vmem:[%s0 + $0x468] sm:$0xff]
    %v175 = vld [vmem:[%s0 + $0x470] sm:$0xff]
    %v176 = vld [vmem:[%s0 + $0x478] sm:$0xff]
    %v177 = vld [vmem:[%s1] sm:$0xff]
    %v178 = vld [vmem:[%s1 + $0x8] sm:$0xff]
    %v179 = vld [vmem:[%s1 + $0x10] sm:$0xff]
    %v180 = vld [vmem:[%s1 + $0x18] sm:$0x1]
    %v181 = vld [vmem:[%s2] sm:$0x1]
    %v183 = vperm.slane %v181, 0
    %vm185 = vcmask 203776
    %v187 = vsel %vm185, %v33, 0
    %v190 = vsel %vm185, %v34, 0
    %v193 = vsel %vm185, %v35, 0
    %v196 = vsel %vm185, %v36, 0
    %v199 = vsel %vm185, %v37, 0
    %v202 = vsel %vm185, %v38, 0
    %v205 = vsel %vm185, %v39, 0
    %v208 = vsel %vm185, %v40, 0
    %v211 = vsel %vm185, %v41, 0
    %v214 = vsel %vm185, %v42, 0
    %v217 = vsel %vm185, %v43, 0
    %v220 = vsel %vm185, %v44, 0
    %v223 = vsel %vm185, %v45, 0
    %v226 = vsel %vm185, %v46, 0
    %v229 = vsel %vm185, %v47, 0
    %v232 = vsel %vm185, %v48, 0
    %v235 = vsel %vm185, %v49, 0
    %v238 = vsel %vm185, %v50, 0
    %v241 = vsel %vm185, %v51, 0
    %v244 = vsel %vm185, %v52, 0
    %v247 = vsel %vm185, %v53, 0
    %v250 = vsel %vm185, %v54, 0
    %v253 = vsel %vm185, %v55, 0
    %v256 = vsel %vm185, %v56, 0
    %v259 = vsel %vm185, %v57, 0
    %v262 = vsel %vm185, %v58, 0
    %v265 = vsel %vm185, %v59, 0
    %v268 = vsel %vm185, %v60, 0
    %v271 = vsel %vm185, %v61, 0
    %v274 = vsel %vm185, %v62, 0
    %v277 = vsel %vm185, %v63, 0
    %v280 = vsel %vm185, %v64, 0
    %v283 = vsel %vm185, %v65, 0
    %v286 = vsel %vm185, %v66, 0
    %v289 = vsel %vm185, %v67, 0
    %v292 = vsel %vm185, %v68, 0
    %v295 = vsel %vm185, %v69, 0
    %v298 = vsel %vm185, %v70, 0
    %v301 = vsel %vm185, %v71, 0
    %v304 = vsel %vm185, %v72, 0
    %v307 = vsel %vm185, %v73, 0
    %v310 = vsel %vm185, %v74, 0
    %v313 = vsel %vm185, %v75, 0
    %v316 = vsel %vm185, %v76, 0
    %v319 = vsel %vm185, %v77, 0
    %v322 = vsel %vm185, %v78, 0
    %v325 = vsel %vm185, %v79, 0
    %v328 = vsel %vm185, %v80, 0
    %v331 = vsel %vm185, %v81, 0
    %v334 = vsel %vm185, %v82, 0
    %v337 = vsel %vm185, %v83, 0
    %v340 = vsel %vm185, %v84, 0
    %v343 = vsel %vm185, %v85, 0
    %v346 = vsel %vm185, %v86, 0
    %v349 = vsel %vm185, %v87, 0
    %v352 = vsel %vm185, %v88, 0
    %v355 = vsel %vm185, %v89, 0
    %v358 = vsel %vm185, %v90, 0
    %v361 = vsel %vm185, %v91, 0
    %v364 = vsel %vm185, %v92, 0
    %v367 = vsel %vm185, %v93, 0
    %v370 = vsel %vm185, %v94, 0
    %v373 = vsel %vm185, %v95, 0
    %v376 = vsel %vm185, %v96, 0
    %v379 = vsel %vm185, %v97, 0
    %v382 = vsel %vm185, %v98, 0
    %v385 = vsel %vm185, %v99, 0
    %v388 = vsel %vm185, %v100, 0
    %v391 = vsel %vm185, %v101, 0
    %v394 = vsel %vm185, %v102, 0
    %v397 = vsel %vm185, %v103, 0
    %v400 = vsel %vm185, %v104, 0
    %v403 = vsel %vm185, %v105, 0
    %v406 = vsel %vm185, %v106, 0
    %v409 = vsel %vm185, %v107, 0
    %v412 = vsel %vm185, %v108, 0
    %v415 = vsel %vm185, %v109, 0
    %v418 = vsel %vm185, %v110, 0
    %v421 = vsel %vm185, %v111, 0
    %v424 = vsel %vm185, %v112, 0
    %v427 = vsel %vm185, %v113, 0
    %v430 = vsel %vm185, %v114, 0
    %v433 = vsel %vm185, %v115, 0
    %v436 = vsel %vm185, %v116, 0
    %v439 = vsel %vm185, %v117, 0
    %v442 = vsel %vm185, %v118, 0
    %v445 = vsel %vm185, %v119, 0
    %v448 = vsel %vm185, %v120, 0
    %v451 = vsel %vm185, %v121, 0
    %v454 = vsel %vm185, %v122, 0
    %v457 = vsel %vm185, %v123, 0
    %v460 = vsel %vm185, %v124, 0
    %v463 = vsel %vm185, %v125, 0
    %v466 = vsel %vm185, %v126, 0
    %v469 = vsel %vm185, %v127, 0
    %v472 = vsel %vm185, %v128, 0
    %v475 = vsel %vm185, %v129, 0
    %v478 = vsel %vm185, %v130, 0
    %v481 = vsel %vm185, %v131, 0
    %v484 = vsel %vm185, %v132, 0
    %v487 = vsel %vm185, %v133, 0
    %v490 = vsel %vm185, %v134, 0
    %v493 = vsel %vm185, %v135, 0
    %v496 = vsel %vm185, %v136, 0
    %v499 = vsel %vm185, %v137, 0
    %v502 = vsel %vm185, %v138, 0
    %v505 = vsel %vm185, %v139, 0
    %v508 = vsel %vm185, %v140, 0
    %v511 = vsel %vm185, %v141, 0
    %v514 = vsel %vm185, %v142, 0
    %v517 = vsel %vm185, %v143, 0
    %v520 = vsel %vm185, %v144, 0
    %v523 = vsel %vm185, %v145, 0
    %v526 = vsel %vm185, %v146, 0
    %v529 = vsel %vm185, %v147, 0
    %v532 = vsel %vm185, %v148, 0
    %v535 = vsel %vm185, %v149, 0
    %v538 = vsel %vm185, %v150, 0
    %v541 = vsel %vm185, %v151, 0
    %v544 = vsel %vm185, %v152, 0
    %v547 = vsel %vm185, %v153, 0
    %v550 = vsel %vm185, %v154, 0
    %v553 = vsel %vm185, %v155, 0
    %v556 = vsel %vm185, %v156, 0
    %v559 = vsel %vm185, %v157, 0
    %v562 = vsel %vm185, %v158, 0
    %v565 = vsel %vm185, %v159, 0
    %v568 = vsel %vm185, %v160, 0
    %v571 = vsel %vm185, %v161, 0
    %v574 = vsel %vm185, %v162, 0
    %v577 = vsel %vm185, %v163, 0
    %v580 = vsel %vm185, %v164, 0
    %v583 = vsel %vm185, %v165, 0
    %v586 = vsel %vm185, %v166, 0
    %v589 = vsel %vm185, %v167, 0
    %v592 = vsel %vm185, %v168, 0
    %v595 = vsel %vm185, %v169, 0
    %v598 = vsel %vm185, %v170, 0
    %v601 = vsel %vm185, %v171, 0
    %v604 = vsel %vm185, %v172, 0
    %v607 = vsel %vm185, %v173, 0
    %v610 = vsel %vm185, %v174, 0
    %v613 = vsel %vm185, %v175, 0
    %v616 = vsel %vm185, %v176, 0
    %vm618 = vcmask 1040384
    %v620 = vsel %vm618, %v180, 0
    %622 = vmatpush.msra.mxu0 0.0
    %623 = vmatpush.msra.mxu0 0.0
    %624 = vmatpush.msra.mxu0 0.0
    %625 = vmatpush.msra.mxu0 0.0
    %626 = vmatpush.msra.mxu0 0.0
    %627 = vmatpush.msra.mxu0 0.0
    %628 = vmatpush.msra.mxu0 0.0
    %629 = vmatpush.msra.mxu0 0.0
    %630 = vmatpush.msra.mxu0 0.0
    %631 = vmatpush.msra.mxu0 0.0
    %632 = vmatpush.msra.mxu0 0.0
    %633 = vmatpush.msra.mxu0 0.0
    %634 = vmatpush.msra.mxu0 %v620
    %635 = vmatpush.msra.mxu0 %v179
    %636 = vmatpush.msra.mxu0 %v178
    %637 = vmatpush.msra.mxu0 %v177
    %638 = vmatmul.f32.gmra.mxu0 %v187
    %v639 = vpop.f32.mrf.mxu0
    %v640 = vadd.f32 %v183, %v639
    %641 = vmatmul.f32.gmra.mxu0 %v190
    %v642 = vpop.f32.mrf.mxu0
    %v643 = vadd.f32 %v183, %v642
    %644 = vmatmul.f32.gmra.mxu0 %v193
    %v645 = vpop.f32.mrf.mxu0
    %v646 = vadd.f32 %v183, %v645
    %647 = vmatmul.f32.gmra.mxu0 %v196
    %v648 = vpop.f32.mrf.mxu0
    %v649 = vadd.f32 %v183, %v648
    %650 = vmatmul.f32.gmra.mxu0 %v199
    %v651 = vpop.f32.mrf.mxu0
    %v652 = vadd.f32 %v183, %v651
    %653 = vmatmul.f32.gmra.mxu0 %v202
    %v654 = vpop.f32.mrf.mxu0
    %v655 = vadd.f32 %v183, %v654
    %656 = vmatmul.f32.gmra.mxu0 %v205
    %v657 = vpop.f32.mrf.mxu0
    %v658 = vadd.f32 %v183, %v657
    %659 = vmatmul.f32.gmra.mxu0 %v208
    %v660 = vpop.f32.mrf.mxu0
    %v661 = vadd.f32 %v183, %v660
    %662 = vmatmul.f32.gmra.mxu0 %v211
    %v663 = vpop.f32.mrf.mxu0
    %v664 = vadd.f32 %v183, %v663
    %665 = vmatmul.f32.gmra.mxu0 %v214
    %v666 = vpop.f32.mrf.mxu0
    %v667 = vadd.f32 %v183, %v666
    %668 = vmatmul.f32.gmra.mxu0 %v217
    %v669 = vpop.f32.mrf.mxu0
    %v670 = vadd.f32 %v183, %v669
    %671 = vmatmul.f32.gmra.mxu0 %v220
    %v672 = vpop.f32.mrf.mxu0
    %v673 = vadd.f32 %v183, %v672
    %674 = vmatmul.f32.gmra.mxu0 %v223
    %v675 = vpop.f32.mrf.mxu0
    %v676 = vadd.f32 %v183, %v675
    %677 = vmatmul.f32.gmra.mxu0 %v226
    %v678 = vpop.f32.mrf.mxu0
    %v679 = vadd.f32 %v183, %v678
    %680 = vmatmul.f32.gmra.mxu0 %v229
    %v681 = vpop.f32.mrf.mxu0
    %v682 = vadd.f32 %v183, %v681
    %683 = vmatmul.f32.gmra.mxu0 %v232
    %v684 = vpop.f32.mrf.mxu0
    %v685 = vadd.f32 %v183, %v684
    %686 = vmatmul.f32.gmra.mxu0 %v235
    %v687 = vpop.f32.mrf.mxu0
    %v688 = vadd.f32 %v183, %v687
    %689 = vmatmul.f32.gmra.mxu0 %v238
    %v690 = vpop.f32.mrf.mxu0
    %v691 = vadd.f32 %v183, %v690
    %692 = vmatmul.f32.gmra.mxu0 %v241
    %v693 = vpop.f32.mrf.mxu0
    %v694 = vadd.f32 %v183, %v693
    %695 = vmatmul.f32.gmra.mxu0 %v244
    %v696 = vpop.f32.mrf.mxu0
    %v697 = vadd.f32 %v183, %v696
    %698 = vmatmul.f32.gmra.mxu0 %v247
    %v699 = vpop.f32.mrf.mxu0
    %v700 = vadd.f32 %v183, %v699
    %701 = vmatmul.f32.gmra.mxu0 %v250
    %v702 = vpop.f32.mrf.mxu0
    %v703 = vadd.f32 %v183, %v702
    %704 = vmatmul.f32.gmra.mxu0 %v253
    %v705 = vpop.f32.mrf.mxu0
    %v706 = vadd.f32 %v183, %v705
    %707 = vmatmul.f32.gmra.mxu0 %v256
    %v708 = vpop.f32.mrf.mxu0
    %v709 = vadd.f32 %v183, %v708
    %710 = vmatmul.f32.gmra.mxu0 %v259
    %v711 = vpop.f32.mrf.mxu0
    %v712 = vadd.f32 %v183, %v711
    %713 = vmatmul.f32.gmra.mxu0 %v262
    %v714 = vpop.f32.mrf.mxu0
    %v715 = vadd.f32 %v183, %v714
    %716 = vmatmul.f32.gmra.mxu0 %v265
    %v717 = vpop.f32.mrf.mxu0
    %v718 = vadd.f32 %v183, %v717
    %719 = vmatmul.f32.gmra.mxu0 %v268
    %v720 = vpop.f32.mrf.mxu0
    %v721 = vadd.f32 %v183, %v720
    %722 = vmatmul.f32.gmra.mxu0 %v271
    %v723 = vpop.f32.mrf.mxu0
    %v724 = vadd.f32 %v183, %v723
    %725 = vmatmul.f32.gmra.mxu0 %v274
    %v726 = vpop.f32.mrf.mxu0
    %v727 = vadd.f32 %v183, %v726
    %728 = vmatmul.f32.gmra.mxu0 %v277
    %v729 = vpop.f32.mrf.mxu0
    %v730 = vadd.f32 %v183, %v729
    %731 = vmatmul.f32.gmra.mxu0 %v280
    %v732 = vpop.f32.mrf.mxu0
    %v733 = vadd.f32 %v183, %v732
    %734 = vmatmul.f32.gmra.mxu0 %v283
    %v735 = vpop.f32.mrf.mxu0
    %v736 = vadd.f32 %v183, %v735
    %737 = vmatmul.f32.gmra.mxu0 %v286
    %v738 = vpop.f32.mrf.mxu0
    %v739 = vadd.f32 %v183, %v738
    %740 = vmatmul.f32.gmra.mxu0 %v289
    %v741 = vpop.f32.mrf.mxu0
    %v742 = vadd.f32 %v183, %v741
    %743 = vmatmul.f32.gmra.mxu0 %v292
    %v744 = vpop.f32.mrf.mxu0
    %v745 = vadd.f32 %v183, %v744
    %746 = vmatmul.f32.gmra.mxu0 %v295
    %v747 = vpop.f32.mrf.mxu0
    %v748 = vadd.f32 %v183, %v747
    %749 = vmatmul.f32.gmra.mxu0 %v298
    %v750 = vpop.f32.mrf.mxu0
    %v751 = vadd.f32 %v183, %v750
    %752 = vmatmul.f32.gmra.mxu0 %v301
    %v753 = vpop.f32.mrf.mxu0
    %v754 = vadd.f32 %v183, %v753
    %755 = vmatmul.f32.gmra.mxu0 %v304
    %v756 = vpop.f32.mrf.mxu0
    %v757 = vadd.f32 %v183, %v756
    %758 = vmatmul.f32.gmra.mxu0 %v307
    %v759 = vpop.f32.mrf.mxu0
    %v760 = vadd.f32 %v183, %v759
    %761 = vmatmul.f32.gmra.mxu0 %v310
    %v762 = vpop.f32.mrf.mxu0
    %v763 = vadd.f32 %v183, %v762
    %764 = vmatmul.f32.gmra.mxu0 %v313
    %v765 = vpop.f32.mrf.mxu0
    %v766 = vadd.f32 %v183, %v765
    %767 = vmatmul.f32.gmra.mxu0 %v316
    %v768 = vpop.f32.mrf.mxu0
    %v769 = vadd.f32 %v183, %v768
    %770 = vmatmul.f32.gmra.mxu0 %v319
    %v771 = vpop.f32.mrf.mxu0
    %v772 = vadd.f32 %v183, %v771
    %773 = vmatmul.f32.gmra.mxu0 %v322
    %v774 = vpop.f32.mrf.mxu0
    %v775 = vadd.f32 %v183, %v774
    %776 = vmatmul.f32.gmra.mxu0 %v325
    %v777 = vpop.f32.mrf.mxu0
    %v778 = vadd.f32 %v183, %v777
    %779 = vmatmul.f32.gmra.mxu0 %v328
    %v780 = vpop.f32.mrf.mxu0
    %v781 = vadd.f32 %v183, %v780
    %782 = vmatmul.f32.gmra.mxu0 %v331
    %v783 = vpop.f32.mrf.mxu0
    %v784 = vadd.f32 %v183, %v783
    %785 = vmatmul.f32.gmra.mxu0 %v334
    %v786 = vpop.f32.mrf.mxu0
    %v787 = vadd.f32 %v183, %v786
    %788 = vmatmul.f32.gmra.mxu0 %v337
    %v789 = vpop.f32.mrf.mxu0
    %v790 = vadd.f32 %v183, %v789
    %791 = vmatmul.f32.gmra.mxu0 %v340
    %v792 = vpop.f32.mrf.mxu0
    %v793 = vadd.f32 %v183, %v792
    %794 = vmatmul.f32.gmra.mxu0 %v343
    %v795 = vpop.f32.mrf.mxu0
    %v796 = vadd.f32 %v183, %v795
    %797 = vmatmul.f32.gmra.mxu0 %v346
    %v798 = vpop.f32.mrf.mxu0
    %v799 = vadd.f32 %v183, %v798
    %800 = vmatmul.f32.gmra.mxu0 %v349
    %v801 = vpop.f32.mrf.mxu0
    %v802 = vadd.f32 %v183, %v801
    %803 = vmatmul.f32.gmra.mxu0 %v352
    %v804 = vpop.f32.mrf.mxu0
    %v805 = vadd.f32 %v183, %v804
    %806 = vmatmul.f32.gmra.mxu0 %v355
    %v807 = vpop.f32.mrf.mxu0
    %v808 = vadd.f32 %v183, %v807
    %809 = vmatmul.f32.gmra.mxu0 %v358
    %v810 = vpop.f32.mrf.mxu0
    %v811 = vadd.f32 %v183, %v810
    %812 = vmatmul.f32.gmra.mxu0 %v361
    %v813 = vpop.f32.mrf.mxu0
    %v814 = vadd.f32 %v183, %v813
    %815 = vmatmul.f32.gmra.mxu0 %v364
    %v816 = vpop.f32.mrf.mxu0
    %v817 = vadd.f32 %v183, %v816
    %818 = vmatmul.f32.gmra.mxu0 %v367
    %v819 = vpop.f32.mrf.mxu0
    %v820 = vadd.f32 %v183, %v819
    %821 = vmatmul.f32.gmra.mxu0 %v370
    %v822 = vpop.f32.mrf.mxu0
    %v823 = vadd.f32 %v183, %v822
    %824 = vmatmul.f32.gmra.mxu0 %v373
    %v825 = vpop.f32.mrf.mxu0
    %v826 = vadd.f32 %v183, %v825
    %827 = vmatmul.f32.gmra.mxu0 %v376
    %v828 = vpop.f32.mrf.mxu0
    %v829 = vadd.f32 %v183, %v828
    %830 = vmatmul.f32.gmra.mxu0 %v379
    %v831 = vpop.f32.mrf.mxu0
    %v832 = vadd.f32 %v183, %v831
    %833 = vmatmul.f32.gmra.mxu0 %v382
    %v834 = vpop.f32.mrf.mxu0
    %v835 = vadd.f32 %v183, %v834
    %836 = vmatmul.f32.gmra.mxu0 %v385
    %v837 = vpop.f32.mrf.mxu0
    %v838 = vadd.f32 %v183, %v837
    %839 = vmatmul.f32.gmra.mxu0 %v388
    %v840 = vpop.f32.mrf.mxu0
    %v841 = vadd.f32 %v183, %v840
    %842 = vmatmul.f32.gmra.mxu0 %v391
    %v843 = vpop.f32.mrf.mxu0
    %v844 = vadd.f32 %v183, %v843
    %845 = vmatmul.f32.gmra.mxu0 %v394
    %v846 = vpop.f32.mrf.mxu0
    %v847 = vadd.f32 %v183, %v846
    %848 = vmatmul.f32.gmra.mxu0 %v397
    %v849 = vpop.f32.mrf.mxu0
    %v850 = vadd.f32 %v183, %v849
    %851 = vmatmul.f32.gmra.mxu0 %v400
    %v852 = vpop.f32.mrf.mxu0
    %v853 = vadd.f32 %v183, %v852
    %854 = vmatmul.f32.gmra.mxu0 %v403
    %v855 = vpop.f32.mrf.mxu0
    %v856 = vadd.f32 %v183, %v855
    %857 = vmatmul.f32.gmra.mxu0 %v406
    %v858 = vpop.f32.mrf.mxu0
    %v859 = vadd.f32 %v183, %v858
    %860 = vmatmul.f32.gmra.mxu0 %v409
    %v861 = vpop.f32.mrf.mxu0
    %v862 = vadd.f32 %v183, %v861
    %863 = vmatmul.f32.gmra.mxu0 %v412
    %v864 = vpop.f32.mrf.mxu0
    %v865 = vadd.f32 %v183, %v864
    %866 = vmatmul.f32.gmra.mxu0 %v415
    %v867 = vpop.f32.mrf.mxu0
    %v868 = vadd.f32 %v183, %v867
    %869 = vmatmul.f32.gmra.mxu0 %v418
    %v870 = vpop.f32.mrf.mxu0
    %v871 = vadd.f32 %v183, %v870
    %872 = vmatmul.f32.gmra.mxu0 %v421
    %v873 = vpop.f32.mrf.mxu0
    %v874 = vadd.f32 %v183, %v873
    %875 = vmatmul.f32.gmra.mxu0 %v424
    %v876 = vpop.f32.mrf.mxu0
    %v877 = vadd.f32 %v183, %v876
    %878 = vmatmul.f32.gmra.mxu0 %v427
    %v879 = vpop.f32.mrf.mxu0
    %v880 = vadd.f32 %v183, %v879
    %881 = vmatmul.f32.gmra.mxu0 %v430
    %v882 = vpop.f32.mrf.mxu0
    %v883 = vadd.f32 %v183, %v882
    %884 = vmatmul.f32.gmra.mxu0 %v433
    %v885 = vpop.f32.mrf.mxu0
    %v886 = vadd.f32 %v183, %v885
    %887 = vmatmul.f32.gmra.mxu0 %v436
    %v888 = vpop.f32.mrf.mxu0
    %v889 = vadd.f32 %v183, %v888
    %890 = vmatmul.f32.gmra.mxu0 %v439
    %v891 = vpop.f32.mrf.mxu0
    %v892 = vadd.f32 %v183, %v891
    %893 = vmatmul.f32.gmra.mxu0 %v442
    %v894 = vpop.f32.mrf.mxu0
    %v895 = vadd.f32 %v183, %v894
    %896 = vmatmul.f32.gmra.mxu0 %v445
    %v897 = vpop.f32.mrf.mxu0
    %v898 = vadd.f32 %v183, %v897
    %899 = vmatmul.f32.gmra.mxu0 %v448
    %v900 = vpop.f32.mrf.mxu0
    %v901 = vadd.f32 %v183, %v900
    %902 = vmatmul.f32.gmra.mxu0 %v451
    %v903 = vpop.f32.mrf.mxu0
    %v904 = vadd.f32 %v183, %v903
    %905 = vmatmul.f32.gmra.mxu0 %v454
    %v906 = vpop.f32.mrf.mxu0
    %v907 = vadd.f32 %v183, %v906
    %908 = vmatmul.f32.gmra.mxu0 %v457
    %v909 = vpop.f32.mrf.mxu0
    %v910 = vadd.f32 %v183, %v909
    %911 = vmatmul.f32.gmra.mxu0 %v460
    %v912 = vpop.f32.mrf.mxu0
    %v913 = vadd.f32 %v183, %v912
    %914 = vmatmul.f32.gmra.mxu0 %v463
    %v915 = vpop.f32.mrf.mxu0
    %v916 = vadd.f32 %v183, %v915
    %917 = vmatmul.f32.gmra.mxu0 %v466
    %v918 = vpop.f32.mrf.mxu0
    %v919 = vadd.f32 %v183, %v918
    %920 = vmatmul.f32.gmra.mxu0 %v469
    %v921 = vpop.f32.mrf.mxu0
    %v922 = vadd.f32 %v183, %v921
    %923 = vmatmul.f32.gmra.mxu0 %v472
    %v924 = vpop.f32.mrf.mxu0
    %v925 = vadd.f32 %v183, %v924
    %926 = vmatmul.f32.gmra.mxu0 %v475
    %v927 = vpop.f32.mrf.mxu0
    %v928 = vadd.f32 %v183, %v927
    %929 = vmatmul.f32.gmra.mxu0 %v478
    %v930 = vpop.f32.mrf.mxu0
    %v931 = vadd.f32 %v183, %v930
    %932 = vmatmul.f32.gmra.mxu0 %v481
    %v933 = vpop.f32.mrf.mxu0
    %v934 = vadd.f32 %v183, %v933
    %935 = vmatmul.f32.gmra.mxu0 %v484
    %v936 = vpop.f32.mrf.mxu0
    %v937 = vadd.f32 %v183, %v936
    %938 = vmatmul.f32.gmra.mxu0 %v487
    %v939 = vpop.f32.mrf.mxu0
    %v940 = vadd.f32 %v183, %v939
    %941 = vmatmul.f32.gmra.mxu0 %v490
    %v942 = vpop.f32.mrf.mxu0
    %v943 = vadd.f32 %v183, %v942
    %944 = vmatmul.f32.gmra.mxu0 %v493
    %v945 = vpop.f32.mrf.mxu0
    %v946 = vadd.f32 %v183, %v945
    %947 = vmatmul.f32.gmra.mxu0 %v496
    %v948 = vpop.f32.mrf.mxu0
    %v949 = vadd.f32 %v183, %v948
    %950 = vmatmul.f32.gmra.mxu0 %v499
    %v951 = vpop.f32.mrf.mxu0
    %v952 = vadd.f32 %v183, %v951
    %953 = vmatmul.f32.gmra.mxu0 %v502
    %v954 = vpop.f32.mrf.mxu0
    %v955 = vadd.f32 %v183, %v954
    %956 = vmatmul.f32.gmra.mxu0 %v505
    %v957 = vpop.f32.mrf.mxu0
    %v958 = vadd.f32 %v183, %v957
    %959 = vmatmul.f32.gmra.mxu0 %v508
    %v960 = vpop.f32.mrf.mxu0
    %v961 = vadd.f32 %v183, %v960
    %962 = vmatmul.f32.gmra.mxu0 %v511
    %v963 = vpop.f32.mrf.mxu0
    %v964 = vadd.f32 %v183, %v963
    %965 = vmatmul.f32.gmra.mxu0 %v514
    %v966 = vpop.f32.mrf.mxu0
    %v967 = vadd.f32 %v183, %v966
    %968 = vmatmul.f32.gmra.mxu0 %v517
    %v969 = vpop.f32.mrf.mxu0
    %v970 = vadd.f32 %v183, %v969
    %971 = vmatmul.f32.gmra.mxu0 %v520
    %v972 = vpop.f32.mrf.mxu0
    %v973 = vadd.f32 %v183, %v972
    %974 = vmatmul.f32.gmra.mxu0 %v523
    %v975 = vpop.f32.mrf.mxu0
    %v976 = vadd.f32 %v183, %v975
    %977 = vmatmul.f32.gmra.mxu0 %v526
    %v978 = vpop.f32.mrf.mxu0
    %v979 = vadd.f32 %v183, %v978
    %980 = vmatmul.f32.gmra.mxu0 %v529
    %v981 = vpop.f32.mrf.mxu0
    %v982 = vadd.f32 %v183, %v981
    %983 = vmatmul.f32.gmra.mxu0 %v532
    %v984 = vpop.f32.mrf.mxu0
    %v985 = vadd.f32 %v183, %v984
    %986 = vmatmul.f32.gmra.mxu0 %v535
    %v987 = vpop.f32.mrf.mxu0
    %v988 = vadd.f32 %v183, %v987
    %989 = vmatmul.f32.gmra.mxu0 %v538
    %v990 = vpop.f32.mrf.mxu0
    %v991 = vadd.f32 %v183, %v990
    %992 = vmatmul.f32.gmra.mxu0 %v541
    %v993 = vpop.f32.mrf.mxu0
    %v994 = vadd.f32 %v183, %v993
    %995 = vmatmul.f32.gmra.mxu0 %v544
    %v996 = vpop.f32.mrf.mxu0
    %v997 = vadd.f32 %v183, %v996
    %998 = vmatmul.f32.gmra.mxu0 %v547
    %v999 = vpop.f32.mrf.mxu0
    %v1000 = vadd.f32 %v183, %v999
    %1001 = vmatmul.f32.gmra.mxu0 %v550
    %v1002 = vpop.f32.mrf.mxu0
    %v1003 = vadd.f32 %v183, %v1002
    %1004 = vmatmul.f32.gmra.mxu0 %v553
    %v1005 = vpop.f32.mrf.mxu0
    %v1006 = vadd.f32 %v183, %v1005
    %1007 = vmatmul.f32.gmra.mxu0 %v556
    %v1008 = vpop.f32.mrf.mxu0
    %v1009 = vadd.f32 %v183, %v1008
    %1010 = vmatmul.f32.gmra.mxu0 %v559
    %v1011 = vpop.f32.mrf.mxu0
    %v1012 = vadd.f32 %v183, %v1011
    %1013 = vmatmul.f32.gmra.mxu0 %v562
    %v1014 = vpop.f32.mrf.mxu0
    %v1015 = vadd.f32 %v183, %v1014
    %1016 = vmatmul.f32.gmra.mxu0 %v565
    %v1017 = vpop.f32.mrf.mxu0
    %v1018 = vadd.f32 %v183, %v1017
    %1019 = vmatmul.f32.gmra.mxu0 %v568
    %v1020 = vpop.f32.mrf.mxu0
    %v1021 = vadd.f32 %v183, %v1020
    %1022 = vmatmul.f32.gmra.mxu0 %v571
    %v1023 = vpop.f32.mrf.mxu0
    %v1024 = vadd.f32 %v183, %v1023
    %1025 = vmatmul.f32.gmra.mxu0 %v574
    %v1026 = vpop.f32.mrf.mxu0
    %v1027 = vadd.f32 %v183, %v1026
    %1028 = vmatmul.f32.gmra.mxu0 %v577
    %v1029 = vpop.f32.mrf.mxu0
    %v1030 = vadd.f32 %v183, %v1029
    %1031 = vmatmul.f32.gmra.mxu0 %v580
    %v1032 = vpop.f32.mrf.mxu0
    %v1033 = vadd.f32 %v183, %v1032
    %1034 = vmatmul.f32.gmra.mxu0 %v583
    %v1035 = vpop.f32.mrf.mxu0
    %v1036 = vadd.f32 %v183, %v1035
    %1037 = vmatmul.f32.gmra.mxu0 %v586
    %v1038 = vpop.f32.mrf.mxu0
    %v1039 = vadd.f32 %v183, %v1038
    %1040 = vmatmul.f32.gmra.mxu0 %v589
    %v1041 = vpop.f32.mrf.mxu0
    %v1042 = vadd.f32 %v183, %v1041
    %1043 = vmatmul.f32.gmra.mxu0 %v592
    %v1044 = vpop.f32.mrf.mxu0
    %v1045 = vadd.f32 %v183, %v1044
    %1046 = vmatmul.f32.gmra.mxu0 %v595
    %v1047 = vpop.f32.mrf.mxu0
    %v1048 = vadd.f32 %v183, %v1047
    %1049 = vmatmul.f32.gmra.mxu0 %v598
    %v1050 = vpop.f32.mrf.mxu0
    %v1051 = vadd.f32 %v183, %v1050
    %1052 = vmatmul.f32.gmra.mxu0 %v601
    %v1053 = vpop.f32.mrf.mxu0
    %v1054 = vadd.f32 %v183, %v1053
    %1055 = vmatmul.f32.gmra.mxu0 %v604
    %v1056 = vpop.f32.mrf.mxu0
    %v1057 = vadd.f32 %v183, %v1056
    %1058 = vmatmul.f32.gmra.mxu0 %v607
    %v1059 = vpop.f32.mrf.mxu0
    %v1060 = vadd.f32 %v183, %v1059
    %1061 = vmatmul.f32.gmra.mxu0 %v610
    %v1062 = vpop.f32.mrf.mxu0
    %v1063 = vadd.f32 %v183, %v1062
    %1064 = vmatmul.f32.gmra.mxu0 %v613
    %v1065 = vpop.f32.mrf.mxu0
    %v1066 = vadd.f32 %v183, %v1065
    %1067 = vmatmul.f32.gmra.mxu0 %v616
    %v1068 = vpop.f32.mrf.mxu0
    %v1069 = vadd.f32 %v183, %v1068
    %1070 = vdwg.mxu0
    %v1071 = vmax.f32 %v640, 0.0
    %v1072 = vmax.f32 %v643, 0.0
    %v1073 = vmax.f32 %v646, 0.0
    %v1074 = vmax.f32 %v649, 0.0
    %v1075 = vmax.f32 %v652, 0.0
    %v1076 = vmax.f32 %v655, 0.0
    %v1077 = vmax.f32 %v658, 0.0
    %v1078 = vmax.f32 %v661, 0.0
    %v1079 = vmax.f32 %v664, 0.0
    %v1080 = vmax.f32 %v667, 0.0
    %v1081 = vmax.f32 %v670, 0.0
    %v1082 = vmax.f32 %v673, 0.0
    %v1083 = vmax.f32 %v676, 0.0
    %v1084 = vmax.f32 %v679, 0.0
    %v1085 = vmax.f32 %v682, 0.0
    %v1086 = vmax.f32 %v685, 0.0
    %v1087 = vmax.f32 %v688, 0.0
    %v1088 = vmax.f32 %v691, 0.0
    %v1089 = vmax.f32 %v694, 0.0
    %v1090 = vmax.f32 %v697, 0.0
    %v1091 = vmax.f32 %v700, 0.0
    %v1092 = vmax.f32 %v703, 0.0
    %v1093 = vmax.f32 %v706, 0.0
    %v1094 = vmax.f32 %v709, 0.0
    %v1095 = vmax.f32 %v712, 0.0
    %v1096 = vmax.f32 %v715, 0.0
    %v1097 = vmax.f32 %v718, 0.0
    %v1098 = vmax.f32 %v721, 0.0
    %v1099 = vmax.f32 %v724, 0.0
    %v1100 = vmax.f32 %v727, 0.0
    %v1101 = vmax.f32 %v730, 0.0
    %v1102 = vmax.f32 %v733, 0.0
    %v1103 = vmax.f32 %v736, 0.0
    %v1104 = vmax.f32 %v739, 0.0
    %v1105 = vmax.f32 %v742, 0.0
    %v1106 = vmax.f32 %v745, 0.0
    %v1107 = vmax.f32 %v748, 0.0
    %v1108 = vmax.f32 %v751, 0.0
    %v1109 = vmax.f32 %v754, 0.0
    %v1110 = vmax.f32 %v757, 0.0
    %v1111 = vmax.f32 %v760, 0.0
    %v1112 = vmax.f32 %v763, 0.0
    %v1113 = vmax.f32 %v766, 0.0
    %v1114 = vmax.f32 %v769, 0.0
    %v1115 = vmax.f32 %v772, 0.0
    %v1116 = vmax.f32 %v775, 0.0
    %v1117 = vmax.f32 %v778, 0.0
    %v1118 = vmax.f32 %v781, 0.0
    %v1119 = vmax.f32 %v784, 0.0
    %v1120 = vmax.f32 %v787, 0.0
    %v1121 = vmax.f32 %v790, 0.0
    %v1122 = vmax.f32 %v793, 0.0
    %v1123 = vmax.f32 %v796, 0.0
    %v1124 = vmax.f32 %v799, 0.0
    %v1125 = vmax.f32 %v802, 0.0
    %v1126 = vmax.f32 %v805, 0.0
    %v1127 = vmax.f32 %v808, 0.0
    %v1128 = vmax.f32 %v811, 0.0
    %v1129 = vmax.f32 %v814, 0.0
    %v1130 = vmax.f32 %v817, 0.0
    %v1131 = vmax.f32 %v820, 0.0
    %v1132 = vmax.f32 %v823, 0.0
    %v1133 = vmax.f32 %v826, 0.0
    %v1134 = vmax.f32 %v829, 0.0
    %v1135 = vmax.f32 %v832, 0.0
    %v1136 = vmax.f32 %v835, 0.0
    %v1137 = vmax.f32 %v838, 0.0
    %v1138 = vmax.f32 %v841, 0.0
    %v1139 = vmax.f32 %v844, 0.0
    %v1140 = vmax.f32 %v847, 0.0
    %v1141 = vmax.f32 %v850, 0.0
    %v1142 = vmax.f32 %v853, 0.0
    %v1143 = vmax.f32 %v856, 0.0
    %v1144 = vmax.f32 %v859, 0.0
    %v1145 = vmax.f32 %v862, 0.0
    %v1146 = vmax.f32 %v865, 0.0
    %v1147 = vmax.f32 %v868, 0.0
    %v1148 = vmax.f32 %v871, 0.0
    %v1149 = vmax.f32 %v874, 0.0
    %v1150 = vmax.f32 %v877, 0.0
    %v1151 = vmax.f32 %v880, 0.0
    %v1152 = vmax.f32 %v883, 0.0
    %v1153 = vmax.f32 %v886, 0.0
    %v1154 = vmax.f32 %v889, 0.0
    %v1155 = vmax.f32 %v892, 0.0
    %v1156 = vmax.f32 %v895, 0.0
    %v1157 = vmax.f32 %v898, 0.0
    %v1158 = vmax.f32 %v901, 0.0
    %v1159 = vmax.f32 %v904, 0.0
    %v1160 = vmax.f32 %v907, 0.0
    %v1161 = vmax.f32 %v910, 0.0
    %v1162 = vmax.f32 %v913, 0.0
    %v1163 = vmax.f32 %v916, 0.0
    %v1164 = vmax.f32 %v919, 0.0
    %v1165 = vmax.f32 %v922, 0.0
    %v1166 = vmax.f32 %v925, 0.0
    %v1167 = vmax.f32 %v928, 0.0
    %v1168 = vmax.f32 %v931, 0.0
    %v1169 = vmax.f32 %v934, 0.0
    %v1170 = vmax.f32 %v937, 0.0
    %v1171 = vmax.f32 %v940, 0.0
    %v1172 = vmax.f32 %v943, 0.0
    %v1173 = vmax.f32 %v946, 0.0
    %v1174 = vmax.f32 %v949, 0.0
    %v1175 = vmax.f32 %v952, 0.0
    %v1176 = vmax.f32 %v955, 0.0
    %v1177 = vmax.f32 %v958, 0.0
    %v1178 = vmax.f32 %v961, 0.0
    %v1179 = vmax.f32 %v964, 0.0
    %v1180 = vmax.f32 %v967, 0.0
    %v1181 = vmax.f32 %v970, 0.0
    %v1182 = vmax.f32 %v973, 0.0
    %v1183 = vmax.f32 %v976, 0.0
    %v1184 = vmax.f32 %v979, 0.0
    %v1185 = vmax.f32 %v982, 0.0
    %v1186 = vmax.f32 %v985, 0.0
    %v1187 = vmax.f32 %v988, 0.0
    %v1188 = vmax.f32 %v991, 0.0
    %v1189 = vmax.f32 %v994, 0.0
    %v1190 = vmax.f32 %v997, 0.0
    %v1191 = vmax.f32 %v1000, 0.0
    %v1192 = vmax.f32 %v1003, 0.0
    %v1193 = vmax.f32 %v1006, 0.0
    %v1194 = vmax.f32 %v1009, 0.0
    %v1195 = vmax.f32 %v1012, 0.0
    %v1196 = vmax.f32 %v1015, 0.0
    %v1197 = vmax.f32 %v1018, 0.0
    %v1198 = vmax.f32 %v1021, 0.0
    %v1199 = vmax.f32 %v1024, 0.0
    %v1200 = vmax.f32 %v1027, 0.0
    %v1201 = vmax.f32 %v1030, 0.0
    %v1202 = vmax.f32 %v1033, 0.0
    %v1203 = vmax.f32 %v1036, 0.0
    %v1204 = vmax.f32 %v1039, 0.0
    %v1205 = vmax.f32 %v1042, 0.0
    %v1206 = vmax.f32 %v1045, 0.0
    %v1207 = vmax.f32 %v1048, 0.0
    %v1208 = vmax.f32 %v1051, 0.0
    %v1209 = vmax.f32 %v1054, 0.0
    %v1210 = vmax.f32 %v1057, 0.0
    %v1211 = vmax.f32 %v1060, 0.0
    %v1212 = vmax.f32 %v1063, 0.0
    %v1213 = vmax.f32 %v1066, 0.0
    %v1214 = vmax.f32 %v1069, 0.0
    %v1215 = vmax.f32 %v1071, %v1074
    %v1216 = vmax.f32 %v1072, %v1075
    %v1217 = vmax.f32 %v1073, %v1076
    %v1218 = vmax.f32 %v1077, %v1080
    %v1219 = vmax.f32 %v1078, %v1081
    %v1220 = vmax.f32 %v1079, %v1082
    %v1221 = vmax.f32 %v1083, %v1086
    %v1222 = vmax.f32 %v1084, %v1087
    %v1223 = vmax.f32 %v1085, %v1088
    %v1224 = vmax.f32 %v1089, %v1092
    %v1225 = vmax.f32 %v1090, %v1093
    %v1226 = vmax.f32 %v1091, %v1094
    %v1227 = vmax.f32 %v1095, %v1098
    %v1228 = vmax.f32 %v1096, %v1099
    %v1229 = vmax.f32 %v1097, %v1100
    %v1230 = vmax.f32 %v1101, %v1104
    %v1231 = vmax.f32 %v1102, %v1105
    %v1232 = vmax.f32 %v1103, %v1106
    %v1233 = vmax.f32 %v1107, %v1110
    %v1234 = vmax.f32 %v1108, %v1111
    %v1235 = vmax.f32 %v1109, %v1112
    %v1236 = vmax.f32 %v1113, %v1116
    %v1237 = vmax.f32 %v1114, %v1117
    %v1238 = vmax.f32 %v1115, %v1118
    %v1239 = vmax.f32 %v1119, %v1122
    %v1240 = vmax.f32 %v1120, %v1123
    %v1241 = vmax.f32 %v1121, %v1124
    %v1242 = vmax.f32 %v1125, %v1128
    %v1243 = vmax.f32 %v1126, %v1129
    %v1244 = vmax.f32 %v1127, %v1130
    %v1245 = vmax.f32 %v1131, %v1134
    %v1246 = vmax.f32 %v1132, %v1135
    %v1247 = vmax.f32 %v1133, %v1136
    %v1248 = vmax.f32 %v1137, %v1140
    %v1249 = vmax.f32 %v1138, %v1141
    %v1250 = vmax.f32 %v1139, %v1142
    %v1251 = vmax.f32 %v1143, %v1146
    %v1252 = vmax.f32 %v1144, %v1147
    %v1253 = vmax.f32 %v1145, %v1148
    %v1254 = vmax.f32 %v1149, %v1152
    %v1255 = vmax.f32 %v1150, %v1153
    %v1256 = vmax.f32 %v1151, %v1154
    %v1257 = vmax.f32 %v1155, %v1158
    %v1258 = vmax.f32 %v1156, %v1159
    %v1259 = vmax.f32 %v1157, %v1160
    %v1260 = vmax.f32 %v1161, %v1164
    %v1261 = vmax.f32 %v1162, %v1165
    %v1262 = vmax.f32 %v1163, %v1166
    %v1263 = vmax.f32 %v1167, %v1170
    %v1264 = vmax.f32 %v1168, %v1171
    %v1265 = vmax.f32 %v1169, %v1172
    %v1266 = vmax.f32 %v1173, %v1176
    %v1267 = vmax.f32 %v1174, %v1177
    %v1268 = vmax.f32 %v1175, %v1178
    %v1269 = vmax.f32 %v1179, %v1182
    %v1270 = vmax.f32 %v1180, %v1183
    %v1271 = vmax.f32 %v1181, %v1184
    %v1272 = vmax.f32 %v1185, %v1188
    %v1273 = vmax.f32 %v1186, %v1189
    %v1274 = vmax.f32 %v1187, %v1190
    %v1275 = vmax.f32 %v1191, %v1194
    %v1276 = vmax.f32 %v1192, %v1195
    %v1277 = vmax.f32 %v1193, %v1196
    %v1278 = vmax.f32 %v1197, %v1200
    %v1279 = vmax.f32 %v1198, %v1201
    %v1280 = vmax.f32 %v1199, %v1202
    %v1281 = vmax.f32 %v1203, %v1206
    %v1282 = vmax.f32 %v1204, %v1207
    %v1283 = vmax.f32 %v1205, %v1208
    %v1284 = vmax.f32 %v1209, %v1212
    %v1285 = vmax.f32 %v1210, %v1213
    %v1286 = vmax.f32 %v1211, %v1214
    %v1311 = vrot.slane %v1215, 1
    %v1312 = vrot.slane %v1218, 1
    %v1313 = vrot.slane %v1221, 1
    %v1314 = vrot.slane %v1224, 1
    %v1315 = vrot.slane %v1227, 1
    %v1316 = vrot.slane %v1230, 1
    %v1317 = vrot.slane %v1233, 1
    %v1318 = vrot.slane %v1236, 1
    %v1319 = vrot.slane %v1239, 1
    %v1320 = vrot.slane %v1242, 1
    %v1321 = vrot.slane %v1245, 1
    %v1322 = vrot.slane %v1248, 1
    %v1323 = vrot.slane %v1251, 1
    %v1324 = vrot.slane %v1254, 1
    %v1325 = vrot.slane %v1257, 1
    %v1326 = vrot.slane %v1260, 1
    %v1327 = vrot.slane %v1263, 1
    %v1328 = vrot.slane %v1266, 1
    %v1329 = vrot.slane %v1269, 1
    %v1330 = vrot.slane %v1272, 1
    %v1331 = vrot.slane %v1275, 1
    %v1332 = vrot.slane %v1278, 1
    %v1333 = vrot.slane %v1281, 1
    %v1334 = vrot.slane %v1284, 1
    %v1359 = vmax.f32 %v1215, %v1311
    %v1360 = vmax.f32 %v1218, %v1312
    %v1361 = vmax.f32 %v1221, %v1313
    %v1362 = vmax.f32 %v1224, %v1314
    %v1363 = vmax.f32 %v1227, %v1315
    %v1364 = vmax.f32 %v1230, %v1316
    %v1365 = vmax.f32 %v1233, %v1317
    %v1366 = vmax.f32 %v1236, %v1318
    %v1367 = vmax.f32 %v1239, %v1319
    %v1368 = vmax.f32 %v1242, %v1320
    %v1369 = vmax.f32 %v1245, %v1321
    %v1370 = vmax.f32 %v1248, %v1322
    %v1371 = vmax.f32 %v1251, %v1323
    %v1372 = vmax.f32 %v1254, %v1324
    %v1373 = vmax.f32 %v1257, %v1325
    %v1374 = vmax.f32 %v1260, %v1326
    %v1375 = vmax.f32 %v1263, %v1327
    %v1376 = vmax.f32 %v1266, %v1328
    %v1377 = vmax.f32 %v1269, %v1329
    %v1378 = vmax.f32 %v1272, %v1330
    %v1379 = vmax.f32 %v1275, %v1331
    %v1380 = vmax.f32 %v1278, %v1332
    %v1381 = vmax.f32 %v1281, %v1333
    %v1382 = vmax.f32 %v1284, %v1334
    %v1407 = vrot.slane %v1216, 1
    %v1408 = vrot.slane %v1219, 1
    %v1409 = vrot.slane %v1222, 1
    %v1410 = vrot.slane %v1225, 1
    %v1411 = vrot.slane %v1228, 1
    %v1412 = vrot.slane %v1231, 1
    %v1413 = vrot.slane %v1234, 1
    %v1414 = vrot.slane %v1237, 1
    %v1415 = vrot.slane %v1240, 1
    %v1416 = vrot.slane %v1243, 1
    %v1417 = vrot.slane %v1246, 1
    %v1418 = vrot.slane %v1249, 1
    %v1419 = vrot.slane %v1252, 1
    %v1420 = vrot.slane %v1255, 1
    %v1421 = vrot.slane %v1258, 1
    %v1422 = vrot.slane %v1261, 1
    %v1423 = vrot.slane %v1264, 1
    %v1424 = vrot.slane %v1267, 1
    %v1425 = vrot.slane %v1270, 1
    %v1426 = vrot.slane %v1273, 1
    %v1427 = vrot.slane %v1276, 1
    %v1428 = vrot.slane %v1279, 1
    %v1429 = vrot.slane %v1282, 1
    %v1430 = vrot.slane %v1285, 1
    %v1455 = vmax.f32 %v1216, %v1407
    %v1456 = vmax.f32 %v1219, %v1408
    %v1457 = vmax.f32 %v1222, %v1409
    %v1458 = vmax.f32 %v1225, %v1410
    %v1459 = vmax.f32 %v1228, %v1411
    %v1460 = vmax.f32 %v1231, %v1412
    %v1461 = vmax.f32 %v1234, %v1413
    %v1462 = vmax.f32 %v1237, %v1414
    %v1463 = vmax.f32 %v1240, %v1415
    %v1464 = vmax.f32 %v1243, %v1416
    %v1465 = vmax.f32 %v1246, %v1417
    %v1466 = vmax.f32 %v1249, %v1418
    %v1467 = vmax.f32 %v1252, %v1419
    %v1468 = vmax.f32 %v1255, %v1420
    %v1469 = vmax.f32 %v1258, %v1421
    %v1470 = vmax.f32 %v1261, %v1422
    %v1471 = vmax.f32 %v1264, %v1423
    %v1472 = vmax.f32 %v1267, %v1424
    %v1473 = vmax.f32 %v1270, %v1425
    %v1474 = vmax.f32 %v1273, %v1426
    %v1475 = vmax.f32 %v1276, %v1427
    %v1476 = vmax.f32 %v1279, %v1428
    %v1477 = vmax.f32 %v1282, %v1429
    %v1478 = vmax.f32 %v1285, %v1430
    %v1503 = vrot.slane %v1217, 1
    %v1504 = vrot.slane %v1220, 1
    %v1505 = vrot.slane %v1223, 1
    %v1506 = vrot.slane %v1226, 1
    %v1507 = vrot.slane %v1229, 1
    %v1508 = vrot.slane %v1232, 1
    %v1509 = vrot.slane %v1235, 1
    %v1510 = vrot.slane %v1238, 1
    %v1511 = vrot.slane %v1241, 1
    %v1512 = vrot.slane %v1244, 1
    %v1513 = vrot.slane %v1247, 1
    %v1514 = vrot.slane %v1250, 1
    %v1515 = vrot.slane %v1253, 1
    %v1516 = vrot.slane %v1256, 1
    %v1517 = vrot.slane %v1259, 1
    %v1518 = vrot.slane %v1262, 1
    %v1519 = vrot.slane %v1265, 1
    %v1520 = vrot.slane %v1268, 1
    %v1521 = vrot.slane %v1271, 1
    %v1522 = vrot.slane %v1274, 1
    %v1523 = vrot.slane %v1277, 1
    %v1524 = vrot.slane %v1280, 1
    %v1525 = vrot.slane %v1283, 1
    %v1526 = vrot.slane %v1286, 1
    %v1551 = vmax.f32 %v1217, %v1503
    %v1552 = vmax.f32 %v1220, %v1504
    %v1553 = vmax.f32 %v1223, %v1505
    %v1554 = vmax.f32 %v1226, %v1506
    %v1555 = vmax.f32 %v1229, %v1507
    %v1556 = vmax.f32 %v1232, %v1508
    %v1557 = vmax.f32 %v1235, %v1509
    %v1558 = vmax.f32 %v1238, %v1510
    %v1559 = vmax.f32 %v1241, %v1511
    %v1560 = vmax.f32 %v1244, %v1512
    %v1561 = vmax.f32 %v1247, %v1513
    %v1562 = vmax.f32 %v1250, %v1514
    %v1563 = vmax.f32 %v1253, %v1515
    %v1564 = vmax.f32 %v1256, %v1516
    %v1565 = vmax.f32 %v1259, %v1517
    %v1566 = vmax.f32 %v1262, %v1518
    %v1567 = vmax.f32 %v1265, %v1519
    %v1568 = vmax.f32 %v1268, %v1520
    %v1569 = vmax.f32 %v1271, %v1521
    %v1570 = vmax.f32 %v1274, %v1522
    %v1571 = vmax.f32 %v1277, %v1523
    %v1572 = vmax.f32 %v1280, %v1524
    %v1573 = vmax.f32 %v1283, %v1525
    %v1574 = vmax.f32 %v1286, %v1526
    %v1599 = vrot.slane %v1359, 2
    %v1600 = vrot.slane %v1360, 2
    %v1601 = vrot.slane %v1361, 2
    %v1602 = vrot.slane %v1362, 2
    %v1603 = vrot.slane %v1363, 2
    %v1604 = vrot.slane %v1364, 2
    %v1605 = vrot.slane %v1365, 2
    %v1606 = vrot.slane %v1366, 2
    %v1607 = vrot.slane %v1367, 2
    %v1608 = vrot.slane %v1368, 2
    %v1609 = vrot.slane %v1369, 2
    %v1610 = vrot.slane %v1370, 2
    %v1611 = vrot.slane %v1371, 2
    %v1612 = vrot.slane %v1372, 2
    %v1613 = vrot.slane %v1373, 2
    %v1614 = vrot.slane %v1374, 2
    %v1615 = vrot.slane %v1375, 2
    %v1616 = vrot.slane %v1376, 2
    %v1617 = vrot.slane %v1377, 2
    %v1618 = vrot.slane %v1378, 2
    %v1619 = vrot.slane %v1379, 2
    %v1620 = vrot.slane %v1380, 2
    %v1621 = vrot.slane %v1381, 2
    %v1622 = vrot.slane %v1382, 2
    %v1623 = vrot.slane %v1359, 4
    %v1624 = vrot.slane %v1360, 4
    %v1625 = vrot.slane %v1361, 4
    %v1626 = vrot.slane %v1362, 4
    %v1627 = vrot.slane %v1363, 4
    %v1628 = vrot.slane %v1364, 4
    %v1629 = vrot.slane %v1365, 4
    %v1630 = vrot.slane %v1366, 4
    %v1631 = vrot.slane %v1367, 4
    %v1632 = vrot.slane %v1368, 4
    %v1633 = vrot.slane %v1369, 4
    %v1634 = vrot.slane %v1370, 4
    %v1635 = vrot.slane %v1371, 4
    %v1636 = vrot.slane %v1372, 4
    %v1637 = vrot.slane %v1373, 4
    %v1638 = vrot.slane %v1374, 4
    %v1639 = vrot.slane %v1375, 4
    %v1640 = vrot.slane %v1376, 4
    %v1641 = vrot.slane %v1377, 4
    %v1642 = vrot.slane %v1378, 4
    %v1643 = vrot.slane %v1379, 4
    %v1644 = vrot.slane %v1380, 4
    %v1645 = vrot.slane %v1381, 4
    %v1646 = vrot.slane %v1382, 4
    %v1647 = vrot.slane %v1359, 6
    %v1648 = vrot.slane %v1360, 6
    %v1649 = vrot.slane %v1361, 6
    %v1650 = vrot.slane %v1362, 6
    %v1651 = vrot.slane %v1363, 6
    %v1652 = vrot.slane %v1364, 6
    %v1653 = vrot.slane %v1365, 6
    %v1654 = vrot.slane %v1366, 6
    %v1655 = vrot.slane %v1367, 6
    %v1656 = vrot.slane %v1368, 6
    %v1657 = vrot.slane %v1369, 6
    %v1658 = vrot.slane %v1370, 6
    %v1659 = vrot.slane %v1371, 6
    %v1660 = vrot.slane %v1372, 6
    %v1661 = vrot.slane %v1373, 6
    %v1662 = vrot.slane %v1374, 6
    %v1663 = vrot.slane %v1375, 6
    %v1664 = vrot.slane %v1376, 6
    %v1665 = vrot.slane %v1377, 6
    %v1666 = vrot.slane %v1378, 6
    %v1667 = vrot.slane %v1379, 6
    %v1668 = vrot.slane %v1380, 6
    %v1669 = vrot.slane %v1381, 6
    %v1670 = vrot.slane %v1382, 6
    %v1695 = vrot.slane %v1455, 2
    %v1696 = vrot.slane %v1456, 2
    %v1697 = vrot.slane %v1457, 2
    %v1698 = vrot.slane %v1458, 2
    %v1699 = vrot.slane %v1459, 2
    %v1700 = vrot.slane %v1460, 2
    %v1701 = vrot.slane %v1461, 2
    %v1702 = vrot.slane %v1462, 2
    %v1703 = vrot.slane %v1463, 2
    %v1704 = vrot.slane %v1464, 2
    %v1705 = vrot.slane %v1465, 2
    %v1706 = vrot.slane %v1466, 2
    %v1707 = vrot.slane %v1467, 2
    %v1708 = vrot.slane %v1468, 2
    %v1709 = vrot.slane %v1469, 2
    %v1710 = vrot.slane %v1470, 2
    %v1711 = vrot.slane %v1471, 2
    %v1712 = vrot.slane %v1472, 2
    %v1713 = vrot.slane %v1473, 2
    %v1714 = vrot.slane %v1474, 2
    %v1715 = vrot.slane %v1475, 2
    %v1716 = vrot.slane %v1476, 2
    %v1717 = vrot.slane %v1477, 2
    %v1718 = vrot.slane %v1478, 2
    %v1719 = vrot.slane %v1455, 4
    %v1720 = vrot.slane %v1456, 4
    %v1721 = vrot.slane %v1457, 4
    %v1722 = vrot.slane %v1458, 4
    %v1723 = vrot.slane %v1459, 4
    %v1724 = vrot.slane %v1460, 4
    %v1725 = vrot.slane %v1461, 4
    %v1726 = vrot.slane %v1462, 4
    %v1727 = vrot.slane %v1463, 4
    %v1728 = vrot.slane %v1464, 4
    %v1729 = vrot.slane %v1465, 4
    %v1730 = vrot.slane %v1466, 4
    %v1731 = vrot.slane %v1467, 4
    %v1732 = vrot.slane %v1468, 4
    %v1733 = vrot.slane %v1469, 4
    %v1734 = vrot.slane %v1470, 4
    %v1735 = vrot.slane %v1471, 4
    %v1736 = vrot.slane %v1472, 4
    %v1737 = vrot.slane %v1473, 4
    %v1738 = vrot.slane %v1474, 4
    %v1739 = vrot.slane %v1475, 4
    %v1740 = vrot.slane %v1476, 4
    %v1741 = vrot.slane %v1477, 4
    %v1742 = vrot.slane %v1478, 4
    %v1743 = vrot.slane %v1455, 6
    %v1744 = vrot.slane %v1456, 6
    %v1745 = vrot.slane %v1457, 6
    %v1746 = vrot.slane %v1458, 6
    %v1747 = vrot.slane %v1459, 6
    %v1748 = vrot.slane %v1460, 6
    %v1749 = vrot.slane %v1461, 6
    %v1750 = vrot.slane %v1462, 6
    %v1751 = vrot.slane %v1463, 6
    %v1752 = vrot.slane %v1464, 6
    %v1753 = vrot.slane %v1465, 6
    %v1754 = vrot.slane %v1466, 6
    %v1755 = vrot.slane %v1467, 6
    %v1756 = vrot.slane %v1468, 6
    %v1757 = vrot.slane %v1469, 6
    %v1758 = vrot.slane %v1470, 6
    %v1759 = vrot.slane %v1471, 6
    %v1760 = vrot.slane %v1472, 6
    %v1761 = vrot.slane %v1473, 6
    %v1762 = vrot.slane %v1474, 6
    %v1763 = vrot.slane %v1475, 6
    %v1764 = vrot.slane %v1476, 6
    %v1765 = vrot.slane %v1477, 6
    %v1766 = vrot.slane %v1478, 6
    %v1791 = vrot.slane %v1551, 2
    %v1792 = vrot.slane %v1552, 2
    %v1793 = vrot.slane %v1553, 2
    %v1794 = vrot.slane %v1554, 2
    %v1795 = vrot.slane %v1555, 2
    %v1796 = vrot.slane %v1556, 2
    %v1797 = vrot.slane %v1557, 2
    %v1798 = vrot.slane %v1558, 2
    %v1799 = vrot.slane %v1559, 2
    %v1800 = vrot.slane %v1560, 2
    %v1801 = vrot.slane %v1561, 2
    %v1802 = vrot.slane %v1562, 2
    %v1803 = vrot.slane %v1563, 2
    %v1804 = vrot.slane %v1564, 2
    %v1805 = vrot.slane %v1565, 2
    %v1806 = vrot.slane %v1566, 2
    %v1807 = vrot.slane %v1567, 2
    %v1808 = vrot.slane %v1568, 2
    %v1809 = vrot.slane %v1569, 2
    %v1810 = vrot.slane %v1570, 2
    %v1811 = vrot.slane %v1571, 2
    %v1812 = vrot.slane %v1572, 2
    %v1813 = vrot.slane %v1573, 2
    %v1814 = vrot.slane %v1574, 2
    %v1815 = vrot.slane %v1551, 4
    %v1816 = vrot.slane %v1552, 4
    %v1817 = vrot.slane %v1553, 4
    %v1818 = vrot.slane %v1554, 4
    %v1819 = vrot.slane %v1555, 4
    %v1820 = vrot.slane %v1556, 4
    %v1821 = vrot.slane %v1557, 4
    %v1822 = vrot.slane %v1558, 4
    %v1823 = vrot.slane %v1559, 4
    %v1824 = vrot.slane %v1560, 4
    %v1825 = vrot.slane %v1561, 4
    %v1826 = vrot.slane %v1562, 4
    %v1827 = vrot.slane %v1563, 4
    %v1828 = vrot.slane %v1564, 4
    %v1829 = vrot.slane %v1565, 4
    %v1830 = vrot.slane %v1566, 4
    %v1831 = vrot.slane %v1567, 4
    %v1832 = vrot.slane %v1568, 4
    %v1833 = vrot.slane %v1569, 4
    %v1834 = vrot.slane %v1570, 4
    %v1835 = vrot.slane %v1571, 4
    %v1836 = vrot.slane %v1572, 4
    %v1837 = vrot.slane %v1573, 4
    %v1838 = vrot.slane %v1574, 4
    %v1839 = vrot.slane %v1551, 6
    %v1840 = vrot.slane %v1552, 6
    %v1841 = vrot.slane %v1553, 6
    %v1842 = vrot.slane %v1554, 6
    %v1843 = vrot.slane %v1555, 6
    %v1844 = vrot.slane %v1556, 6
    %v1845 = vrot.slane %v1557, 6
    %v1846 = vrot.slane %v1558, 6
    %v1847 = vrot.slane %v1559, 6
    %v1848 = vrot.slane %v1560, 6
    %v1849 = vrot.slane %v1561, 6
    %v1850 = vrot.slane %v1562, 6
    %v1851 = vrot.slane %v1563, 6
    %v1852 = vrot.slane %v1564, 6
    %v1853 = vrot.slane %v1565, 6
    %v1854 = vrot.slane %v1566, 6
    %v1855 = vrot.slane %v1567, 6
    %v1856 = vrot.slane %v1568, 6
    %v1857 = vrot.slane %v1569, 6
    %v1858 = vrot.slane %v1570, 6
    %v1859 = vrot.slane %v1571, 6
    %v1860 = vrot.slane %v1572, 6
    %v1861 = vrot.slane %v1573, 6
    %v1862 = vrot.slane %v1574, 6
    %v1863 = vld [vmem:[%s3] sm:$0xff]
    %v1864 = vld [vmem:[%s3 + $0x8] sm:$0x3]
    %s1865 = scalar_lea.vmem %s3, 16
    %v1866 = vld [vmem:[%s1865] sm:$0xff]
    %v1867 = vld [vmem:[%s1865 + $0x8] sm:$0x3]
    %v1868 = vrot.slane %v1600, 7
    %vm1869 = vcmask 1041409
    %v1870 = vsel %vm1869, %v1868, %v1599
    %v1871 = vrot.slane %v1601, 6
    %vm1872 = vcmask 1042434
    %v1873 = vsel %vm1872, %v1871, %v1870
    %v1874 = vrot.slane %v1602, 5
    %vm1875 = vcmask 1043459
    %v1876 = vsel %vm1875, %v1874, %v1873
    %v1877 = vrot.slane %v1603, 4
    %vm1878 = vcmask 1044484
    %v1879 = vsel %vm1878, %v1877, %v1876
    %v1880 = vrot.slane %v1604, 3
    %vm1881 = vcmask 1045509
    %v1882 = vsel %vm1881, %v1880, %v1879
    %v1883 = vrot.slane %v1605, 2
    %vm1884 = vcmask 1046534
    %v1885 = vsel %vm1884, %v1883, %v1882
    %v1886 = vrot.slane %v1606, 1
    %vm1887 = vcmask 1047559
    %v1888 = vsel %vm1887, %v1886, %v1885
    %v1889 = vrot.slane %v1624, 7
    %v1890 = vsel %vm1869, %v1889, %v1623
    %v1891 = vrot.slane %v1625, 6
    %v1892 = vsel %vm1872, %v1891, %v1890
    %v1893 = vrot.slane %v1626, 5
    %v1894 = vsel %vm1875, %v1893, %v1892
    %v1895 = vrot.slane %v1627, 4
    %v1896 = vsel %vm1878, %v1895, %v1894
    %v1897 = vrot.slane %v1628, 3
    %v1898 = vsel %vm1881, %v1897, %v1896
    %v1899 = vrot.slane %v1629, 2
    %v1900 = vsel %vm1884, %v1899, %v1898
    %v1901 = vrot.slane %v1630, 1
    %v1902 = vsel %vm1887, %v1901, %v1900
    %v1903 = vrot.slane %v1648, 7
    %v1904 = vsel %vm1869, %v1903, %v1647
    %v1905 = vrot.slane %v1649, 6
    %v1906 = vsel %vm1872, %v1905, %v1904
    %v1907 = vrot.slane %v1650, 5
    %v1908 = vsel %vm1875, %v1907, %v1906
    %v1909 = vrot.slane %v1651, 4
    %v1910 = vsel %vm1878, %v1909, %v1908
    %v1911 = vrot.slane %v1652, 3
    %v1912 = vsel %vm1881, %v1911, %v1910
    %v1913 = vrot.slane %v1653, 2
    %v1914 = vsel %vm1884, %v1913, %v1912
    %v1915 = vrot.slane %v1654, 1
    %v1916 = vsel %vm1887, %v1915, %v1914
    %v1917 = vrot.slane %v1456, 7
    %v1918 = vsel %vm1869, %v1917, %v1455
    %v1919 = vsel %vm1872, %v1745, %v1918
    %v1920 = vrot.slane %v1458, 5
    %v1921 = vsel %vm1875, %v1920, %v1919
    %v1922 = vsel %vm1878, %v1723, %v1921
    %v1923 = vrot.slane %v1460, 3
    %v1924 = vsel %vm1881, %v1923, %v1922
    %v1925 = vsel %vm1884, %v1701, %v1924
    %v1926 = vrot.slane %v1462, 1
    %v1927 = vsel %vm1887, %v1926, %v1925
    %v1928 = vrot.slane %v1696, 7
    %v1929 = vsel %vm1869, %v1928, %v1695
    %v1930 = vrot.slane %v1697, 6
    %v1931 = vsel %vm1872, %v1930, %v1929
    %v1932 = vrot.slane %v1698, 5
    %v1933 = vsel %vm1875, %v1932, %v1931
    %v1934 = vrot.slane %v1699, 4
    %v1935 = vsel %vm1878, %v1934, %v1933
    %v1936 = vrot.slane %v1700, 3
    %v1937 = vsel %vm1881, %v1936, %v1935
    %v1938 = vrot.slane %v1701, 2
    %v1939 = vsel %vm1884, %v1938, %v1937
    %v1940 = vrot.slane %v1702, 1
    %v1941 = vsel %vm1887, %v1940, %v1939
    %v1942 = vrot.slane %v1720, 7
    %v1943 = vsel %vm1869, %v1942, %v1719
    %v1944 = vrot.slane %v1721, 6
    %v1945 = vsel %vm1872, %v1944, %v1943
    %v1946 = vrot.slane %v1722, 5
    %v1947 = vsel %vm1875, %v1946, %v1945
    %v1948 = vrot.slane %v1723, 4
    %v1949 = vsel %vm1878, %v1948, %v1947
    %v1950 = vrot.slane %v1724, 3
    %v1951 = vsel %vm1881, %v1950, %v1949
    %v1952 = vrot.slane %v1725, 2
    %v1953 = vsel %vm1884, %v1952, %v1951
    %v1954 = vrot.slane %v1726, 1
    %v1955 = vsel %vm1887, %v1954, %v1953
    %v1956 = vrot.slane %v1744, 7
    %v1957 = vsel %vm1869, %v1956, %v1743
    %v1958 = vrot.slane %v1745, 6
    %v1959 = vsel %vm1872, %v1958, %v1957
    %v1960 = vrot.slane %v1746, 5
    %v1961 = vsel %vm1875, %v1960, %v1959
    %v1962 = vrot.slane %v1747, 4
    %v1963 = vsel %vm1878, %v1962, %v1961
    %v1964 = vrot.slane %v1748, 3
    %v1965 = vsel %vm1881, %v1964, %v1963
    %v1966 = vrot.slane %v1749, 2
    %v1967 = vsel %vm1884, %v1966, %v1965
    %v1968 = vrot.slane %v1750, 1
    %v1969 = vsel %vm1887, %v1968, %v1967
    %v1970 = vrot.slane %v1552, 7
    %v1971 = vsel %vm1869, %v1970, %v1551
    %v1972 = vsel %vm1872, %v1841, %v1971
    %v1973 = vrot.slane %v1554, 5
    %v1974 = vsel %vm1875, %v1973, %v1972
    %v1975 = vsel %vm1878, %v1819, %v1974
    %v1976 = vrot.slane %v1556, 3
    %v1977 = vsel %vm1881, %v1976, %v1975
    %v1978 = vsel %vm1884, %v1797, %v1977
    %v1979 = vrot.slane %v1558, 1
    %v1980 = vsel %vm1887, %v1979, %v1978
    %v1981 = vrot.slane %v1612, 7
    %v1982 = vsel %vm1869, %v1981, %v1611
    %v1983 = vrot.slane %v1613, 6
    %v1984 = vsel %vm1872, %v1983, %v1982
    %v1985 = vrot.slane %v1614, 5
    %v1986 = vsel %vm1875, %v1985, %v1984
    %v1987 = vrot.slane %v1615, 4
    %v1988 = vsel %vm1878, %v1987, %v1986
    %v1989 = vrot.slane %v1616, 3
    %v1990 = vsel %vm1881, %v1989, %v1988
    %v1991 = vrot.slane %v1617, 2
    %v1992 = vsel %vm1884, %v1991, %v1990
    %v1993 = vrot.slane %v1618, 1
    %v1994 = vsel %vm1887, %v1993, %v1992
    %v1995 = vrot.slane %v1636, 7
    %v1996 = vsel %vm1869, %v1995, %v1635
    %v1997 = vrot.slane %v1637, 6
    %v1998 = vsel %vm1872, %v1997, %v1996
    %v1999 = vrot.slane %v1638, 5
    %v2000 = vsel %vm1875, %v1999, %v1998
    %v2001 = vrot.slane %v1639, 4
    %v2002 = vsel %vm1878, %v2001, %v2000
    %v2003 = vrot.slane %v1640, 3
    %v2004 = vsel %vm1881, %v2003, %v2002
    %v2005 = vrot.slane %v1641, 2
    %v2006 = vsel %vm1884, %v2005, %v2004
    %v2007 = vrot.slane %v1642, 1
    %v2008 = vsel %vm1887, %v2007, %v2006
    %v2009 = vrot.slane %v1660, 7
    %v2010 = vsel %vm1869, %v2009, %v1659
    %v2011 = vrot.slane %v1661, 6
    %v2012 = vsel %vm1872, %v2011, %v2010
    %v2013 = vrot.slane %v1662, 5
    %v2014 = vsel %vm1875, %v2013, %v2012
    %v2015 = vrot.slane %v1663, 4
    %v2016 = vsel %vm1878, %v2015, %v2014
    %v2017 = vrot.slane %v1664, 3
    %v2018 = vsel %vm1881, %v2017, %v2016
    %v2019 = vrot.slane %v1665, 2
    %v2020 = vsel %vm1884, %v2019, %v2018
    %v2021 = vrot.slane %v1666, 1
    %v2022 = vsel %vm1887, %v2021, %v2020
    %v2023 = vrot.slane %v1468, 7
    %v2024 = vsel %vm1869, %v2023, %v1467
    %v2025 = vsel %vm1872, %v1757, %v2024
    %v2026 = vrot.slane %v1470, 5
    %v2027 = vsel %vm1875, %v2026, %v2025
    %v2028 = vsel %vm1878, %v1735, %v2027
    %v2029 = vrot.slane %v1472, 3
    %v2030 = vsel %vm1881, %v2029, %v2028
    %v2031 = vsel %vm1884, %v1713, %v2030
    %v2032 = vrot.slane %v1474, 1
    %v2033 = vsel %vm1887, %v2032, %v2031
    %v2034 = vrot.slane %v1708, 7
    %v2035 = vsel %vm1869, %v2034, %v1707
    %v2036 = vrot.slane %v1709, 6
    %v2037 = vsel %vm1872, %v2036, %v2035
    %v2038 = vrot.slane %v1710, 5
    %v2039 = vsel %vm1875, %v2038, %v2037
    %v2040 = vrot.slane %v1711, 4
    %v2041 = vsel %vm1878, %v2040, %v2039
    %v2042 = vrot.slane %v1712, 3
    %v2043 = vsel %vm1881, %v2042, %v2041
    %v2044 = vrot.slane %v1713, 2
    %v2045 = vsel %vm1884, %v2044, %v2043
    %v2046 = vrot.slane %v1714, 1
    %v2047 = vsel %vm1887, %v2046, %v2045
    %v2048 = vrot.slane %v1732, 7
    %v2049 = vsel %vm1869, %v2048, %v1731
    %v2050 = vrot.slane %v1733, 6
    %v2051 = vsel %vm1872, %v2050, %v2049
    %v2052 = vrot.slane %v1734, 5
    %v2053 = vsel %vm1875, %v2052, %v2051
    %v2054 = vrot.slane %v1735, 4
    %v2055 = vsel %vm1878, %v2054, %v2053
    %v2056 = vrot.slane %v1736, 3
    %v2057 = vsel %vm1881, %v2056, %v2055
    %v2058 = vrot.slane %v1737, 2
    %v2059 = vsel %vm1884, %v2058, %v2057
    %v2060 = vrot.slane %v1738, 1
    %v2061 = vsel %vm1887, %v2060, %v2059
    %v2062 = vrot.slane %v1756, 7
    %v2063 = vsel %vm1869, %v2062, %v1755
    %v2064 = vrot.slane %v1757, 6
    %v2065 = vsel %vm1872, %v2064, %v2063
    %v2066 = vrot.slane %v1758, 5
    %v2067 = vsel %vm1875, %v2066, %v2065
    %v2068 = vrot.slane %v1759, 4
    %v2069 = vsel %vm1878, %v2068, %v2067
    %v2070 = vrot.slane %v1760, 3
    %v2071 = vsel %vm1881, %v2070, %v2069
    %v2072 = vrot.slane %v1761, 2
    %v2073 = vsel %vm1884, %v2072, %v2071
    %v2074 = vrot.slane %v1762, 1
    %v2075 = vsel %vm1887, %v2074, %v2073
    %v2076 = vrot.slane %v1564, 7
    %v2077 = vsel %vm1869, %v2076, %v1563
    %v2078 = vsel %vm1872, %v1853, %v2077
    %v2079 = vrot.slane %v1566, 5
    %v2080 = vsel %vm1875, %v2079, %v2078
    %v2081 = vsel %vm1878, %v1831, %v2080
    %v2082 = vrot.slane %v1568, 3
    %v2083 = vsel %vm1881, %v2082, %v2081
    %v2084 = vsel %vm1884, %v1809, %v2083
    %v2085 = vrot.slane %v1570, 1
    %v2086 = vsel %vm1887, %v2085, %v2084
    %vm2087 = vcmask 80896
    %v2088 = vsel %vm2087, %v1888, 0
    %v2090 = vsel %vm2087, %v1902, 0
    %v2092 = vsel %vm2087, %v1916, 0
    %v2094 = vsel %vm2087, %v1927, 0
    %v2096 = vsel %vm2087, %v1941, 0
    %v2098 = vsel %vm2087, %v1955, 0
    %v2100 = vsel %vm2087, %v1969, 0
    %v2102 = vsel %vm2087, %v1980, 0
    %v2104 = vsel %vm2087, %v1994, 0
    %v2106 = vsel %vm2087, %v2008, 0
    %v2108 = vsel %vm2087, %v2022, 0
    %v2110 = vsel %vm2087, %v2033, 0
    %v2112 = vsel %vm2087, %v2047, 0
    %v2114 = vsel %vm2087, %v2061, 0
    %v2116 = vsel %vm2087, %v2075, 0
    %v2118 = vsel %vm2087, %v2086, 0
    %vm2120 = vcmask 1041408
    %v2122 = vsel %vm2120, %v1867, 0
    %2124 = vmatpush.msra.mxu0 0.0
    %2125 = vmatpush.msra.mxu0 0.0
    %2126 = vmatpush.msra.mxu0 0.0
    %2127 = vmatpush.msra.mxu0 0.0
    %2128 = vmatpush.msra.mxu0 0.0
    %2129 = vmatpush.msra.mxu0 0.0
    %2130 = vmatpush.msra.mxu0 0.0
    %2131 = vmatpush.msra.mxu0 0.0
    %2132 = vmatpush.msra.mxu0 0.0
    %2133 = vmatpush.msra.mxu0 0.0
    %2134 = vmatpush.msra.mxu0 0.0
    %2135 = vmatpush.msra.mxu0 0.0
    %2136 = vmatpush.msra.mxu0 0.0
    %2137 = vmatpush.msra.mxu0 0.0
    %2138 = vmatpush.msra.mxu0 %v2122
    %2139 = vmatpush.msra.mxu0 %v1866
    %2140 = vmatmul.f32.gmra.mxu0 %v2088
    %v2141 = vpop.f32.mrf.mxu0
    %v2142 = vadd.f32 0.0, %v2141
    %2143 = vmatmul.f32.gmra.mxu0 %v2090
    %v2144 = vpop.f32.mrf.mxu0
    %v2145 = vadd.f32 0.0, %v2144
    %2146 = vmatmul.f32.gmra.mxu0 %v2092
    %v2147 = vpop.f32.mrf.mxu0
    %v2148 = vadd.f32 0.0, %v2147
    %2149 = vmatmul.f32.gmra.mxu0 %v2094
    %v2150 = vpop.f32.mrf.mxu0
    %v2151 = vadd.f32 0.0, %v2150
    %2152 = vmatmul.f32.gmra.mxu0 %v2096
    %v2153 = vpop.f32.mrf.mxu0
    %v2154 = vadd.f32 0.0, %v2153
    %2155 = vmatmul.f32.gmra.mxu0 %v2098
    %v2156 = vpop.f32.mrf.mxu0
    %v2157 = vadd.f32 0.0, %v2156
    %2158 = vmatmul.f32.gmra.mxu0 %v2100
    %v2159 = vpop.f32.mrf.mxu0
    %v2160 = vadd.f32 0.0, %v2159
    %2161 = vmatmul.f32.gmra.mxu0 %v2102
    %v2162 = vpop.f32.mrf.mxu0
    %v2163 = vadd.f32 0.0, %v2162
    %2164 = vmatmul.f32.gmra.mxu0 %v2104
    %v2165 = vpop.f32.mrf.mxu0
    %v2166 = vadd.f32 0.0, %v2165
    %2167 = vmatmul.f32.gmra.mxu0 %v2106
    %v2168 = vpop.f32.mrf.mxu0
    %v2169 = vadd.f32 0.0, %v2168
    %2170 = vmatmul.f32.gmra.mxu0 %v2108
    %v2171 = vpop.f32.mrf.mxu0
    %v2172 = vadd.f32 0.0, %v2171
    %2173 = vmatmul.f32.gmra.mxu0 %v2110
    %v2174 = vpop.f32.mrf.mxu0
    %v2175 = vadd.f32 0.0, %v2174
    %2176 = vmatmul.f32.gmra.mxu0 %v2112
    %v2177 = vpop.f32.mrf.mxu0
    %v2178 = vadd.f32 0.0, %v2177
    %2179 = vmatmul.f32.gmra.mxu0 %v2114
    %v2180 = vpop.f32.mrf.mxu0
    %v2181 = vadd.f32 0.0, %v2180
    %2182 = vmatmul.f32.gmra.mxu0 %v2116
    %v2183 = vpop.f32.mrf.mxu0
    %v2184 = vadd.f32 0.0, %v2183
    %2185 = vmatmul.f32.gmra.mxu0 %v2118
    %v2186 = vpop.f32.mrf.mxu0
    %v2187 = vadd.f32 0.0, %v2186
    %2188 = vdwg.mxu0
    %v2189 = vrot.slane %v1360, 7
    %v2190 = vsel %vm1869, %v2189, %v1359
    %v2191 = vsel %vm1872, %v1649, %v2190
    %v2192 = vrot.slane %v1362, 5
    %v2193 = vsel %vm1875, %v2192, %v2191
    %v2194 = vsel %vm1878, %v1627, %v2193
    %v2195 = vrot.slane %v1364, 3
    %v2196 = vsel %vm1881, %v2195, %v2194
    %v2197 = vsel %vm1884, %v1605, %v2196
    %v2198 = vrot.slane %v1366, 1
    %v2199 = vsel %vm1887, %v2198, %v2197
    %v2200 = vrot.slane %v1372, 7
    %v2201 = vsel %vm1869, %v2200, %v1371
    %v2202 = vsel %vm1872, %v1661, %v2201
    %v2203 = vrot.slane %v1374, 5
    %v2204 = vsel %vm1875, %v2203, %v2202
    %v2205 = vsel %vm1878, %v1639, %v2204
    %v2206 = vrot.slane %v1376, 3
    %v2207 = vsel %vm1881, %v2206, %v2205
    %v2208 = vsel %vm1884, %v1617, %v2207
    %v2209 = vrot.slane %v1378, 1
    %v2210 = vsel %vm1887, %v2209, %v2208
    %v2211 = vsel %vm2087, %v2199, 0
    %v2213 = vsel %vm2087, %v2210, 0
    %v2216 = vsel %vm2120, %v1864, 0
    %2218 = vmatpush.msra.mxu0 0.0
    %2219 = vmatpush.msra.mxu0 0.0
    %2220 = vmatpush.msra.mxu0 0.0
    %2221 = vmatpush.msra.mxu0 0.0
    %2222 = vmatpush.msra.mxu0 0.0
    %2223 = vmatpush.msra.mxu0 0.0
    %2224 = vmatpush.msra.mxu0 0.0
    %2225 = vmatpush.msra.mxu0 0.0
    %2226 = vmatpush.msra.mxu0 0.0
    %2227 = vmatpush.msra.mxu0 0.0
    %2228 = vmatpush.msra.mxu0 0.0
    %2229 = vmatpush.msra.mxu0 0.0
    %2230 = vmatpush.msra.mxu0 0.0
    %2231 = vmatpush.msra.mxu0 0.0
    %2232 = vmatpush.msra.mxu0 %v2216
    %2233 = vmatpush.msra.mxu0 %v1863
    %2234 = vmatmul.f32.gmra.mxu0 %v2211
    %v2235 = vpop.f32.mrf.mxu0
    %v2236 = vadd.f32 %v2142, %v2235
    %2237 = vmatmul.f32.gmra.mxu0 %v2088
    %v2238 = vpop.f32.mrf.mxu0
    %v2239 = vadd.f32 %v2145, %v2238
    %2240 = vmatmul.f32.gmra.mxu0 %v2090
    %v2241 = vpop.f32.mrf.mxu0
    %v2242 = vadd.f32 %v2148, %v2241
    %2243 = vmatmul.f32.gmra.mxu0 %v2092
    %v2244 = vpop.f32.mrf.mxu0
    %v2245 = vadd.f32 %v2151, %v2244
    %2246 = vmatmul.f32.gmra.mxu0 %v2094
    %v2247 = vpop.f32.mrf.mxu0
    %v2248 = vadd.f32 %v2154, %v2247
    %2249 = vmatmul.f32.gmra.mxu0 %v2096
    %v2250 = vpop.f32.mrf.mxu0
    %v2251 = vadd.f32 %v2157, %v2250
    %2252 = vmatmul.f32.gmra.mxu0 %v2098
    %v2253 = vpop.f32.mrf.mxu0
    %v2254 = vadd.f32 %v2160, %v2253
    %2255 = vmatmul.f32.gmra.mxu0 %v2100
    %v2256 = vpop.f32.mrf.mxu0
    %v2257 = vadd.f32 %v2163, %v2256
    %2258 = vmatmul.f32.gmra.mxu0 %v2213
    %v2259 = vpop.f32.mrf.mxu0
    %v2260 = vadd.f32 %v2166, %v2259
    %2261 = vmatmul.f32.gmra.mxu0 %v2104
    %v2262 = vpop.f32.mrf.mxu0
    %v2263 = vadd.f32 %v2169, %v2262
    %2264 = vmatmul.f32.gmra.mxu0 %v2106
    %v2265 = vpop.f32.mrf.mxu0
    %v2266 = vadd.f32 %v2172, %v2265
    %2267 = vmatmul.f32.gmra.mxu0 %v2108
    %v2268 = vpop.f32.mrf.mxu0
    %v2269 = vadd.f32 %v2175, %v2268
    %2270 = vmatmul.f32.gmra.mxu0 %v2110
    %v2271 = vpop.f32.mrf.mxu0
    %v2272 = vadd.f32 %v2178, %v2271
    %2273 = vmatmul.f32.gmra.mxu0 %v2112
    %v2274 = vpop.f32.mrf.mxu0
    %v2275 = vadd.f32 %v2181, %v2274
    %2276 = vmatmul.f32.gmra.mxu0 %v2114
    %v2277 = vpop.f32.mrf.mxu0
    %v2278 = vadd.f32 %v2184, %v2277
    %2279 = vmatmul.f32.gmra.mxu0 %v2116
    %v2280 = vpop.f32.mrf.mxu0
    %v2281 = vadd.f32 %v2187, %v2280
    %2282 = vdwg.mxu0
    %s2283 = scalar_lea.vmem %s3, 32
    %v2284 = vld [vmem:[%s2283] sm:$0xff]
    %v2285 = vld [vmem:[%s2283 + $0x8] sm:$0x3]
    %v2286 = vrot.slane %v1792, 7
    %v2287 = vsel %vm1869, %v2286, %v1791
    %v2288 = vrot.slane %v1793, 6
    %v2289 = vsel %vm1872, %v2288, %v2287
    %v2290 = vrot.slane %v1794, 5
    %v2291 = vsel %vm1875, %v2290, %v2289
    %v2292 = vrot.slane %v1795, 4
    %v2293 = vsel %vm1878, %v2292, %v2291
    %v2294 = vrot.slane %v1796, 3
    %v2295 = vsel %vm1881, %v2294, %v2293
    %v2296 = vrot.slane %v1797, 2
    %v2297 = vsel %vm1884, %v2296, %v2295
    %v2298 = vrot.slane %v1798, 1
    %v2299 = vsel %vm1887, %v2298, %v2297
    %v2300 = vrot.slane %v1804, 7
    %v2301 = vsel %vm1869, %v2300, %v1803
    %v2302 = vrot.slane %v1805, 6
    %v2303 = vsel %vm1872, %v2302, %v2301
    %v2304 = vrot.slane %v1806, 5
    %v2305 = vsel %vm1875, %v2304, %v2303
    %v2306 = vrot.slane %v1807, 4
    %v2307 = vsel %vm1878, %v2306, %v2305
    %v2308 = vrot.slane %v1808, 3
    %v2309 = vsel %vm1881, %v2308, %v2307
    %v2310 = vrot.slane %v1809, 2
    %v2311 = vsel %vm1884, %v2310, %v2309
    %v2312 = vrot.slane %v1810, 1
    %v2313 = vsel %vm1887, %v2312, %v2311
    %v2314 = vsel %vm2087, %v2299, 0
    %v2316 = vsel %vm2087, %v2313, 0
    %v2319 = vsel %vm2120, %v2285, 0
    %2321 = vmatpush.msra.mxu0 0.0
    %2322 = vmatpush.msra.mxu0 0.0
    %2323 = vmatpush.msra.mxu0 0.0
    %2324 = vmatpush.msra.mxu0 0.0
    %2325 = vmatpush.msra.mxu0 0.0
    %2326 = vmatpush.msra.mxu0 0.0
    %2327 = vmatpush.msra.mxu0 0.0
    %2328 = vmatpush.msra.mxu0 0.0
    %2329 = vmatpush.msra.mxu0 0.0
    %2330 = vmatpush.msra.mxu0 0.0
    %2331 = vmatpush.msra.mxu0 0.0
    %2332 = vmatpush.msra.mxu0 0.0
    %2333 = vmatpush.msra.mxu0 0.0
    %2334 = vmatpush.msra.mxu0 0.0
    %2335 = vmatpush.msra.mxu0 %v2319
    %2336 = vmatpush.msra.mxu0 %v2284
    %2337 = vmatmul.f32.gmra.mxu0 %v2090
    %v2338 = vpop.f32.mrf.mxu0
    %v2339 = vadd.f32 0.0, %v2338
    %2340 = vmatmul.f32.gmra.mxu0 %v2092
    %v2341 = vpop.f32.mrf.mxu0
    %v2342 = vadd.f32 0.0, %v2341
    %2343 = vmatmul.f32.gmra.mxu0 %v2094
    %v2344 = vpop.f32.mrf.mxu0
    %v2345 = vadd.f32 0.0, %v2344
    %2346 = vmatmul.f32.gmra.mxu0 %v2096
    %v2347 = vpop.f32.mrf.mxu0
    %v2348 = vadd.f32 0.0, %v2347
    %2349 = vmatmul.f32.gmra.mxu0 %v2098
    %v2350 = vpop.f32.mrf.mxu0
    %v2351 = vadd.f32 0.0, %v2350
    %2352 = vmatmul.f32.gmra.mxu0 %v2100
    %v2353 = vpop.f32.mrf.mxu0
    %v2354 = vadd.f32 0.0, %v2353
    %2355 = vmatmul.f32.gmra.mxu0 %v2102
    %v2356 = vpop.f32.mrf.mxu0
    %v2357 = vadd.f32 0.0, %v2356
    %2358 = vmatmul.f32.gmra.mxu0 %v2314
    %v2359 = vpop.f32.mrf.mxu0
    %v2360 = vadd.f32 0.0, %v2359
    %2361 = vmatmul.f32.gmra.mxu0 %v2106
    %v2362 = vpop.f32.mrf.mxu0
    %v2363 = vadd.f32 0.0, %v2362
    %2364 = vmatmul.f32.gmra.mxu0 %v2108
    %v2365 = vpop.f32.mrf.mxu0
    %v2366 = vadd.f32 0.0, %v2365
    %2367 = vmatmul.f32.gmra.mxu0 %v2110
    %v2368 = vpop.f32.mrf.mxu0
    %v2369 = vadd.f32 0.0, %v2368
    %2370 = vmatmul.f32.gmra.mxu0 %v2112
    %v2371 = vpop.f32.mrf.mxu0
    %v2372 = vadd.f32 0.0, %v2371
    %2373 = vmatmul.f32.gmra.mxu0 %v2114
    %v2374 = vpop.f32.mrf.mxu0
    %v2375 = vadd.f32 0.0, %v2374
    %2376 = vmatmul.f32.gmra.mxu0 %v2116
    %v2377 = vpop.f32.mrf.mxu0
    %v2378 = vadd.f32 0.0, %v2377
    %2379 = vmatmul.f32.gmra.mxu0 %v2118
    %v2380 = vpop.f32.mrf.mxu0
    %v2381 = vadd.f32 0.0, %v2380
    %2382 = vmatmul.f32.gmra.mxu0 %v2316
    %v2383 = vpop.f32.mrf.mxu0
    %v2384 = vadd.f32 0.0, %v2383
    %2385 = vdwg.mxu0
    %v2386 = vadd.f32 %v2236, %v2339
    %v2387 = vadd.f32 %v2239, %v2342
    %v2388 = vadd.f32 %v2242, %v2345
    %v2389 = vadd.f32 %v2245, %v2348
    %v2390 = vadd.f32 %v2248, %v2351
    %v2391 = vadd.f32 %v2251, %v2354
    %v2392 = vadd.f32 %v2254, %v2357
    %v2393 = vadd.f32 %v2257, %v2360
    %v2394 = vadd.f32 %v2260, %v2363
    %v2395 = vadd.f32 %v2263, %v2366
    %v2396 = vadd.f32 %v2266, %v2369
    %v2397 = vadd.f32 %v2269, %v2372
    %v2398 = vadd.f32 %v2272, %v2375
    %v2399 = vadd.f32 %v2275, %v2378
    %v2400 = vadd.f32 %v2278, %v2381
    %v2401 = vadd.f32 %v2281, %v2384
    %s2402 = scalar_lea.vmem %s3, 48
    %v2403 = vld [vmem:[%s2402] sm:$0xff]
    %v2404 = vld [vmem:[%s2402 + $0x8] sm:$0x3]
    %v2405 = vrot.slane %v1816, 7
    %v2406 = vsel %vm1869, %v2405, %v1815
    %v2407 = vrot.slane %v1817, 6
    %v2408 = vsel %vm1872, %v2407, %v2406
    %v2409 = vrot.slane %v1818, 5
    %v2410 = vsel %vm1875, %v2409, %v2408
    %v2411 = vrot.slane %v1819, 4
    %v2412 = vsel %vm1878, %v2411, %v2410
    %v2413 = vrot.slane %v1820, 3
    %v2414 = vsel %vm1881, %v2413, %v2412
    %v2415 = vrot.slane %v1821, 2
    %v2416 = vsel %vm1884, %v2415, %v2414
    %v2417 = vrot.slane %v1822, 1
    %v2418 = vsel %vm1887, %v2417, %v2416
    %v2419 = vrot.slane %v1828, 7
    %v2420 = vsel %vm1869, %v2419, %v1827
    %v2421 = vrot.slane %v1829, 6
    %v2422 = vsel %vm1872, %v2421, %v2420
    %v2423 = vrot.slane %v1830, 5
    %v2424 = vsel %vm1875, %v2423, %v2422
    %v2425 = vrot.slane %v1831, 4
    %v2426 = vsel %vm1878, %v2425, %v2424
    %v2427 = vrot.slane %v1832, 3
    %v2428 = vsel %vm1881, %v2427, %v2426
    %v2429 = vrot.slane %v1833, 2
    %v2430 = vsel %vm1884, %v2429, %v2428
    %v2431 = vrot.slane %v1834, 1
    %v2432 = vsel %vm1887, %v2431, %v2430
    %v2433 = vsel %vm2087, %v2418, 0
    %v2435 = vsel %vm2087, %v2432, 0
    %v2438 = vsel %vm2120, %v2404, 0
    %2440 = vmatpush.msra.mxu0 0.0
    %2441 = vmatpush.msra.mxu0 0.0
    %2442 = vmatpush.msra.mxu0 0.0
    %2443 = vmatpush.msra.mxu0 0.0
    %2444 = vmatpush.msra.mxu0 0.0
    %2445 = vmatpush.msra.mxu0 0.0
    %2446 = vmatpush.msra.mxu0 0.0
    %2447 = vmatpush.msra.mxu0 0.0
    %2448 = vmatpush.msra.mxu0 0.0
    %2449 = vmatpush.msra.mxu0 0.0
    %2450 = vmatpush.msra.mxu0 0.0
    %2451 = vmatpush.msra.mxu0 0.0
    %2452 = vmatpush.msra.mxu0 0.0
    %2453 = vmatpush.msra.mxu0 0.0
    %2454 = vmatpush.msra.mxu0 %v2438
    %2455 = vmatpush.msra.mxu0 %v2403
    %2456 = vmatmul.f32.gmra.mxu0 %v2092
    %v2457 = vpop.f32.mrf.mxu0
    %v2458 = vadd.f32 0.0, %v2457
    %2459 = vmatmul.f32.gmra.mxu0 %v2094
    %v2460 = vpop.f32.mrf.mxu0
    %v2461 = vadd.f32 0.0, %v2460
    %2462 = vmatmul.f32.gmra.mxu0 %v2096
    %v2463 = vpop.f32.mrf.mxu0
    %v2464 = vadd.f32 0.0, %v2463
    %2465 = vmatmul.f32.gmra.mxu0 %v2098
    %v2466 = vpop.f32.mrf.mxu0
    %v2467 = vadd.f32 0.0, %v2466
    %2468 = vmatmul.f32.gmra.mxu0 %v2100
    %v2469 = vpop.f32.mrf.mxu0
    %v2470 = vadd.f32 0.0, %v2469
    %2471 = vmatmul.f32.gmra.mxu0 %v2102
    %v2472 = vpop.f32.mrf.mxu0
    %v2473 = vadd.f32 0.0, %v2472
    %2474 = vmatmul.f32.gmra.mxu0 %v2314
    %v2475 = vpop.f32.mrf.mxu0
    %v2476 = vadd.f32 0.0, %v2475
    %2477 = vmatmul.f32.gmra.mxu0 %v2433
    %v2478 = vpop.f32.mrf.mxu0
    %v2479 = vadd.f32 0.0, %v2478
    %2480 = vmatmul.f32.gmra.mxu0 %v2108
    %v2481 = vpop.f32.mrf.mxu0
    %v2482 = vadd.f32 0.0, %v2481
    %2483 = vmatmul.f32.gmra.mxu0 %v2110
    %v2484 = vpop.f32.mrf.mxu0
    %v2485 = vadd.f32 0.0, %v2484
    %2486 = vmatmul.f32.gmra.mxu0 %v2112
    %v2487 = vpop.f32.mrf.mxu0
    %v2488 = vadd.f32 0.0, %v2487
    %2489 = vmatmul.f32.gmra.mxu0 %v2114
    %v2490 = vpop.f32.mrf.mxu0
    %v2491 = vadd.f32 0.0, %v2490
    %2492 = vmatmul.f32.gmra.mxu0 %v2116
    %v2493 = vpop.f32.mrf.mxu0
    %v2494 = vadd.f32 0.0, %v2493
    %2495 = vmatmul.f32.gmra.mxu0 %v2118
    %v2496 = vpop.f32.mrf.mxu0
    %v2497 = vadd.f32 0.0, %v2496
    %2498 = vmatmul.f32.gmra.mxu0 %v2316
    %v2499 = vpop.f32.mrf.mxu0
    %v2500 = vadd.f32 0.0, %v2499
    %2501 = vmatmul.f32.gmra.mxu0 %v2435
    %v2502 = vpop.f32.mrf.mxu0
    %v2503 = vadd.f32 0.0, %v2502
    %2504 = vdwg.mxu0
    %v2505 = vadd.f32 %v2386, %v2458
    %v2506 = vadd.f32 %v2387, %v2461
    %v2507 = vadd.f32 %v2388, %v2464
    %v2508 = vadd.f32 %v2389, %v2467
    %v2509 = vadd.f32 %v2390, %v2470
    %v2510 = vadd.f32 %v2391, %v2473
    %v2511 = vadd.f32 %v2392, %v2476
    %v2512 = vadd.f32 %v2393, %v2479
    %v2513 = vadd.f32 %v2394, %v2482
    %v2514 = vadd.f32 %v2395, %v2485
    %v2515 = vadd.f32 %v2396, %v2488
    %v2516 = vadd.f32 %v2397, %v2491
    %v2517 = vadd.f32 %v2398, %v2494
    %v2518 = vadd.f32 %v2399, %v2497
    %v2519 = vadd.f32 %v2400, %v2500
    %v2520 = vadd.f32 %v2401, %v2503
    %s2521 = scalar_lea.vmem %s3, 64
    %v2522 = vld [vmem:[%s2521] sm:$0xff]
    %v2523 = vld [vmem:[%s2521 + $0x8] sm:$0x3]
    %v2524 = vrot.slane %v1840, 7
    %v2525 = vsel %vm1869, %v2524, %v1839
    %v2526 = vrot.slane %v1841, 6
    %v2527 = vsel %vm1872, %v2526, %v2525
    %v2528 = vrot.slane %v1842, 5
    %v2529 = vsel %vm1875, %v2528, %v2527
    %v2530 = vrot.slane %v1843, 4
    %v2531 = vsel %vm1878, %v2530, %v2529
    %v2532 = vrot.slane %v1844, 3
    %v2533 = vsel %vm1881, %v2532, %v2531
    %v2534 = vrot.slane %v1845, 2
    %v2535 = vsel %vm1884, %v2534, %v2533
    %v2536 = vrot.slane %v1846, 1
    %v2537 = vsel %vm1887, %v2536, %v2535
    %v2538 = vrot.slane %v1852, 7
    %v2539 = vsel %vm1869, %v2538, %v1851
    %v2540 = vrot.slane %v1853, 6
    %v2541 = vsel %vm1872, %v2540, %v2539
    %v2542 = vrot.slane %v1854, 5
    %v2543 = vsel %vm1875, %v2542, %v2541
    %v2544 = vrot.slane %v1855, 4
    %v2545 = vsel %vm1878, %v2544, %v2543
    %v2546 = vrot.slane %v1856, 3
    %v2547 = vsel %vm1881, %v2546, %v2545
    %v2548 = vrot.slane %v1857, 2
    %v2549 = vsel %vm1884, %v2548, %v2547
    %v2550 = vrot.slane %v1858, 1
    %v2551 = vsel %vm1887, %v2550, %v2549
    %v2552 = vsel %vm2087, %v2537, 0
    %v2554 = vsel %vm2087, %v2551, 0
    %v2557 = vsel %vm2120, %v2523, 0
    %2559 = vmatpush.msra.mxu0 0.0
    %2560 = vmatpush.msra.mxu0 0.0
    %2561 = vmatpush.msra.mxu0 0.0
    %2562 = vmatpush.msra.mxu0 0.0
    %2563 = vmatpush.msra.mxu0 0.0
    %2564 = vmatpush.msra.mxu0 0.0
    %2565 = vmatpush.msra.mxu0 0.0
    %2566 = vmatpush.msra.mxu0 0.0
    %2567 = vmatpush.msra.mxu0 0.0
    %2568 = vmatpush.msra.mxu0 0.0
    %2569 = vmatpush.msra.mxu0 0.0
    %2570 = vmatpush.msra.mxu0 0.0
    %2571 = vmatpush.msra.mxu0 0.0
    %2572 = vmatpush.msra.mxu0 0.0
    %2573 = vmatpush.msra.mxu0 %v2557
    %2574 = vmatpush.msra.mxu0 %v2522
    %2575 = vmatmul.f32.gmra.mxu0 %v2094
    %v2576 = vpop.f32.mrf.mxu0
    %v2577 = vadd.f32 0.0, %v2576
    %2578 = vmatmul.f32.gmra.mxu0 %v2096
    %v2579 = vpop.f32.mrf.mxu0
    %v2580 = vadd.f32 0.0, %v2579
    %2581 = vmatmul.f32.gmra.mxu0 %v2098
    %v2582 = vpop.f32.mrf.mxu0
    %v2583 = vadd.f32 0.0, %v2582
    %2584 = vmatmul.f32.gmra.mxu0 %v2100
    %v2585 = vpop.f32.mrf.mxu0
    %v2586 = vadd.f32 0.0, %v2585
    %2587 = vmatmul.f32.gmra.mxu0 %v2102
    %v2588 = vpop.f32.mrf.mxu0
    %v2589 = vadd.f32 0.0, %v2588
    %2590 = vmatmul.f32.gmra.mxu0 %v2314
    %v2591 = vpop.f32.mrf.mxu0
    %v2592 = vadd.f32 0.0, %v2591
    %2593 = vmatmul.f32.gmra.mxu0 %v2433
    %v2594 = vpop.f32.mrf.mxu0
    %v2595 = vadd.f32 0.0, %v2594
    %2596 = vmatmul.f32.gmra.mxu0 %v2552
    %v2597 = vpop.f32.mrf.mxu0
    %v2598 = vadd.f32 0.0, %v2597
    %2599 = vmatmul.f32.gmra.mxu0 %v2110
    %v2600 = vpop.f32.mrf.mxu0
    %v2601 = vadd.f32 0.0, %v2600
    %2602 = vmatmul.f32.gmra.mxu0 %v2112
    %v2603 = vpop.f32.mrf.mxu0
    %v2604 = vadd.f32 0.0, %v2603
    %2605 = vmatmul.f32.gmra.mxu0 %v2114
    %v2606 = vpop.f32.mrf.mxu0
    %v2607 = vadd.f32 0.0, %v2606
    %2608 = vmatmul.f32.gmra.mxu0 %v2116
    %v2609 = vpop.f32.mrf.mxu0
    %v2610 = vadd.f32 0.0, %v2609
    %2611 = vmatmul.f32.gmra.mxu0 %v2118
    %v2612 = vpop.f32.mrf.mxu0
    %v2613 = vadd.f32 0.0, %v2612
    %2614 = vmatmul.f32.gmra.mxu0 %v2316
    %v2615 = vpop.f32.mrf.mxu0
    %v2616 = vadd.f32 0.0, %v2615
    %2617 = vmatmul.f32.gmra.mxu0 %v2435
    %v2618 = vpop.f32.mrf.mxu0
    %v2619 = vadd.f32 0.0, %v2618
    %2620 = vmatmul.f32.gmra.mxu0 %v2554
    %v2621 = vpop.f32.mrf.mxu0
    %v2622 = vadd.f32 0.0, %v2621
    %2623 = vdwg.mxu0
    %v2624 = vadd.f32 %v2505, %v2577
    %v2625 = vadd.f32 %v2506, %v2580
    %v2626 = vadd.f32 %v2507, %v2583
    %v2627 = vadd.f32 %v2508, %v2586
    %v2628 = vadd.f32 %v2509, %v2589
    %v2629 = vadd.f32 %v2510, %v2592
    %v2630 = vadd.f32 %v2511, %v2595
    %v2631 = vadd.f32 %v2512, %v2598
    %v2632 = vadd.f32 %v2513, %v2601
    %v2633 = vadd.f32 %v2514, %v2604
    %v2634 = vadd.f32 %v2515, %v2607
    %v2635 = vadd.f32 %v2516, %v2610
    %v2636 = vadd.f32 %v2517, %v2613
    %v2637 = vadd.f32 %v2518, %v2616
    %v2638 = vadd.f32 %v2519, %v2619
    %v2639 = vadd.f32 %v2520, %v2622
    %s2640 = scalar_lea.vmem %s3, 80
    %v2641 = vld [vmem:[%s2640] sm:$0xff]
    %v2642 = vld [vmem:[%s2640 + $0x8] sm:$0x3]
    %v2643 = vrot.slane %v1361, 7
    %v2644 = vsel %vm1869, %v2643, %v1360
    %v2645 = vsel %vm1872, %v1650, %v2644
    %v2646 = vrot.slane %v1363, 5
    %v2647 = vsel %vm1875, %v2646, %v2645
    %v2648 = vsel %vm1878, %v1628, %v2647
    %v2649 = vrot.slane %v1365, 3
    %v2650 = vsel %vm1881, %v2649, %v2648
    %v2651 = vsel %vm1884, %v1606, %v2650
    %v2652 = vrot.slane %v1367, 1
    %v2653 = vsel %vm1887, %v2652, %v2651
    %v2654 = vrot.slane %v1601, 7
    %v2655 = vsel %vm1869, %v2654, %v1600
    %v2656 = vrot.slane %v1602, 6
    %v2657 = vsel %vm1872, %v2656, %v2655
    %v2658 = vrot.slane %v1603, 5
    %v2659 = vsel %vm1875, %v2658, %v2657
    %v2660 = vrot.slane %v1604, 4
    %v2661 = vsel %vm1878, %v2660, %v2659
    %v2662 = vrot.slane %v1605, 3
    %v2663 = vsel %vm1881, %v2662, %v2661
    %v2664 = vrot.slane %v1606, 2
    %v2665 = vsel %vm1884, %v2664, %v2663
    %v2666 = vrot.slane %v1607, 1
    %v2667 = vsel %vm1887, %v2666, %v2665
    %v2668 = vrot.slane %v1625, 7
    %v2669 = vsel %vm1869, %v2668, %v1624
    %v2670 = vrot.slane %v1626, 6
    %v2671 = vsel %vm1872, %v2670, %v2669
    %v2672 = vrot.slane %v1627, 5
    %v2673 = vsel %vm1875, %v2672, %v2671
    %v2674 = vrot.slane %v1628, 4
    %v2675 = vsel %vm1878, %v2674, %v2673
    %v2676 = vrot.slane %v1629, 3
    %v2677 = vsel %vm1881, %v2676, %v2675
    %v2678 = vrot.slane %v1630, 2
    %v2679 = vsel %vm1884, %v2678, %v2677
    %v2680 = vrot.slane %v1631, 1
    %v2681 = vsel %vm1887, %v2680, %v2679
    %v2682 = vrot.slane %v1649, 7
    %v2683 = vsel %vm1869, %v2682, %v1648
    %v2684 = vrot.slane %v1650, 6
    %v2685 = vsel %vm1872, %v2684, %v2683
    %v2686 = vrot.slane %v1651, 5
    %v2687 = vsel %vm1875, %v2686, %v2685
    %v2688 = vrot.slane %v1652, 4
    %v2689 = vsel %vm1878, %v2688, %v2687
    %v2690 = vrot.slane %v1653, 3
    %v2691 = vsel %vm1881, %v2690, %v2689
    %v2692 = vrot.slane %v1654, 2
    %v2693 = vsel %vm1884, %v2692, %v2691
    %v2694 = vrot.slane %v1655, 1
    %v2695 = vsel %vm1887, %v2694, %v2693
    %v2696 = vrot.slane %v1457, 7
    %v2697 = vsel %vm1869, %v2696, %v1456
    %v2698 = vsel %vm1872, %v1746, %v2697
    %v2699 = vrot.slane %v1459, 5
    %v2700 = vsel %vm1875, %v2699, %v2698
    %v2701 = vsel %vm1878, %v1724, %v2700
    %v2702 = vrot.slane %v1461, 3
    %v2703 = vsel %vm1881, %v2702, %v2701
    %v2704 = vsel %vm1884, %v1702, %v2703
    %v2705 = vrot.slane %v1463, 1
    %v2706 = vsel %vm1887, %v2705, %v2704
    %v2707 = vrot.slane %v1697, 7
    %v2708 = vsel %vm1869, %v2707, %v1696
    %v2709 = vrot.slane %v1698, 6
    %v2710 = vsel %vm1872, %v2709, %v2708
    %v2711 = vrot.slane %v1699, 5
    %v2712 = vsel %vm1875, %v2711, %v2710
    %v2713 = vrot.slane %v1700, 4
    %v2714 = vsel %vm1878, %v2713, %v2712
    %v2715 = vrot.slane %v1701, 3
    %v2716 = vsel %vm1881, %v2715, %v2714
    %v2717 = vrot.slane %v1702, 2
    %v2718 = vsel %vm1884, %v2717, %v2716
    %v2719 = vrot.slane %v1703, 1
    %v2720 = vsel %vm1887, %v2719, %v2718
    %v2721 = vrot.slane %v1721, 7
    %v2722 = vsel %vm1869, %v2721, %v1720
    %v2723 = vrot.slane %v1722, 6
    %v2724 = vsel %vm1872, %v2723, %v2722
    %v2725 = vrot.slane %v1723, 5
    %v2726 = vsel %vm1875, %v2725, %v2724
    %v2727 = vrot.slane %v1724, 4
    %v2728 = vsel %vm1878, %v2727, %v2726
    %v2729 = vrot.slane %v1725, 3
    %v2730 = vsel %vm1881, %v2729, %v2728
    %v2731 = vrot.slane %v1726, 2
    %v2732 = vsel %vm1884, %v2731, %v2730
    %v2733 = vrot.slane %v1727, 1
    %v2734 = vsel %vm1887, %v2733, %v2732
    %v2735 = vrot.slane %v1745, 7
    %v2736 = vsel %vm1869, %v2735, %v1744
    %v2737 = vrot.slane %v1746, 6
    %v2738 = vsel %vm1872, %v2737, %v2736
    %v2739 = vrot.slane %v1747, 5
    %v2740 = vsel %vm1875, %v2739, %v2738
    %v2741 = vrot.slane %v1748, 4
    %v2742 = vsel %vm1878, %v2741, %v2740
    %v2743 = vrot.slane %v1749, 3
    %v2744 = vsel %vm1881, %v2743, %v2742
    %v2745 = vrot.slane %v1750, 2
    %v2746 = vsel %vm1884, %v2745, %v2744
    %v2747 = vrot.slane %v1751, 1
    %v2748 = vsel %vm1887, %v2747, %v2746
    %v2749 = vrot.slane %v1373, 7
    %v2750 = vsel %vm1869, %v2749, %v1372
    %v2751 = vsel %vm1872, %v1662, %v2750
    %v2752 = vrot.slane %v1375, 5
    %v2753 = vsel %vm1875, %v2752, %v2751
    %v2754 = vsel %vm1878, %v1640, %v2753
    %v2755 = vrot.slane %v1377, 3
    %v2756 = vsel %vm1881, %v2755, %v2754
    %v2757 = vsel %vm1884, %v1618, %v2756
    %v2758 = vrot.slane %v1379, 1
    %v2759 = vsel %vm1887, %v2758, %v2757
    %v2760 = vrot.slane %v1613, 7
    %v2761 = vsel %vm1869, %v2760, %v1612
    %v2762 = vrot.slane %v1614, 6
    %v2763 = vsel %vm1872, %v2762, %v2761
    %v2764 = vrot.slane %v1615, 5
    %v2765 = vsel %vm1875, %v2764, %v2763
    %v2766 = vrot.slane %v1616, 4
    %v2767 = vsel %vm1878, %v2766, %v2765
    %v2768 = vrot.slane %v1617, 3
    %v2769 = vsel %vm1881, %v2768, %v2767
    %v2770 = vrot.slane %v1618, 2
    %v2771 = vsel %vm1884, %v2770, %v2769
    %v2772 = vrot.slane %v1619, 1
    %v2773 = vsel %vm1887, %v2772, %v2771
    %v2774 = vrot.slane %v1637, 7
    %v2775 = vsel %vm1869, %v2774, %v1636
    %v2776 = vrot.slane %v1638, 6
    %v2777 = vsel %vm1872, %v2776, %v2775
    %v2778 = vrot.slane %v1639, 5
    %v2779 = vsel %vm1875, %v2778, %v2777
    %v2780 = vrot.slane %v1640, 4
    %v2781 = vsel %vm1878, %v2780, %v2779
    %v2782 = vrot.slane %v1641, 3
    %v2783 = vsel %vm1881, %v2782, %v2781
    %v2784 = vrot.slane %v1642, 2
    %v2785 = vsel %vm1884, %v2784, %v2783
    %v2786 = vrot.slane %v1643, 1
    %v2787 = vsel %vm1887, %v2786, %v2785
    %v2788 = vrot.slane %v1661, 7
    %v2789 = vsel %vm1869, %v2788, %v1660
    %v2790 = vrot.slane %v1662, 6
    %v2791 = vsel %vm1872, %v2790, %v2789
    %v2792 = vrot.slane %v1663, 5
    %v2793 = vsel %vm1875, %v2792, %v2791
    %v2794 = vrot.slane %v1664, 4
    %v2795 = vsel %vm1878, %v2794, %v2793
    %v2796 = vrot.slane %v1665, 3
    %v2797 = vsel %vm1881, %v2796, %v2795
    %v2798 = vrot.slane %v1666, 2
    %v2799 = vsel %vm1884, %v2798, %v2797
    %v2800 = vrot.slane %v1667, 1
    %v2801 = vsel %vm1887, %v2800, %v2799
    %v2802 = vrot.slane %v1469, 7
    %v2803 = vsel %vm1869, %v2802, %v1468
    %v2804 = vsel %vm1872, %v1758, %v2803
    %v2805 = vrot.slane %v1471, 5
    %v2806 = vsel %vm1875, %v2805, %v2804
    %v2807 = vsel %vm1878, %v1736, %v2806
    %v2808 = vrot.slane %v1473, 3
    %v2809 = vsel %vm1881, %v2808, %v2807
    %v2810 = vsel %vm1884, %v1714, %v2809
    %v2811 = vrot.slane %v1475, 1
    %v2812 = vsel %vm1887, %v2811, %v2810
    %v2813 = vrot.slane %v1709, 7
    %v2814 = vsel %vm1869, %v2813, %v1708
    %v2815 = vrot.slane %v1710, 6
    %v2816 = vsel %vm1872, %v2815, %v2814
    %v2817 = vrot.slane %v1711, 5
    %v2818 = vsel %vm1875, %v2817, %v2816
    %v2819 = vrot.slane %v1712, 4
    %v2820 = vsel %vm1878, %v2819, %v2818
    %v2821 = vrot.slane %v1713, 3
    %v2822 = vsel %vm1881, %v2821, %v2820
    %v2823 = vrot.slane %v1714, 2
    %v2824 = vsel %vm1884, %v2823, %v2822
    %v2825 = vrot.slane %v1715, 1
    %v2826 = vsel %vm1887, %v2825, %v2824
    %v2827 = vrot.slane %v1733, 7
    %v2828 = vsel %vm1869, %v2827, %v1732
    %v2829 = vrot.slane %v1734, 6
    %v2830 = vsel %vm1872, %v2829, %v2828
    %v2831 = vrot.slane %v1735, 5
    %v2832 = vsel %vm1875, %v2831, %v2830
    %v2833 = vrot.slane %v1736, 4
    %v2834 = vsel %vm1878, %v2833, %v2832
    %v2835 = vrot.slane %v1737, 3
    %v2836 = vsel %vm1881, %v2835, %v2834
    %v2837 = vrot.slane %v1738, 2
    %v2838 = vsel %vm1884, %v2837, %v2836
    %v2839 = vrot.slane %v1739, 1
    %v2840 = vsel %vm1887, %v2839, %v2838
    %v2841 = vrot.slane %v1757, 7
    %v2842 = vsel %vm1869, %v2841, %v1756
    %v2843 = vrot.slane %v1758, 6
    %v2844 = vsel %vm1872, %v2843, %v2842
    %v2845 = vrot.slane %v1759, 5
    %v2846 = vsel %vm1875, %v2845, %v2844
    %v2847 = vrot.slane %v1760, 4
    %v2848 = vsel %vm1878, %v2847, %v2846
    %v2849 = vrot.slane %v1761, 3
    %v2850 = vsel %vm1881, %v2849, %v2848
    %v2851 = vrot.slane %v1762, 2
    %v2852 = vsel %vm1884, %v2851, %v2850
    %v2853 = vrot.slane %v1763, 1
    %v2854 = vsel %vm1887, %v2853, %v2852
    %v2855 = vsel %vm2087, %v2653, 0
    %v2857 = vsel %vm2087, %v2667, 0
    %v2859 = vsel %vm2087, %v2681, 0
    %v2861 = vsel %vm2087, %v2695, 0
    %v2863 = vsel %vm2087, %v2706, 0
    %v2865 = vsel %vm2087, %v2720, 0
    %v2867 = vsel %vm2087, %v2734, 0
    %v2869 = vsel %vm2087, %v2748, 0
    %v2871 = vsel %vm2087, %v2759, 0
    %v2873 = vsel %vm2087, %v2773, 0
    %v2875 = vsel %vm2087, %v2787, 0
    %v2877 = vsel %vm2087, %v2801, 0
    %v2879 = vsel %vm2087, %v2812, 0
    %v2881 = vsel %vm2087, %v2826, 0
    %v2883 = vsel %vm2087, %v2840, 0
    %v2885 = vsel %vm2087, %v2854, 0
    %v2888 = vsel %vm2120, %v2642, 0
    %2890 = vmatpush.msra.mxu0 0.0
    %2891 = vmatpush.msra.mxu0 0.0
    %2892 = vmatpush.msra.mxu0 0.0
    %2893 = vmatpush.msra.mxu0 0.0
    %2894 = vmatpush.msra.mxu0 0.0
    %2895 = vmatpush.msra.mxu0 0.0
    %2896 = vmatpush.msra.mxu0 0.0
    %2897 = vmatpush.msra.mxu0 0.0
    %2898 = vmatpush.msra.mxu0 0.0
    %2899 = vmatpush.msra.mxu0 0.0
    %2900 = vmatpush.msra.mxu0 0.0
    %2901 = vmatpush.msra.mxu0 0.0
    %2902 = vmatpush.msra.mxu0 0.0
    %2903 = vmatpush.msra.mxu0 0.0
    %2904 = vmatpush.msra.mxu0 %v2888
    %2905 = vmatpush.msra.mxu0 %v2641
    %2906 = vmatmul.f32.gmra.mxu0 %v2855
    %v2907 = vpop.f32.mrf.mxu0
    %v2908 = vadd.f32 0.0, %v2907
    %2909 = vmatmul.f32.gmra.mxu0 %v2857
    %v2910 = vpop.f32.mrf.mxu0
    %v2911 = vadd.f32 0.0, %v2910
    %2912 = vmatmul.f32.gmra.mxu0 %v2859
    %v2913 = vpop.f32.mrf.mxu0
    %v2914 = vadd.f32 0.0, %v2913
    %2915 = vmatmul.f32.gmra.mxu0 %v2861
    %v2916 = vpop.f32.mrf.mxu0
    %v2917 = vadd.f32 0.0, %v2916
    %2918 = vmatmul.f32.gmra.mxu0 %v2863
    %v2919 = vpop.f32.mrf.mxu0
    %v2920 = vadd.f32 0.0, %v2919
    %2921 = vmatmul.f32.gmra.mxu0 %v2865
    %v2922 = vpop.f32.mrf.mxu0
    %v2923 = vadd.f32 0.0, %v2922
    %2924 = vmatmul.f32.gmra.mxu0 %v2867
    %v2925 = vpop.f32.mrf.mxu0
    %v2926 = vadd.f32 0.0, %v2925
    %2927 = vmatmul.f32.gmra.mxu0 %v2869
    %v2928 = vpop.f32.mrf.mxu0
    %v2929 = vadd.f32 0.0, %v2928
    %2930 = vmatmul.f32.gmra.mxu0 %v2871
    %v2931 = vpop.f32.mrf.mxu0
    %v2932 = vadd.f32 0.0, %v2931
    %2933 = vmatmul.f32.gmra.mxu0 %v2873
    %v2934 = vpop.f32.mrf.mxu0
    %v2935 = vadd.f32 0.0, %v2934
    %2936 = vmatmul.f32.gmra.mxu0 %v2875
    %v2937 = vpop.f32.mrf.mxu0
    %v2938 = vadd.f32 0.0, %v2937
    %2939 = vmatmul.f32.gmra.mxu0 %v2877
    %v2940 = vpop.f32.mrf.mxu0
    %v2941 = vadd.f32 0.0, %v2940
    %2942 = vmatmul.f32.gmra.mxu0 %v2879
    %v2943 = vpop.f32.mrf.mxu0
    %v2944 = vadd.f32 0.0, %v2943
    %2945 = vmatmul.f32.gmra.mxu0 %v2881
    %v2946 = vpop.f32.mrf.mxu0
    %v2947 = vadd.f32 0.0, %v2946
    %2948 = vmatmul.f32.gmra.mxu0 %v2883
    %v2949 = vpop.f32.mrf.mxu0
    %v2950 = vadd.f32 0.0, %v2949
    %2951 = vmatmul.f32.gmra.mxu0 %v2885
    %v2952 = vpop.f32.mrf.mxu0
    %v2953 = vadd.f32 0.0, %v2952
    %2954 = vdwg.mxu0
    %v2955 = vadd.f32 %v2624, %v2908
    %v2956 = vadd.f32 %v2625, %v2911
    %v2957 = vadd.f32 %v2626, %v2914
    %v2958 = vadd.f32 %v2627, %v2917
    %v2959 = vadd.f32 %v2628, %v2920
    %v2960 = vadd.f32 %v2629, %v2923
    %v2961 = vadd.f32 %v2630, %v2926
    %v2962 = vadd.f32 %v2631, %v2929
    %v2963 = vadd.f32 %v2632, %v2932
    %v2964 = vadd.f32 %v2633, %v2935
    %v2965 = vadd.f32 %v2634, %v2938
    %v2966 = vadd.f32 %v2635, %v2941
    %v2967 = vadd.f32 %v2636, %v2944
    %v2968 = vadd.f32 %v2637, %v2947
    %v2969 = vadd.f32 %v2638, %v2950
    %v2970 = vadd.f32 %v2639, %v2953
    %s2971 = scalar_lea.vmem %s3, 96
    %v2972 = vld [vmem:[%s2971] sm:$0xff]
    %v2973 = vld [vmem:[%s2971 + $0x8] sm:$0x3]
    %v2974 = vrot.slane %v1553, 7
    %v2975 = vsel %vm1869, %v2974, %v1552
    %v2976 = vsel %vm1872, %v1842, %v2975
    %v2977 = vrot.slane %v1555, 5
    %v2978 = vsel %vm1875, %v2977, %v2976
    %v2979 = vsel %vm1878, %v1820, %v2978
    %v2980 = vrot.slane %v1557, 3
    %v2981 = vsel %vm1881, %v2980, %v2979
    %v2982 = vsel %vm1884, %v1798, %v2981
    %v2983 = vrot.slane %v1559, 1
    %v2984 = vsel %vm1887, %v2983, %v2982
    %v2985 = vrot.slane %v1565, 7
    %v2986 = vsel %vm1869, %v2985, %v1564
    %v2987 = vsel %vm1872, %v1854, %v2986
    %v2988 = vrot.slane %v1567, 5
    %v2989 = vsel %vm1875, %v2988, %v2987
    %v2990 = vsel %vm1878, %v1832, %v2989
    %v2991 = vrot.slane %v1569, 3
    %v2992 = vsel %vm1881, %v2991, %v2990
    %v2993 = vsel %vm1884, %v1810, %v2992
    %v2994 = vrot.slane %v1571, 1
    %v2995 = vsel %vm1887, %v2994, %v2993
    %v2996 = vsel %vm2087, %v2984, 0
    %v2998 = vsel %vm2087, %v2995, 0
    %v3001 = vsel %vm2120, %v2973, 0
    %3003 = vmatpush.msra.mxu0 0.0
    %3004 = vmatpush.msra.mxu0 0.0
    %3005 = vmatpush.msra.mxu0 0.0
    %3006 = vmatpush.msra.mxu0 0.0
    %3007 = vmatpush.msra.mxu0 0.0
    %3008 = vmatpush.msra.mxu0 0.0
    %3009 = vmatpush.msra.mxu0 0.0
    %3010 = vmatpush.msra.mxu0 0.0
    %3011 = vmatpush.msra.mxu0 0.0
    %3012 = vmatpush.msra.mxu0 0.0
    %3013 = vmatpush.msra.mxu0 0.0
    %3014 = vmatpush.msra.mxu0 0.0
    %3015 = vmatpush.msra.mxu0 0.0
    %3016 = vmatpush.msra.mxu0 0.0
    %3017 = vmatpush.msra.mxu0 %v3001
    %3018 = vmatpush.msra.mxu0 %v2972
    %3019 = vmatmul.f32.gmra.mxu0 %v2857
    %v3020 = vpop.f32.mrf.mxu0
    %v3021 = vadd.f32 0.0, %v3020
    %3022 = vmatmul.f32.gmra.mxu0 %v2859
    %v3023 = vpop.f32.mrf.mxu0
    %v3024 = vadd.f32 0.0, %v3023
    %3025 = vmatmul.f32.gmra.mxu0 %v2861
    %v3026 = vpop.f32.mrf.mxu0
    %v3027 = vadd.f32 0.0, %v3026
    %3028 = vmatmul.f32.gmra.mxu0 %v2863
    %v3029 = vpop.f32.mrf.mxu0
    %v3030 = vadd.f32 0.0, %v3029
    %3031 = vmatmul.f32.gmra.mxu0 %v2865
    %v3032 = vpop.f32.mrf.mxu0
    %v3033 = vadd.f32 0.0, %v3032
    %3034 = vmatmul.f32.gmra.mxu0 %v2867
    %v3035 = vpop.f32.mrf.mxu0
    %v3036 = vadd.f32 0.0, %v3035
    %3037 = vmatmul.f32.gmra.mxu0 %v2869
    %v3038 = vpop.f32.mrf.mxu0
    %v3039 = vadd.f32 0.0, %v3038
    %3040 = vmatmul.f32.gmra.mxu0 %v2996
    %v3041 = vpop.f32.mrf.mxu0
    %v3042 = vadd.f32 0.0, %v3041
    %3043 = vmatmul.f32.gmra.mxu0 %v2873
    %v3044 = vpop.f32.mrf.mxu0
    %v3045 = vadd.f32 0.0, %v3044
    %3046 = vmatmul.f32.gmra.mxu0 %v2875
    %v3047 = vpop.f32.mrf.mxu0
    %v3048 = vadd.f32 0.0, %v3047
    %3049 = vmatmul.f32.gmra.mxu0 %v2877
    %v3050 = vpop.f32.mrf.mxu0
    %v3051 = vadd.f32 0.0, %v3050
    %3052 = vmatmul.f32.gmra.mxu0 %v2879
    %v3053 = vpop.f32.mrf.mxu0
    %v3054 = vadd.f32 0.0, %v3053
    %3055 = vmatmul.f32.gmra.mxu0 %v2881
    %v3056 = vpop.f32.mrf.mxu0
    %v3057 = vadd.f32 0.0, %v3056
    %3058 = vmatmul.f32.gmra.mxu0 %v2883
    %v3059 = vpop.f32.mrf.mxu0
    %v3060 = vadd.f32 0.0, %v3059
    %3061 = vmatmul.f32.gmra.mxu0 %v2885
    %v3062 = vpop.f32.mrf.mxu0
    %v3063 = vadd.f32 0.0, %v3062
    %3064 = vmatmul.f32.gmra.mxu0 %v2998
    %v3065 = vpop.f32.mrf.mxu0
    %v3066 = vadd.f32 0.0, %v3065
    %3067 = vdwg.mxu0
    %v3068 = vadd.f32 %v2955, %v3021
    %v3069 = vadd.f32 %v2956, %v3024
    %v3070 = vadd.f32 %v2957, %v3027
    %v3071 = vadd.f32 %v2958, %v3030
    %v3072 = vadd.f32 %v2959, %v3033
    %v3073 = vadd.f32 %v2960, %v3036
    %v3074 = vadd.f32 %v2961, %v3039
    %v3075 = vadd.f32 %v2962, %v3042
    %v3076 = vadd.f32 %v2963, %v3045
    %v3077 = vadd.f32 %v2964, %v3048
    %v3078 = vadd.f32 %v2965, %v3051
    %v3079 = vadd.f32 %v2966, %v3054
    %v3080 = vadd.f32 %v2967, %v3057
    %v3081 = vadd.f32 %v2968, %v3060
    %v3082 = vadd.f32 %v2969, %v3063
    %v3083 = vadd.f32 %v2970, %v3066
    %s3084 = scalar_lea.vmem %s3, 112
    %v3085 = vld [vmem:[%s3084] sm:$0xff]
    %v3086 = vld [vmem:[%s3084 + $0x8] sm:$0x3]
    %v3087 = vrot.slane %v1793, 7
    %v3088 = vsel %vm1869, %v3087, %v1792
    %v3089 = vrot.slane %v1794, 6
    %v3090 = vsel %vm1872, %v3089, %v3088
    %v3091 = vrot.slane %v1795, 5
    %v3092 = vsel %vm1875, %v3091, %v3090
    %v3093 = vrot.slane %v1796, 4
    %v3094 = vsel %vm1878, %v3093, %v3092
    %v3095 = vrot.slane %v1797, 3
    %v3096 = vsel %vm1881, %v3095, %v3094
    %v3097 = vrot.slane %v1798, 2
    %v3098 = vsel %vm1884, %v3097, %v3096
    %v3099 = vrot.slane %v1799, 1
    %v3100 = vsel %vm1887, %v3099, %v3098
    %v3101 = vrot.slane %v1805, 7
    %v3102 = vsel %vm1869, %v3101, %v1804
    %v3103 = vrot.slane %v1806, 6
    %v3104 = vsel %vm1872, %v3103, %v3102
    %v3105 = vrot.slane %v1807, 5
    %v3106 = vsel %vm1875, %v3105, %v3104
    %v3107 = vrot.slane %v1808, 4
    %v3108 = vsel %vm1878, %v3107, %v3106
    %v3109 = vrot.slane %v1809, 3
    %v3110 = vsel %vm1881, %v3109, %v3108
    %v3111 = vrot.slane %v1810, 2
    %v3112 = vsel %vm1884, %v3111, %v3110
    %v3113 = vrot.slane %v1811, 1
    %v3114 = vsel %vm1887, %v3113, %v3112
    %v3115 = vsel %vm2087, %v3100, 0
    %v3117 = vsel %vm2087, %v3114, 0
    %v3120 = vsel %vm2120, %v3086, 0
    %3122 = vmatpush.msra.mxu0 0.0
    %3123 = vmatpush.msra.mxu0 0.0
    %3124 = vmatpush.msra.mxu0 0.0
    %3125 = vmatpush.msra.mxu0 0.0
    %3126 = vmatpush.msra.mxu0 0.0
    %3127 = vmatpush.msra.mxu0 0.0
    %3128 = vmatpush.msra.mxu0 0.0
    %3129 = vmatpush.msra.mxu0 0.0
    %3130 = vmatpush.msra.mxu0 0.0
    %3131 = vmatpush.msra.mxu0 0.0
    %3132 = vmatpush.msra.mxu0 0.0
    %3133 = vmatpush.msra.mxu0 0.0
    %3134 = vmatpush.msra.mxu0 0.0
    %3135 = vmatpush.msra.mxu0 0.0
    %3136 = vmatpush.msra.mxu0 %v3120
    %3137 = vmatpush.msra.mxu0 %v3085
    %3138 = vmatmul.f32.gmra.mxu0 %v2859
    %v3139 = vpop.f32.mrf.mxu0
    %v3140 = vadd.f32 0.0, %v3139
    %3141 = vmatmul.f32.gmra.mxu0 %v2861
    %v3142 = vpop.f32.mrf.mxu0
    %v3143 = vadd.f32 0.0, %v3142
    %3144 = vmatmul.f32.gmra.mxu0 %v2863
    %v3145 = vpop.f32.mrf.mxu0
    %v3146 = vadd.f32 0.0, %v3145
    %3147 = vmatmul.f32.gmra.mxu0 %v2865
    %v3148 = vpop.f32.mrf.mxu0
    %v3149 = vadd.f32 0.0, %v3148
    %3150 = vmatmul.f32.gmra.mxu0 %v2867
    %v3151 = vpop.f32.mrf.mxu0
    %v3152 = vadd.f32 0.0, %v3151
    %3153 = vmatmul.f32.gmra.mxu0 %v2869
    %v3154 = vpop.f32.mrf.mxu0
    %v3155 = vadd.f32 0.0, %v3154
    %3156 = vmatmul.f32.gmra.mxu0 %v2996
    %v3157 = vpop.f32.mrf.mxu0
    %v3158 = vadd.f32 0.0, %v3157
    %3159 = vmatmul.f32.gmra.mxu0 %v3115
    %v3160 = vpop.f32.mrf.mxu0
    %v3161 = vadd.f32 0.0, %v3160
    %3162 = vmatmul.f32.gmra.mxu0 %v2875
    %v3163 = vpop.f32.mrf.mxu0
    %v3164 = vadd.f32 0.0, %v3163
    %3165 = vmatmul.f32.gmra.mxu0 %v2877
    %v3166 = vpop.f32.mrf.mxu0
    %v3167 = vadd.f32 0.0, %v3166
    %3168 = vmatmul.f32.gmra.mxu0 %v2879
    %v3169 = vpop.f32.mrf.mxu0
    %v3170 = vadd.f32 0.0, %v3169
    %3171 = vmatmul.f32.gmra.mxu0 %v2881
    %v3172 = vpop.f32.mrf.mxu0
    %v3173 = vadd.f32 0.0, %v3172
    %3174 = vmatmul.f32.gmra.mxu0 %v2883
    %v3175 = vpop.f32.mrf.mxu0
    %v3176 = vadd.f32 0.0, %v3175
    %3177 = vmatmul.f32.gmra.mxu0 %v2885
    %v3178 = vpop.f32.mrf.mxu0
    %v3179 = vadd.f32 0.0, %v3178
    %3180 = vmatmul.f32.gmra.mxu0 %v2998
    %v3181 = vpop.f32.mrf.mxu0
    %v3182 = vadd.f32 0.0, %v3181
    %3183 = vmatmul.f32.gmra.mxu0 %v3117
    %v3184 = vpop.f32.mrf.mxu0
    %v3185 = vadd.f32 0.0, %v3184
    %3186 = vdwg.mxu0
    %v3187 = vadd.f32 %v3068, %v3140
    %v3188 = vadd.f32 %v3069, %v3143
    %v3189 = vadd.f32 %v3070, %v3146
    %v3190 = vadd.f32 %v3071, %v3149
    %v3191 = vadd.f32 %v3072, %v3152
    %v3192 = vadd.f32 %v3073, %v3155
    %v3193 = vadd.f32 %v3074, %v3158
    %v3194 = vadd.f32 %v3075, %v3161
    %v3195 = vadd.f32 %v3076, %v3164
    %v3196 = vadd.f32 %v3077, %v3167
    %v3197 = vadd.f32 %v3078, %v3170
    %v3198 = vadd.f32 %v3079, %v3173
    %v3199 = vadd.f32 %v3080, %v3176
    %v3200 = vadd.f32 %v3081, %v3179
    %v3201 = vadd.f32 %v3082, %v3182
    %v3202 = vadd.f32 %v3083, %v3185
    %s3203 = scalar_lea.vmem %s3, 128
    %v3204 = vld [vmem:[%s3203] sm:$0xff]
    %v3205 = vld [vmem:[%s3203 + $0x8] sm:$0x3]
    %v3206 = vrot.slane %v1817, 7
    %v3207 = vsel %vm1869, %v3206, %v1816
    %v3208 = vrot.slane %v1818, 6
    %v3209 = vsel %vm1872, %v3208, %v3207
    %v3210 = vrot.slane %v1819, 5
    %v3211 = vsel %vm1875, %v3210, %v3209
    %v3212 = vrot.slane %v1820, 4
    %v3213 = vsel %vm1878, %v3212, %v3211
    %v3214 = vrot.slane %v1821, 3
    %v3215 = vsel %vm1881, %v3214, %v3213
    %v3216 = vrot.slane %v1822, 2
    %v3217 = vsel %vm1884, %v3216, %v3215
    %v3218 = vrot.slane %v1823, 1
    %v3219 = vsel %vm1887, %v3218, %v3217
    %v3220 = vrot.slane %v1829, 7
    %v3221 = vsel %vm1869, %v3220, %v1828
    %v3222 = vrot.slane %v1830, 6
    %v3223 = vsel %vm1872, %v3222, %v3221
    %v3224 = vrot.slane %v1831, 5
    %v3225 = vsel %vm1875, %v3224, %v3223
    %v3226 = vrot.slane %v1832, 4
    %v3227 = vsel %vm1878, %v3226, %v3225
    %v3228 = vrot.slane %v1833, 3
    %v3229 = vsel %vm1881, %v3228, %v3227
    %v3230 = vrot.slane %v1834, 2
    %v3231 = vsel %vm1884, %v3230, %v3229
    %v3232 = vrot.slane %v1835, 1
    %v3233 = vsel %vm1887, %v3232, %v3231
    %v3234 = vsel %vm2087, %v3219, 0
    %v3236 = vsel %vm2087, %v3233, 0
    %v3239 = vsel %vm2120, %v3205, 0
    %3241 = vmatpush.msra.mxu0 0.0
    %3242 = vmatpush.msra.mxu0 0.0
    %3243 = vmatpush.msra.mxu0 0.0
    %3244 = vmatpush.msra.mxu0 0.0
    %3245 = vmatpush.msra.mxu0 0.0
    %3246 = vmatpush.msra.mxu0 0.0
    %3247 = vmatpush.msra.mxu0 0.0
    %3248 = vmatpush.msra.mxu0 0.0
    %3249 = vmatpush.msra.mxu0 0.0
    %3250 = vmatpush.msra.mxu0 0.0
    %3251 = vmatpush.msra.mxu0 0.0
    %3252 = vmatpush.msra.mxu0 0.0
    %3253 = vmatpush.msra.mxu0 0.0
    %3254 = vmatpush.msra.mxu0 0.0
    %3255 = vmatpush.msra.mxu0 %v3239
    %3256 = vmatpush.msra.mxu0 %v3204
    %3257 = vmatmul.f32.gmra.mxu0 %v2861
    %v3258 = vpop.f32.mrf.mxu0
    %v3259 = vadd.f32 0.0, %v3258
    %3260 = vmatmul.f32.gmra.mxu0 %v2863
    %v3261 = vpop.f32.mrf.mxu0
    %v3262 = vadd.f32 0.0, %v3261
    %3263 = vmatmul.f32.gmra.mxu0 %v2865
    %v3264 = vpop.f32.mrf.mxu0
    %v3265 = vadd.f32 0.0, %v3264
    %3266 = vmatmul.f32.gmra.mxu0 %v2867
    %v3267 = vpop.f32.mrf.mxu0
    %v3268 = vadd.f32 0.0, %v3267
    %3269 = vmatmul.f32.gmra.mxu0 %v2869
    %v3270 = vpop.f32.mrf.mxu0
    %v3271 = vadd.f32 0.0, %v3270
    %3272 = vmatmul.f32.gmra.mxu0 %v2996
    %v3273 = vpop.f32.mrf.mxu0
    %v3274 = vadd.f32 0.0, %v3273
    %3275 = vmatmul.f32.gmra.mxu0 %v3115
    %v3276 = vpop.f32.mrf.mxu0
    %v3277 = vadd.f32 0.0, %v3276
    %3278 = vmatmul.f32.gmra.mxu0 %v3234
    %v3279 = vpop.f32.mrf.mxu0
    %v3280 = vadd.f32 0.0, %v3279
    %3281 = vmatmul.f32.gmra.mxu0 %v2877
    %v3282 = vpop.f32.mrf.mxu0
    %v3283 = vadd.f32 0.0, %v3282
    %3284 = vmatmul.f32.gmra.mxu0 %v2879
    %v3285 = vpop.f32.mrf.mxu0
    %v3286 = vadd.f32 0.0, %v3285
    %3287 = vmatmul.f32.gmra.mxu0 %v2881
    %v3288 = vpop.f32.mrf.mxu0
    %v3289 = vadd.f32 0.0, %v3288
    %3290 = vmatmul.f32.gmra.mxu0 %v2883
    %v3291 = vpop.f32.mrf.mxu0
    %v3292 = vadd.f32 0.0, %v3291
    %3293 = vmatmul.f32.gmra.mxu0 %v2885
    %v3294 = vpop.f32.mrf.mxu0
    %v3295 = vadd.f32 0.0, %v3294
    %3296 = vmatmul.f32.gmra.mxu0 %v2998
    %v3297 = vpop.f32.mrf.mxu0
    %v3298 = vadd.f32 0.0, %v3297
    %3299 = vmatmul.f32.gmra.mxu0 %v3117
    %v3300 = vpop.f32.mrf.mxu0
    %v3301 = vadd.f32 0.0, %v3300
    %3302 = vmatmul.f32.gmra.mxu0 %v3236
    %v3303 = vpop.f32.mrf.mxu0
    %v3304 = vadd.f32 0.0, %v3303
    %3305 = vdwg.mxu0
    %v3306 = vadd.f32 %v3187, %v3259
    %v3307 = vadd.f32 %v3188, %v3262
    %v3308 = vadd.f32 %v3189, %v3265
    %v3309 = vadd.f32 %v3190, %v3268
    %v3310 = vadd.f32 %v3191, %v3271
    %v3311 = vadd.f32 %v3192, %v3274
    %v3312 = vadd.f32 %v3193, %v3277
    %v3313 = vadd.f32 %v3194, %v3280
    %v3314 = vadd.f32 %v3195, %v3283
    %v3315 = vadd.f32 %v3196, %v3286
    %v3316 = vadd.f32 %v3197, %v3289
    %v3317 = vadd.f32 %v3198, %v3292
    %v3318 = vadd.f32 %v3199, %v3295
    %v3319 = vadd.f32 %v3200, %v3298
    %v3320 = vadd.f32 %v3201, %v3301
    %v3321 = vadd.f32 %v3202, %v3304
    %s3322 = scalar_lea.vmem %s3, 144
    %v3323 = vld [vmem:[%s3322] sm:$0xff]
    %v3324 = vld [vmem:[%s3322 + $0x8] sm:$0x3]
    %v3325 = vrot.slane %v1841, 7
    %v3326 = vsel %vm1869, %v3325, %v1840
    %v3327 = vrot.slane %v1842, 6
    %v3328 = vsel %vm1872, %v3327, %v3326
    %v3329 = vrot.slane %v1843, 5
    %v3330 = vsel %vm1875, %v3329, %v3328
    %v3331 = vrot.slane %v1844, 4
    %v3332 = vsel %vm1878, %v3331, %v3330
    %v3333 = vrot.slane %v1845, 3
    %v3334 = vsel %vm1881, %v3333, %v3332
    %v3335 = vrot.slane %v1846, 2
    %v3336 = vsel %vm1884, %v3335, %v3334
    %v3337 = vrot.slane %v1847, 1
    %v3338 = vsel %vm1887, %v3337, %v3336
    %v3339 = vrot.slane %v1853, 7
    %v3340 = vsel %vm1869, %v3339, %v1852
    %v3341 = vrot.slane %v1854, 6
    %v3342 = vsel %vm1872, %v3341, %v3340
    %v3343 = vrot.slane %v1855, 5
    %v3344 = vsel %vm1875, %v3343, %v3342
    %v3345 = vrot.slane %v1856, 4
    %v3346 = vsel %vm1878, %v3345, %v3344
    %v3347 = vrot.slane %v1857, 3
    %v3348 = vsel %vm1881, %v3347, %v3346
    %v3349 = vrot.slane %v1858, 2
    %v3350 = vsel %vm1884, %v3349, %v3348
    %v3351 = vrot.slane %v1859, 1
    %v3352 = vsel %vm1887, %v3351, %v3350
    %v3353 = vsel %vm2087, %v3338, 0
    %v3355 = vsel %vm2087, %v3352, 0
    %v3358 = vsel %vm2120, %v3324, 0
    %3360 = vmatpush.msra.mxu0 0.0
    %3361 = vmatpush.msra.mxu0 0.0
    %3362 = vmatpush.msra.mxu0 0.0
    %3363 = vmatpush.msra.mxu0 0.0
    %3364 = vmatpush.msra.mxu0 0.0
    %3365 = vmatpush.msra.mxu0 0.0
    %3366 = vmatpush.msra.mxu0 0.0
    %3367 = vmatpush.msra.mxu0 0.0
    %3368 = vmatpush.msra.mxu0 0.0
    %3369 = vmatpush.msra.mxu0 0.0
    %3370 = vmatpush.msra.mxu0 0.0
    %3371 = vmatpush.msra.mxu0 0.0
    %3372 = vmatpush.msra.mxu0 0.0
    %3373 = vmatpush.msra.mxu0 0.0
    %3374 = vmatpush.msra.mxu0 %v3358
    %3375 = vmatpush.msra.mxu0 %v3323
    %3376 = vmatmul.f32.gmra.mxu0 %v2863
    %v3377 = vpop.f32.mrf.mxu0
    %v3378 = vadd.f32 0.0, %v3377
    %3379 = vmatmul.f32.gmra.mxu0 %v2865
    %v3380 = vpop.f32.mrf.mxu0
    %v3381 = vadd.f32 0.0, %v3380
    %3382 = vmatmul.f32.gmra.mxu0 %v2867
    %v3383 = vpop.f32.mrf.mxu0
    %v3384 = vadd.f32 0.0, %v3383
    %3385 = vmatmul.f32.gmra.mxu0 %v2869
    %v3386 = vpop.f32.mrf.mxu0
    %v3387 = vadd.f32 0.0, %v3386
    %3388 = vmatmul.f32.gmra.mxu0 %v2996
    %v3389 = vpop.f32.mrf.mxu0
    %v3390 = vadd.f32 0.0, %v3389
    %3391 = vmatmul.f32.gmra.mxu0 %v3115
    %v3392 = vpop.f32.mrf.mxu0
    %v3393 = vadd.f32 0.0, %v3392
    %3394 = vmatmul.f32.gmra.mxu0 %v3234
    %v3395 = vpop.f32.mrf.mxu0
    %v3396 = vadd.f32 0.0, %v3395
    %3397 = vmatmul.f32.gmra.mxu0 %v3353
    %v3398 = vpop.f32.mrf.mxu0
    %v3399 = vadd.f32 0.0, %v3398
    %3400 = vmatmul.f32.gmra.mxu0 %v2879
    %v3401 = vpop.f32.mrf.mxu0
    %v3402 = vadd.f32 0.0, %v3401
    %3403 = vmatmul.f32.gmra.mxu0 %v2881
    %v3404 = vpop.f32.mrf.mxu0
    %v3405 = vadd.f32 0.0, %v3404
    %3406 = vmatmul.f32.gmra.mxu0 %v2883
    %v3407 = vpop.f32.mrf.mxu0
    %v3408 = vadd.f32 0.0, %v3407
    %3409 = vmatmul.f32.gmra.mxu0 %v2885
    %v3410 = vpop.f32.mrf.mxu0
    %v3411 = vadd.f32 0.0, %v3410
    %3412 = vmatmul.f32.gmra.mxu0 %v2998
    %v3413 = vpop.f32.mrf.mxu0
    %v3414 = vadd.f32 0.0, %v3413
    %3415 = vmatmul.f32.gmra.mxu0 %v3117
    %v3416 = vpop.f32.mrf.mxu0
    %v3417 = vadd.f32 0.0, %v3416
    %3418 = vmatmul.f32.gmra.mxu0 %v3236
    %v3419 = vpop.f32.mrf.mxu0
    %v3420 = vadd.f32 0.0, %v3419
    %3421 = vmatmul.f32.gmra.mxu0 %v3355
    %v3422 = vpop.f32.mrf.mxu0
    %v3423 = vadd.f32 0.0, %v3422
    %3424 = vdwg.mxu0
    %v3425 = vadd.f32 %v3306, %v3378
    %v3426 = vadd.f32 %v3307, %v3381
    %v3427 = vadd.f32 %v3308, %v3384
    %v3428 = vadd.f32 %v3309, %v3387
    %v3429 = vadd.f32 %v3310, %v3390
    %v3430 = vadd.f32 %v3311, %v3393
    %v3431 = vadd.f32 %v3312, %v3396
    %v3432 = vadd.f32 %v3313, %v3399
    %v3433 = vadd.f32 %v3314, %v3402
    %v3434 = vadd.f32 %v3315, %v3405
    %v3435 = vadd.f32 %v3316, %v3408
    %v3436 = vadd.f32 %v3317, %v3411
    %v3437 = vadd.f32 %v3318, %v3414
    %v3438 = vadd.f32 %v3319, %v3417
    %v3439 = vadd.f32 %v3320, %v3420
    %v3440 = vadd.f32 %v3321, %v3423
    %s3441 = scalar_lea.vmem %s3, 160
    %v3442 = vld [vmem:[%s3441] sm:$0xff]
    %v3443 = vld [vmem:[%s3441 + $0x8] sm:$0x3]
    %v3444 = vrot.slane %v1362, 7
    %v3445 = vsel %vm1869, %v3444, %v1361
    %v3446 = vsel %vm1872, %v1651, %v3445
    %v3447 = vrot.slane %v1364, 5
    %v3448 = vsel %vm1875, %v3447, %v3446
    %v3449 = vsel %vm1878, %v1629, %v3448
    %v3450 = vrot.slane %v1366, 3
    %v3451 = vsel %vm1881, %v3450, %v3449
    %v3452 = vsel %vm1884, %v1607, %v3451
    %v3453 = vrot.slane %v1368, 1
    %v3454 = vsel %vm1887, %v3453, %v3452
    %v3455 = vrot.slane %v1602, 7
    %v3456 = vsel %vm1869, %v3455, %v1601
    %v3457 = vrot.slane %v1603, 6
    %v3458 = vsel %vm1872, %v3457, %v3456
    %v3459 = vrot.slane %v1604, 5
    %v3460 = vsel %vm1875, %v3459, %v3458
    %v3461 = vrot.slane %v1605, 4
    %v3462 = vsel %vm1878, %v3461, %v3460
    %v3463 = vrot.slane %v1606, 3
    %v3464 = vsel %vm1881, %v3463, %v3462
    %v3465 = vrot.slane %v1607, 2
    %v3466 = vsel %vm1884, %v3465, %v3464
    %v3467 = vrot.slane %v1608, 1
    %v3468 = vsel %vm1887, %v3467, %v3466
    %v3469 = vrot.slane %v1626, 7
    %v3470 = vsel %vm1869, %v3469, %v1625
    %v3471 = vrot.slane %v1627, 6
    %v3472 = vsel %vm1872, %v3471, %v3470
    %v3473 = vrot.slane %v1628, 5
    %v3474 = vsel %vm1875, %v3473, %v3472
    %v3475 = vrot.slane %v1629, 4
    %v3476 = vsel %vm1878, %v3475, %v3474
    %v3477 = vrot.slane %v1630, 3
    %v3478 = vsel %vm1881, %v3477, %v3476
    %v3479 = vrot.slane %v1631, 2
    %v3480 = vsel %vm1884, %v3479, %v3478
    %v3481 = vrot.slane %v1632, 1
    %v3482 = vsel %vm1887, %v3481, %v3480
    %v3483 = vrot.slane %v1650, 7
    %v3484 = vsel %vm1869, %v3483, %v1649
    %v3485 = vrot.slane %v1651, 6
    %v3486 = vsel %vm1872, %v3485, %v3484
    %v3487 = vrot.slane %v1652, 5
    %v3488 = vsel %vm1875, %v3487, %v3486
    %v3489 = vrot.slane %v1653, 4
    %v3490 = vsel %vm1878, %v3489, %v3488
    %v3491 = vrot.slane %v1654, 3
    %v3492 = vsel %vm1881, %v3491, %v3490
    %v3493 = vrot.slane %v1655, 2
    %v3494 = vsel %vm1884, %v3493, %v3492
    %v3495 = vrot.slane %v1656, 1
    %v3496 = vsel %vm1887, %v3495, %v3494
    %v3497 = vrot.slane %v1458, 7
    %v3498 = vsel %vm1869, %v3497, %v1457
    %v3499 = vsel %vm1872, %v1747, %v3498
    %v3500 = vrot.slane %v1460, 5
    %v3501 = vsel %vm1875, %v3500, %v3499
    %v3502 = vsel %vm1878, %v1725, %v3501
    %v3503 = vrot.slane %v1462, 3
    %v3504 = vsel %vm1881, %v3503, %v3502
    %v3505 = vsel %vm1884, %v1703, %v3504
    %v3506 = vrot.slane %v1464, 1
    %v3507 = vsel %vm1887, %v3506, %v3505
    %v3508 = vrot.slane %v1698, 7
    %v3509 = vsel %vm1869, %v3508, %v1697
    %v3510 = vrot.slane %v1699, 6
    %v3511 = vsel %vm1872, %v3510, %v3509
    %v3512 = vrot.slane %v1700, 5
    %v3513 = vsel %vm1875, %v3512, %v3511
    %v3514 = vrot.slane %v1701, 4
    %v3515 = vsel %vm1878, %v3514, %v3513
    %v3516 = vrot.slane %v1702, 3
    %v3517 = vsel %vm1881, %v3516, %v3515
    %v3518 = vrot.slane %v1703, 2
    %v3519 = vsel %vm1884, %v3518, %v3517
    %v3520 = vrot.slane %v1704, 1
    %v3521 = vsel %vm1887, %v3520, %v3519
    %v3522 = vrot.slane %v1722, 7
    %v3523 = vsel %vm1869, %v3522, %v1721
    %v3524 = vrot.slane %v1723, 6
    %v3525 = vsel %vm1872, %v3524, %v3523
    %v3526 = vrot.slane %v1724, 5
    %v3527 = vsel %vm1875, %v3526, %v3525
    %v3528 = vrot.slane %v1725, 4
    %v3529 = vsel %vm1878, %v3528, %v3527
    %v3530 = vrot.slane %v1726, 3
    %v3531 = vsel %vm1881, %v3530, %v3529
    %v3532 = vrot.slane %v1727, 2
    %v3533 = vsel %vm1884, %v3532, %v3531
    %v3534 = vrot.slane %v1728, 1
    %v3535 = vsel %vm1887, %v3534, %v3533
    %v3536 = vrot.slane %v1746, 7
    %v3537 = vsel %vm1869, %v3536, %v1745
    %v3538 = vrot.slane %v1747, 6
    %v3539 = vsel %vm1872, %v3538, %v3537
    %v3540 = vrot.slane %v1748, 5
    %v3541 = vsel %vm1875, %v3540, %v3539
    %v3542 = vrot.slane %v1749, 4
    %v3543 = vsel %vm1878, %v3542, %v3541
    %v3544 = vrot.slane %v1750, 3
    %v3545 = vsel %vm1881, %v3544, %v3543
    %v3546 = vrot.slane %v1751, 2
    %v3547 = vsel %vm1884, %v3546, %v3545
    %v3548 = vrot.slane %v1752, 1
    %v3549 = vsel %vm1887, %v3548, %v3547
    %v3550 = vrot.slane %v1374, 7
    %v3551 = vsel %vm1869, %v3550, %v1373
    %v3552 = vsel %vm1872, %v1663, %v3551
    %v3553 = vrot.slane %v1376, 5
    %v3554 = vsel %vm1875, %v3553, %v3552
    %v3555 = vsel %vm1878, %v1641, %v3554
    %v3556 = vrot.slane %v1378, 3
    %v3557 = vsel %vm1881, %v3556, %v3555
    %v3558 = vsel %vm1884, %v1619, %v3557
    %v3559 = vrot.slane %v1380, 1
    %v3560 = vsel %vm1887, %v3559, %v3558
    %v3561 = vrot.slane %v1614, 7
    %v3562 = vsel %vm1869, %v3561, %v1613
    %v3563 = vrot.slane %v1615, 6
    %v3564 = vsel %vm1872, %v3563, %v3562
    %v3565 = vrot.slane %v1616, 5
    %v3566 = vsel %vm1875, %v3565, %v3564
    %v3567 = vrot.slane %v1617, 4
    %v3568 = vsel %vm1878, %v3567, %v3566
    %v3569 = vrot.slane %v1618, 3
    %v3570 = vsel %vm1881, %v3569, %v3568
    %v3571 = vrot.slane %v1619, 2
    %v3572 = vsel %vm1884, %v3571, %v3570
    %v3573 = vrot.slane %v1620, 1
    %v3574 = vsel %vm1887, %v3573, %v3572
    %v3575 = vrot.slane %v1638, 7
    %v3576 = vsel %vm1869, %v3575, %v1637
    %v3577 = vrot.slane %v1639, 6
    %v3578 = vsel %vm1872, %v3577, %v3576
    %v3579 = vrot.slane %v1640, 5
    %v3580 = vsel %vm1875, %v3579, %v3578
    %v3581 = vrot.slane %v1641, 4
    %v3582 = vsel %vm1878, %v3581, %v3580
    %v3583 = vrot.slane %v1642, 3
    %v3584 = vsel %vm1881, %v3583, %v3582
    %v3585 = vrot.slane %v1643, 2
    %v3586 = vsel %vm1884, %v3585, %v3584
    %v3587 = vrot.slane %v1644, 1
    %v3588 = vsel %vm1887, %v3587, %v3586
    %v3589 = vrot.slane %v1662, 7
    %v3590 = vsel %vm1869, %v3589, %v1661
    %v3591 = vrot.slane %v1663, 6
    %v3592 = vsel %vm1872, %v3591, %v3590
    %v3593 = vrot.slane %v1664, 5
    %v3594 = vsel %vm1875, %v3593, %v3592
    %v3595 = vrot.slane %v1665, 4
    %v3596 = vsel %vm1878, %v3595, %v3594
    %v3597 = vrot.slane %v1666, 3
    %v3598 = vsel %vm1881, %v3597, %v3596
    %v3599 = vrot.slane %v1667, 2
    %v3600 = vsel %vm1884, %v3599, %v3598
    %v3601 = vrot.slane %v1668, 1
    %v3602 = vsel %vm1887, %v3601, %v3600
    %v3603 = vrot.slane %v1470, 7
    %v3604 = vsel %vm1869, %v3603, %v1469
    %v3605 = vsel %vm1872, %v1759, %v3604
    %v3606 = vrot.slane %v1472, 5
    %v3607 = vsel %vm1875, %v3606, %v3605
    %v3608 = vsel %vm1878, %v1737, %v3607
    %v3609 = vrot.slane %v1474, 3
    %v3610 = vsel %vm1881, %v3609, %v3608
    %v3611 = vsel %vm1884, %v1715, %v3610
    %v3612 = vrot.slane %v1476, 1
    %v3613 = vsel %vm1887, %v3612, %v3611
    %v3614 = vrot.slane %v1710, 7
    %v3615 = vsel %vm1869, %v3614, %v1709
    %v3616 = vrot.slane %v1711, 6
    %v3617 = vsel %vm1872, %v3616, %v3615
    %v3618 = vrot.slane %v1712, 5
    %v3619 = vsel %vm1875, %v3618, %v3617
    %v3620 = vrot.slane %v1713, 4
    %v3621 = vsel %vm1878, %v3620, %v3619
    %v3622 = vrot.slane %v1714, 3
    %v3623 = vsel %vm1881, %v3622, %v3621
    %v3624 = vrot.slane %v1715, 2
    %v3625 = vsel %vm1884, %v3624, %v3623
    %v3626 = vrot.slane %v1716, 1
    %v3627 = vsel %vm1887, %v3626, %v3625
    %v3628 = vrot.slane %v1734, 7
    %v3629 = vsel %vm1869, %v3628, %v1733
    %v3630 = vrot.slane %v1735, 6
    %v3631 = vsel %vm1872, %v3630, %v3629
    %v3632 = vrot.slane %v1736, 5
    %v3633 = vsel %vm1875, %v3632, %v3631
    %v3634 = vrot.slane %v1737, 4
    %v3635 = vsel %vm1878, %v3634, %v3633
    %v3636 = vrot.slane %v1738, 3
    %v3637 = vsel %vm1881, %v3636, %v3635
    %v3638 = vrot.slane %v1739, 2
    %v3639 = vsel %vm1884, %v3638, %v3637
    %v3640 = vrot.slane %v1740, 1
    %v3641 = vsel %vm1887, %v3640, %v3639
    %v3642 = vrot.slane %v1758, 7
    %v3643 = vsel %vm1869, %v3642, %v1757
    %v3644 = vrot.slane %v1759, 6
    %v3645 = vsel %vm1872, %v3644, %v3643
    %v3646 = vrot.slane %v1760, 5
    %v3647 = vsel %vm1875, %v3646, %v3645
    %v3648 = vrot.slane %v1761, 4
    %v3649 = vsel %vm1878, %v3648, %v3647
    %v3650 = vrot.slane %v1762, 3
    %v3651 = vsel %vm1881, %v3650, %v3649
    %v3652 = vrot.slane %v1763, 2
    %v3653 = vsel %vm1884, %v3652, %v3651
    %v3654 = vrot.slane %v1764, 1
    %v3655 = vsel %vm1887, %v3654, %v3653
    %v3656 = vsel %vm2087, %v3454, 0
    %v3658 = vsel %vm2087, %v3468, 0
    %v3660 = vsel %vm2087, %v3482, 0
    %v3662 = vsel %vm2087, %v3496, 0
    %v3664 = vsel %vm2087, %v3507, 0
    %v3666 = vsel %vm2087, %v3521, 0
    %v3668 = vsel %vm2087, %v3535, 0
    %v3670 = vsel %vm2087, %v3549, 0
    %v3672 = vsel %vm2087, %v3560, 0
    %v3674 = vsel %vm2087, %v3574, 0
    %v3676 = vsel %vm2087, %v3588, 0
    %v3678 = vsel %vm2087, %v3602, 0
    %v3680 = vsel %vm2087, %v3613, 0
    %v3682 = vsel %vm2087, %v3627, 0
    %v3684 = vsel %vm2087, %v3641, 0
    %v3686 = vsel %vm2087, %v3655, 0
    %v3689 = vsel %vm2120, %v3443, 0
    %3691 = vmatpush.msra.mxu0 0.0
    %3692 = vmatpush.msra.mxu0 0.0
    %3693 = vmatpush.msra.mxu0 0.0
    %3694 = vmatpush.msra.mxu0 0.0
    %3695 = vmatpush.msra.mxu0 0.0
    %3696 = vmatpush.msra.mxu0 0.0
    %3697 = vmatpush.msra.mxu0 0.0
    %3698 = vmatpush.msra.mxu0 0.0
    %3699 = vmatpush.msra.mxu0 0.0
    %3700 = vmatpush.msra.mxu0 0.0
    %3701 = vmatpush.msra.mxu0 0.0
    %3702 = vmatpush.msra.mxu0 0.0
    %3703 = vmatpush.msra.mxu0 0.0
    %3704 = vmatpush.msra.mxu0 0.0
    %3705 = vmatpush.msra.mxu0 %v3689
    %3706 = vmatpush.msra.mxu0 %v3442
    %3707 = vmatmul.f32.gmra.mxu0 %v3656
    %v3708 = vpop.f32.mrf.mxu0
    %v3709 = vadd.f32 0.0, %v3708
    %3710 = vmatmul.f32.gmra.mxu0 %v3658
    %v3711 = vpop.f32.mrf.mxu0
    %v3712 = vadd.f32 0.0, %v3711
    %3713 = vmatmul.f32.gmra.mxu0 %v3660
    %v3714 = vpop.f32.mrf.mxu0
    %v3715 = vadd.f32 0.0, %v3714
    %3716 = vmatmul.f32.gmra.mxu0 %v3662
    %v3717 = vpop.f32.mrf.mxu0
    %v3718 = vadd.f32 0.0, %v3717
    %3719 = vmatmul.f32.gmra.mxu0 %v3664
    %v3720 = vpop.f32.mrf.mxu0
    %v3721 = vadd.f32 0.0, %v3720
    %3722 = vmatmul.f32.gmra.mxu0 %v3666
    %v3723 = vpop.f32.mrf.mxu0
    %v3724 = vadd.f32 0.0, %v3723
    %3725 = vmatmul.f32.gmra.mxu0 %v3668
    %v3726 = vpop.f32.mrf.mxu0
    %v3727 = vadd.f32 0.0, %v3726
    %3728 = vmatmul.f32.gmra.mxu0 %v3670
    %v3729 = vpop.f32.mrf.mxu0
    %v3730 = vadd.f32 0.0, %v3729
    %3731 = vmatmul.f32.gmra.mxu0 %v3672
    %v3732 = vpop.f32.mrf.mxu0
    %v3733 = vadd.f32 0.0, %v3732
    %3734 = vmatmul.f32.gmra.mxu0 %v3674
    %v3735 = vpop.f32.mrf.mxu0
    %v3736 = vadd.f32 0.0, %v3735
    %3737 = vmatmul.f32.gmra.mxu0 %v3676
    %v3738 = vpop.f32.mrf.mxu0
    %v3739 = vadd.f32 0.0, %v3738
    %3740 = vmatmul.f32.gmra.mxu0 %v3678
    %v3741 = vpop.f32.mrf.mxu0
    %v3742 = vadd.f32 0.0, %v3741
    %3743 = vmatmul.f32.gmra.mxu0 %v3680
    %v3744 = vpop.f32.mrf.mxu0
    %v3745 = vadd.f32 0.0, %v3744
    %3746 = vmatmul.f32.gmra.mxu0 %v3682
    %v3747 = vpop.f32.mrf.mxu0
    %v3748 = vadd.f32 0.0, %v3747
    %3749 = vmatmul.f32.gmra.mxu0 %v3684
    %v3750 = vpop.f32.mrf.mxu0
    %v3751 = vadd.f32 0.0, %v3750
    %3752 = vmatmul.f32.gmra.mxu0 %v3686
    %v3753 = vpop.f32.mrf.mxu0
    %v3754 = vadd.f32 0.0, %v3753
    %3755 = vdwg.mxu0
    %v3756 = vadd.f32 %v3425, %v3709
    %v3757 = vadd.f32 %v3426, %v3712
    %v3758 = vadd.f32 %v3427, %v3715
    %v3759 = vadd.f32 %v3428, %v3718
    %v3760 = vadd.f32 %v3429, %v3721
    %v3761 = vadd.f32 %v3430, %v3724
    %v3762 = vadd.f32 %v3431, %v3727
    %v3763 = vadd.f32 %v3432, %v3730
    %v3764 = vadd.f32 %v3433, %v3733
    %v3765 = vadd.f32 %v3434, %v3736
    %v3766 = vadd.f32 %v3435, %v3739
    %v3767 = vadd.f32 %v3436, %v3742
    %v3768 = vadd.f32 %v3437, %v3745
    %v3769 = vadd.f32 %v3438, %v3748
    %v3770 = vadd.f32 %v3439, %v3751
    %v3771 = vadd.f32 %v3440, %v3754
    %s3772 = scalar_lea.vmem %s3, 176
    %v3773 = vld [vmem:[%s3772] sm:$0xff]
    %v3774 = vld [vmem:[%s3772 + $0x8] sm:$0x3]
    %v3775 = vrot.slane %v1554, 7
    %v3776 = vsel %vm1869, %v3775, %v1553
    %v3777 = vsel %vm1872, %v1843, %v3776
    %v3778 = vrot.slane %v1556, 5
    %v3779 = vsel %vm1875, %v3778, %v3777
    %v3780 = vsel %vm1878, %v1821, %v3779
    %v3781 = vrot.slane %v1558, 3
    %v3782 = vsel %vm1881, %v3781, %v3780
    %v3783 = vsel %vm1884, %v1799, %v3782
    %v3784 = vrot.slane %v1560, 1
    %v3785 = vsel %vm1887, %v3784, %v3783
    %v3786 = vrot.slane %v1566, 7
    %v3787 = vsel %vm1869, %v3786, %v1565
    %v3788 = vsel %vm1872, %v1855, %v3787
    %v3789 = vrot.slane %v1568, 5
    %v3790 = vsel %vm1875, %v3789, %v3788
    %v3791 = vsel %vm1878, %v1833, %v3790
    %v3792 = vrot.slane %v1570, 3
    %v3793 = vsel %vm1881, %v3792, %v3791
    %v3794 = vsel %vm1884, %v1811, %v3793
    %v3795 = vrot.slane %v1572, 1
    %v3796 = vsel %vm1887, %v3795, %v3794
    %v3797 = vsel %vm2087, %v3785, 0
    %v3799 = vsel %vm2087, %v3796, 0
    %v3802 = vsel %vm2120, %v3774, 0
    %3804 = vmatpush.msra.mxu0 0.0
    %3805 = vmatpush.msra.mxu0 0.0
    %3806 = vmatpush.msra.mxu0 0.0
    %3807 = vmatpush.msra.mxu0 0.0
    %3808 = vmatpush.msra.mxu0 0.0
    %3809 = vmatpush.msra.mxu0 0.0
    %3810 = vmatpush.msra.mxu0 0.0
    %3811 = vmatpush.msra.mxu0 0.0
    %3812 = vmatpush.msra.mxu0 0.0
    %3813 = vmatpush.msra.mxu0 0.0
    %3814 = vmatpush.msra.mxu0 0.0
    %3815 = vmatpush.msra.mxu0 0.0
    %3816 = vmatpush.msra.mxu0 0.0
    %3817 = vmatpush.msra.mxu0 0.0
    %3818 = vmatpush.msra.mxu0 %v3802
    %3819 = vmatpush.msra.mxu0 %v3773
    %3820 = vmatmul.f32.gmra.mxu0 %v3658
    %v3821 = vpop.f32.mrf.mxu0
    %v3822 = vadd.f32 0.0, %v3821
    %3823 = vmatmul.f32.gmra.mxu0 %v3660
    %v3824 = vpop.f32.mrf.mxu0
    %v3825 = vadd.f32 0.0, %v3824
    %3826 = vmatmul.f32.gmra.mxu0 %v3662
    %v3827 = vpop.f32.mrf.mxu0
    %v3828 = vadd.f32 0.0, %v3827
    %3829 = vmatmul.f32.gmra.mxu0 %v3664
    %v3830 = vpop.f32.mrf.mxu0
    %v3831 = vadd.f32 0.0, %v3830
    %3832 = vmatmul.f32.gmra.mxu0 %v3666
    %v3833 = vpop.f32.mrf.mxu0
    %v3834 = vadd.f32 0.0, %v3833
    %3835 = vmatmul.f32.gmra.mxu0 %v3668
    %v3836 = vpop.f32.mrf.mxu0
    %v3837 = vadd.f32 0.0, %v3836
    %3838 = vmatmul.f32.gmra.mxu0 %v3670
    %v3839 = vpop.f32.mrf.mxu0
    %v3840 = vadd.f32 0.0, %v3839
    %3841 = vmatmul.f32.gmra.mxu0 %v3797
    %v3842 = vpop.f32.mrf.mxu0
    %v3843 = vadd.f32 0.0, %v3842
    %3844 = vmatmul.f32.gmra.mxu0 %v3674
    %v3845 = vpop.f32.mrf.mxu0
    %v3846 = vadd.f32 0.0, %v3845
    %3847 = vmatmul.f32.gmra.mxu0 %v3676
    %v3848 = vpop.f32.mrf.mxu0
    %v3849 = vadd.f32 0.0, %v3848
    %3850 = vmatmul.f32.gmra.mxu0 %v3678
    %v3851 = vpop.f32.mrf.mxu0
    %v3852 = vadd.f32 0.0, %v3851
    %3853 = vmatmul.f32.gmra.mxu0 %v3680
    %v3854 = vpop.f32.mrf.mxu0
    %v3855 = vadd.f32 0.0, %v3854
    %3856 = vmatmul.f32.gmra.mxu0 %v3682
    %v3857 = vpop.f32.mrf.mxu0
    %v3858 = vadd.f32 0.0, %v3857
    %3859 = vmatmul.f32.gmra.mxu0 %v3684
    %v3860 = vpop.f32.mrf.mxu0
    %v3861 = vadd.f32 0.0, %v3860
    %3862 = vmatmul.f32.gmra.mxu0 %v3686
    %v3863 = vpop.f32.mrf.mxu0
    %v3864 = vadd.f32 0.0, %v3863
    %3865 = vmatmul.f32.gmra.mxu0 %v3799
    %v3866 = vpop.f32.mrf.mxu0
    %v3867 = vadd.f32 0.0, %v3866
    %3868 = vdwg.mxu0
    %v3869 = vadd.f32 %v3756, %v3822
    %v3870 = vadd.f32 %v3757, %v3825
    %v3871 = vadd.f32 %v3758, %v3828
    %v3872 = vadd.f32 %v3759, %v3831
    %v3873 = vadd.f32 %v3760, %v3834
    %v3874 = vadd.f32 %v3761, %v3837
    %v3875 = vadd.f32 %v3762, %v3840
    %v3876 = vadd.f32 %v3763, %v3843
    %v3877 = vadd.f32 %v3764, %v3846
    %v3878 = vadd.f32 %v3765, %v3849
    %v3879 = vadd.f32 %v3766, %v3852
    %v3880 = vadd.f32 %v3767, %v3855
    %v3881 = vadd.f32 %v3768, %v3858
    %v3882 = vadd.f32 %v3769, %v3861
    %v3883 = vadd.f32 %v3770, %v3864
    %v3884 = vadd.f32 %v3771, %v3867
    %s3885 = scalar_lea.vmem %s3, 192
    %v3886 = vld [vmem:[%s3885] sm:$0xff]
    %v3887 = vld [vmem:[%s3885 + $0x8] sm:$0x3]
    %v3888 = vrot.slane %v1794, 7
    %v3889 = vsel %vm1869, %v3888, %v1793
    %v3890 = vrot.slane %v1795, 6
    %v3891 = vsel %vm1872, %v3890, %v3889
    %v3892 = vrot.slane %v1796, 5
    %v3893 = vsel %vm1875, %v3892, %v3891
    %v3894 = vrot.slane %v1797, 4
    %v3895 = vsel %vm1878, %v3894, %v3893
    %v3896 = vrot.slane %v1798, 3
    %v3897 = vsel %vm1881, %v3896, %v3895
    %v3898 = vrot.slane %v1799, 2
    %v3899 = vsel %vm1884, %v3898, %v3897
    %v3900 = vrot.slane %v1800, 1
    %v3901 = vsel %vm1887, %v3900, %v3899
    %v3902 = vrot.slane %v1806, 7
    %v3903 = vsel %vm1869, %v3902, %v1805
    %v3904 = vrot.slane %v1807, 6
    %v3905 = vsel %vm1872, %v3904, %v3903
    %v3906 = vrot.slane %v1808, 5
    %v3907 = vsel %vm1875, %v3906, %v3905
    %v3908 = vrot.slane %v1809, 4
    %v3909 = vsel %vm1878, %v3908, %v3907
    %v3910 = vrot.slane %v1810, 3
    %v3911 = vsel %vm1881, %v3910, %v3909
    %v3912 = vrot.slane %v1811, 2
    %v3913 = vsel %vm1884, %v3912, %v3911
    %v3914 = vrot.slane %v1812, 1
    %v3915 = vsel %vm1887, %v3914, %v3913
    %v3916 = vsel %vm2087, %v3901, 0
    %v3918 = vsel %vm2087, %v3915, 0
    %v3921 = vsel %vm2120, %v3887, 0
    %3923 = vmatpush.msra.mxu0 0.0
    %3924 = vmatpush.msra.mxu0 0.0
    %3925 = vmatpush.msra.mxu0 0.0
    %3926 = vmatpush.msra.mxu0 0.0
    %3927 = vmatpush.msra.mxu0 0.0
    %3928 = vmatpush.msra.mxu0 0.0
    %3929 = vmatpush.msra.mxu0 0.0
    %3930 = vmatpush.msra.mxu0 0.0
    %3931 = vmatpush.msra.mxu0 0.0
    %3932 = vmatpush.msra.mxu0 0.0
    %3933 = vmatpush.msra.mxu0 0.0
    %3934 = vmatpush.msra.mxu0 0.0
    %3935 = vmatpush.msra.mxu0 0.0
    %3936 = vmatpush.msra.mxu0 0.0
    %3937 = vmatpush.msra.mxu0 %v3921
    %3938 = vmatpush.msra.mxu0 %v3886
    %3939 = vmatmul.f32.gmra.mxu0 %v3660
    %v3940 = vpop.f32.mrf.mxu0
    %v3941 = vadd.f32 0.0, %v3940
    %3942 = vmatmul.f32.gmra.mxu0 %v3662
    %v3943 = vpop.f32.mrf.mxu0
    %v3944 = vadd.f32 0.0, %v3943
    %3945 = vmatmul.f32.gmra.mxu0 %v3664
    %v3946 = vpop.f32.mrf.mxu0
    %v3947 = vadd.f32 0.0, %v3946
    %3948 = vmatmul.f32.gmra.mxu0 %v3666
    %v3949 = vpop.f32.mrf.mxu0
    %v3950 = vadd.f32 0.0, %v3949
    %3951 = vmatmul.f32.gmra.mxu0 %v3668
    %v3952 = vpop.f32.mrf.mxu0
    %v3953 = vadd.f32 0.0, %v3952
    %3954 = vmatmul.f32.gmra.mxu0 %v3670
    %v3955 = vpop.f32.mrf.mxu0
    %v3956 = vadd.f32 0.0, %v3955
    %3957 = vmatmul.f32.gmra.mxu0 %v3797
    %v3958 = vpop.f32.mrf.mxu0
    %v3959 = vadd.f32 0.0, %v3958
    %3960 = vmatmul.f32.gmra.mxu0 %v3916
    %v3961 = vpop.f32.mrf.mxu0
    %v3962 = vadd.f32 0.0, %v3961
    %3963 = vmatmul.f32.gmra.mxu0 %v3676
    %v3964 = vpop.f32.mrf.mxu0
    %v3965 = vadd.f32 0.0, %v3964
    %3966 = vmatmul.f32.gmra.mxu0 %v3678
    %v3967 = vpop.f32.mrf.mxu0
    %v3968 = vadd.f32 0.0, %v3967
    %3969 = vmatmul.f32.gmra.mxu0 %v3680
    %v3970 = vpop.f32.mrf.mxu0
    %v3971 = vadd.f32 0.0, %v3970
    %3972 = vmatmul.f32.gmra.mxu0 %v3682
    %v3973 = vpop.f32.mrf.mxu0
    %v3974 = vadd.f32 0.0, %v3973
    %3975 = vmatmul.f32.gmra.mxu0 %v3684
    %v3976 = vpop.f32.mrf.mxu0
    %v3977 = vadd.f32 0.0, %v3976
    %3978 = vmatmul.f32.gmra.mxu0 %v3686
    %v3979 = vpop.f32.mrf.mxu0
    %v3980 = vadd.f32 0.0, %v3979
    %3981 = vmatmul.f32.gmra.mxu0 %v3799
    %v3982 = vpop.f32.mrf.mxu0
    %v3983 = vadd.f32 0.0, %v3982
    %3984 = vmatmul.f32.gmra.mxu0 %v3918
    %v3985 = vpop.f32.mrf.mxu0
    %v3986 = vadd.f32 0.0, %v3985
    %3987 = vdwg.mxu0
    %v3988 = vadd.f32 %v3869, %v3941
    %v3989 = vadd.f32 %v3870, %v3944
    %v3990 = vadd.f32 %v3871, %v3947
    %v3991 = vadd.f32 %v3872, %v3950
    %v3992 = vadd.f32 %v3873, %v3953
    %v3993 = vadd.f32 %v3874, %v3956
    %v3994 = vadd.f32 %v3875, %v3959
    %v3995 = vadd.f32 %v3876, %v3962
    %v3996 = vadd.f32 %v3877, %v3965
    %v3997 = vadd.f32 %v3878, %v3968
    %v3998 = vadd.f32 %v3879, %v3971
    %v3999 = vadd.f32 %v3880, %v3974
    %v4000 = vadd.f32 %v3881, %v3977
    %v4001 = vadd.f32 %v3882, %v3980
    %v4002 = vadd.f32 %v3883, %v3983
    %v4003 = vadd.f32 %v3884, %v3986
    %s4004 = scalar_lea.vmem %s3, 208
    %v4005 = vld [vmem:[%s4004] sm:$0xff]
    %v4006 = vld [vmem:[%s4004 + $0x8] sm:$0x3]
    %v4007 = vrot.slane %v1818, 7
    %v4008 = vsel %vm1869, %v4007, %v1817
    %v4009 = vrot.slane %v1819, 6
    %v4010 = vsel %vm1872, %v4009, %v4008
    %v4011 = vrot.slane %v1820, 5
    %v4012 = vsel %vm1875, %v4011, %v4010
    %v4013 = vrot.slane %v1821, 4
    %v4014 = vsel %vm1878, %v4013, %v4012
    %v4015 = vrot.slane %v1822, 3
    %v4016 = vsel %vm1881, %v4015, %v4014
    %v4017 = vrot.slane %v1823, 2
    %v4018 = vsel %vm1884, %v4017, %v4016
    %v4019 = vrot.slane %v1824, 1
    %v4020 = vsel %vm1887, %v4019, %v4018
    %v4021 = vrot.slane %v1830, 7
    %v4022 = vsel %vm1869, %v4021, %v1829
    %v4023 = vrot.slane %v1831, 6
    %v4024 = vsel %vm1872, %v4023, %v4022
    %v4025 = vrot.slane %v1832, 5
    %v4026 = vsel %vm1875, %v4025, %v4024
    %v4027 = vrot.slane %v1833, 4
    %v4028 = vsel %vm1878, %v4027, %v4026
    %v4029 = vrot.slane %v1834, 3
    %v4030 = vsel %vm1881, %v4029, %v4028
    %v4031 = vrot.slane %v1835, 2
    %v4032 = vsel %vm1884, %v4031, %v4030
    %v4033 = vrot.slane %v1836, 1
    %v4034 = vsel %vm1887, %v4033, %v4032
    %v4035 = vsel %vm2087, %v4020, 0
    %v4037 = vsel %vm2087, %v4034, 0
    %v4040 = vsel %vm2120, %v4006, 0
    %4042 = vmatpush.msra.mxu0 0.0
    %4043 = vmatpush.msra.mxu0 0.0
    %4044 = vmatpush.msra.mxu0 0.0
    %4045 = vmatpush.msra.mxu0 0.0
    %4046 = vmatpush.msra.mxu0 0.0
    %4047 = vmatpush.msra.mxu0 0.0
    %4048 = vmatpush.msra.mxu0 0.0
    %4049 = vmatpush.msra.mxu0 0.0
    %4050 = vmatpush.msra.mxu0 0.0
    %4051 = vmatpush.msra.mxu0 0.0
    %4052 = vmatpush.msra.mxu0 0.0
    %4053 = vmatpush.msra.mxu0 0.0
    %4054 = vmatpush.msra.mxu0 0.0
    %4055 = vmatpush.msra.mxu0 0.0
    %4056 = vmatpush.msra.mxu0 %v4040
    %4057 = vmatpush.msra.mxu0 %v4005
    %4058 = vmatmul.f32.gmra.mxu0 %v3662
    %v4059 = vpop.f32.mrf.mxu0
    %v4060 = vadd.f32 0.0, %v4059
    %4061 = vmatmul.f32.gmra.mxu0 %v3664
    %v4062 = vpop.f32.mrf.mxu0
    %v4063 = vadd.f32 0.0, %v4062
    %4064 = vmatmul.f32.gmra.mxu0 %v3666
    %v4065 = vpop.f32.mrf.mxu0
    %v4066 = vadd.f32 0.0, %v4065
    %4067 = vmatmul.f32.gmra.mxu0 %v3668
    %v4068 = vpop.f32.mrf.mxu0
    %v4069 = vadd.f32 0.0, %v4068
    %4070 = vmatmul.f32.gmra.mxu0 %v3670
    %v4071 = vpop.f32.mrf.mxu0
    %v4072 = vadd.f32 0.0, %v4071
    %4073 = vmatmul.f32.gmra.mxu0 %v3797
    %v4074 = vpop.f32.mrf.mxu0
    %v4075 = vadd.f32 0.0, %v4074
    %4076 = vmatmul.f32.gmra.mxu0 %v3916
    %v4077 = vpop.f32.mrf.mxu0
    %v4078 = vadd.f32 0.0, %v4077
    %4079 = vmatmul.f32.gmra.mxu0 %v4035
    %v4080 = vpop.f32.mrf.mxu0
    %v4081 = vadd.f32 0.0, %v4080
    %4082 = vmatmul.f32.gmra.mxu0 %v3678
    %v4083 = vpop.f32.mrf.mxu0
    %v4084 = vadd.f32 0.0, %v4083
    %4085 = vmatmul.f32.gmra.mxu0 %v3680
    %v4086 = vpop.f32.mrf.mxu0
    %v4087 = vadd.f32 0.0, %v4086
    %4088 = vmatmul.f32.gmra.mxu0 %v3682
    %v4089 = vpop.f32.mrf.mxu0
    %v4090 = vadd.f32 0.0, %v4089
    %4091 = vmatmul.f32.gmra.mxu0 %v3684
    %v4092 = vpop.f32.mrf.mxu0
    %v4093 = vadd.f32 0.0, %v4092
    %4094 = vmatmul.f32.gmra.mxu0 %v3686
    %v4095 = vpop.f32.mrf.mxu0
    %v4096 = vadd.f32 0.0, %v4095
    %4097 = vmatmul.f32.gmra.mxu0 %v3799
    %v4098 = vpop.f32.mrf.mxu0
    %v4099 = vadd.f32 0.0, %v4098
    %4100 = vmatmul.f32.gmra.mxu0 %v3918
    %v4101 = vpop.f32.mrf.mxu0
    %v4102 = vadd.f32 0.0, %v4101
    %4103 = vmatmul.f32.gmra.mxu0 %v4037
    %v4104 = vpop.f32.mrf.mxu0
    %v4105 = vadd.f32 0.0, %v4104
    %4106 = vdwg.mxu0
    %v4107 = vadd.f32 %v3988, %v4060
    %v4108 = vadd.f32 %v3989, %v4063
    %v4109 = vadd.f32 %v3990, %v4066
    %v4110 = vadd.f32 %v3991, %v4069
    %v4111 = vadd.f32 %v3992, %v4072
    %v4112 = vadd.f32 %v3993, %v4075
    %v4113 = vadd.f32 %v3994, %v4078
    %v4114 = vadd.f32 %v3995, %v4081
    %v4115 = vadd.f32 %v3996, %v4084
    %v4116 = vadd.f32 %v3997, %v4087
    %v4117 = vadd.f32 %v3998, %v4090
    %v4118 = vadd.f32 %v3999, %v4093
    %v4119 = vadd.f32 %v4000, %v4096
    %v4120 = vadd.f32 %v4001, %v4099
    %v4121 = vadd.f32 %v4002, %v4102
    %v4122 = vadd.f32 %v4003, %v4105
    %s4123 = scalar_lea.vmem %s3, 224
    %v4124 = vld [vmem:[%s4123] sm:$0xff]
    %v4125 = vld [vmem:[%s4123 + $0x8] sm:$0x3]
    %v4126 = vrot.slane %v1842, 7
    %v4127 = vsel %vm1869, %v4126, %v1841
    %v4128 = vrot.slane %v1843, 6
    %v4129 = vsel %vm1872, %v4128, %v4127
    %v4130 = vrot.slane %v1844, 5
    %v4131 = vsel %vm1875, %v4130, %v4129
    %v4132 = vrot.slane %v1845, 4
    %v4133 = vsel %vm1878, %v4132, %v4131
    %v4134 = vrot.slane %v1846, 3
    %v4135 = vsel %vm1881, %v4134, %v4133
    %v4136 = vrot.slane %v1847, 2
    %v4137 = vsel %vm1884, %v4136, %v4135
    %v4138 = vrot.slane %v1848, 1
    %v4139 = vsel %vm1887, %v4138, %v4137
    %v4140 = vrot.slane %v1854, 7
    %v4141 = vsel %vm1869, %v4140, %v1853
    %v4142 = vrot.slane %v1855, 6
    %v4143 = vsel %vm1872, %v4142, %v4141
    %v4144 = vrot.slane %v1856, 5
    %v4145 = vsel %vm1875, %v4144, %v4143
    %v4146 = vrot.slane %v1857, 4
    %v4147 = vsel %vm1878, %v4146, %v4145
    %v4148 = vrot.slane %v1858, 3
    %v4149 = vsel %vm1881, %v4148, %v4147
    %v4150 = vrot.slane %v1859, 2
    %v4151 = vsel %vm1884, %v4150, %v4149
    %v4152 = vrot.slane %v1860, 1
    %v4153 = vsel %vm1887, %v4152, %v4151
    %v4154 = vsel %vm2087, %v4139, 0
    %v4156 = vsel %vm2087, %v4153, 0
    %v4159 = vsel %vm2120, %v4125, 0
    %4161 = vmatpush.msra.mxu0 0.0
    %4162 = vmatpush.msra.mxu0 0.0
    %4163 = vmatpush.msra.mxu0 0.0
    %4164 = vmatpush.msra.mxu0 0.0
    %4165 = vmatpush.msra.mxu0 0.0
    %4166 = vmatpush.msra.mxu0 0.0
    %4167 = vmatpush.msra.mxu0 0.0
    %4168 = vmatpush.msra.mxu0 0.0
    %4169 = vmatpush.msra.mxu0 0.0
    %4170 = vmatpush.msra.mxu0 0.0
    %4171 = vmatpush.msra.mxu0 0.0
    %4172 = vmatpush.msra.mxu0 0.0
    %4173 = vmatpush.msra.mxu0 0.0
    %4174 = vmatpush.msra.mxu0 0.0
    %4175 = vmatpush.msra.mxu0 %v4159
    %4176 = vmatpush.msra.mxu0 %v4124
    %4177 = vmatmul.f32.gmra.mxu0 %v3664
    %v4178 = vpop.f32.mrf.mxu0
    %v4179 = vadd.f32 0.0, %v4178
    %4180 = vmatmul.f32.gmra.mxu0 %v3666
    %v4181 = vpop.f32.mrf.mxu0
    %v4182 = vadd.f32 0.0, %v4181
    %4183 = vmatmul.f32.gmra.mxu0 %v3668
    %v4184 = vpop.f32.mrf.mxu0
    %v4185 = vadd.f32 0.0, %v4184
    %4186 = vmatmul.f32.gmra.mxu0 %v3670
    %v4187 = vpop.f32.mrf.mxu0
    %v4188 = vadd.f32 0.0, %v4187
    %4189 = vmatmul.f32.gmra.mxu0 %v3797
    %v4190 = vpop.f32.mrf.mxu0
    %v4191 = vadd.f32 0.0, %v4190
    %4192 = vmatmul.f32.gmra.mxu0 %v3916
    %v4193 = vpop.f32.mrf.mxu0
    %v4194 = vadd.f32 0.0, %v4193
    %4195 = vmatmul.f32.gmra.mxu0 %v4035
    %v4196 = vpop.f32.mrf.mxu0
    %v4197 = vadd.f32 0.0, %v4196
    %4198 = vmatmul.f32.gmra.mxu0 %v4154
    %v4199 = vpop.f32.mrf.mxu0
    %v4200 = vadd.f32 0.0, %v4199
    %4201 = vmatmul.f32.gmra.mxu0 %v3680
    %v4202 = vpop.f32.mrf.mxu0
    %v4203 = vadd.f32 0.0, %v4202
    %4204 = vmatmul.f32.gmra.mxu0 %v3682
    %v4205 = vpop.f32.mrf.mxu0
    %v4206 = vadd.f32 0.0, %v4205
    %4207 = vmatmul.f32.gmra.mxu0 %v3684
    %v4208 = vpop.f32.mrf.mxu0
    %v4209 = vadd.f32 0.0, %v4208
    %4210 = vmatmul.f32.gmra.mxu0 %v3686
    %v4211 = vpop.f32.mrf.mxu0
    %v4212 = vadd.f32 0.0, %v4211
    %4213 = vmatmul.f32.gmra.mxu0 %v3799
    %v4214 = vpop.f32.mrf.mxu0
    %v4215 = vadd.f32 0.0, %v4214
    %4216 = vmatmul.f32.gmra.mxu0 %v3918
    %v4217 = vpop.f32.mrf.mxu0
    %v4218 = vadd.f32 0.0, %v4217
    %4219 = vmatmul.f32.gmra.mxu0 %v4037
    %v4220 = vpop.f32.mrf.mxu0
    %v4221 = vadd.f32 0.0, %v4220
    %4222 = vmatmul.f32.gmra.mxu0 %v4156
    %v4223 = vpop.f32.mrf.mxu0
    %v4224 = vadd.f32 0.0, %v4223
    %4225 = vdwg.mxu0
    %v4226 = vadd.f32 %v4107, %v4179
    %v4227 = vadd.f32 %v4108, %v4182
    %v4228 = vadd.f32 %v4109, %v4185
    %v4229 = vadd.f32 %v4110, %v4188
    %v4230 = vadd.f32 %v4111, %v4191
    %v4231 = vadd.f32 %v4112, %v4194
    %v4232 = vadd.f32 %v4113, %v4197
    %v4233 = vadd.f32 %v4114, %v4200
    %v4234 = vadd.f32 %v4115, %v4203
    %v4235 = vadd.f32 %v4116, %v4206
    %v4236 = vadd.f32 %v4117, %v4209
    %v4237 = vadd.f32 %v4118, %v4212
    %v4238 = vadd.f32 %v4119, %v4215
    %v4239 = vadd.f32 %v4120, %v4218
    %v4240 = vadd.f32 %v4121, %v4221
    %v4241 = vadd.f32 %v4122, %v4224
    %s4242 = scalar_lea.vmem %s3, 240
    %v4243 = vld [vmem:[%s4242] sm:$0xff]
    %v4244 = vld [vmem:[%s4242 + $0x8] sm:$0x3]
    %v4245 = vrot.slane %v1363, 7
    %v4246 = vsel %vm1869, %v4245, %v1362
    %v4247 = vsel %vm1872, %v1652, %v4246
    %v4248 = vrot.slane %v1365, 5
    %v4249 = vsel %vm1875, %v4248, %v4247
    %v4250 = vsel %vm1878, %v1630, %v4249
    %v4251 = vrot.slane %v1367, 3
    %v4252 = vsel %vm1881, %v4251, %v4250
    %v4253 = vsel %vm1884, %v1608, %v4252
    %v4254 = vrot.slane %v1369, 1
    %v4255 = vsel %vm1887, %v4254, %v4253
    %v4256 = vrot.slane %v1603, 7
    %v4257 = vsel %vm1869, %v4256, %v1602
    %v4258 = vrot.slane %v1604, 6
    %v4259 = vsel %vm1872, %v4258, %v4257
    %v4260 = vrot.slane %v1605, 5
    %v4261 = vsel %vm1875, %v4260, %v4259
    %v4262 = vrot.slane %v1606, 4
    %v4263 = vsel %vm1878, %v4262, %v4261
    %v4264 = vrot.slane %v1607, 3
    %v4265 = vsel %vm1881, %v4264, %v4263
    %v4266 = vrot.slane %v1608, 2
    %v4267 = vsel %vm1884, %v4266, %v4265
    %v4268 = vrot.slane %v1609, 1
    %v4269 = vsel %vm1887, %v4268, %v4267
    %v4270 = vrot.slane %v1627, 7
    %v4271 = vsel %vm1869, %v4270, %v1626
    %v4272 = vrot.slane %v1628, 6
    %v4273 = vsel %vm1872, %v4272, %v4271
    %v4274 = vrot.slane %v1629, 5
    %v4275 = vsel %vm1875, %v4274, %v4273
    %v4276 = vrot.slane %v1630, 4
    %v4277 = vsel %vm1878, %v4276, %v4275
    %v4278 = vrot.slane %v1631, 3
    %v4279 = vsel %vm1881, %v4278, %v4277
    %v4280 = vrot.slane %v1632, 2
    %v4281 = vsel %vm1884, %v4280, %v4279
    %v4282 = vrot.slane %v1633, 1
    %v4283 = vsel %vm1887, %v4282, %v4281
    %v4284 = vrot.slane %v1651, 7
    %v4285 = vsel %vm1869, %v4284, %v1650
    %v4286 = vrot.slane %v1652, 6
    %v4287 = vsel %vm1872, %v4286, %v4285
    %v4288 = vrot.slane %v1653, 5
    %v4289 = vsel %vm1875, %v4288, %v4287
    %v4290 = vrot.slane %v1654, 4
    %v4291 = vsel %vm1878, %v4290, %v4289
    %v4292 = vrot.slane %v1655, 3
    %v4293 = vsel %vm1881, %v4292, %v4291
    %v4294 = vrot.slane %v1656, 2
    %v4295 = vsel %vm1884, %v4294, %v4293
    %v4296 = vrot.slane %v1657, 1
    %v4297 = vsel %vm1887, %v4296, %v4295
    %v4298 = vrot.slane %v1459, 7
    %v4299 = vsel %vm1869, %v4298, %v1458
    %v4300 = vsel %vm1872, %v1748, %v4299
    %v4301 = vrot.slane %v1461, 5
    %v4302 = vsel %vm1875, %v4301, %v4300
    %v4303 = vsel %vm1878, %v1726, %v4302
    %v4304 = vrot.slane %v1463, 3
    %v4305 = vsel %vm1881, %v4304, %v4303
    %v4306 = vsel %vm1884, %v1704, %v4305
    %v4307 = vrot.slane %v1465, 1
    %v4308 = vsel %vm1887, %v4307, %v4306
    %v4309 = vrot.slane %v1699, 7
    %v4310 = vsel %vm1869, %v4309, %v1698
    %v4311 = vrot.slane %v1700, 6
    %v4312 = vsel %vm1872, %v4311, %v4310
    %v4313 = vrot.slane %v1701, 5
    %v4314 = vsel %vm1875, %v4313, %v4312
    %v4315 = vrot.slane %v1702, 4
    %v4316 = vsel %vm1878, %v4315, %v4314
    %v4317 = vrot.slane %v1703, 3
    %v4318 = vsel %vm1881, %v4317, %v4316
    %v4319 = vrot.slane %v1704, 2
    %v4320 = vsel %vm1884, %v4319, %v4318
    %v4321 = vrot.slane %v1705, 1
    %v4322 = vsel %vm1887, %v4321, %v4320
    %v4323 = vrot.slane %v1723, 7
    %v4324 = vsel %vm1869, %v4323, %v1722
    %v4325 = vrot.slane %v1724, 6
    %v4326 = vsel %vm1872, %v4325, %v4324
    %v4327 = vrot.slane %v1725, 5
    %v4328 = vsel %vm1875, %v4327, %v4326
    %v4329 = vrot.slane %v1726, 4
    %v4330 = vsel %vm1878, %v4329, %v4328
    %v4331 = vrot.slane %v1727, 3
    %v4332 = vsel %vm1881, %v4331, %v4330
    %v4333 = vrot.slane %v1728, 2
    %v4334 = vsel %vm1884, %v4333, %v4332
    %v4335 = vrot.slane %v1729, 1
    %v4336 = vsel %vm1887, %v4335, %v4334
    %v4337 = vrot.slane %v1747, 7
    %v4338 = vsel %vm1869, %v4337, %v1746
    %v4339 = vrot.slane %v1748, 6
    %v4340 = vsel %vm1872, %v4339, %v4338
    %v4341 = vrot.slane %v1749, 5
    %v4342 = vsel %vm1875, %v4341, %v4340
    %v4343 = vrot.slane %v1750, 4
    %v4344 = vsel %vm1878, %v4343, %v4342
    %v4345 = vrot.slane %v1751, 3
    %v4346 = vsel %vm1881, %v4345, %v4344
    %v4347 = vrot.slane %v1752, 2
    %v4348 = vsel %vm1884, %v4347, %v4346
    %v4349 = vrot.slane %v1753, 1
    %v4350 = vsel %vm1887, %v4349, %v4348
    %v4351 = vrot.slane %v1375, 7
    %v4352 = vsel %vm1869, %v4351, %v1374
    %v4353 = vsel %vm1872, %v1664, %v4352
    %v4354 = vrot.slane %v1377, 5
    %v4355 = vsel %vm1875, %v4354, %v4353
    %v4356 = vsel %vm1878, %v1642, %v4355
    %v4357 = vrot.slane %v1379, 3
    %v4358 = vsel %vm1881, %v4357, %v4356
    %v4359 = vsel %vm1884, %v1620, %v4358
    %v4360 = vrot.slane %v1381, 1
    %v4361 = vsel %vm1887, %v4360, %v4359
    %v4362 = vrot.slane %v1615, 7
    %v4363 = vsel %vm1869, %v4362, %v1614
    %v4364 = vrot.slane %v1616, 6
    %v4365 = vsel %vm1872, %v4364, %v4363
    %v4366 = vrot.slane %v1617, 5
    %v4367 = vsel %vm1875, %v4366, %v4365
    %v4368 = vrot.slane %v1618, 4
    %v4369 = vsel %vm1878, %v4368, %v4367
    %v4370 = vrot.slane %v1619, 3
    %v4371 = vsel %vm1881, %v4370, %v4369
    %v4372 = vrot.slane %v1620, 2
    %v4373 = vsel %vm1884, %v4372, %v4371
    %v4374 = vrot.slane %v1621, 1
    %v4375 = vsel %vm1887, %v4374, %v4373
    %v4376 = vrot.slane %v1639, 7
    %v4377 = vsel %vm1869, %v4376, %v1638
    %v4378 = vrot.slane %v1640, 6
    %v4379 = vsel %vm1872, %v4378, %v4377
    %v4380 = vrot.slane %v1641, 5
    %v4381 = vsel %vm1875, %v4380, %v4379
    %v4382 = vrot.slane %v1642, 4
    %v4383 = vsel %vm1878, %v4382, %v4381
    %v4384 = vrot.slane %v1643, 3
    %v4385 = vsel %vm1881, %v4384, %v4383
    %v4386 = vrot.slane %v1644, 2
    %v4387 = vsel %vm1884, %v4386, %v4385
    %v4388 = vrot.slane %v1645, 1
    %v4389 = vsel %vm1887, %v4388, %v4387
    %v4390 = vrot.slane %v1663, 7
    %v4391 = vsel %vm1869, %v4390, %v1662
    %v4392 = vrot.slane %v1664, 6
    %v4393 = vsel %vm1872, %v4392, %v4391
    %v4394 = vrot.slane %v1665, 5
    %v4395 = vsel %vm1875, %v4394, %v4393
    %v4396 = vrot.slane %v1666, 4
    %v4397 = vsel %vm1878, %v4396, %v4395
    %v4398 = vrot.slane %v1667, 3
    %v4399 = vsel %vm1881, %v4398, %v4397
    %v4400 = vrot.slane %v1668, 2
    %v4401 = vsel %vm1884, %v4400, %v4399
    %v4402 = vrot.slane %v1669, 1
    %v4403 = vsel %vm1887, %v4402, %v4401
    %v4404 = vrot.slane %v1471, 7
    %v4405 = vsel %vm1869, %v4404, %v1470
    %v4406 = vsel %vm1872, %v1760, %v4405
    %v4407 = vrot.slane %v1473, 5
    %v4408 = vsel %vm1875, %v4407, %v4406
    %v4409 = vsel %vm1878, %v1738, %v4408
    %v4410 = vrot.slane %v1475, 3
    %v4411 = vsel %vm1881, %v4410, %v4409
    %v4412 = vsel %vm1884, %v1716, %v4411
    %v4413 = vrot.slane %v1477, 1
    %v4414 = vsel %vm1887, %v4413, %v4412
    %v4415 = vrot.slane %v1711, 7
    %v4416 = vsel %vm1869, %v4415, %v1710
    %v4417 = vrot.slane %v1712, 6
    %v4418 = vsel %vm1872, %v4417, %v4416
    %v4419 = vrot.slane %v1713, 5
    %v4420 = vsel %vm1875, %v4419, %v4418
    %v4421 = vrot.slane %v1714, 4
    %v4422 = vsel %vm1878, %v4421, %v4420
    %v4423 = vrot.slane %v1715, 3
    %v4424 = vsel %vm1881, %v4423, %v4422
    %v4425 = vrot.slane %v1716, 2
    %v4426 = vsel %vm1884, %v4425, %v4424
    %v4427 = vrot.slane %v1717, 1
    %v4428 = vsel %vm1887, %v4427, %v4426
    %v4429 = vrot.slane %v1735, 7
    %v4430 = vsel %vm1869, %v4429, %v1734
    %v4431 = vrot.slane %v1736, 6
    %v4432 = vsel %vm1872, %v4431, %v4430
    %v4433 = vrot.slane %v1737, 5
    %v4434 = vsel %vm1875, %v4433, %v4432
    %v4435 = vrot.slane %v1738, 4
    %v4436 = vsel %vm1878, %v4435, %v4434
    %v4437 = vrot.slane %v1739, 3
    %v4438 = vsel %vm1881, %v4437, %v4436
    %v4439 = vrot.slane %v1740, 2
    %v4440 = vsel %vm1884, %v4439, %v4438
    %v4441 = vrot.slane %v1741, 1
    %v4442 = vsel %vm1887, %v4441, %v4440
    %v4443 = vrot.slane %v1759, 7
    %v4444 = vsel %vm1869, %v4443, %v1758
    %v4445 = vrot.slane %v1760, 6
    %v4446 = vsel %vm1872, %v4445, %v4444
    %v4447 = vrot.slane %v1761, 5
    %v4448 = vsel %vm1875, %v4447, %v4446
    %v4449 = vrot.slane %v1762, 4
    %v4450 = vsel %vm1878, %v4449, %v4448
    %v4451 = vrot.slane %v1763, 3
    %v4452 = vsel %vm1881, %v4451, %v4450
    %v4453 = vrot.slane %v1764, 2
    %v4454 = vsel %vm1884, %v4453, %v4452
    %v4455 = vrot.slane %v1765, 1
    %v4456 = vsel %vm1887, %v4455, %v4454
    %v4457 = vsel %vm2087, %v4255, 0
    %v4459 = vsel %vm2087, %v4269, 0
    %v4461 = vsel %vm2087, %v4283, 0
    %v4463 = vsel %vm2087, %v4297, 0
    %v4465 = vsel %vm2087, %v4308, 0
    %v4467 = vsel %vm2087, %v4322, 0
    %v4469 = vsel %vm2087, %v4336, 0
    %v4471 = vsel %vm2087, %v4350, 0
    %v4473 = vsel %vm2087, %v4361, 0
    %v4475 = vsel %vm2087, %v4375, 0
    %v4477 = vsel %vm2087, %v4389, 0
    %v4479 = vsel %vm2087, %v4403, 0
    %v4481 = vsel %vm2087, %v4414, 0
    %v4483 = vsel %vm2087, %v4428, 0
    %v4485 = vsel %vm2087, %v4442, 0
    %v4487 = vsel %vm2087, %v4456, 0
    %v4490 = vsel %vm2120, %v4244, 0
    %4492 = vmatpush.msra.mxu0 0.0
    %4493 = vmatpush.msra.mxu0 0.0
    %4494 = vmatpush.msra.mxu0 0.0
    %4495 = vmatpush.msra.mxu0 0.0
    %4496 = vmatpush.msra.mxu0 0.0
    %4497 = vmatpush.msra.mxu0 0.0
    %4498 = vmatpush.msra.mxu0 0.0
    %4499 = vmatpush.msra.mxu0 0.0
    %4500 = vmatpush.msra.mxu0 0.0
    %4501 = vmatpush.msra.mxu0 0.0
    %4502 = vmatpush.msra.mxu0 0.0
    %4503 = vmatpush.msra.mxu0 0.0
    %4504 = vmatpush.msra.mxu0 0.0
    %4505 = vmatpush.msra.mxu0 0.0
    %4506 = vmatpush.msra.mxu0 %v4490
    %4507 = vmatpush.msra.mxu0 %v4243
    %4508 = vmatmul.f32.gmra.mxu0 %v4457
    %v4509 = vpop.f32.mrf.mxu0
    %v4510 = vadd.f32 0.0, %v4509
    %4511 = vmatmul.f32.gmra.mxu0 %v4459
    %v4512 = vpop.f32.mrf.mxu0
    %v4513 = vadd.f32 0.0, %v4512
    %4514 = vmatmul.f32.gmra.mxu0 %v4461
    %v4515 = vpop.f32.mrf.mxu0
    %v4516 = vadd.f32 0.0, %v4515
    %4517 = vmatmul.f32.gmra.mxu0 %v4463
    %v4518 = vpop.f32.mrf.mxu0
    %v4519 = vadd.f32 0.0, %v4518
    %4520 = vmatmul.f32.gmra.mxu0 %v4465
    %v4521 = vpop.f32.mrf.mxu0
    %v4522 = vadd.f32 0.0, %v4521
    %4523 = vmatmul.f32.gmra.mxu0 %v4467
    %v4524 = vpop.f32.mrf.mxu0
    %v4525 = vadd.f32 0.0, %v4524
    %4526 = vmatmul.f32.gmra.mxu0 %v4469
    %v4527 = vpop.f32.mrf.mxu0
    %v4528 = vadd.f32 0.0, %v4527
    %4529 = vmatmul.f32.gmra.mxu0 %v4471
    %v4530 = vpop.f32.mrf.mxu0
    %v4531 = vadd.f32 0.0, %v4530
    %4532 = vmatmul.f32.gmra.mxu0 %v4473
    %v4533 = vpop.f32.mrf.mxu0
    %v4534 = vadd.f32 0.0, %v4533
    %4535 = vmatmul.f32.gmra.mxu0 %v4475
    %v4536 = vpop.f32.mrf.mxu0
    %v4537 = vadd.f32 0.0, %v4536
    %4538 = vmatmul.f32.gmra.mxu0 %v4477
    %v4539 = vpop.f32.mrf.mxu0
    %v4540 = vadd.f32 0.0, %v4539
    %4541 = vmatmul.f32.gmra.mxu0 %v4479
    %v4542 = vpop.f32.mrf.mxu0
    %v4543 = vadd.f32 0.0, %v4542
    %4544 = vmatmul.f32.gmra.mxu0 %v4481
    %v4545 = vpop.f32.mrf.mxu0
    %v4546 = vadd.f32 0.0, %v4545
    %4547 = vmatmul.f32.gmra.mxu0 %v4483
    %v4548 = vpop.f32.mrf.mxu0
    %v4549 = vadd.f32 0.0, %v4548
    %4550 = vmatmul.f32.gmra.mxu0 %v4485
    %v4551 = vpop.f32.mrf.mxu0
    %v4552 = vadd.f32 0.0, %v4551
    %4553 = vmatmul.f32.gmra.mxu0 %v4487
    %v4554 = vpop.f32.mrf.mxu0
    %v4555 = vadd.f32 0.0, %v4554
    %4556 = vdwg.mxu0
    %v4557 = vadd.f32 %v4226, %v4510
    %v4558 = vadd.f32 %v4227, %v4513
    %v4559 = vadd.f32 %v4228, %v4516
    %v4560 = vadd.f32 %v4229, %v4519
    %v4561 = vadd.f32 %v4230, %v4522
    %v4562 = vadd.f32 %v4231, %v4525
    %v4563 = vadd.f32 %v4232, %v4528
    %v4564 = vadd.f32 %v4233, %v4531
    %v4565 = vadd.f32 %v4234, %v4534
    %v4566 = vadd.f32 %v4235, %v4537
    %v4567 = vadd.f32 %v4236, %v4540
    %v4568 = vadd.f32 %v4237, %v4543
    %v4569 = vadd.f32 %v4238, %v4546
    %v4570 = vadd.f32 %v4239, %v4549
    %v4571 = vadd.f32 %v4240, %v4552
    %v4572 = vadd.f32 %v4241, %v4555
    %s4573 = scalar_lea.vmem %s3, 256
    %v4574 = vld [vmem:[%s4573] sm:$0xff]
    %v4575 = vld [vmem:[%s4573 + $0x8] sm:$0x3]
    %v4576 = vrot.slane %v1555, 7
    %v4577 = vsel %vm1869, %v4576, %v1554
    %v4578 = vsel %vm1872, %v1844, %v4577
    %v4579 = vrot.slane %v1557, 5
    %v4580 = vsel %vm1875, %v4579, %v4578
    %v4581 = vsel %vm1878, %v1822, %v4580
    %v4582 = vrot.slane %v1559, 3
    %v4583 = vsel %vm1881, %v4582, %v4581
    %v4584 = vsel %vm1884, %v1800, %v4583
    %v4585 = vrot.slane %v1561, 1
    %v4586 = vsel %vm1887, %v4585, %v4584
    %v4587 = vrot.slane %v1567, 7
    %v4588 = vsel %vm1869, %v4587, %v1566
    %v4589 = vsel %vm1872, %v1856, %v4588
    %v4590 = vrot.slane %v1569, 5
    %v4591 = vsel %vm1875, %v4590, %v4589
    %v4592 = vsel %vm1878, %v1834, %v4591
    %v4593 = vrot.slane %v1571, 3
    %v4594 = vsel %vm1881, %v4593, %v4592
    %v4595 = vsel %vm1884, %v1812, %v4594
    %v4596 = vrot.slane %v1573, 1
    %v4597 = vsel %vm1887, %v4596, %v4595
    %v4598 = vsel %vm2087, %v4586, 0
    %v4600 = vsel %vm2087, %v4597, 0
    %v4603 = vsel %vm2120, %v4575, 0
    %4605 = vmatpush.msra.mxu0 0.0
    %4606 = vmatpush.msra.mxu0 0.0
    %4607 = vmatpush.msra.mxu0 0.0
    %4608 = vmatpush.msra.mxu0 0.0
    %4609 = vmatpush.msra.mxu0 0.0
    %4610 = vmatpush.msra.mxu0 0.0
    %4611 = vmatpush.msra.mxu0 0.0
    %4612 = vmatpush.msra.mxu0 0.0
    %4613 = vmatpush.msra.mxu0 0.0
    %4614 = vmatpush.msra.mxu0 0.0
    %4615 = vmatpush.msra.mxu0 0.0
    %4616 = vmatpush.msra.mxu0 0.0
    %4617 = vmatpush.msra.mxu0 0.0
    %4618 = vmatpush.msra.mxu0 0.0
    %4619 = vmatpush.msra.mxu0 %v4603
    %4620 = vmatpush.msra.mxu0 %v4574
    %4621 = vmatmul.f32.gmra.mxu0 %v4459
    %v4622 = vpop.f32.mrf.mxu0
    %v4623 = vadd.f32 0.0, %v4622
    %4624 = vmatmul.f32.gmra.mxu0 %v4461
    %v4625 = vpop.f32.mrf.mxu0
    %v4626 = vadd.f32 0.0, %v4625
    %4627 = vmatmul.f32.gmra.mxu0 %v4463
    %v4628 = vpop.f32.mrf.mxu0
    %v4629 = vadd.f32 0.0, %v4628
    %4630 = vmatmul.f32.gmra.mxu0 %v4465
    %v4631 = vpop.f32.mrf.mxu0
    %v4632 = vadd.f32 0.0, %v4631
    %4633 = vmatmul.f32.gmra.mxu0 %v4467
    %v4634 = vpop.f32.mrf.mxu0
    %v4635 = vadd.f32 0.0, %v4634
    %4636 = vmatmul.f32.gmra.mxu0 %v4469
    %v4637 = vpop.f32.mrf.mxu0
    %v4638 = vadd.f32 0.0, %v4637
    %4639 = vmatmul.f32.gmra.mxu0 %v4471
    %v4640 = vpop.f32.mrf.mxu0
    %v4641 = vadd.f32 0.0, %v4640
    %4642 = vmatmul.f32.gmra.mxu0 %v4598
    %v4643 = vpop.f32.mrf.mxu0
    %v4644 = vadd.f32 0.0, %v4643
    %4645 = vmatmul.f32.gmra.mxu0 %v4475
    %v4646 = vpop.f32.mrf.mxu0
    %v4647 = vadd.f32 0.0, %v4646
    %4648 = vmatmul.f32.gmra.mxu0 %v4477
    %v4649 = vpop.f32.mrf.mxu0
    %v4650 = vadd.f32 0.0, %v4649
    %4651 = vmatmul.f32.gmra.mxu0 %v4479
    %v4652 = vpop.f32.mrf.mxu0
    %v4653 = vadd.f32 0.0, %v4652
    %4654 = vmatmul.f32.gmra.mxu0 %v4481
    %v4655 = vpop.f32.mrf.mxu0
    %v4656 = vadd.f32 0.0, %v4655
    %4657 = vmatmul.f32.gmra.mxu0 %v4483
    %v4658 = vpop.f32.mrf.mxu0
    %v4659 = vadd.f32 0.0, %v4658
    %4660 = vmatmul.f32.gmra.mxu0 %v4485
    %v4661 = vpop.f32.mrf.mxu0
    %v4662 = vadd.f32 0.0, %v4661
    %4663 = vmatmul.f32.gmra.mxu0 %v4487
    %v4664 = vpop.f32.mrf.mxu0
    %v4665 = vadd.f32 0.0, %v4664
    %4666 = vmatmul.f32.gmra.mxu0 %v4600
    %v4667 = vpop.f32.mrf.mxu0
    %v4668 = vadd.f32 0.0, %v4667
    %4669 = vdwg.mxu0
    %v4670 = vadd.f32 %v4557, %v4623
    %v4671 = vadd.f32 %v4558, %v4626
    %v4672 = vadd.f32 %v4559, %v4629
    %v4673 = vadd.f32 %v4560, %v4632
    %v4674 = vadd.f32 %v4561, %v4635
    %v4675 = vadd.f32 %v4562, %v4638
    %v4676 = vadd.f32 %v4563, %v4641
    %v4677 = vadd.f32 %v4564, %v4644
    %v4678 = vadd.f32 %v4565, %v4647
    %v4679 = vadd.f32 %v4566, %v4650
    %v4680 = vadd.f32 %v4567, %v4653
    %v4681 = vadd.f32 %v4568, %v4656
    %v4682 = vadd.f32 %v4569, %v4659
    %v4683 = vadd.f32 %v4570, %v4662
    %v4684 = vadd.f32 %v4571, %v4665
    %v4685 = vadd.f32 %v4572, %v4668
    %s4686 = scalar_lea.vmem %s3, 272
    %v4687 = vld [vmem:[%s4686] sm:$0xff]
    %v4688 = vld [vmem:[%s4686 + $0x8] sm:$0x3]
    %v4689 = vrot.slane %v1795, 7
    %v4690 = vsel %vm1869, %v4689, %v1794
    %v4691 = vrot.slane %v1796, 6
    %v4692 = vsel %vm1872, %v4691, %v4690
    %v4693 = vrot.slane %v1797, 5
    %v4694 = vsel %vm1875, %v4693, %v4692
    %v4695 = vrot.slane %v1798, 4
    %v4696 = vsel %vm1878, %v4695, %v4694
    %v4697 = vrot.slane %v1799, 3
    %v4698 = vsel %vm1881, %v4697, %v4696
    %v4699 = vrot.slane %v1800, 2
    %v4700 = vsel %vm1884, %v4699, %v4698
    %v4701 = vrot.slane %v1801, 1
    %v4702 = vsel %vm1887, %v4701, %v4700
    %v4703 = vrot.slane %v1807, 7
    %v4704 = vsel %vm1869, %v4703, %v1806
    %v4705 = vrot.slane %v1808, 6
    %v4706 = vsel %vm1872, %v4705, %v4704
    %v4707 = vrot.slane %v1809, 5
    %v4708 = vsel %vm1875, %v4707, %v4706
    %v4709 = vrot.slane %v1810, 4
    %v4710 = vsel %vm1878, %v4709, %v4708
    %v4711 = vrot.slane %v1811, 3
    %v4712 = vsel %vm1881, %v4711, %v4710
    %v4713 = vrot.slane %v1812, 2
    %v4714 = vsel %vm1884, %v4713, %v4712
    %v4715 = vrot.slane %v1813, 1
    %v4716 = vsel %vm1887, %v4715, %v4714
    %v4717 = vsel %vm2087, %v4702, 0
    %v4719 = vsel %vm2087, %v4716, 0
    %v4722 = vsel %vm2120, %v4688, 0
    %4724 = vmatpush.msra.mxu0 0.0
    %4725 = vmatpush.msra.mxu0 0.0
    %4726 = vmatpush.msra.mxu0 0.0
    %4727 = vmatpush.msra.mxu0 0.0
    %4728 = vmatpush.msra.mxu0 0.0
    %4729 = vmatpush.msra.mxu0 0.0
    %4730 = vmatpush.msra.mxu0 0.0
    %4731 = vmatpush.msra.mxu0 0.0
    %4732 = vmatpush.msra.mxu0 0.0
    %4733 = vmatpush.msra.mxu0 0.0
    %4734 = vmatpush.msra.mxu0 0.0
    %4735 = vmatpush.msra.mxu0 0.0
    %4736 = vmatpush.msra.mxu0 0.0
    %4737 = vmatpush.msra.mxu0 0.0
    %4738 = vmatpush.msra.mxu0 %v4722
    %4739 = vmatpush.msra.mxu0 %v4687
    %4740 = vmatmul.f32.gmra.mxu0 %v4461
    %v4741 = vpop.f32.mrf.mxu0
    %v4742 = vadd.f32 0.0, %v4741
    %4743 = vmatmul.f32.gmra.mxu0 %v4463
    %v4744 = vpop.f32.mrf.mxu0
    %v4745 = vadd.f32 0.0, %v4744
    %4746 = vmatmul.f32.gmra.mxu0 %v4465
    %v4747 = vpop.f32.mrf.mxu0
    %v4748 = vadd.f32 0.0, %v4747
    %4749 = vmatmul.f32.gmra.mxu0 %v4467
    %v4750 = vpop.f32.mrf.mxu0
    %v4751 = vadd.f32 0.0, %v4750
    %4752 = vmatmul.f32.gmra.mxu0 %v4469
    %v4753 = vpop.f32.mrf.mxu0
    %v4754 = vadd.f32 0.0, %v4753
    %4755 = vmatmul.f32.gmra.mxu0 %v4471
    %v4756 = vpop.f32.mrf.mxu0
    %v4757 = vadd.f32 0.0, %v4756
    %4758 = vmatmul.f32.gmra.mxu0 %v4598
    %v4759 = vpop.f32.mrf.mxu0
    %v4760 = vadd.f32 0.0, %v4759
    %4761 = vmatmul.f32.gmra.mxu0 %v4717
    %v4762 = vpop.f32.mrf.mxu0
    %v4763 = vadd.f32 0.0, %v4762
    %4764 = vmatmul.f32.gmra.mxu0 %v4477
    %v4765 = vpop.f32.mrf.mxu0
    %v4766 = vadd.f32 0.0, %v4765
    %4767 = vmatmul.f32.gmra.mxu0 %v4479
    %v4768 = vpop.f32.mrf.mxu0
    %v4769 = vadd.f32 0.0, %v4768
    %4770 = vmatmul.f32.gmra.mxu0 %v4481
    %v4771 = vpop.f32.mrf.mxu0
    %v4772 = vadd.f32 0.0, %v4771
    %4773 = vmatmul.f32.gmra.mxu0 %v4483
    %v4774 = vpop.f32.mrf.mxu0
    %v4775 = vadd.f32 0.0, %v4774
    %4776 = vmatmul.f32.gmra.mxu0 %v4485
    %v4777 = vpop.f32.mrf.mxu0
    %v4778 = vadd.f32 0.0, %v4777
    %4779 = vmatmul.f32.gmra.mxu0 %v4487
    %v4780 = vpop.f32.mrf.mxu0
    %v4781 = vadd.f32 0.0, %v4780
    %4782 = vmatmul.f32.gmra.mxu0 %v4600
    %v4783 = vpop.f32.mrf.mxu0
    %v4784 = vadd.f32 0.0, %v4783
    %4785 = vmatmul.f32.gmra.mxu0 %v4719
    %v4786 = vpop.f32.mrf.mxu0
    %v4787 = vadd.f32 0.0, %v4786
    %4788 = vdwg.mxu0
    %v4789 = vadd.f32 %v4670, %v4742
    %v4790 = vadd.f32 %v4671, %v4745
    %v4791 = vadd.f32 %v4672, %v4748
    %v4792 = vadd.f32 %v4673, %v4751
    %v4793 = vadd.f32 %v4674, %v4754
    %v4794 = vadd.f32 %v4675, %v4757
    %v4795 = vadd.f32 %v4676, %v4760
    %v4796 = vadd.f32 %v4677, %v4763
    %v4797 = vadd.f32 %v4678, %v4766
    %v4798 = vadd.f32 %v4679, %v4769
    %v4799 = vadd.f32 %v4680, %v4772
    %v4800 = vadd.f32 %v4681, %v4775
    %v4801 = vadd.f32 %v4682, %v4778
    %v4802 = vadd.f32 %v4683, %v4781
    %v4803 = vadd.f32 %v4684, %v4784
    %v4804 = vadd.f32 %v4685, %v4787
    %s4805 = scalar_lea.vmem %s3, 288
    %v4806 = vld [vmem:[%s4805] sm:$0xff]
    %v4807 = vld [vmem:[%s4805 + $0x8] sm:$0x3]
    %v4808 = vrot.slane %v1819, 7
    %v4809 = vsel %vm1869, %v4808, %v1818
    %v4810 = vrot.slane %v1820, 6
    %v4811 = vsel %vm1872, %v4810, %v4809
    %v4812 = vrot.slane %v1821, 5
    %v4813 = vsel %vm1875, %v4812, %v4811
    %v4814 = vrot.slane %v1822, 4
    %v4815 = vsel %vm1878, %v4814, %v4813
    %v4816 = vrot.slane %v1823, 3
    %v4817 = vsel %vm1881, %v4816, %v4815
    %v4818 = vrot.slane %v1824, 2
    %v4819 = vsel %vm1884, %v4818, %v4817
    %v4820 = vrot.slane %v1825, 1
    %v4821 = vsel %vm1887, %v4820, %v4819
    %v4822 = vrot.slane %v1831, 7
    %v4823 = vsel %vm1869, %v4822, %v1830
    %v4824 = vrot.slane %v1832, 6
    %v4825 = vsel %vm1872, %v4824, %v4823
    %v4826 = vrot.slane %v1833, 5
    %v4827 = vsel %vm1875, %v4826, %v4825
    %v4828 = vrot.slane %v1834, 4
    %v4829 = vsel %vm1878, %v4828, %v4827
    %v4830 = vrot.slane %v1835, 3
    %v4831 = vsel %vm1881, %v4830, %v4829
    %v4832 = vrot.slane %v1836, 2
    %v4833 = vsel %vm1884, %v4832, %v4831
    %v4834 = vrot.slane %v1837, 1
    %v4835 = vsel %vm1887, %v4834, %v4833
    %v4836 = vsel %vm2087, %v4821, 0
    %v4838 = vsel %vm2087, %v4835, 0
    %v4841 = vsel %vm2120, %v4807, 0
    %4843 = vmatpush.msra.mxu0 0.0
    %4844 = vmatpush.msra.mxu0 0.0
    %4845 = vmatpush.msra.mxu0 0.0
    %4846 = vmatpush.msra.mxu0 0.0
    %4847 = vmatpush.msra.mxu0 0.0
    %4848 = vmatpush.msra.mxu0 0.0
    %4849 = vmatpush.msra.mxu0 0.0
    %4850 = vmatpush.msra.mxu0 0.0
    %4851 = vmatpush.msra.mxu0 0.0
    %4852 = vmatpush.msra.mxu0 0.0
    %4853 = vmatpush.msra.mxu0 0.0
    %4854 = vmatpush.msra.mxu0 0.0
    %4855 = vmatpush.msra.mxu0 0.0
    %4856 = vmatpush.msra.mxu0 0.0
    %4857 = vmatpush.msra.mxu0 %v4841
    %4858 = vmatpush.msra.mxu0 %v4806
    %4859 = vmatmul.f32.gmra.mxu0 %v4463
    %v4860 = vpop.f32.mrf.mxu0
    %v4861 = vadd.f32 0.0, %v4860
    %4862 = vmatmul.f32.gmra.mxu0 %v4465
    %v4863 = vpop.f32.mrf.mxu0
    %v4864 = vadd.f32 0.0, %v4863
    %4865 = vmatmul.f32.gmra.mxu0 %v4467
    %v4866 = vpop.f32.mrf.mxu0
    %v4867 = vadd.f32 0.0, %v4866
    %4868 = vmatmul.f32.gmra.mxu0 %v4469
    %v4869 = vpop.f32.mrf.mxu0
    %v4870 = vadd.f32 0.0, %v4869
    %4871 = vmatmul.f32.gmra.mxu0 %v4471
    %v4872 = vpop.f32.mrf.mxu0
    %v4873 = vadd.f32 0.0, %v4872
    %4874 = vmatmul.f32.gmra.mxu0 %v4598
    %v4875 = vpop.f32.mrf.mxu0
    %v4876 = vadd.f32 0.0, %v4875
    %4877 = vmatmul.f32.gmra.mxu0 %v4717
    %v4878 = vpop.f32.mrf.mxu0
    %v4879 = vadd.f32 0.0, %v4878
    %4880 = vmatmul.f32.gmra.mxu0 %v4836
    %v4881 = vpop.f32.mrf.mxu0
    %v4882 = vadd.f32 0.0, %v4881
    %4883 = vmatmul.f32.gmra.mxu0 %v4479
    %v4884 = vpop.f32.mrf.mxu0
    %v4885 = vadd.f32 0.0, %v4884
    %4886 = vmatmul.f32.gmra.mxu0 %v4481
    %v4887 = vpop.f32.mrf.mxu0
    %v4888 = vadd.f32 0.0, %v4887
    %4889 = vmatmul.f32.gmra.mxu0 %v4483
    %v4890 = vpop.f32.mrf.mxu0
    %v4891 = vadd.f32 0.0, %v4890
    %4892 = vmatmul.f32.gmra.mxu0 %v4485
    %v4893 = vpop.f32.mrf.mxu0
    %v4894 = vadd.f32 0.0, %v4893
    %4895 = vmatmul.f32.gmra.mxu0 %v4487
    %v4896 = vpop.f32.mrf.mxu0
    %v4897 = vadd.f32 0.0, %v4896
    %4898 = vmatmul.f32.gmra.mxu0 %v4600
    %v4899 = vpop.f32.mrf.mxu0
    %v4900 = vadd.f32 0.0, %v4899
    %4901 = vmatmul.f32.gmra.mxu0 %v4719
    %v4902 = vpop.f32.mrf.mxu0
    %v4903 = vadd.f32 0.0, %v4902
    %4904 = vmatmul.f32.gmra.mxu0 %v4838
    %v4905 = vpop.f32.mrf.mxu0
    %v4906 = vadd.f32 0.0, %v4905
    %4907 = vdwg.mxu0
    %v4908 = vadd.f32 %v4789, %v4861
    %v4909 = vadd.f32 %v4790, %v4864
    %v4910 = vadd.f32 %v4791, %v4867
    %v4911 = vadd.f32 %v4792, %v4870
    %v4912 = vadd.f32 %v4793, %v4873
    %v4913 = vadd.f32 %v4794, %v4876
    %v4914 = vadd.f32 %v4795, %v4879
    %v4915 = vadd.f32 %v4796, %v4882
    %v4916 = vadd.f32 %v4797, %v4885
    %v4917 = vadd.f32 %v4798, %v4888
    %v4918 = vadd.f32 %v4799, %v4891
    %v4919 = vadd.f32 %v4800, %v4894
    %v4920 = vadd.f32 %v4801, %v4897
    %v4921 = vadd.f32 %v4802, %v4900
    %v4922 = vadd.f32 %v4803, %v4903
    %v4923 = vadd.f32 %v4804, %v4906
    %s4924 = scalar_lea.vmem %s3, 304
    %v4925 = vld [vmem:[%s4924] sm:$0xff]
    %v4926 = vld [vmem:[%s4924 + $0x8] sm:$0x3]
    %v4927 = vrot.slane %v1843, 7
    %v4928 = vsel %vm1869, %v4927, %v1842
    %v4929 = vrot.slane %v1844, 6
    %v4930 = vsel %vm1872, %v4929, %v4928
    %v4931 = vrot.slane %v1845, 5
    %v4932 = vsel %vm1875, %v4931, %v4930
    %v4933 = vrot.slane %v1846, 4
    %v4934 = vsel %vm1878, %v4933, %v4932
    %v4935 = vrot.slane %v1847, 3
    %v4936 = vsel %vm1881, %v4935, %v4934
    %v4937 = vrot.slane %v1848, 2
    %v4938 = vsel %vm1884, %v4937, %v4936
    %v4939 = vrot.slane %v1849, 1
    %v4940 = vsel %vm1887, %v4939, %v4938
    %v4941 = vrot.slane %v1855, 7
    %v4942 = vsel %vm1869, %v4941, %v1854
    %v4943 = vrot.slane %v1856, 6
    %v4944 = vsel %vm1872, %v4943, %v4942
    %v4945 = vrot.slane %v1857, 5
    %v4946 = vsel %vm1875, %v4945, %v4944
    %v4947 = vrot.slane %v1858, 4
    %v4948 = vsel %vm1878, %v4947, %v4946
    %v4949 = vrot.slane %v1859, 3
    %v4950 = vsel %vm1881, %v4949, %v4948
    %v4951 = vrot.slane %v1860, 2
    %v4952 = vsel %vm1884, %v4951, %v4950
    %v4953 = vrot.slane %v1861, 1
    %v4954 = vsel %vm1887, %v4953, %v4952
    %v4955 = vsel %vm2087, %v4940, 0
    %v4957 = vsel %vm2087, %v4954, 0
    %v4960 = vsel %vm2120, %v4926, 0
    %4962 = vmatpush.msra.mxu0 0.0
    %4963 = vmatpush.msra.mxu0 0.0
    %4964 = vmatpush.msra.mxu0 0.0
    %4965 = vmatpush.msra.mxu0 0.0
    %4966 = vmatpush.msra.mxu0 0.0
    %4967 = vmatpush.msra.mxu0 0.0
    %4968 = vmatpush.msra.mxu0 0.0
    %4969 = vmatpush.msra.mxu0 0.0
    %4970 = vmatpush.msra.mxu0 0.0
    %4971 = vmatpush.msra.mxu0 0.0
    %4972 = vmatpush.msra.mxu0 0.0
    %4973 = vmatpush.msra.mxu0 0.0
    %4974 = vmatpush.msra.mxu0 0.0
    %4975 = vmatpush.msra.mxu0 0.0
    %4976 = vmatpush.msra.mxu0 %v4960
    %4977 = vmatpush.msra.mxu0 %v4925
    %4978 = vmatmul.f32.gmra.mxu0 %v4465
    %v4979 = vpop.f32.mrf.mxu0
    %v4980 = vadd.f32 0.0, %v4979
    %4981 = vmatmul.f32.gmra.mxu0 %v4467
    %v4982 = vpop.f32.mrf.mxu0
    %v4983 = vadd.f32 0.0, %v4982
    %4984 = vmatmul.f32.gmra.mxu0 %v4469
    %v4985 = vpop.f32.mrf.mxu0
    %v4986 = vadd.f32 0.0, %v4985
    %4987 = vmatmul.f32.gmra.mxu0 %v4471
    %v4988 = vpop.f32.mrf.mxu0
    %v4989 = vadd.f32 0.0, %v4988
    %4990 = vmatmul.f32.gmra.mxu0 %v4598
    %v4991 = vpop.f32.mrf.mxu0
    %v4992 = vadd.f32 0.0, %v4991
    %4993 = vmatmul.f32.gmra.mxu0 %v4717
    %v4994 = vpop.f32.mrf.mxu0
    %v4995 = vadd.f32 0.0, %v4994
    %4996 = vmatmul.f32.gmra.mxu0 %v4836
    %v4997 = vpop.f32.mrf.mxu0
    %v4998 = vadd.f32 0.0, %v4997
    %4999 = vmatmul.f32.gmra.mxu0 %v4955
    %v5000 = vpop.f32.mrf.mxu0
    %v5001 = vadd.f32 0.0, %v5000
    %5002 = vmatmul.f32.gmra.mxu0 %v4481
    %v5003 = vpop.f32.mrf.mxu0
    %v5004 = vadd.f32 0.0, %v5003
    %5005 = vmatmul.f32.gmra.mxu0 %v4483
    %v5006 = vpop.f32.mrf.mxu0
    %v5007 = vadd.f32 0.0, %v5006
    %5008 = vmatmul.f32.gmra.mxu0 %v4485
    %v5009 = vpop.f32.mrf.mxu0
    %v5010 = vadd.f32 0.0, %v5009
    %5011 = vmatmul.f32.gmra.mxu0 %v4487
    %v5012 = vpop.f32.mrf.mxu0
    %v5013 = vadd.f32 0.0, %v5012
    %5014 = vmatmul.f32.gmra.mxu0 %v4600
    %v5015 = vpop.f32.mrf.mxu0
    %v5016 = vadd.f32 0.0, %v5015
    %5017 = vmatmul.f32.gmra.mxu0 %v4719
    %v5018 = vpop.f32.mrf.mxu0
    %v5019 = vadd.f32 0.0, %v5018
    %5020 = vmatmul.f32.gmra.mxu0 %v4838
    %v5021 = vpop.f32.mrf.mxu0
    %v5022 = vadd.f32 0.0, %v5021
    %5023 = vmatmul.f32.gmra.mxu0 %v4957
    %v5024 = vpop.f32.mrf.mxu0
    %v5025 = vadd.f32 0.0, %v5024
    %5026 = vdwg.mxu0
    %v5027 = vadd.f32 %v4908, %v4980
    %v5028 = vadd.f32 %v4909, %v4983
    %v5029 = vadd.f32 %v4910, %v4986
    %v5030 = vadd.f32 %v4911, %v4989
    %v5031 = vadd.f32 %v4912, %v4992
    %v5032 = vadd.f32 %v4913, %v4995
    %v5033 = vadd.f32 %v4914, %v4998
    %v5034 = vadd.f32 %v4915, %v5001
    %v5035 = vadd.f32 %v4916, %v5004
    %v5036 = vadd.f32 %v4917, %v5007
    %v5037 = vadd.f32 %v4918, %v5010
    %v5038 = vadd.f32 %v4919, %v5013
    %v5039 = vadd.f32 %v4920, %v5016
    %v5040 = vadd.f32 %v4921, %v5019
    %v5041 = vadd.f32 %v4922, %v5022
    %v5042 = vadd.f32 %v4923, %v5025
    %s5043 = scalar_lea.vmem %s3, 320
    %v5044 = vld [vmem:[%s5043] sm:$0xff]
    %v5045 = vld [vmem:[%s5043 + $0x8] sm:$0x3]
    %v5046 = vrot.slane %v1364, 7
    %v5047 = vsel %vm1869, %v5046, %v1363
    %v5048 = vsel %vm1872, %v1653, %v5047
    %v5049 = vrot.slane %v1366, 5
    %v5050 = vsel %vm1875, %v5049, %v5048
    %v5051 = vsel %vm1878, %v1631, %v5050
    %v5052 = vrot.slane %v1368, 3
    %v5053 = vsel %vm1881, %v5052, %v5051
    %v5054 = vsel %vm1884, %v1609, %v5053
    %v5055 = vrot.slane %v1370, 1
    %v5056 = vsel %vm1887, %v5055, %v5054
    %v5057 = vrot.slane %v1604, 7
    %v5058 = vsel %vm1869, %v5057, %v1603
    %v5059 = vrot.slane %v1605, 6
    %v5060 = vsel %vm1872, %v5059, %v5058
    %v5061 = vrot.slane %v1606, 5
    %v5062 = vsel %vm1875, %v5061, %v5060
    %v5063 = vrot.slane %v1607, 4
    %v5064 = vsel %vm1878, %v5063, %v5062
    %v5065 = vrot.slane %v1608, 3
    %v5066 = vsel %vm1881, %v5065, %v5064
    %v5067 = vrot.slane %v1609, 2
    %v5068 = vsel %vm1884, %v5067, %v5066
    %v5069 = vrot.slane %v1610, 1
    %v5070 = vsel %vm1887, %v5069, %v5068
    %v5071 = vrot.slane %v1628, 7
    %v5072 = vsel %vm1869, %v5071, %v1627
    %v5073 = vrot.slane %v1629, 6
    %v5074 = vsel %vm1872, %v5073, %v5072
    %v5075 = vrot.slane %v1630, 5
    %v5076 = vsel %vm1875, %v5075, %v5074
    %v5077 = vrot.slane %v1631, 4
    %v5078 = vsel %vm1878, %v5077, %v5076
    %v5079 = vrot.slane %v1632, 3
    %v5080 = vsel %vm1881, %v5079, %v5078
    %v5081 = vrot.slane %v1633, 2
    %v5082 = vsel %vm1884, %v5081, %v5080
    %v5083 = vrot.slane %v1634, 1
    %v5084 = vsel %vm1887, %v5083, %v5082
    %v5085 = vrot.slane %v1652, 7
    %v5086 = vsel %vm1869, %v5085, %v1651
    %v5087 = vrot.slane %v1653, 6
    %v5088 = vsel %vm1872, %v5087, %v5086
    %v5089 = vrot.slane %v1654, 5
    %v5090 = vsel %vm1875, %v5089, %v5088
    %v5091 = vrot.slane %v1655, 4
    %v5092 = vsel %vm1878, %v5091, %v5090
    %v5093 = vrot.slane %v1656, 3
    %v5094 = vsel %vm1881, %v5093, %v5092
    %v5095 = vrot.slane %v1657, 2
    %v5096 = vsel %vm1884, %v5095, %v5094
    %v5097 = vrot.slane %v1658, 1
    %v5098 = vsel %vm1887, %v5097, %v5096
    %v5099 = vrot.slane %v1460, 7
    %v5100 = vsel %vm1869, %v5099, %v1459
    %v5101 = vsel %vm1872, %v1749, %v5100
    %v5102 = vrot.slane %v1462, 5
    %v5103 = vsel %vm1875, %v5102, %v5101
    %v5104 = vsel %vm1878, %v1727, %v5103
    %v5105 = vrot.slane %v1464, 3
    %v5106 = vsel %vm1881, %v5105, %v5104
    %v5107 = vsel %vm1884, %v1705, %v5106
    %v5108 = vrot.slane %v1466, 1
    %v5109 = vsel %vm1887, %v5108, %v5107
    %v5110 = vrot.slane %v1700, 7
    %v5111 = vsel %vm1869, %v5110, %v1699
    %v5112 = vrot.slane %v1701, 6
    %v5113 = vsel %vm1872, %v5112, %v5111
    %v5114 = vrot.slane %v1702, 5
    %v5115 = vsel %vm1875, %v5114, %v5113
    %v5116 = vrot.slane %v1703, 4
    %v5117 = vsel %vm1878, %v5116, %v5115
    %v5118 = vrot.slane %v1704, 3
    %v5119 = vsel %vm1881, %v5118, %v5117
    %v5120 = vrot.slane %v1705, 2
    %v5121 = vsel %vm1884, %v5120, %v5119
    %v5122 = vrot.slane %v1706, 1
    %v5123 = vsel %vm1887, %v5122, %v5121
    %v5124 = vrot.slane %v1724, 7
    %v5125 = vsel %vm1869, %v5124, %v1723
    %v5126 = vrot.slane %v1725, 6
    %v5127 = vsel %vm1872, %v5126, %v5125
    %v5128 = vrot.slane %v1726, 5
    %v5129 = vsel %vm1875, %v5128, %v5127
    %v5130 = vrot.slane %v1727, 4
    %v5131 = vsel %vm1878, %v5130, %v5129
    %v5132 = vrot.slane %v1728, 3
    %v5133 = vsel %vm1881, %v5132, %v5131
    %v5134 = vrot.slane %v1729, 2
    %v5135 = vsel %vm1884, %v5134, %v5133
    %v5136 = vrot.slane %v1730, 1
    %v5137 = vsel %vm1887, %v5136, %v5135
    %v5138 = vrot.slane %v1748, 7
    %v5139 = vsel %vm1869, %v5138, %v1747
    %v5140 = vrot.slane %v1749, 6
    %v5141 = vsel %vm1872, %v5140, %v5139
    %v5142 = vrot.slane %v1750, 5
    %v5143 = vsel %vm1875, %v5142, %v5141
    %v5144 = vrot.slane %v1751, 4
    %v5145 = vsel %vm1878, %v5144, %v5143
    %v5146 = vrot.slane %v1752, 3
    %v5147 = vsel %vm1881, %v5146, %v5145
    %v5148 = vrot.slane %v1753, 2
    %v5149 = vsel %vm1884, %v5148, %v5147
    %v5150 = vrot.slane %v1754, 1
    %v5151 = vsel %vm1887, %v5150, %v5149
    %v5152 = vrot.slane %v1376, 7
    %v5153 = vsel %vm1869, %v5152, %v1375
    %v5154 = vsel %vm1872, %v1665, %v5153
    %v5155 = vrot.slane %v1378, 5
    %v5156 = vsel %vm1875, %v5155, %v5154
    %v5157 = vsel %vm1878, %v1643, %v5156
    %v5158 = vrot.slane %v1380, 3
    %v5159 = vsel %vm1881, %v5158, %v5157
    %v5160 = vsel %vm1884, %v1621, %v5159
    %v5161 = vrot.slane %v1382, 1
    %v5162 = vsel %vm1887, %v5161, %v5160
    %v5163 = vrot.slane %v1616, 7
    %v5164 = vsel %vm1869, %v5163, %v1615
    %v5165 = vrot.slane %v1617, 6
    %v5166 = vsel %vm1872, %v5165, %v5164
    %v5167 = vrot.slane %v1618, 5
    %v5168 = vsel %vm1875, %v5167, %v5166
    %v5169 = vrot.slane %v1619, 4
    %v5170 = vsel %vm1878, %v5169, %v5168
    %v5171 = vrot.slane %v1620, 3
    %v5172 = vsel %vm1881, %v5171, %v5170
    %v5173 = vrot.slane %v1621, 2
    %v5174 = vsel %vm1884, %v5173, %v5172
    %v5175 = vrot.slane %v1622, 1
    %v5176 = vsel %vm1887, %v5175, %v5174
    %v5177 = vrot.slane %v1640, 7
    %v5178 = vsel %vm1869, %v5177, %v1639
    %v5179 = vrot.slane %v1641, 6
    %v5180 = vsel %vm1872, %v5179, %v5178
    %v5181 = vrot.slane %v1642, 5
    %v5182 = vsel %vm1875, %v5181, %v5180
    %v5183 = vrot.slane %v1643, 4
    %v5184 = vsel %vm1878, %v5183, %v5182
    %v5185 = vrot.slane %v1644, 3
    %v5186 = vsel %vm1881, %v5185, %v5184
    %v5187 = vrot.slane %v1645, 2
    %v5188 = vsel %vm1884, %v5187, %v5186
    %v5189 = vrot.slane %v1646, 1
    %v5190 = vsel %vm1887, %v5189, %v5188
    %v5191 = vrot.slane %v1664, 7
    %v5192 = vsel %vm1869, %v5191, %v1663
    %v5193 = vrot.slane %v1665, 6
    %v5194 = vsel %vm1872, %v5193, %v5192
    %v5195 = vrot.slane %v1666, 5
    %v5196 = vsel %vm1875, %v5195, %v5194
    %v5197 = vrot.slane %v1667, 4
    %v5198 = vsel %vm1878, %v5197, %v5196
    %v5199 = vrot.slane %v1668, 3
    %v5200 = vsel %vm1881, %v5199, %v5198
    %v5201 = vrot.slane %v1669, 2
    %v5202 = vsel %vm1884, %v5201, %v5200
    %v5203 = vrot.slane %v1670, 1
    %v5204 = vsel %vm1887, %v5203, %v5202
    %v5205 = vrot.slane %v1472, 7
    %v5206 = vsel %vm1869, %v5205, %v1471
    %v5207 = vsel %vm1872, %v1761, %v5206
    %v5208 = vrot.slane %v1474, 5
    %v5209 = vsel %vm1875, %v5208, %v5207
    %v5210 = vsel %vm1878, %v1739, %v5209
    %v5211 = vrot.slane %v1476, 3
    %v5212 = vsel %vm1881, %v5211, %v5210
    %v5213 = vsel %vm1884, %v1717, %v5212
    %v5214 = vrot.slane %v1478, 1
    %v5215 = vsel %vm1887, %v5214, %v5213
    %v5216 = vrot.slane %v1712, 7
    %v5217 = vsel %vm1869, %v5216, %v1711
    %v5218 = vrot.slane %v1713, 6
    %v5219 = vsel %vm1872, %v5218, %v5217
    %v5220 = vrot.slane %v1714, 5
    %v5221 = vsel %vm1875, %v5220, %v5219
    %v5222 = vrot.slane %v1715, 4
    %v5223 = vsel %vm1878, %v5222, %v5221
    %v5224 = vrot.slane %v1716, 3
    %v5225 = vsel %vm1881, %v5224, %v5223
    %v5226 = vrot.slane %v1717, 2
    %v5227 = vsel %vm1884, %v5226, %v5225
    %v5228 = vrot.slane %v1718, 1
    %v5229 = vsel %vm1887, %v5228, %v5227
    %v5230 = vrot.slane %v1736, 7
    %v5231 = vsel %vm1869, %v5230, %v1735
    %v5232 = vrot.slane %v1737, 6
    %v5233 = vsel %vm1872, %v5232, %v5231
    %v5234 = vrot.slane %v1738, 5
    %v5235 = vsel %vm1875, %v5234, %v5233
    %v5236 = vrot.slane %v1739, 4
    %v5237 = vsel %vm1878, %v5236, %v5235
    %v5238 = vrot.slane %v1740, 3
    %v5239 = vsel %vm1881, %v5238, %v5237
    %v5240 = vrot.slane %v1741, 2
    %v5241 = vsel %vm1884, %v5240, %v5239
    %v5242 = vrot.slane %v1742, 1
    %v5243 = vsel %vm1887, %v5242, %v5241
    %v5244 = vrot.slane %v1760, 7
    %v5245 = vsel %vm1869, %v5244, %v1759
    %v5246 = vrot.slane %v1761, 6
    %v5247 = vsel %vm1872, %v5246, %v5245
    %v5248 = vrot.slane %v1762, 5
    %v5249 = vsel %vm1875, %v5248, %v5247
    %v5250 = vrot.slane %v1763, 4
    %v5251 = vsel %vm1878, %v5250, %v5249
    %v5252 = vrot.slane %v1764, 3
    %v5253 = vsel %vm1881, %v5252, %v5251
    %v5254 = vrot.slane %v1765, 2
    %v5255 = vsel %vm1884, %v5254, %v5253
    %v5256 = vrot.slane %v1766, 1
    %v5257 = vsel %vm1887, %v5256, %v5255
    %v5258 = vsel %vm2087, %v5056, 0
    %v5260 = vsel %vm2087, %v5070, 0
    %v5262 = vsel %vm2087, %v5084, 0
    %v5264 = vsel %vm2087, %v5098, 0
    %v5266 = vsel %vm2087, %v5109, 0
    %v5268 = vsel %vm2087, %v5123, 0
    %v5270 = vsel %vm2087, %v5137, 0
    %v5272 = vsel %vm2087, %v5151, 0
    %v5274 = vsel %vm2087, %v5162, 0
    %v5276 = vsel %vm2087, %v5176, 0
    %v5278 = vsel %vm2087, %v5190, 0
    %v5280 = vsel %vm2087, %v5204, 0
    %v5282 = vsel %vm2087, %v5215, 0
    %v5284 = vsel %vm2087, %v5229, 0
    %v5286 = vsel %vm2087, %v5243, 0
    %v5288 = vsel %vm2087, %v5257, 0
    %v5291 = vsel %vm2120, %v5045, 0
    %5293 = vmatpush.msra.mxu0 0.0
    %5294 = vmatpush.msra.mxu0 0.0
    %5295 = vmatpush.msra.mxu0 0.0
    %5296 = vmatpush.msra.mxu0 0.0
    %5297 = vmatpush.msra.mxu0 0.0
    %5298 = vmatpush.msra.mxu0 0.0
    %5299 = vmatpush.msra.mxu0 0.0
    %5300 = vmatpush.msra.mxu0 0.0
    %5301 = vmatpush.msra.mxu0 0.0
    %5302 = vmatpush.msra.mxu0 0.0
    %5303 = vmatpush.msra.mxu0 0.0
    %5304 = vmatpush.msra.mxu0 0.0
    %5305 = vmatpush.msra.mxu0 0.0
    %5306 = vmatpush.msra.mxu0 0.0
    %5307 = vmatpush.msra.mxu0 %v5291
    %5308 = vmatpush.msra.mxu0 %v5044
    %5309 = vmatmul.f32.gmra.mxu0 %v5258
    %v5310 = vpop.f32.mrf.mxu0
    %v5311 = vadd.f32 0.0, %v5310
    %5312 = vmatmul.f32.gmra.mxu0 %v5260
    %v5313 = vpop.f32.mrf.mxu0
    %v5314 = vadd.f32 0.0, %v5313
    %5315 = vmatmul.f32.gmra.mxu0 %v5262
    %v5316 = vpop.f32.mrf.mxu0
    %v5317 = vadd.f32 0.0, %v5316
    %5318 = vmatmul.f32.gmra.mxu0 %v5264
    %v5319 = vpop.f32.mrf.mxu0
    %v5320 = vadd.f32 0.0, %v5319
    %5321 = vmatmul.f32.gmra.mxu0 %v5266
    %v5322 = vpop.f32.mrf.mxu0
    %v5323 = vadd.f32 0.0, %v5322
    %5324 = vmatmul.f32.gmra.mxu0 %v5268
    %v5325 = vpop.f32.mrf.mxu0
    %v5326 = vadd.f32 0.0, %v5325
    %5327 = vmatmul.f32.gmra.mxu0 %v5270
    %v5328 = vpop.f32.mrf.mxu0
    %v5329 = vadd.f32 0.0, %v5328
    %5330 = vmatmul.f32.gmra.mxu0 %v5272
    %v5331 = vpop.f32.mrf.mxu0
    %v5332 = vadd.f32 0.0, %v5331
    %5333 = vmatmul.f32.gmra.mxu0 %v5274
    %v5334 = vpop.f32.mrf.mxu0
    %v5335 = vadd.f32 0.0, %v5334
    %5336 = vmatmul.f32.gmra.mxu0 %v5276
    %v5337 = vpop.f32.mrf.mxu0
    %v5338 = vadd.f32 0.0, %v5337
    %5339 = vmatmul.f32.gmra.mxu0 %v5278
    %v5340 = vpop.f32.mrf.mxu0
    %v5341 = vadd.f32 0.0, %v5340
    %5342 = vmatmul.f32.gmra.mxu0 %v5280
    %v5343 = vpop.f32.mrf.mxu0
    %v5344 = vadd.f32 0.0, %v5343
    %5345 = vmatmul.f32.gmra.mxu0 %v5282
    %v5346 = vpop.f32.mrf.mxu0
    %v5347 = vadd.f32 0.0, %v5346
    %5348 = vmatmul.f32.gmra.mxu0 %v5284
    %v5349 = vpop.f32.mrf.mxu0
    %v5350 = vadd.f32 0.0, %v5349
    %5351 = vmatmul.f32.gmra.mxu0 %v5286
    %v5352 = vpop.f32.mrf.mxu0
    %v5353 = vadd.f32 0.0, %v5352
    %5354 = vmatmul.f32.gmra.mxu0 %v5288
    %v5355 = vpop.f32.mrf.mxu0
    %v5356 = vadd.f32 0.0, %v5355
    %5357 = vdwg.mxu0
    %v5358 = vadd.f32 %v5027, %v5311
    %v5359 = vadd.f32 %v5028, %v5314
    %v5360 = vadd.f32 %v5029, %v5317
    %v5361 = vadd.f32 %v5030, %v5320
    %v5362 = vadd.f32 %v5031, %v5323
    %v5363 = vadd.f32 %v5032, %v5326
    %v5364 = vadd.f32 %v5033, %v5329
    %v5365 = vadd.f32 %v5034, %v5332
    %v5366 = vadd.f32 %v5035, %v5335
    %v5367 = vadd.f32 %v5036, %v5338
    %v5368 = vadd.f32 %v5037, %v5341
    %v5369 = vadd.f32 %v5038, %v5344
    %v5370 = vadd.f32 %v5039, %v5347
    %v5371 = vadd.f32 %v5040, %v5350
    %v5372 = vadd.f32 %v5041, %v5353
    %v5373 = vadd.f32 %v5042, %v5356
    %s5374 = scalar_lea.vmem %s3, 336
    %v5375 = vld [vmem:[%s5374] sm:$0xff]
    %v5376 = vld [vmem:[%s5374 + $0x8] sm:$0x3]
    %v5377 = vrot.slane %v1556, 7
    %v5378 = vsel %vm1869, %v5377, %v1555
    %v5379 = vsel %vm1872, %v1845, %v5378
    %v5380 = vrot.slane %v1558, 5
    %v5381 = vsel %vm1875, %v5380, %v5379
    %v5382 = vsel %vm1878, %v1823, %v5381
    %v5383 = vrot.slane %v1560, 3
    %v5384 = vsel %vm1881, %v5383, %v5382
    %v5385 = vsel %vm1884, %v1801, %v5384
    %v5386 = vrot.slane %v1562, 1
    %v5387 = vsel %vm1887, %v5386, %v5385
    %v5388 = vrot.slane %v1568, 7
    %v5389 = vsel %vm1869, %v5388, %v1567
    %v5390 = vsel %vm1872, %v1857, %v5389
    %v5391 = vrot.slane %v1570, 5
    %v5392 = vsel %vm1875, %v5391, %v5390
    %v5393 = vsel %vm1878, %v1835, %v5392
    %v5394 = vrot.slane %v1572, 3
    %v5395 = vsel %vm1881, %v5394, %v5393
    %v5396 = vsel %vm1884, %v1813, %v5395
    %v5397 = vrot.slane %v1574, 1
    %v5398 = vsel %vm1887, %v5397, %v5396
    %v5399 = vsel %vm2087, %v5387, 0
    %v5401 = vsel %vm2087, %v5398, 0
    %v5404 = vsel %vm2120, %v5376, 0
    %5406 = vmatpush.msra.mxu0 0.0
    %5407 = vmatpush.msra.mxu0 0.0
    %5408 = vmatpush.msra.mxu0 0.0
    %5409 = vmatpush.msra.mxu0 0.0
    %5410 = vmatpush.msra.mxu0 0.0
    %5411 = vmatpush.msra.mxu0 0.0
    %5412 = vmatpush.msra.mxu0 0.0
    %5413 = vmatpush.msra.mxu0 0.0
    %5414 = vmatpush.msra.mxu0 0.0
    %5415 = vmatpush.msra.mxu0 0.0
    %5416 = vmatpush.msra.mxu0 0.0
    %5417 = vmatpush.msra.mxu0 0.0
    %5418 = vmatpush.msra.mxu0 0.0
    %5419 = vmatpush.msra.mxu0 0.0
    %5420 = vmatpush.msra.mxu0 %v5404
    %5421 = vmatpush.msra.mxu0 %v5375
    %5422 = vmatmul.f32.gmra.mxu0 %v5260
    %v5423 = vpop.f32.mrf.mxu0
    %v5424 = vadd.f32 0.0, %v5423
    %5425 = vmatmul.f32.gmra.mxu0 %v5262
    %v5426 = vpop.f32.mrf.mxu0
    %v5427 = vadd.f32 0.0, %v5426
    %5428 = vmatmul.f32.gmra.mxu0 %v5264
    %v5429 = vpop.f32.mrf.mxu0
    %v5430 = vadd.f32 0.0, %v5429
    %5431 = vmatmul.f32.gmra.mxu0 %v5266
    %v5432 = vpop.f32.mrf.mxu0
    %v5433 = vadd.f32 0.0, %v5432
    %5434 = vmatmul.f32.gmra.mxu0 %v5268
    %v5435 = vpop.f32.mrf.mxu0
    %v5436 = vadd.f32 0.0, %v5435
    %5437 = vmatmul.f32.gmra.mxu0 %v5270
    %v5438 = vpop.f32.mrf.mxu0
    %v5439 = vadd.f32 0.0, %v5438
    %5440 = vmatmul.f32.gmra.mxu0 %v5272
    %v5441 = vpop.f32.mrf.mxu0
    %v5442 = vadd.f32 0.0, %v5441
    %5443 = vmatmul.f32.gmra.mxu0 %v5399
    %v5444 = vpop.f32.mrf.mxu0
    %v5445 = vadd.f32 0.0, %v5444
    %5446 = vmatmul.f32.gmra.mxu0 %v5276
    %v5447 = vpop.f32.mrf.mxu0
    %v5448 = vadd.f32 0.0, %v5447
    %5449 = vmatmul.f32.gmra.mxu0 %v5278
    %v5450 = vpop.f32.mrf.mxu0
    %v5451 = vadd.f32 0.0, %v5450
    %5452 = vmatmul.f32.gmra.mxu0 %v5280
    %v5453 = vpop.f32.mrf.mxu0
    %v5454 = vadd.f32 0.0, %v5453
    %5455 = vmatmul.f32.gmra.mxu0 %v5282
    %v5456 = vpop.f32.mrf.mxu0
    %v5457 = vadd.f32 0.0, %v5456
    %5458 = vmatmul.f32.gmra.mxu0 %v5284
    %v5459 = vpop.f32.mrf.mxu0
    %v5460 = vadd.f32 0.0, %v5459
    %5461 = vmatmul.f32.gmra.mxu0 %v5286
    %v5462 = vpop.f32.mrf.mxu0
    %v5463 = vadd.f32 0.0, %v5462
    %5464 = vmatmul.f32.gmra.mxu0 %v5288
    %v5465 = vpop.f32.mrf.mxu0
    %v5466 = vadd.f32 0.0, %v5465
    %5467 = vmatmul.f32.gmra.mxu0 %v5401
    %v5468 = vpop.f32.mrf.mxu0
    %v5469 = vadd.f32 0.0, %v5468
    %5470 = vdwg.mxu0
    %v5471 = vadd.f32 %v5358, %v5424
    %v5472 = vadd.f32 %v5359, %v5427
    %v5473 = vadd.f32 %v5360, %v5430
    %v5474 = vadd.f32 %v5361, %v5433
    %v5475 = vadd.f32 %v5362, %v5436
    %v5476 = vadd.f32 %v5363, %v5439
    %v5477 = vadd.f32 %v5364, %v5442
    %v5478 = vadd.f32 %v5365, %v5445
    %v5479 = vadd.f32 %v5366, %v5448
    %v5480 = vadd.f32 %v5367, %v5451
    %v5481 = vadd.f32 %v5368, %v5454
    %v5482 = vadd.f32 %v5369, %v5457
    %v5483 = vadd.f32 %v5370, %v5460
    %v5484 = vadd.f32 %v5371, %v5463
    %v5485 = vadd.f32 %v5372, %v5466
    %v5486 = vadd.f32 %v5373, %v5469
    %s5487 = scalar_lea.vmem %s3, 352
    %v5488 = vld [vmem:[%s5487] sm:$0xff]
    %v5489 = vld [vmem:[%s5487 + $0x8] sm:$0x3]
    %v5490 = vrot.slane %v1796, 7
    %v5491 = vsel %vm1869, %v5490, %v1795
    %v5492 = vrot.slane %v1797, 6
    %v5493 = vsel %vm1872, %v5492, %v5491
    %v5494 = vrot.slane %v1798, 5
    %v5495 = vsel %vm1875, %v5494, %v5493
    %v5496 = vrot.slane %v1799, 4
    %v5497 = vsel %vm1878, %v5496, %v5495
    %v5498 = vrot.slane %v1800, 3
    %v5499 = vsel %vm1881, %v5498, %v5497
    %v5500 = vrot.slane %v1801, 2
    %v5501 = vsel %vm1884, %v5500, %v5499
    %v5502 = vrot.slane %v1802, 1
    %v5503 = vsel %vm1887, %v5502, %v5501
    %v5504 = vrot.slane %v1808, 7
    %v5505 = vsel %vm1869, %v5504, %v1807
    %v5506 = vrot.slane %v1809, 6
    %v5507 = vsel %vm1872, %v5506, %v5505
    %v5508 = vrot.slane %v1810, 5
    %v5509 = vsel %vm1875, %v5508, %v5507
    %v5510 = vrot.slane %v1811, 4
    %v5511 = vsel %vm1878, %v5510, %v5509
    %v5512 = vrot.slane %v1812, 3
    %v5513 = vsel %vm1881, %v5512, %v5511
    %v5514 = vrot.slane %v1813, 2
    %v5515 = vsel %vm1884, %v5514, %v5513
    %v5516 = vrot.slane %v1814, 1
    %v5517 = vsel %vm1887, %v5516, %v5515
    %v5518 = vsel %vm2087, %v5503, 0
    %v5520 = vsel %vm2087, %v5517, 0
    %v5523 = vsel %vm2120, %v5489, 0
    %5525 = vmatpush.msra.mxu0 0.0
    %5526 = vmatpush.msra.mxu0 0.0
    %5527 = vmatpush.msra.mxu0 0.0
    %5528 = vmatpush.msra.mxu0 0.0
    %5529 = vmatpush.msra.mxu0 0.0
    %5530 = vmatpush.msra.mxu0 0.0
    %5531 = vmatpush.msra.mxu0 0.0
    %5532 = vmatpush.msra.mxu0 0.0
    %5533 = vmatpush.msra.mxu0 0.0
    %5534 = vmatpush.msra.mxu0 0.0
    %5535 = vmatpush.msra.mxu0 0.0
    %5536 = vmatpush.msra.mxu0 0.0
    %5537 = vmatpush.msra.mxu0 0.0
    %5538 = vmatpush.msra.mxu0 0.0
    %5539 = vmatpush.msra.mxu0 %v5523
    %5540 = vmatpush.msra.mxu0 %v5488
    %5541 = vmatmul.f32.gmra.mxu0 %v5262
    %v5542 = vpop.f32.mrf.mxu0
    %v5543 = vadd.f32 0.0, %v5542
    %5544 = vmatmul.f32.gmra.mxu0 %v5264
    %v5545 = vpop.f32.mrf.mxu0
    %v5546 = vadd.f32 0.0, %v5545
    %5547 = vmatmul.f32.gmra.mxu0 %v5266
    %v5548 = vpop.f32.mrf.mxu0
    %v5549 = vadd.f32 0.0, %v5548
    %5550 = vmatmul.f32.gmra.mxu0 %v5268
    %v5551 = vpop.f32.mrf.mxu0
    %v5552 = vadd.f32 0.0, %v5551
    %5553 = vmatmul.f32.gmra.mxu0 %v5270
    %v5554 = vpop.f32.mrf.mxu0
    %v5555 = vadd.f32 0.0, %v5554
    %5556 = vmatmul.f32.gmra.mxu0 %v5272
    %v5557 = vpop.f32.mrf.mxu0
    %v5558 = vadd.f32 0.0, %v5557
    %5559 = vmatmul.f32.gmra.mxu0 %v5399
    %v5560 = vpop.f32.mrf.mxu0
    %v5561 = vadd.f32 0.0, %v5560
    %5562 = vmatmul.f32.gmra.mxu0 %v5518
    %v5563 = vpop.f32.mrf.mxu0
    %v5564 = vadd.f32 0.0, %v5563
    %5565 = vmatmul.f32.gmra.mxu0 %v5278
    %v5566 = vpop.f32.mrf.mxu0
    %v5567 = vadd.f32 0.0, %v5566
    %5568 = vmatmul.f32.gmra.mxu0 %v5280
    %v5569 = vpop.f32.mrf.mxu0
    %v5570 = vadd.f32 0.0, %v5569
    %5571 = vmatmul.f32.gmra.mxu0 %v5282
    %v5572 = vpop.f32.mrf.mxu0
    %v5573 = vadd.f32 0.0, %v5572
    %5574 = vmatmul.f32.gmra.mxu0 %v5284
    %v5575 = vpop.f32.mrf.mxu0
    %v5576 = vadd.f32 0.0, %v5575
    %5577 = vmatmul.f32.gmra.mxu0 %v5286
    %v5578 = vpop.f32.mrf.mxu0
    %v5579 = vadd.f32 0.0, %v5578
    %5580 = vmatmul.f32.gmra.mxu0 %v5288
    %v5581 = vpop.f32.mrf.mxu0
    %v5582 = vadd.f32 0.0, %v5581
    %5583 = vmatmul.f32.gmra.mxu0 %v5401
    %v5584 = vpop.f32.mrf.mxu0
    %v5585 = vadd.f32 0.0, %v5584
    %5586 = vmatmul.f32.gmra.mxu0 %v5520
    %v5587 = vpop.f32.mrf.mxu0
    %v5588 = vadd.f32 0.0, %v5587
    %5589 = vdwg.mxu0
    %v5590 = vadd.f32 %v5471, %v5543
    %v5591 = vadd.f32 %v5472, %v5546
    %v5592 = vadd.f32 %v5473, %v5549
    %v5593 = vadd.f32 %v5474, %v5552
    %v5594 = vadd.f32 %v5475, %v5555
    %v5595 = vadd.f32 %v5476, %v5558
    %v5596 = vadd.f32 %v5477, %v5561
    %v5597 = vadd.f32 %v5478, %v5564
    %v5598 = vadd.f32 %v5479, %v5567
    %v5599 = vadd.f32 %v5480, %v5570
    %v5600 = vadd.f32 %v5481, %v5573
    %v5601 = vadd.f32 %v5482, %v5576
    %v5602 = vadd.f32 %v5483, %v5579
    %v5603 = vadd.f32 %v5484, %v5582
    %v5604 = vadd.f32 %v5485, %v5585
    %v5605 = vadd.f32 %v5486, %v5588
    %s5606 = scalar_lea.vmem %s3, 368
    %v5607 = vld [vmem:[%s5606] sm:$0xff]
    %v5608 = vld [vmem:[%s5606 + $0x8] sm:$0x3]
    %v5609 = vrot.slane %v1820, 7
    %v5610 = vsel %vm1869, %v5609, %v1819
    %v5611 = vrot.slane %v1821, 6
    %v5612 = vsel %vm1872, %v5611, %v5610
    %v5613 = vrot.slane %v1822, 5
    %v5614 = vsel %vm1875, %v5613, %v5612
    %v5615 = vrot.slane %v1823, 4
    %v5616 = vsel %vm1878, %v5615, %v5614
    %v5617 = vrot.slane %v1824, 3
    %v5618 = vsel %vm1881, %v5617, %v5616
    %v5619 = vrot.slane %v1825, 2
    %v5620 = vsel %vm1884, %v5619, %v5618
    %v5621 = vrot.slane %v1826, 1
    %v5622 = vsel %vm1887, %v5621, %v5620
    %v5623 = vrot.slane %v1832, 7
    %v5624 = vsel %vm1869, %v5623, %v1831
    %v5625 = vrot.slane %v1833, 6
    %v5626 = vsel %vm1872, %v5625, %v5624
    %v5627 = vrot.slane %v1834, 5
    %v5628 = vsel %vm1875, %v5627, %v5626
    %v5629 = vrot.slane %v1835, 4
    %v5630 = vsel %vm1878, %v5629, %v5628
    %v5631 = vrot.slane %v1836, 3
    %v5632 = vsel %vm1881, %v5631, %v5630
    %v5633 = vrot.slane %v1837, 2
    %v5634 = vsel %vm1884, %v5633, %v5632
    %v5635 = vrot.slane %v1838, 1
    %v5636 = vsel %vm1887, %v5635, %v5634
    %v5637 = vsel %vm2087, %v5622, 0
    %v5639 = vsel %vm2087, %v5636, 0
    %v5642 = vsel %vm2120, %v5608, 0
    %5644 = vmatpush.msra.mxu0 0.0
    %5645 = vmatpush.msra.mxu0 0.0
    %5646 = vmatpush.msra.mxu0 0.0
    %5647 = vmatpush.msra.mxu0 0.0
    %5648 = vmatpush.msra.mxu0 0.0
    %5649 = vmatpush.msra.mxu0 0.0
    %5650 = vmatpush.msra.mxu0 0.0
    %5651 = vmatpush.msra.mxu0 0.0
    %5652 = vmatpush.msra.mxu0 0.0
    %5653 = vmatpush.msra.mxu0 0.0
    %5654 = vmatpush.msra.mxu0 0.0
    %5655 = vmatpush.msra.mxu0 0.0
    %5656 = vmatpush.msra.mxu0 0.0
    %5657 = vmatpush.msra.mxu0 0.0
    %5658 = vmatpush.msra.mxu0 %v5642
    %5659 = vmatpush.msra.mxu0 %v5607
    %5660 = vmatmul.f32.gmra.mxu0 %v5264
    %v5661 = vpop.f32.mrf.mxu0
    %v5662 = vadd.f32 0.0, %v5661
    %5663 = vmatmul.f32.gmra.mxu0 %v5266
    %v5664 = vpop.f32.mrf.mxu0
    %v5665 = vadd.f32 0.0, %v5664
    %5666 = vmatmul.f32.gmra.mxu0 %v5268
    %v5667 = vpop.f32.mrf.mxu0
    %v5668 = vadd.f32 0.0, %v5667
    %5669 = vmatmul.f32.gmra.mxu0 %v5270
    %v5670 = vpop.f32.mrf.mxu0
    %v5671 = vadd.f32 0.0, %v5670
    %5672 = vmatmul.f32.gmra.mxu0 %v5272
    %v5673 = vpop.f32.mrf.mxu0
    %v5674 = vadd.f32 0.0, %v5673
    %5675 = vmatmul.f32.gmra.mxu0 %v5399
    %v5676 = vpop.f32.mrf.mxu0
    %v5677 = vadd.f32 0.0, %v5676
    %5678 = vmatmul.f32.gmra.mxu0 %v5518
    %v5679 = vpop.f32.mrf.mxu0
    %v5680 = vadd.f32 0.0, %v5679
    %5681 = vmatmul.f32.gmra.mxu0 %v5637
    %v5682 = vpop.f32.mrf.mxu0
    %v5683 = vadd.f32 0.0, %v5682
    %5684 = vmatmul.f32.gmra.mxu0 %v5280
    %v5685 = vpop.f32.mrf.mxu0
    %v5686 = vadd.f32 0.0, %v5685
    %5687 = vmatmul.f32.gmra.mxu0 %v5282
    %v5688 = vpop.f32.mrf.mxu0
    %v5689 = vadd.f32 0.0, %v5688
    %5690 = vmatmul.f32.gmra.mxu0 %v5284
    %v5691 = vpop.f32.mrf.mxu0
    %v5692 = vadd.f32 0.0, %v5691
    %5693 = vmatmul.f32.gmra.mxu0 %v5286
    %v5694 = vpop.f32.mrf.mxu0
    %v5695 = vadd.f32 0.0, %v5694
    %5696 = vmatmul.f32.gmra.mxu0 %v5288
    %v5697 = vpop.f32.mrf.mxu0
    %v5698 = vadd.f32 0.0, %v5697
    %5699 = vmatmul.f32.gmra.mxu0 %v5401
    %v5700 = vpop.f32.mrf.mxu0
    %v5701 = vadd.f32 0.0, %v5700
    %5702 = vmatmul.f32.gmra.mxu0 %v5520
    %v5703 = vpop.f32.mrf.mxu0
    %v5704 = vadd.f32 0.0, %v5703
    %5705 = vmatmul.f32.gmra.mxu0 %v5639
    %v5706 = vpop.f32.mrf.mxu0
    %v5707 = vadd.f32 0.0, %v5706
    %5708 = vdwg.mxu0
    %v5709 = vadd.f32 %v5590, %v5662
    %v5710 = vadd.f32 %v5591, %v5665
    %v5711 = vadd.f32 %v5592, %v5668
    %v5712 = vadd.f32 %v5593, %v5671
    %v5713 = vadd.f32 %v5594, %v5674
    %v5714 = vadd.f32 %v5595, %v5677
    %v5715 = vadd.f32 %v5596, %v5680
    %v5716 = vadd.f32 %v5597, %v5683
    %v5717 = vadd.f32 %v5598, %v5686
    %v5718 = vadd.f32 %v5599, %v5689
    %v5719 = vadd.f32 %v5600, %v5692
    %v5720 = vadd.f32 %v5601, %v5695
    %v5721 = vadd.f32 %v5602, %v5698
    %v5722 = vadd.f32 %v5603, %v5701
    %v5723 = vadd.f32 %v5604, %v5704
    %v5724 = vadd.f32 %v5605, %v5707
    %s5725 = scalar_lea.vmem %s3, 384
    %v5726 = vld [vmem:[%s5725] sm:$0xff]
    %v5727 = vld [vmem:[%s5725 + $0x8] sm:$0x3]
    %v5728 = vrot.slane %v1844, 7
    %v5729 = vsel %vm1869, %v5728, %v1843
    %v5730 = vrot.slane %v1845, 6
    %v5731 = vsel %vm1872, %v5730, %v5729
    %v5732 = vrot.slane %v1846, 5
    %v5733 = vsel %vm1875, %v5732, %v5731
    %v5734 = vrot.slane %v1847, 4
    %v5735 = vsel %vm1878, %v5734, %v5733
    %v5736 = vrot.slane %v1848, 3
    %v5737 = vsel %vm1881, %v5736, %v5735
    %v5738 = vrot.slane %v1849, 2
    %v5739 = vsel %vm1884, %v5738, %v5737
    %v5740 = vrot.slane %v1850, 1
    %v5741 = vsel %vm1887, %v5740, %v5739
    %v5742 = vrot.slane %v1856, 7
    %v5743 = vsel %vm1869, %v5742, %v1855
    %v5744 = vrot.slane %v1857, 6
    %v5745 = vsel %vm1872, %v5744, %v5743
    %v5746 = vrot.slane %v1858, 5
    %v5747 = vsel %vm1875, %v5746, %v5745
    %v5748 = vrot.slane %v1859, 4
    %v5749 = vsel %vm1878, %v5748, %v5747
    %v5750 = vrot.slane %v1860, 3
    %v5751 = vsel %vm1881, %v5750, %v5749
    %v5752 = vrot.slane %v1861, 2
    %v5753 = vsel %vm1884, %v5752, %v5751
    %v5754 = vrot.slane %v1862, 1
    %v5755 = vsel %vm1887, %v5754, %v5753
    %v5756 = vsel %vm2087, %v5741, 0
    %v5758 = vsel %vm2087, %v5755, 0
    %v5761 = vsel %vm2120, %v5727, 0
    %5763 = vmatpush.msra.mxu0 0.0
    %5764 = vmatpush.msra.mxu0 0.0
    %5765 = vmatpush.msra.mxu0 0.0
    %5766 = vmatpush.msra.mxu0 0.0
    %5767 = vmatpush.msra.mxu0 0.0
    %5768 = vmatpush.msra.mxu0 0.0
    %5769 = vmatpush.msra.mxu0 0.0
    %5770 = vmatpush.msra.mxu0 0.0
    %5771 = vmatpush.msra.mxu0 0.0
    %5772 = vmatpush.msra.mxu0 0.0
    %5773 = vmatpush.msra.mxu0 0.0
    %5774 = vmatpush.msra.mxu0 0.0
    %5775 = vmatpush.msra.mxu0 0.0
    %5776 = vmatpush.msra.mxu0 0.0
    %5777 = vmatpush.msra.mxu0 %v5761
    %5778 = vmatpush.msra.mxu0 %v5726
    %5779 = vmatmul.f32.gmra.mxu0 %v5266
    %v5780 = vpop.f32.mrf.mxu0
    %v5781 = vadd.f32 0.0, %v5780
    %5782 = vmatmul.f32.gmra.mxu0 %v5268
    %v5783 = vpop.f32.mrf.mxu0
    %v5784 = vadd.f32 0.0, %v5783
    %5785 = vmatmul.f32.gmra.mxu0 %v5270
    %v5786 = vpop.f32.mrf.mxu0
    %v5787 = vadd.f32 0.0, %v5786
    %5788 = vmatmul.f32.gmra.mxu0 %v5272
    %v5789 = vpop.f32.mrf.mxu0
    %v5790 = vadd.f32 0.0, %v5789
    %5791 = vmatmul.f32.gmra.mxu0 %v5399
    %v5792 = vpop.f32.mrf.mxu0
    %v5793 = vadd.f32 0.0, %v5792
    %5794 = vmatmul.f32.gmra.mxu0 %v5518
    %v5795 = vpop.f32.mrf.mxu0
    %v5796 = vadd.f32 0.0, %v5795
    %5797 = vmatmul.f32.gmra.mxu0 %v5637
    %v5798 = vpop.f32.mrf.mxu0
    %v5799 = vadd.f32 0.0, %v5798
    %5800 = vmatmul.f32.gmra.mxu0 %v5756
    %v5801 = vpop.f32.mrf.mxu0
    %v5802 = vadd.f32 0.0, %v5801
    %5803 = vmatmul.f32.gmra.mxu0 %v5282
    %v5804 = vpop.f32.mrf.mxu0
    %v5805 = vadd.f32 0.0, %v5804
    %5806 = vmatmul.f32.gmra.mxu0 %v5284
    %v5807 = vpop.f32.mrf.mxu0
    %v5808 = vadd.f32 0.0, %v5807
    %5809 = vmatmul.f32.gmra.mxu0 %v5286
    %v5810 = vpop.f32.mrf.mxu0
    %v5811 = vadd.f32 0.0, %v5810
    %5812 = vmatmul.f32.gmra.mxu0 %v5288
    %v5813 = vpop.f32.mrf.mxu0
    %v5814 = vadd.f32 0.0, %v5813
    %5815 = vmatmul.f32.gmra.mxu0 %v5401
    %v5816 = vpop.f32.mrf.mxu0
    %v5817 = vadd.f32 0.0, %v5816
    %5818 = vmatmul.f32.gmra.mxu0 %v5520
    %v5819 = vpop.f32.mrf.mxu0
    %v5820 = vadd.f32 0.0, %v5819
    %5821 = vmatmul.f32.gmra.mxu0 %v5639
    %v5822 = vpop.f32.mrf.mxu0
    %v5823 = vadd.f32 0.0, %v5822
    %5824 = vmatmul.f32.gmra.mxu0 %v5758
    %v5825 = vpop.f32.mrf.mxu0
    %v5826 = vadd.f32 0.0, %v5825
    %5827 = vdwg.mxu0
    %v5828 = vadd.f32 %v5709, %v5781
    %v5829 = vadd.f32 %v5710, %v5784
    %v5830 = vadd.f32 %v5711, %v5787
    %v5831 = vadd.f32 %v5712, %v5790
    %v5832 = vadd.f32 %v5713, %v5793
    %v5833 = vadd.f32 %v5714, %v5796
    %v5834 = vadd.f32 %v5715, %v5799
    %v5835 = vadd.f32 %v5716, %v5802
    %v5836 = vadd.f32 %v5717, %v5805
    %v5837 = vadd.f32 %v5718, %v5808
    %v5838 = vadd.f32 %v5719, %v5811
    %v5839 = vadd.f32 %v5720, %v5814
    %v5840 = vadd.f32 %v5721, %v5817
    %v5841 = vadd.f32 %v5722, %v5820
    %v5842 = vadd.f32 %v5723, %v5823
    %v5843 = vadd.f32 %v5724, %v5826
    %v5844 = vld [vmem:[%s4] sm:$0x1]
    %v5846 = vperm.slane %v5844, 0
    %v5848 = vadd.f32 %v5828, %v5846
    %v5849 = vadd.f32 %v5829, %v5846
    %v5850 = vadd.f32 %v5830, %v5846
    %v5851 = vadd.f32 %v5831, %v5846
    %v5852 = vadd.f32 %v5832, %v5846
    %v5853 = vadd.f32 %v5833, %v5846
    %v5854 = vadd.f32 %v5834, %v5846
    %v5855 = vadd.f32 %v5835, %v5846
    %v5856 = vadd.f32 %v5836, %v5846
    %v5857 = vadd.f32 %v5837, %v5846
    %v5858 = vadd.f32 %v5838, %v5846
    %v5859 = vadd.f32 %v5839, %v5846
    %v5860 = vadd.f32 %v5840, %v5846
    %v5861 = vadd.f32 %v5841, %v5846
    %v5862 = vadd.f32 %v5842, %v5846
    %v5863 = vadd.f32 %v5843, %v5846
    %v5864 = vmax.f32 %v5848, 0.0
    %v5865 = vmax.f32 %v5849, 0.0
    %v5866 = vmax.f32 %v5850, 0.0
    %v5867 = vmax.f32 %v5851, 0.0
    %v5868 = vmax.f32 %v5852, 0.0
    %v5869 = vmax.f32 %v5853, 0.0
    %v5870 = vmax.f32 %v5854, 0.0
    %v5871 = vmax.f32 %v5855, 0.0
    %v5872 = vmax.f32 %v5856, 0.0
    %v5873 = vmax.f32 %v5857, 0.0
    %v5874 = vmax.f32 %v5858, 0.0
    %v5875 = vmax.f32 %v5859, 0.0
    %v5876 = vmax.f32 %v5860, 0.0
    %v5877 = vmax.f32 %v5861, 0.0
    %v5878 = vmax.f32 %v5862, 0.0
    %v5879 = vmax.f32 %v5863, 0.0
    %v5880 = vmax.f32 %v5864, %v5865
    %v5881 = vmax.f32 %v5866, %v5867
    %v5882 = vmax.f32 %v5868, %v5869
    %v5883 = vmax.f32 %v5870, %v5871
    %v5884 = vmax.f32 %v5872, %v5873
    %v5885 = vmax.f32 %v5874, %v5875
    %v5886 = vmax.f32 %v5876, %v5877
    %v5887 = vmax.f32 %v5878, %v5879
    %v5896 = vrot.slane %v5880, 1
    %v5897 = vrot.slane %v5881, 1
    %v5898 = vrot.slane %v5882, 1
    %v5899 = vrot.slane %v5883, 1
    %v5900 = vrot.slane %v5884, 1
    %v5901 = vrot.slane %v5885, 1
    %v5902 = vrot.slane %v5886, 1
    %v5903 = vrot.slane %v5887, 1
    %v5912 = vmax.f32 %v5880, %v5896
    %v5913 = vmax.f32 %v5881, %v5897
    %v5914 = vmax.f32 %v5882, %v5898
    %v5915 = vmax.f32 %v5883, %v5899
    %v5916 = vmax.f32 %v5884, %v5900
    %v5917 = vmax.f32 %v5885, %v5901
    %v5918 = vmax.f32 %v5886, %v5902
    %v5919 = vmax.f32 %v5887, %v5903
    %v5920 = vld [vmem:[%s5] sm:$0xff]
    %v5921 = vld [vmem:[%s5 + $0x8] sm:$0xff]
    %v5922 = vld [vmem:[%s5 + $0x10] sm:$0xf]
    %s5923 = scalar_lea.vmem %s5, 96
    %v5924 = vld [vmem:[%s5923] sm:$0xff]
    %v5925 = vld [vmem:[%s5923 + $0x8] sm:$0xff]
    %v5926 = vld [vmem:[%s5923 + $0x10] sm:$0xf]
    %v5929 = vrot.slane %v5917, 7
    %v5930 = vsel %vm1869, %v5929, %v5913
    %vm5931 = vcmask 162816
    %v5932 = vsel %vm5931, %v5930, 0
    %vm5934 = vcmask 1043456
    %v5936 = vsel %vm5934, %v5926, 0
    %5938 = vmatpush.msra.mxu0 0.0
    %5939 = vmatpush.msra.mxu0 0.0
    %5940 = vmatpush.msra.mxu0 0.0
    %5941 = vmatpush.msra.mxu0 0.0
    %5942 = vmatpush.msra.mxu0 0.0
    %5943 = vmatpush.msra.mxu0 0.0
    %5944 = vmatpush.msra.mxu0 0.0
    %5945 = vmatpush.msra.mxu0 0.0
    %5946 = vmatpush.msra.mxu0 0.0
    %5947 = vmatpush.msra.mxu0 0.0
    %5948 = vmatpush.msra.mxu0 0.0
    %5949 = vmatpush.msra.mxu0 0.0
    %5950 = vmatpush.msra.mxu0 0.0
    %5951 = vmatpush.msra.mxu0 %v5936
    %5952 = vmatpush.msra.mxu0 %v5925
    %5953 = vmatpush.msra.mxu0 %v5924
    %5954 = vmatmul.f32.gmra.mxu0 %v5932
    %v5955 = vpop.f32.mrf.mxu0
    %v5956 = vadd.f32 0.0, %v5955
    %5957 = vdwg.mxu0
    %v5960 = vrot.slane %v5916, 7
    %v5961 = vsel %vm1869, %v5960, %v5912
    %v5962 = vsel %vm5931, %v5961, 0
    %v5965 = vsel %vm5934, %v5922, 0
    %5967 = vmatpush.msra.mxu0 0.0
    %5968 = vmatpush.msra.mxu0 0.0
    %5969 = vmatpush.msra.mxu0 0.0
    %5970 = vmatpush.msra.mxu0 0.0
    %5971 = vmatpush.msra.mxu0 0.0
    %5972 = vmatpush.msra.mxu0 0.0
    %5973 = vmatpush.msra.mxu0 0.0
    %5974 = vmatpush.msra.mxu0 0.0
    %5975 = vmatpush.msra.mxu0 0.0
    %5976 = vmatpush.msra.mxu0 0.0
    %5977 = vmatpush.msra.mxu0 0.0
    %5978 = vmatpush.msra.mxu0 0.0
    %5979 = vmatpush.msra.mxu0 0.0
    %5980 = vmatpush.msra.mxu0 %v5965
    %5981 = vmatpush.msra.mxu0 %v5921
    %5982 = vmatpush.msra.mxu0 %v5920
    %5983 = vmatmul.f32.gmra.mxu0 %v5962
    %v5984 = vpop.f32.mrf.mxu0
    %v5985 = vadd.f32 %v5956, %v5984
    %5986 = vdwg.mxu0
    %s5987 = scalar_lea.vmem %s5, 192
    %v5988 = vld [vmem:[%s5987] sm:$0xff]
    %v5989 = vld [vmem:[%s5987 + $0x8] sm:$0xff]
    %v5990 = vld [vmem:[%s5987 + $0x10] sm:$0xf]
    %v5993 = vrot.slane %v5918, 7
    %v5994 = vsel %vm1869, %v5993, %v5914
    %v5995 = vsel %vm5931, %v5994, 0
    %v5998 = vsel %vm5934, %v5990, 0
    %6000 = vmatpush.msra.mxu0 0.0
    %6001 = vmatpush.msra.mxu0 0.0
    %6002 = vmatpush.msra.mxu0 0.0
    %6003 = vmatpush.msra.mxu0 0.0
    %6004 = vmatpush.msra.mxu0 0.0
    %6005 = vmatpush.msra.mxu0 0.0
    %6006 = vmatpush.msra.mxu0 0.0
    %6007 = vmatpush.msra.mxu0 0.0
    %6008 = vmatpush.msra.mxu0 0.0
    %6009 = vmatpush.msra.mxu0 0.0
    %6010 = vmatpush.msra.mxu0 0.0
    %6011 = vmatpush.msra.mxu0 0.0
    %6012 = vmatpush.msra.mxu0 0.0
    %6013 = vmatpush.msra.mxu0 %v5998
    %6014 = vmatpush.msra.mxu0 %v5989
    %6015 = vmatpush.msra.mxu0 %v5988
    %6016 = vmatmul.f32.gmra.mxu0 %v5995
    %v6017 = vpop.f32.mrf.mxu0
    %v6018 = vadd.f32 0.0, %v6017
    %6019 = vdwg.mxu0
    %v6020 = vadd.f32 %v5985, %v6018
    %s6021 = scalar_lea.vmem %s5, 288
    %v6022 = vld [vmem:[%s6021] sm:$0xff]
    %v6023 = vld [vmem:[%s6021 + $0x8] sm:$0xff]
    %v6024 = vld [vmem:[%s6021 + $0x10] sm:$0xf]
    %v6027 = vrot.slane %v5919, 7
    %v6028 = vsel %vm1869, %v6027, %v5915
    %v6029 = vsel %vm5931, %v6028, 0
    %v6032 = vsel %vm5934, %v6024, 0
    %6034 = vmatpush.msra.mxu0 0.0
    %6035 = vmatpush.msra.mxu0 0.0
    %6036 = vmatpush.msra.mxu0 0.0
    %6037 = vmatpush.msra.mxu0 0.0
    %6038 = vmatpush.msra.mxu0 0.0
    %6039 = vmatpush.msra.mxu0 0.0
    %6040 = vmatpush.msra.mxu0 0.0
    %6041 = vmatpush.msra.mxu0 0.0
    %6042 = vmatpush.msra.mxu0 0.0
    %6043 = vmatpush.msra.mxu0 0.0
    %6044 = vmatpush.msra.mxu0 0.0
    %6045 = vmatpush.msra.mxu0 0.0
    %6046 = vmatpush.msra.mxu0 0.0
    %6047 = vmatpush.msra.mxu0 %v6032
    %6048 = vmatpush.msra.mxu0 %v6023
    %6049 = vmatpush.msra.mxu0 %v6022
    %6050 = vmatmul.f32.gmra.mxu0 %v6029
    %v6051 = vpop.f32.mrf.mxu0
    %v6052 = vadd.f32 0.0, %v6051
    %6053 = vdwg.mxu0
    %v6054 = vadd.f32 %v6020, %v6052
    %s6055 = scalar_lea.vmem %s5, 24
    %v6056 = vld [vmem:[%s6055] sm:$0xff]
    %v6057 = vld [vmem:[%s6055 + $0x8] sm:$0xff]
    %v6058 = vld [vmem:[%s6055 + $0x10] sm:$0xf]
    %v6059 = vrot.slane %v5912, 2
    %v6060 = vrot.slane %v5916, 1
    %v6061 = vsel %vm1869, %v6060, %v6059
    %v6062 = vsel %vm5931, %v6061, 0
    %v6065 = vsel %vm5934, %v6058, 0
    %6067 = vmatpush.msra.mxu0 0.0
    %6068 = vmatpush.msra.mxu0 0.0
    %6069 = vmatpush.msra.mxu0 0.0
    %6070 = vmatpush.msra.mxu0 0.0
    %6071 = vmatpush.msra.mxu0 0.0
    %6072 = vmatpush.msra.mxu0 0.0
    %6073 = vmatpush.msra.mxu0 0.0
    %6074 = vmatpush.msra.mxu0 0.0
    %6075 = vmatpush.msra.mxu0 0.0
    %6076 = vmatpush.msra.mxu0 0.0
    %6077 = vmatpush.msra.mxu0 0.0
    %6078 = vmatpush.msra.mxu0 0.0
    %6079 = vmatpush.msra.mxu0 0.0
    %6080 = vmatpush.msra.mxu0 %v6065
    %6081 = vmatpush.msra.mxu0 %v6057
    %6082 = vmatpush.msra.mxu0 %v6056
    %6083 = vmatmul.f32.gmra.mxu0 %v6062
    %v6084 = vpop.f32.mrf.mxu0
    %v6085 = vadd.f32 0.0, %v6084
    %6086 = vdwg.mxu0
    %v6087 = vadd.f32 %v6054, %v6085
    %s6088 = scalar_lea.vmem %s5, 120
    %v6089 = vld [vmem:[%s6088] sm:$0xff]
    %v6090 = vld [vmem:[%s6088 + $0x8] sm:$0xff]
    %v6091 = vld [vmem:[%s6088 + $0x10] sm:$0xf]
    %v6092 = vrot.slane %v5913, 2
    %v6093 = vrot.slane %v5917, 1
    %v6094 = vsel %vm1869, %v6093, %v6092
    %v6095 = vsel %vm5931, %v6094, 0
    %v6098 = vsel %vm5934, %v6091, 0
    %6100 = vmatpush.msra.mxu0 0.0
    %6101 = vmatpush.msra.mxu0 0.0
    %6102 = vmatpush.msra.mxu0 0.0
    %6103 = vmatpush.msra.mxu0 0.0
    %6104 = vmatpush.msra.mxu0 0.0
    %6105 = vmatpush.msra.mxu0 0.0
    %6106 = vmatpush.msra.mxu0 0.0
    %6107 = vmatpush.msra.mxu0 0.0
    %6108 = vmatpush.msra.mxu0 0.0
    %6109 = vmatpush.msra.mxu0 0.0
    %6110 = vmatpush.msra.mxu0 0.0
    %6111 = vmatpush.msra.mxu0 0.0
    %6112 = vmatpush.msra.mxu0 0.0
    %6113 = vmatpush.msra.mxu0 %v6098
    %6114 = vmatpush.msra.mxu0 %v6090
    %6115 = vmatpush.msra.mxu0 %v6089
    %6116 = vmatmul.f32.gmra.mxu0 %v6095
    %v6117 = vpop.f32.mrf.mxu0
    %v6118 = vadd.f32 0.0, %v6117
    %6119 = vdwg.mxu0
    %v6120 = vadd.f32 %v6087, %v6118
    %s6121 = scalar_lea.vmem %s5, 216
    %v6122 = vld [vmem:[%s6121] sm:$0xff]
    %v6123 = vld [vmem:[%s6121 + $0x8] sm:$0xff]
    %v6124 = vld [vmem:[%s6121 + $0x10] sm:$0xf]
    %v6125 = vrot.slane %v5914, 2
    %v6126 = vrot.slane %v5918, 1
    %v6127 = vsel %vm1869, %v6126, %v6125
    %v6128 = vsel %vm5931, %v6127, 0
    %v6131 = vsel %vm5934, %v6124, 0
    %6133 = vmatpush.msra.mxu0 0.0
    %6134 = vmatpush.msra.mxu0 0.0
    %6135 = vmatpush.msra.mxu0 0.0
    %6136 = vmatpush.msra.mxu0 0.0
    %6137 = vmatpush.msra.mxu0 0.0
    %6138 = vmatpush.msra.mxu0 0.0
    %6139 = vmatpush.msra.mxu0 0.0
    %6140 = vmatpush.msra.mxu0 0.0
    %6141 = vmatpush.msra.mxu0 0.0
    %6142 = vmatpush.msra.mxu0 0.0
    %6143 = vmatpush.msra.mxu0 0.0
    %6144 = vmatpush.msra.mxu0 0.0
    %6145 = vmatpush.msra.mxu0 0.0
    %6146 = vmatpush.msra.mxu0 %v6131
    %6147 = vmatpush.msra.mxu0 %v6123
    %6148 = vmatpush.msra.mxu0 %v6122
    %6149 = vmatmul.f32.gmra.mxu0 %v6128
    %v6150 = vpop.f32.mrf.mxu0
    %v6151 = vadd.f32 0.0, %v6150
    %6152 = vdwg.mxu0
    %v6153 = vadd.f32 %v6120, %v6151
    %s6154 = scalar_lea.vmem %s5, 312
    %v6155 = vld [vmem:[%s6154] sm:$0xff]
    %v6156 = vld [vmem:[%s6154 + $0x8] sm:$0xff]
    %v6157 = vld [vmem:[%s6154 + $0x10] sm:$0xf]
    %v6158 = vrot.slane %v5915, 2
    %v6159 = vrot.slane %v5919, 1
    %v6160 = vsel %vm1869, %v6159, %v6158
    %v6161 = vsel %vm5931, %v6160, 0
    %v6164 = vsel %vm5934, %v6157, 0
    %6166 = vmatpush.msra.mxu0 0.0
    %6167 = vmatpush.msra.mxu0 0.0
    %6168 = vmatpush.msra.mxu0 0.0
    %6169 = vmatpush.msra.mxu0 0.0
    %6170 = vmatpush.msra.mxu0 0.0
    %6171 = vmatpush.msra.mxu0 0.0
    %6172 = vmatpush.msra.mxu0 0.0
    %6173 = vmatpush.msra.mxu0 0.0
    %6174 = vmatpush.msra.mxu0 0.0
    %6175 = vmatpush.msra.mxu0 0.0
    %6176 = vmatpush.msra.mxu0 0.0
    %6177 = vmatpush.msra.mxu0 0.0
    %6178 = vmatpush.msra.mxu0 0.0
    %6179 = vmatpush.msra.mxu0 %v6164
    %6180 = vmatpush.msra.mxu0 %v6156
    %6181 = vmatpush.msra.mxu0 %v6155
    %6182 = vmatmul.f32.gmra.mxu0 %v6161
    %v6183 = vpop.f32.mrf.mxu0
    %v6184 = vadd.f32 0.0, %v6183
    %6185 = vdwg.mxu0
    %v6186 = vadd.f32 %v6153, %v6184
    %s6187 = scalar_lea.vmem %s5, 48
    %v6188 = vld [vmem:[%s6187] sm:$0xff]
    %v6189 = vld [vmem:[%s6187 + $0x8] sm:$0xff]
    %v6190 = vld [vmem:[%s6187 + $0x10] sm:$0xf]
    %v6191 = vrot.slane %v5912, 4
    %v6192 = vrot.slane %v5916, 3
    %v6193 = vsel %vm1869, %v6192, %v6191
    %v6194 = vsel %vm5931, %v6193, 0
    %v6197 = vsel %vm5934, %v6190, 0
    %6199 = vmatpush.msra.mxu0 0.0
    %6200 = vmatpush.msra.mxu0 0.0
    %6201 = vmatpush.msra.mxu0 0.0
    %6202 = vmatpush.msra.mxu0 0.0
    %6203 = vmatpush.msra.mxu0 0.0
    %6204 = vmatpush.msra.mxu0 0.0
    %6205 = vmatpush.msra.mxu0 0.0
    %6206 = vmatpush.msra.mxu0 0.0
    %6207 = vmatpush.msra.mxu0 0.0
    %6208 = vmatpush.msra.mxu0 0.0
    %6209 = vmatpush.msra.mxu0 0.0
    %6210 = vmatpush.msra.mxu0 0.0
    %6211 = vmatpush.msra.mxu0 0.0
    %6212 = vmatpush.msra.mxu0 %v6197
    %6213 = vmatpush.msra.mxu0 %v6189
    %6214 = vmatpush.msra.mxu0 %v6188
    %6215 = vmatmul.f32.gmra.mxu0 %v6194
    %v6216 = vpop.f32.mrf.mxu0
    %v6217 = vadd.f32 0.0, %v6216
    %6218 = vdwg.mxu0
    %v6219 = vadd.f32 %v6186, %v6217
    %s6220 = scalar_lea.vmem %s5, 144
    %v6221 = vld [vmem:[%s6220] sm:$0xff]
    %v6222 = vld [vmem:[%s6220 + $0x8] sm:$0xff]
    %v6223 = vld [vmem:[%s6220 + $0x10] sm:$0xf]
    %v6224 = vrot.slane %v5913, 4
    %v6225 = vrot.slane %v5917, 3
    %v6226 = vsel %vm1869, %v6225, %v6224
    %v6227 = vsel %vm5931, %v6226, 0
    %v6230 = vsel %vm5934, %v6223, 0
    %6232 = vmatpush.msra.mxu0 0.0
    %6233 = vmatpush.msra.mxu0 0.0
    %6234 = vmatpush.msra.mxu0 0.0
    %6235 = vmatpush.msra.mxu0 0.0
    %6236 = vmatpush.msra.mxu0 0.0
    %6237 = vmatpush.msra.mxu0 0.0
    %6238 = vmatpush.msra.mxu0 0.0
    %6239 = vmatpush.msra.mxu0 0.0
    %6240 = vmatpush.msra.mxu0 0.0
    %6241 = vmatpush.msra.mxu0 0.0
    %6242 = vmatpush.msra.mxu0 0.0
    %6243 = vmatpush.msra.mxu0 0.0
    %6244 = vmatpush.msra.mxu0 0.0
    %6245 = vmatpush.msra.mxu0 %v6230
    %6246 = vmatpush.msra.mxu0 %v6222
    %6247 = vmatpush.msra.mxu0 %v6221
    %6248 = vmatmul.f32.gmra.mxu0 %v6227
    %v6249 = vpop.f32.mrf.mxu0
    %v6250 = vadd.f32 0.0, %v6249
    %6251 = vdwg.mxu0
    %v6252 = vadd.f32 %v6219, %v6250
    %s6253 = scalar_lea.vmem %s5, 240
    %v6254 = vld [vmem:[%s6253] sm:$0xff]
    %v6255 = vld [vmem:[%s6253 + $0x8] sm:$0xff]
    %v6256 = vld [vmem:[%s6253 + $0x10] sm:$0xf]
    %v6257 = vrot.slane %v5914, 4
    %v6258 = vrot.slane %v5918, 3
    %v6259 = vsel %vm1869, %v6258, %v6257
    %v6260 = vsel %vm5931, %v6259, 0
    %v6263 = vsel %vm5934, %v6256, 0
    %6265 = vmatpush.msra.mxu0 0.0
    %6266 = vmatpush.msra.mxu0 0.0
    %6267 = vmatpush.msra.mxu0 0.0
    %6268 = vmatpush.msra.mxu0 0.0
    %6269 = vmatpush.msra.mxu0 0.0
    %6270 = vmatpush.msra.mxu0 0.0
    %6271 = vmatpush.msra.mxu0 0.0
    %6272 = vmatpush.msra.mxu0 0.0
    %6273 = vmatpush.msra.mxu0 0.0
    %6274 = vmatpush.msra.mxu0 0.0
    %6275 = vmatpush.msra.mxu0 0.0
    %6276 = vmatpush.msra.mxu0 0.0
    %6277 = vmatpush.msra.mxu0 0.0
    %6278 = vmatpush.msra.mxu0 %v6263
    %6279 = vmatpush.msra.mxu0 %v6255
    %6280 = vmatpush.msra.mxu0 %v6254
    %6281 = vmatmul.f32.gmra.mxu0 %v6260
    %v6282 = vpop.f32.mrf.mxu0
    %v6283 = vadd.f32 0.0, %v6282
    %6284 = vdwg.mxu0
    %v6285 = vadd.f32 %v6252, %v6283
    %s6286 = scalar_lea.vmem %s5, 336
    %v6287 = vld [vmem:[%s6286] sm:$0xff]
    %v6288 = vld [vmem:[%s6286 + $0x8] sm:$0xff]
    %v6289 = vld [vmem:[%s6286 + $0x10] sm:$0xf]
    %v6290 = vrot.slane %v5915, 4
    %v6291 = vrot.slane %v5919, 3
    %v6292 = vsel %vm1869, %v6291, %v6290
    %v6293 = vsel %vm5931, %v6292, 0
    %v6296 = vsel %vm5934, %v6289, 0
    %6298 = vmatpush.msra.mxu0 0.0
    %6299 = vmatpush.msra.mxu0 0.0
    %6300 = vmatpush.msra.mxu0 0.0
    %6301 = vmatpush.msra.mxu0 0.0
    %6302 = vmatpush.msra.mxu0 0.0
    %6303 = vmatpush.msra.mxu0 0.0
    %6304 = vmatpush.msra.mxu0 0.0
    %6305 = vmatpush.msra.mxu0 0.0
    %6306 = vmatpush.msra.mxu0 0.0
    %6307 = vmatpush.msra.mxu0 0.0
    %6308 = vmatpush.msra.mxu0 0.0
    %6309 = vmatpush.msra.mxu0 0.0
    %6310 = vmatpush.msra.mxu0 0.0
    %6311 = vmatpush.msra.mxu0 %v6296
    %6312 = vmatpush.msra.mxu0 %v6288
    %6313 = vmatpush.msra.mxu0 %v6287
    %6314 = vmatmul.f32.gmra.mxu0 %v6293
    %v6315 = vpop.f32.mrf.mxu0
    %v6316 = vadd.f32 0.0, %v6315
    %6317 = vdwg.mxu0
    %v6318 = vadd.f32 %v6285, %v6316
    %s6319 = scalar_lea.vmem %s5, 72
    %v6320 = vld [vmem:[%s6319] sm:$0xff]
    %v6321 = vld [vmem:[%s6319 + $0x8] sm:$0xff]
    %v6322 = vld [vmem:[%s6319 + $0x10] sm:$0xf]
    %v6323 = vrot.slane %v5912, 6
    %v6324 = vrot.slane %v5916, 5
    %v6325 = vsel %vm1869, %v6324, %v6323
    %v6326 = vsel %vm5931, %v6325, 0
    %v6329 = vsel %vm5934, %v6322, 0
    %6331 = vmatpush.msra.mxu0 0.0
    %6332 = vmatpush.msra.mxu0 0.0
    %6333 = vmatpush.msra.mxu0 0.0
    %6334 = vmatpush.msra.mxu0 0.0
    %6335 = vmatpush.msra.mxu0 0.0
    %6336 = vmatpush.msra.mxu0 0.0
    %6337 = vmatpush.msra.mxu0 0.0
    %6338 = vmatpush.msra.mxu0 0.0
    %6339 = vmatpush.msra.mxu0 0.0
    %6340 = vmatpush.msra.mxu0 0.0
    %6341 = vmatpush.msra.mxu0 0.0
    %6342 = vmatpush.msra.mxu0 0.0
    %6343 = vmatpush.msra.mxu0 0.0
    %6344 = vmatpush.msra.mxu0 %v6329
    %6345 = vmatpush.msra.mxu0 %v6321
    %6346 = vmatpush.msra.mxu0 %v6320
    %6347 = vmatmul.f32.gmra.mxu0 %v6326
    %v6348 = vpop.f32.mrf.mxu0
    %v6349 = vadd.f32 0.0, %v6348
    %6350 = vdwg.mxu0
    %v6351 = vadd.f32 %v6318, %v6349
    %s6352 = scalar_lea.vmem %s5, 168
    %v6353 = vld [vmem:[%s6352] sm:$0xff]
    %v6354 = vld [vmem:[%s6352 + $0x8] sm:$0xff]
    %v6355 = vld [vmem:[%s6352 + $0x10] sm:$0xf]
    %v6356 = vrot.slane %v5913, 6
    %v6357 = vrot.slane %v5917, 5
    %v6358 = vsel %vm1869, %v6357, %v6356
    %v6359 = vsel %vm5931, %v6358, 0
    %v6362 = vsel %vm5934, %v6355, 0
    %6364 = vmatpush.msra.mxu0 0.0
    %6365 = vmatpush.msra.mxu0 0.0
    %6366 = vmatpush.msra.mxu0 0.0
    %6367 = vmatpush.msra.mxu0 0.0
    %6368 = vmatpush.msra.mxu0 0.0
    %6369 = vmatpush.msra.mxu0 0.0
    %6370 = vmatpush.msra.mxu0 0.0
    %6371 = vmatpush.msra.mxu0 0.0
    %6372 = vmatpush.msra.mxu0 0.0
    %6373 = vmatpush.msra.mxu0 0.0
    %6374 = vmatpush.msra.mxu0 0.0
    %6375 = vmatpush.msra.mxu0 0.0
    %6376 = vmatpush.msra.mxu0 0.0
    %6377 = vmatpush.msra.mxu0 %v6362
    %6378 = vmatpush.msra.mxu0 %v6354
    %6379 = vmatpush.msra.mxu0 %v6353
    %6380 = vmatmul.f32.gmra.mxu0 %v6359
    %v6381 = vpop.f32.mrf.mxu0
    %v6382 = vadd.f32 0.0, %v6381
    %6383 = vdwg.mxu0
    %v6384 = vadd.f32 %v6351, %v6382
    %s6385 = scalar_lea.vmem %s5, 264
    %v6386 = vld [vmem:[%s6385] sm:$0xff]
    %v6387 = vld [vmem:[%s6385 + $0x8] sm:$0xff]
    %v6388 = vld [vmem:[%s6385 + $0x10] sm:$0xf]
    %v6389 = vrot.slane %v5914, 6
    %v6390 = vrot.slane %v5918, 5
    %v6391 = vsel %vm1869, %v6390, %v6389
    %v6392 = vsel %vm5931, %v6391, 0
    %v6395 = vsel %vm5934, %v6388, 0
    %6397 = vmatpush.msra.mxu0 0.0
    %6398 = vmatpush.msra.mxu0 0.0
    %6399 = vmatpush.msra.mxu0 0.0
    %6400 = vmatpush.msra.mxu0 0.0
    %6401 = vmatpush.msra.mxu0 0.0
    %6402 = vmatpush.msra.mxu0 0.0
    %6403 = vmatpush.msra.mxu0 0.0
    %6404 = vmatpush.msra.mxu0 0.0
    %6405 = vmatpush.msra.mxu0 0.0
    %6406 = vmatpush.msra.mxu0 0.0
    %6407 = vmatpush.msra.mxu0 0.0
    %6408 = vmatpush.msra.mxu0 0.0
    %6409 = vmatpush.msra.mxu0 0.0
    %6410 = vmatpush.msra.mxu0 %v6395
    %6411 = vmatpush.msra.mxu0 %v6387
    %6412 = vmatpush.msra.mxu0 %v6386
    %6413 = vmatmul.f32.gmra.mxu0 %v6392
    %v6414 = vpop.f32.mrf.mxu0
    %v6415 = vadd.f32 0.0, %v6414
    %6416 = vdwg.mxu0
    %v6417 = vadd.f32 %v6384, %v6415
    %s6418 = scalar_lea.vmem %s5, 360
    %v6419 = vld [vmem:[%s6418] sm:$0xff]
    %v6420 = vld [vmem:[%s6418 + $0x8] sm:$0xff]
    %v6421 = vld [vmem:[%s6418 + $0x10] sm:$0xf]
    %v6422 = vrot.slane %v5915, 6
    %v6423 = vrot.slane %v5919, 5
    %v6424 = vsel %vm1869, %v6423, %v6422
    %v6425 = vsel %vm5931, %v6424, 0
    %v6428 = vsel %vm5934, %v6421, 0
    %6430 = vmatpush.msra.mxu0 0.0
    %6431 = vmatpush.msra.mxu0 0.0
    %6432 = vmatpush.msra.mxu0 0.0
    %6433 = vmatpush.msra.mxu0 0.0
    %6434 = vmatpush.msra.mxu0 0.0
    %6435 = vmatpush.msra.mxu0 0.0
    %6436 = vmatpush.msra.mxu0 0.0
    %6437 = vmatpush.msra.mxu0 0.0
    %6438 = vmatpush.msra.mxu0 0.0
    %6439 = vmatpush.msra.mxu0 0.0
    %6440 = vmatpush.msra.mxu0 0.0
    %6441 = vmatpush.msra.mxu0 0.0
    %6442 = vmatpush.msra.mxu0 0.0
    %6443 = vmatpush.msra.mxu0 %v6428
    %6444 = vmatpush.msra.mxu0 %v6420
    %6445 = vmatpush.msra.mxu0 %v6419
    %6446 = vmatmul.f32.gmra.mxu0 %v6425
    %v6447 = vpop.f32.mrf.mxu0
    %v6448 = vadd.f32 0.0, %v6447
    %6449 = vdwg.mxu0
    %v6450 = vadd.f32 %v6417, %v6448
    %v6451 = vld [vmem:[%s6] sm:$0x1]
    %v6453 = vperm.slane %v6451, 0
    %v6455 = vadd.f32 %v6450, %v6453
    %v6456 = vmax.f32 %v6455, 0.0
    %v6457 = vld [vmem:[%s7] sm:$0xff]
    %v6458 = vld [vmem:[%s7 + $0x8] sm:$0xff]
    %v6459 = vld [vmem:[%s7 + $0x10] sm:$0xff]
    %v6460 = vld [vmem:[%s7 + $0x18] sm:$0xff]
    %v6461 = vld [vmem:[%s7 + $0x20] sm:$0xff]
    %v6462 = vld [vmem:[%s7 + $0x28] sm:$0xff]
    %v6463 = vld [vmem:[%s7 + $0x30] sm:$0x3]
    %v6464 = vld [vmem:[%s8] sm:$0x1]
    %v6466 = vperm.slane %v6464, 0
    %vm6468 = vcmask 408576
    %v6470 = vsel %vm6468, %v6456, 0
    %v6473 = vsel %vm2120, %v6463, 0
    %6475 = vmatpush.msra.mxu0 0.0
    %6476 = vmatpush.msra.mxu0 0.0
    %6477 = vmatpush.msra.mxu0 0.0
    %6478 = vmatpush.msra.mxu0 0.0
    %6479 = vmatpush.msra.mxu0 0.0
    %6480 = vmatpush.msra.mxu0 0.0
    %6481 = vmatpush.msra.mxu0 0.0
    %6482 = vmatpush.msra.mxu0 0.0
    %6483 = vmatpush.msra.mxu0 0.0
    %6484 = vmatpush.msra.mxu0 %v6473
    %6485 = vmatpush.msra.mxu0 %v6462
    %6486 = vmatpush.msra.mxu0 %v6461
    %6487 = vmatpush.msra.mxu0 %v6460
    %6488 = vmatpush.msra.mxu0 %v6459
    %6489 = vmatpush.msra.mxu0 %v6458
    %6490 = vmatpush.msra.mxu0 %v6457
    %6491 = vmatmul.f32.gmra.mxu0 %v6470
    %v6492 = vpop.f32.mrf.mxu0
    %v6493 = vadd.f32 %v6466, %v6492
    %6494 = vdwg.mxu0
    %vm6495 = vcmask 74752
    %6496 = vst.msk [vmem:[#allocation2] sm:$0x3] %vm6495, %v6493
    // Predicated region
    $region38: #{net_forward.1} parent=1 // pred_check
      _
    $region39: #{net_forward.1} parent=1 // pred_check_branch
      %6498 = sbr.rel (0) target = $region41
    $region40: #{net_forward.1} parent=1 // pred_region
      %6500 = vsyncadd [#allocation3], 0
      %s6502 = sshll.u32 [#allocation2], 4
      %s6503 = int_to_ptr.vmem [resolvable:$true] %s6502
      %s6504 = sshll.u32 %s9, 4
      %s6505 = int_to_ptr.hbm [resolvable:$true] %s6504
      %6507 = dma.vmem_to_hbm [thread:$0]  %s6503, 32, %s6505, [#allocation3]
    $region41: #{net_forward.1} parent=1 // pred_fallthru
      _
    // Predicated region
    $region42: #{net_forward.1} parent=1 // pred_check
      _
    $region43: #{net_forward.1} parent=1 // pred_check_branch
      %6509 = sbr.rel (0) target = $region45
    $region44: #{net_forward.1} parent=1 // pred_region
      %6511 = dma.done [#allocation3], 32
    $region45: #{net_forward.1} parent=1 // pred_fallthru
      _
    %6512 = vsyncpa [#allocation3], 1

</llo_original>
